<compile_context>
chip_gen: v6e
topology: v6e:2x2x1
jax: 0.10.0
libtpu: 0.0.40
codegen_flags: <defaults>
</compile_context>

<pallas_src>
import functools

import jax
import jax.numpy as jnp
from jax.experimental import pallas as pl
from jax.experimental.pallas import tpu as pltpu

CFG = dict(vocab=128, d_model=64, d_kv=16, num_heads=4, d_ff=128,
           num_layers=2, rel_buckets=32, rel_max_dist=128, eps=1e-6,
           pad_id=0, decoder_start=0)


# --------------------------- parameter init --------------------------------

def init_params(key, cfg):
    d = cfg['d_model']
    H = cfg['num_heads']
    inner = H * cfg['d_kv']
    ff = cfg['d_ff']
    v = cfg['vocab']
    nl = cfg['num_layers']
    keys = iter(jax.random.split(key, 64))

    def nrm(shape, scale=0.05):
        return jax.random.normal(next(keys), shape, jnp.float32) * scale

    enc = dict(
        ln1=jnp.ones((nl, 1, d), jnp.float32),
        wqkv=nrm((nl, d, 3 * inner)),          # fused Q|K|V
        wo=nrm((nl, inner, d)),
        ln2=jnp.ones((nl, 1, d), jnp.float32),
        wi=nrm((nl, d, ff)),
        wff=nrm((nl, ff, d)),
    )
    dec = dict(
        ln1=jnp.ones((nl, 1, d), jnp.float32),
        wqkv=nrm((nl, d, 3 * inner)),          # fused self-attn Q|K|V
        wo_s=nrm((nl, inner, d)),
        ln2=jnp.ones((nl, 1, d), jnp.float32),
        wq_c=nrm((nl, d, inner)),
        wkv_c=nrm((nl, d, 2 * inner)),         # fused cross-attn K|V
        wo_c=nrm((nl, inner, d)),
        ln3=jnp.ones((nl, 1, d), jnp.float32),
        wi=nrm((nl, d, ff)),
        wff=nrm((nl, ff, d)),
    )
    return dict(
        shared=nrm((v, d), 1.0),
        enc_rel_bias=nrm((cfg['rel_buckets'], H), 0.1),
        dec_rel_bias=nrm((cfg['rel_buckets'], H), 0.1),
        enc=enc, dec=dec,
        enc_final_ln=jnp.ones((1, d), jnp.float32),
        dec_final_ln=jnp.ones((1, d), jnp.float32),
    )


# ------------------ tiny XLA-side helpers (static tables) -------------------

def relative_position_bucket(rel_pos, bidirectional, num_buckets, max_distance):
    ret = jnp.zeros_like(rel_pos)
    if bidirectional:
        num_buckets //= 2
        ret = ret + (rel_pos > 0).astype(jnp.int32) * num_buckets
        rel_pos = jnp.abs(rel_pos)
    else:
        rel_pos = -jnp.minimum(rel_pos, 0)
    max_exact = num_buckets // 2
    is_small = rel_pos < max_exact
    safe = jnp.maximum(rel_pos, 1).astype(jnp.float32)
    if_large = max_exact + (jnp.log(safe / max_exact) /
                            jnp.log(max_distance / max_exact) *
                            (num_buckets - max_exact)).astype(jnp.int32)
    if_large = jnp.minimum(if_large, num_buckets - 1)
    return ret + jnp.where(is_small, rel_pos, if_large)


def compute_position_bias(table, q_len, k_len, bidirectional, cfg):
    ctx = jnp.arange(q_len)[:, None]
    mem = jnp.arange(k_len)[None, :]
    buckets = relative_position_bucket(mem - ctx, bidirectional,
                                       cfg['rel_buckets'], cfg['rel_max_dist'])
    bias = jnp.take(table, buckets, axis=0)      # (q, k, H)
    return jnp.transpose(bias, (2, 0, 1))        # (H, q, k)


def shift_right(labels, cfg):
    start = jnp.full((labels.shape[0], 1), cfg['decoder_start'], labels.dtype)
    shifted = jnp.concatenate([start, labels[:, :-1]], axis=1)
    return jnp.where(shifted == -100, cfg['pad_id'], shifted)


# ----------------------- fused T5 forward (one kernel) ----------------------

def t5_forward(params, input_ids, attention_mask, labels, cfg):
    B, Ls = input_ids.shape
    Lt = labels.shape[1]
    D = cfg['d_model']
    V = cfg['vocab']
    H = cfg['num_heads']
    dk = cfg['d_kv']
    I = H * dk
    NL = cfg['num_layers']
    EPS = cfg['eps']

    # --- cheap integer / static-table prep outside the kernel ---
    dec_input_ids = shift_right(labels, cfg)
    enc_pos_bias = compute_position_bias(params['enc_rel_bias'], Ls, Ls, True, cfg)
    causal = jnp.tril(jnp.ones((Lt, Lt), jnp.float32))
    dec_pos_bias = (compute_position_bias(params['dec_rel_bias'], Lt, Lt, False, cfg)
                    + (1.0 - causal)[None] * -1e9)
    enc_mask_add = (1.0 - attention_mask.astype(jnp.float32))[:, None, :] * -1e9  # (B,1,Ls)

    enc_ids = input_ids.astype(jnp.int32).reshape(B, Ls, 1)
    dec_ids = dec_input_ids.astype(jnp.int32).reshape(B, Lt, 1)
    lbl3 = labels.astype(jnp.int32).reshape(B, Lt, 1)

    def kernel(enc_ids_ref, dec_ids_ref, lbl_ref, mask_ref,
               enc_bias_ref, dec_bias_ref, shared_ref,
               e_ln1, e_wqkv, e_wo, e_ln2, e_wi, e_wff,
               d_ln1, d_wqkv, d_wos, d_ln2, d_wqc, d_wkvc, d_woc, d_ln3,
               d_wi, d_wff, enc_fln, dec_fln,
               logits_ref, ptok_ref):
        f32 = jnp.float32

        def rms(x, w):                       # T5 LayerNorm: no mean subtraction
            var = jnp.mean(x * x, axis=-1, keepdims=True)
            return x * jax.lax.rsqrt(var + EPS) * w

        def mm(a, b):
            return jnp.dot(a, b, preferred_element_type=f32)

        def mm_bt(a, b):                     # a @ b.T without explicit transpose
            return jax.lax.dot_general(a, b, (((1,), (1,)), ((), ())),
                                       preferred_element_type=f32)

        def softmax(s):
            m = jnp.max(s, axis=-1, keepdims=True)
            p = jnp.exp(s - m)
            return p * pl.reciprocal(jnp.sum(p, axis=-1, keepdims=True),
                                     approx=True)

        def embed(ids, L):                   # one-hot(ids) @ shared on the MXU
            onehot = (jax.lax.broadcasted_iota(jnp.int32, (L, V), 1)
                      == ids).astype(f32)
            return mm(onehot, shared_ref[...])

        def mha(q_all, k_all, v_all, w_out, bias_fn):
            # q_all (Lq, I), k_all/v_all (Lk, I), w_out (I, D)
            out = jnp.zeros((q_all.shape[0], D), f32)
            for hd in range(H):
                sl = slice(hd * dk, (hd + 1) * dk)
                # T5 attention: NO 1/sqrt(d) scaling of the scores.
                s = mm_bt(q_all[:, sl], k_all[:, sl]) + bias_fn(hd)
                p = softmax(s)
                out = out + mm(mm(p, v_all[:, sl]), w_out[sl, :])
            return out

        amask = mask_ref[0]                  # (1, Ls) additive pad mask

        # ------------------------------ encoder ------------------------------
        h = embed(enc_ids_ref[0], Ls)
        for l in range(NL):
            n = rms(h, e_ln1[l])
            qkv = mm(n, e_wqkv[l])           # fused QKV matmul (Ls, 3I)
            h = h + mha(qkv[:, :I], qkv[:, I:2 * I], qkv[:, 2 * I:],
                        e_wo[l], lambda hd: enc_bias_ref[hd] + amask)
            n = rms(h, e_ln2[l])
            h = h + mm(jnp.maximum(mm(n, e_wi[l]), 0.0), e_wff[l])  # fused ReLU
        enc_h = rms(h, enc_fln[...])

        # ------------------------------ decoder ------------------------------
        g = embed(dec_ids_ref[0], Lt)
        for l in range(NL):
            n = rms(g, d_ln1[l])
            qkv = mm(n, d_wqkv[l])
            g = g + mha(qkv[:, :I], qkv[:, I:2 * I], qkv[:, 2 * I:],
                        d_wos[l], lambda hd: dec_bias_ref[hd])   # causal + rel bias
            n = rms(g, d_ln2[l])
            q_c = mm(n, d_wqc[l])            # (Lt, I)
            kv_c = mm(enc_h, d_wkvc[l])      # fused cross K|V  (Ls, 2I)
            g = g + mha(q_c, kv_c[:, :I], kv_c[:, I:],
                        d_woc[l], lambda hd: amask)
            n = rms(g, d_ln3[l])
            g = g + mm(jnp.maximum(mm(n, d_wi[l]), 0.0), d_wff[l])
        g = rms(g, dec_fln[...])

        # -------------------- tied lm_head + cross-entropy -------------------
        logits = mm_bt(g * (D ** -0.5), shared_ref[...])   # (Lt, V), lane-dense
        logits_ref[0] = logits
        lbl = lbl_ref[0]                                   # (Lt, 1) int32
        safe = jnp.where(lbl == -100, 0, lbl)
        oh = (jax.lax.broadcasted_iota(jnp.int32, (Lt, V), 1)
              == safe).astype(f32)
        m = jnp.max(logits, axis=-1, keepdims=True)
        lse = jnp.log(jnp.sum(jnp.exp(logits - m), axis=-1, keepdims=True)) + m
        ptok_ref[0] = jnp.sum(oh * (lse - logits), axis=-1, keepdims=True)

    def wspec(shape):                        # weights: full block, same each step
        nd = len(shape)
        return pl.BlockSpec(shape, lambda b: (0,) * nd)

    def bspec(shape):                        # per-batch inputs: block leading dim
        nd = len(shape)
        return pl.BlockSpec((1,) + tuple(shape[1:]),
                            lambda b: (b,) + (0,) * (nd - 1))

    pe, pd = params['enc'], params['dec']
    operands = (enc_ids, dec_ids, lbl3, enc_mask_add,
                enc_pos_bias, dec_pos_bias, params['shared'],
                pe['ln1'], pe['wqkv'], pe['wo'], pe['ln2'], pe['wi'], pe['wff'],
                pd['ln1'], pd['wqkv'], pd['wo_s'], pd['ln2'], pd['wq_c'],
                pd['wkv_c'], pd['wo_c'], pd['ln3'], pd['wi'], pd['wff'],
                params['enc_final_ln'], params['dec_final_ln'])
    batched = {0, 1, 2, 3}
    in_specs = [bspec(a.shape) if i in batched else wspec(a.shape)
                for i, a in enumerate(operands)]

    logits, ptok = pl.pallas_call(
        kernel,
        out_shape=(jax.ShapeDtypeStruct((B, Lt, V), jnp.float32),
                   jax.ShapeDtypeStruct((B, Lt, 1), jnp.float32)),
        grid=(B,),
        in_specs=in_specs,
        out_specs=(pl.BlockSpec((1, Lt, V), lambda b: (b, 0, 0)),
                   pl.BlockSpec((1, Lt, 1), lambda b: (b, 0, 0))),
        compiler_params=pltpu.CompilerParams(
            dimension_semantics=("parallel",)),
    )(*operands)

    # masked mean over valid tokens (ignore_index=-100) -- 16 scalars, trivial.
    labels_flat = labels.reshape(-1)
    valid = (labels_flat != -100).astype(jnp.float32)
    loss = jnp.sum(ptok.reshape(-1) * valid) / jnp.maximum(jnp.sum(valid), 1.0)
    return loss, logits


# ---------------------------------- main ------------------------------------

if __name__ == "__main__":
    key = jax.random.PRNGKey(0)
    pk, ik, lk = jax.random.split(key, 3)
    params = init_params(pk, CFG)

    B, Ls, Lt = 2, 8, 8
    input_ids = jax.random.randint(ik, (B, Ls), 1, CFG['vocab'], jnp.int32)
    attention_mask = jnp.ones((B, Ls), jnp.int32).at[1, 6:].set(0)  # some padding
    labels = jax.random.randint(lk, (B, Lt), 1, CFG['vocab'], jnp.int32)

    fwd = jax.jit(functools.partial(t5_forward, cfg=CFG))
    loss, logits = fwd(params, input_ids, attention_mask, labels)
    jax.block_until_ready((loss, logits))

    assert logits.shape == (B, Lt, CFG['vocab'])
    assert bool(jnp.isfinite(loss))
    print("KERNEL_OK")
</pallas_src>

<mosaic_0001>
module attributes {stable_mosaic.version = 11 : i64} {
  func.func @kernel(%arg0: i32, %arg1: memref<1x8x1xi32, #tpu.memory_space<vmem>>, %arg2: memref<1x8x1xi32, #tpu.memory_space<vmem>>, %arg3: memref<1x8x1xi32, #tpu.memory_space<vmem>>, %arg4: memref<1x1x8xf32, #tpu.memory_space<vmem>>, %arg5: memref<4x8x8xf32, #tpu.memory_space<vmem>>, %arg6: memref<4x8x8xf32, #tpu.memory_space<vmem>>, %arg7: memref<128x64xf32, #tpu.memory_space<vmem>>, %arg8: memref<2x1x64xf32, #tpu.memory_space<vmem>>, %arg9: memref<2x64x192xf32, #tpu.memory_space<vmem>>, %arg10: memref<2x64x64xf32, #tpu.memory_space<vmem>>, %arg11: memref<2x1x64xf32, #tpu.memory_space<vmem>>, %arg12: memref<2x64x128xf32, #tpu.memory_space<vmem>>, %arg13: memref<2x128x64xf32, #tpu.memory_space<vmem>>, %arg14: memref<2x1x64xf32, #tpu.memory_space<vmem>>, %arg15: memref<2x64x192xf32, #tpu.memory_space<vmem>>, %arg16: memref<2x64x64xf32, #tpu.memory_space<vmem>>, %arg17: memref<2x1x64xf32, #tpu.memory_space<vmem>>, %arg18: memref<2x64x64xf32, #tpu.memory_space<vmem>>, %arg19: memref<2x64x128xf32, #tpu.memory_space<vmem>>, %arg20: memref<2x64x64xf32, #tpu.memory_space<vmem>>, %arg21: memref<2x1x64xf32, #tpu.memory_space<vmem>>, %arg22: memref<2x64x128xf32, #tpu.memory_space<vmem>>, %arg23: memref<2x128x64xf32, #tpu.memory_space<vmem>>, %arg24: memref<1x64xf32, #tpu.memory_space<vmem>>, %arg25: memref<1x64xf32, #tpu.memory_space<vmem>>, %arg26: memref<1x8x128xf32, #tpu.memory_space<vmem>>, %arg27: memref<1x8x1xf32, #tpu.memory_space<vmem>>) attributes {dimension_semantics = [#tpu.dimension_semantics<parallel>], iteration_bounds = array<i64: 2>, scalar_prefetch = 0 : i64, scratch_operands = 0 : i64, tpu.core_type = #tpu.core_type<tc>, window_params = [{transform_indices = @transform_0, window_bounds = array<i64: 1, 8, 1>}, {transform_indices = @transform_1, window_bounds = array<i64: 1, 8, 1>}, {transform_indices = @transform_2, window_bounds = array<i64: 1, 8, 1>}, {transform_indices = @transform_3, window_bounds = array<i64: 1, 1, 8>}, {pipeline_mode = #tpu.pipeline_mode<synchronous>, transform_indices = @transform_4, window_bounds = array<i64: 4, 8, 8>}, {pipeline_mode = #tpu.pipeline_mode<synchronous>, transform_indices = @transform_5, window_bounds = array<i64: 4, 8, 8>}, {pipeline_mode = #tpu.pipeline_mode<synchronous>, transform_indices = @transform_6, window_bounds = array<i64: 128, 64>}, {pipeline_mode = #tpu.pipeline_mode<synchronous>, transform_indices = @transform_7, window_bounds = array<i64: 2, 1, 64>}, {pipeline_mode = #tpu.pipeline_mode<synchronous>, transform_indices = @transform_8, window_bounds = array<i64: 2, 64, 192>}, {pipeline_mode = #tpu.pipeline_mode<synchronous>, transform_indices = @transform_9, window_bounds = array<i64: 2, 64, 64>}, {pipeline_mode = #tpu.pipeline_mode<synchronous>, transform_indices = @transform_10, window_bounds = array<i64: 2, 1, 64>}, {pipeline_mode = #tpu.pipeline_mode<synchronous>, transform_indices = @transform_11, window_bounds = array<i64: 2, 64, 128>}, {pipeline_mode = #tpu.pipeline_mode<synchronous>, transform_indices = @transform_12, window_bounds = array<i64: 2, 128, 64>}, {pipeline_mode = #tpu.pipeline_mode<synchronous>, transform_indices = @transform_13, window_bounds = array<i64: 2, 1, 64>}, {pipeline_mode = #tpu.pipeline_mode<synchronous>, transform_indices = @transform_14, window_bounds = array<i64: 2, 64, 192>}, {pipeline_mode = #tpu.pipeline_mode<synchronous>, transform_indices = @transform_15, window_bounds = array<i64: 2, 64, 64>}, {pipeline_mode = #tpu.pipeline_mode<synchronous>, transform_indices = @transform_16, window_bounds = array<i64: 2, 1, 64>}, {pipeline_mode = #tpu.pipeline_mode<synchronous>, transform_indices = @transform_17, window_bounds = array<i64: 2, 64, 64>}, {pipeline_mode = #tpu.pipeline_mode<synchronous>, transform_indices = @transform_18, window_bounds = array<i64: 2, 64, 128>}, {pipeline_mode = #tpu.pipeline_mode<synchronous>, transform_indices = @transform_19, window_bounds = array<i64: 2, 64, 64>}, {pipeline_mode = #tpu.pipeline_mode<synchronous>, transform_indices = @transform_20, window_bounds = array<i64: 2, 1, 64>}, {pipeline_mode = #tpu.pipeline_mode<synchronous>, transform_indices = @transform_21, window_bounds = array<i64: 2, 64, 128>}, {pipeline_mode = #tpu.pipeline_mode<synchronous>, transform_indices = @transform_22, window_bounds = array<i64: 2, 128, 64>}, {pipeline_mode = #tpu.pipeline_mode<synchronous>, transform_indices = @transform_23, window_bounds = array<i64: 1, 64>}, {pipeline_mode = #tpu.pipeline_mode<synchronous>, transform_indices = @transform_24, window_bounds = array<i64: 1, 64>}, {transform_indices = @transform_25, window_bounds = array<i64: 1, 8, 128>}, {transform_indices = @transform_26, window_bounds = array<i64: 1, 8, 1>}]} {
    %c0 = arith.constant 0 : index
    %c0_0 = arith.constant 0 : index
    %c0_1 = arith.constant 0 : index
    %0 = vector.load %arg4[%c0, %c0_0, %c0_1] : memref<1x1x8xf32, #tpu.memory_space<vmem>>, vector<1x1x8xf32>
    %1 = vector.shape_cast %0 : vector<1x1x8xf32> to vector<1x8xf32>
    %c0_2 = arith.constant 0 : index
    %c0_3 = arith.constant 0 : index
    %c0_4 = arith.constant 0 : index
    %2 = vector.load %arg1[%c0_2, %c0_3, %c0_4] : memref<1x8x1xi32, #tpu.memory_space<vmem>>, vector<1x8x1xi32>
    %3 = vector.shape_cast %2 : vector<1x8x1xi32> to vector<8x1xi32>
    %4 = tpu.iota {dimensions = array<i32: 1>} : vector<8x128xi32>
    %5 = vector.broadcast %3 : vector<8x1xi32> to vector<8x128xi32>
    %6 = arith.cmpi eq, %4, %5 : vector<8x128xi32>
    %7 = arith.extui %6 : vector<8x128xi1> to vector<8x128xi32>
    %8 = arith.sitofp %7 : vector<8x128xi32> to vector<8x128xf32>
    %c0_5 = arith.constant 0 : index
    %c0_6 = arith.constant 0 : index
    %9 = vector.load %arg7[%c0_5, %c0_6] : memref<128x64xf32, #tpu.memory_space<vmem>>, vector<128x64xf32>
    %cst = arith.constant dense<0.000000e+00> : vector<8x64xf32>
    %10 = tpu.matmul %8, %9, %cst {dimension_numbers = #tpu.dot_dimension_numbers<[1], [0], [0], [1], [0, 0, 1, 1], [], []>} : vector<8x128xf32>, vector<128x64xf32>, vector<8x64xf32> -> vector<8x64xf32>
    %c0_7 = arith.constant 0 : index
    %c0_8 = arith.constant 0 : index
    %c0_9 = arith.constant 0 : index
    %11 = vector.load %arg8[%c0_7, %c0_8, %c0_9] : memref<2x1x64xf32, #tpu.memory_space<vmem>>, vector<1x1x64xf32>
    %12 = vector.shape_cast %11 : vector<1x1x64xf32> to vector<1x64xf32>
    %13 = arith.mulf %10, %10 : vector<8x64xf32>
    %cst_10 = arith.constant dense<0.000000e+00> : vector<8xf32>
    %14 = vector.multi_reduction <add>, %13, %cst_10 [1] : vector<8x64xf32> to vector<8xf32>
    %15 = vector.shape_cast %14 : vector<8xf32> to vector<8x1xf32>
    %cst_11 = arith.constant 6.400000e+01 : f32
    %16 = vector.broadcast %cst_11 : f32 to vector<8x1xf32>
    %17 = arith.divf %15, %16 : vector<8x1xf32>
    %cst_12 = arith.constant 9.99999997E-7 : f32
    %18 = vector.broadcast %cst_12 : f32 to vector<8x1xf32>
    %19 = arith.addf %17, %18 : vector<8x1xf32>
    %20 = math.rsqrt %19 : vector<8x1xf32>
    %21 = vector.broadcast %20 : vector<8x1xf32> to vector<8x64xf32>
    %22 = arith.mulf %10, %21 : vector<8x64xf32>
    %23 = vector.broadcast %12 : vector<1x64xf32> to vector<8x64xf32>
    %24 = arith.mulf %22, %23 : vector<8x64xf32>
    %c0_13 = arith.constant 0 : index
    %c0_14 = arith.constant 0 : index
    %c0_15 = arith.constant 0 : index
    %25 = vector.load %arg9[%c0_13, %c0_14, %c0_15] : memref<2x64x192xf32, #tpu.memory_space<vmem>>, vector<1x64x192xf32>
    %26 = vector.shape_cast %25 : vector<1x64x192xf32> to vector<64x192xf32>
    %cst_16 = arith.constant dense<0.000000e+00> : vector<8x192xf32>
    %27 = tpu.matmul %24, %26, %cst_16 {dimension_numbers = #tpu.dot_dimension_numbers<[1], [0], [0], [1], [0, 0, 1, 1], [], []>} : vector<8x64xf32>, vector<64x192xf32>, vector<8x192xf32> -> vector<8x192xf32>
    %28 = vector.extract_strided_slice %27 {offsets = [0, 0], sizes = [8, 64], strides = [1, 1]} : vector<8x192xf32> to vector<8x64xf32>
    %29 = vector.extract_strided_slice %27 {offsets = [0, 64], sizes = [8, 64], strides = [1, 1]} : vector<8x192xf32> to vector<8x64xf32>
    %30 = vector.extract_strided_slice %27 {offsets = [0, 128], sizes = [8, 64], strides = [1, 1]} : vector<8x192xf32> to vector<8x64xf32>
    %c0_17 = arith.constant 0 : index
    %c0_18 = arith.constant 0 : index
    %c0_19 = arith.constant 0 : index
    %31 = vector.load %arg10[%c0_17, %c0_18, %c0_19] : memref<2x64x64xf32, #tpu.memory_space<vmem>>, vector<1x64x64xf32>
    %32 = vector.shape_cast %31 : vector<1x64x64xf32> to vector<64x64xf32>
    %cst_20 = arith.constant 0.000000e+00 : f32
    %33 = vector.broadcast %cst_20 : f32 to vector<8x64xf32>
    %34 = vector.extract_strided_slice %28 {offsets = [0, 0], sizes = [8, 16], strides = [1, 1]} : vector<8x64xf32> to vector<8x16xf32>
    %35 = vector.extract_strided_slice %29 {offsets = [0, 0], sizes = [8, 16], strides = [1, 1]} : vector<8x64xf32> to vector<8x16xf32>
    %cst_21 = arith.constant dense<0.000000e+00> : vector<8x8xf32>
    %36 = tpu.matmul %34, %35, %cst_21 {dimension_numbers = #tpu.dot_dimension_numbers<[1], [1], [0], [0], [0, 0, 1, 0], [], []>} : vector<8x16xf32>, vector<8x16xf32>, vector<8x8xf32> -> vector<8x8xf32>
    %c0_22 = arith.constant 0 : index
    %c0_23 = arith.constant 0 : index
    %c0_24 = arith.constant 0 : index
    %37 = vector.load %arg5[%c0_22, %c0_23, %c0_24] : memref<4x8x8xf32, #tpu.memory_space<vmem>>, vector<1x8x8xf32>
    %38 = vector.shape_cast %37 : vector<1x8x8xf32> to vector<8x8xf32>
    %39 = vector.broadcast %1 : vector<1x8xf32> to vector<8x8xf32>
    %40 = arith.addf %38, %39 : vector<8x8xf32>
    %41 = arith.addf %36, %40 : vector<8x8xf32>
    %cst_25 = arith.constant dense<0xFF800000> : vector<8xf32>
    %42 = vector.multi_reduction <maximumf>, %41, %cst_25 [1] : vector<8x8xf32> to vector<8xf32>
    %43 = vector.shape_cast %42 : vector<8xf32> to vector<8x1xf32>
    %44 = vector.broadcast %43 : vector<8x1xf32> to vector<8x8xf32>
    %45 = arith.subf %41, %44 : vector<8x8xf32>
    %46 = math.exp %45 : vector<8x8xf32>
    %cst_26 = arith.constant dense<0.000000e+00> : vector<8xf32>
    %47 = vector.multi_reduction <add>, %46, %cst_26 [1] : vector<8x8xf32> to vector<8xf32>
    %48 = vector.shape_cast %47 : vector<8xf32> to vector<8x1xf32>
    %49 = tpu.reciprocal %48 {approx = true} : vector<8x1xf32> -> vector<8x1xf32>
    %50 = vector.broadcast %49 : vector<8x1xf32> to vector<8x8xf32>
    %51 = arith.mulf %46, %50 : vector<8x8xf32>
    %52 = vector.extract_strided_slice %30 {offsets = [0, 0], sizes = [8, 16], strides = [1, 1]} : vector<8x64xf32> to vector<8x16xf32>
    %cst_27 = arith.constant dense<0.000000e+00> : vector<8x16xf32>
    %53 = tpu.matmul %51, %52, %cst_27 {dimension_numbers = #tpu.dot_dimension_numbers<[1], [0], [0], [1], [0, 0, 1, 1], [], []>} : vector<8x8xf32>, vector<8x16xf32>, vector<8x16xf32> -> vector<8x16xf32>
    %54 = vector.extract_strided_slice %32 {offsets = [0, 0], sizes = [16, 64], strides = [1, 1]} : vector<64x64xf32> to vector<16x64xf32>
    %cst_28 = arith.constant dense<0.000000e+00> : vector<8x64xf32>
    %55 = tpu.matmul %53, %54, %cst_28 {dimension_numbers = #tpu.dot_dimension_numbers<[1], [0], [0], [1], [0, 0, 1, 1], [], []>} : vector<8x16xf32>, vector<16x64xf32>, vector<8x64xf32> -> vector<8x64xf32>
    %56 = arith.addf %33, %55 : vector<8x64xf32>
    %57 = vector.extract_strided_slice %28 {offsets = [0, 16], sizes = [8, 16], strides = [1, 1]} : vector<8x64xf32> to vector<8x16xf32>
    %58 = vector.extract_strided_slice %29 {offsets = [0, 16], sizes = [8, 16], strides = [1, 1]} : vector<8x64xf32> to vector<8x16xf32>
    %cst_29 = arith.constant dense<0.000000e+00> : vector<8x8xf32>
    %59 = tpu.matmul %57, %58, %cst_29 {dimension_numbers = #tpu.dot_dimension_numbers<[1], [1], [0], [0], [0, 0, 1, 0], [], []>} : vector<8x16xf32>, vector<8x16xf32>, vector<8x8xf32> -> vector<8x8xf32>
    %c1 = arith.constant 1 : index
    %c0_30 = arith.constant 0 : index
    %c0_31 = arith.constant 0 : index
    %60 = vector.load %arg5[%c1, %c0_30, %c0_31] : memref<4x8x8xf32, #tpu.memory_space<vmem>>, vector<1x8x8xf32>
    %61 = vector.shape_cast %60 : vector<1x8x8xf32> to vector<8x8xf32>
    %62 = vector.broadcast %1 : vector<1x8xf32> to vector<8x8xf32>
    %63 = arith.addf %61, %62 : vector<8x8xf32>
    %64 = arith.addf %59, %63 : vector<8x8xf32>
    %cst_32 = arith.constant dense<0xFF800000> : vector<8xf32>
    %65 = vector.multi_reduction <maximumf>, %64, %cst_32 [1] : vector<8x8xf32> to vector<8xf32>
    %66 = vector.shape_cast %65 : vector<8xf32> to vector<8x1xf32>
    %67 = vector.broadcast %66 : vector<8x1xf32> to vector<8x8xf32>
    %68 = arith.subf %64, %67 : vector<8x8xf32>
    %69 = math.exp %68 : vector<8x8xf32>
    %cst_33 = arith.constant dense<0.000000e+00> : vector<8xf32>
    %70 = vector.multi_reduction <add>, %69, %cst_33 [1] : vector<8x8xf32> to vector<8xf32>
    %71 = vector.shape_cast %70 : vector<8xf32> to vector<8x1xf32>
    %72 = tpu.reciprocal %71 {approx = true} : vector<8x1xf32> -> vector<8x1xf32>
    %73 = vector.broadcast %72 : vector<8x1xf32> to vector<8x8xf32>
    %74 = arith.mulf %69, %73 : vector<8x8xf32>
    %75 = vector.extract_strided_slice %30 {offsets = [0, 16], sizes = [8, 16], strides = [1, 1]} : vector<8x64xf32> to vector<8x16xf32>
    %cst_34 = arith.constant dense<0.000000e+00> : vector<8x16xf32>
    %76 = tpu.matmul %74, %75, %cst_34 {dimension_numbers = #tpu.dot_dimension_numbers<[1], [0], [0], [1], [0, 0, 1, 1], [], []>} : vector<8x8xf32>, vector<8x16xf32>, vector<8x16xf32> -> vector<8x16xf32>
    %77 = vector.extract_strided_slice %32 {offsets = [16, 0], sizes = [16, 64], strides = [1, 1]} : vector<64x64xf32> to vector<16x64xf32>
    %cst_35 = arith.constant dense<0.000000e+00> : vector<8x64xf32>
    %78 = tpu.matmul %76, %77, %cst_35 {dimension_numbers = #tpu.dot_dimension_numbers<[1], [0], [0], [1], [0, 0, 1, 1], [], []>} : vector<8x16xf32>, vector<16x64xf32>, vector<8x64xf32> -> vector<8x64xf32>
    %79 = arith.addf %56, %78 : vector<8x64xf32>
    %80 = vector.extract_strided_slice %28 {offsets = [0, 32], sizes = [8, 16], strides = [1, 1]} : vector<8x64xf32> to vector<8x16xf32>
    %81 = vector.extract_strided_slice %29 {offsets = [0, 32], sizes = [8, 16], strides = [1, 1]} : vector<8x64xf32> to vector<8x16xf32>
    %cst_36 = arith.constant dense<0.000000e+00> : vector<8x8xf32>
    %82 = tpu.matmul %80, %81, %cst_36 {dimension_numbers = #tpu.dot_dimension_numbers<[1], [1], [0], [0], [0, 0, 1, 0], [], []>} : vector<8x16xf32>, vector<8x16xf32>, vector<8x8xf32> -> vector<8x8xf32>
    %c2 = arith.constant 2 : index
    %c0_37 = arith.constant 0 : index
    %c0_38 = arith.constant 0 : index
    %83 = vector.load %arg5[%c2, %c0_37, %c0_38] : memref<4x8x8xf32, #tpu.memory_space<vmem>>, vector<1x8x8xf32>
    %84 = vector.shape_cast %83 : vector<1x8x8xf32> to vector<8x8xf32>
    %85 = vector.broadcast %1 : vector<1x8xf32> to vector<8x8xf32>
    %86 = arith.addf %84, %85 : vector<8x8xf32>
    %87 = arith.addf %82, %86 : vector<8x8xf32>
    %cst_39 = arith.constant dense<0xFF800000> : vector<8xf32>
    %88 = vector.multi_reduction <maximumf>, %87, %cst_39 [1] : vector<8x8xf32> to vector<8xf32>
    %89 = vector.shape_cast %88 : vector<8xf32> to vector<8x1xf32>
    %90 = vector.broadcast %89 : vector<8x1xf32> to vector<8x8xf32>
    %91 = arith.subf %87, %90 : vector<8x8xf32>
    %92 = math.exp %91 : vector<8x8xf32>
    %cst_40 = arith.constant dense<0.000000e+00> : vector<8xf32>
    %93 = vector.multi_reduction <add>, %92, %cst_40 [1] : vector<8x8xf32> to vector<8xf32>
    %94 = vector.shape_cast %93 : vector<8xf32> to vector<8x1xf32>
    %95 = tpu.reciprocal %94 {approx = true} : vector<8x1xf32> -> vector<8x1xf32>
    %96 = vector.broadcast %95 : vector<8x1xf32> to vector<8x8xf32>
    %97 = arith.mulf %92, %96 : vector<8x8xf32>
    %98 = vector.extract_strided_slice %30 {offsets = [0, 32], sizes = [8, 16], strides = [1, 1]} : vector<8x64xf32> to vector<8x16xf32>
    %cst_41 = arith.constant dense<0.000000e+00> : vector<8x16xf32>
    %99 = tpu.matmul %97, %98, %cst_41 {dimension_numbers = #tpu.dot_dimension_numbers<[1], [0], [0], [1], [0, 0, 1, 1], [], []>} : vector<8x8xf32>, vector<8x16xf32>, vector<8x16xf32> -> vector<8x16xf32>
    %100 = vector.extract_strided_slice %32 {offsets = [32, 0], sizes = [16, 64], strides = [1, 1]} : vector<64x64xf32> to vector<16x64xf32>
    %cst_42 = arith.constant dense<0.000000e+00> : vector<8x64xf32>
    %101 = tpu.matmul %99, %100, %cst_42 {dimension_numbers = #tpu.dot_dimension_numbers<[1], [0], [0], [1], [0, 0, 1, 1], [], []>} : vector<8x16xf32>, vector<16x64xf32>, vector<8x64xf32> -> vector<8x64xf32>
    %102 = arith.addf %79, %101 : vector<8x64xf32>
    %103 = vector.extract_strided_slice %28 {offsets = [0, 48], sizes = [8, 16], strides = [1, 1]} : vector<8x64xf32> to vector<8x16xf32>
    %104 = vector.extract_strided_slice %29 {offsets = [0, 48], sizes = [8, 16], strides = [1, 1]} : vector<8x64xf32> to vector<8x16xf32>
    %cst_43 = arith.constant dense<0.000000e+00> : vector<8x8xf32>
    %105 = tpu.matmul %103, %104, %cst_43 {dimension_numbers = #tpu.dot_dimension_numbers<[1], [1], [0], [0], [0, 0, 1, 0], [], []>} : vector<8x16xf32>, vector<8x16xf32>, vector<8x8xf32> -> vector<8x8xf32>
    %c3 = arith.constant 3 : index
    %c0_44 = arith.constant 0 : index
    %c0_45 = arith.constant 0 : index
    %106 = vector.load %arg5[%c3, %c0_44, %c0_45] : memref<4x8x8xf32, #tpu.memory_space<vmem>>, vector<1x8x8xf32>
    %107 = vector.shape_cast %106 : vector<1x8x8xf32> to vector<8x8xf32>
    %108 = vector.broadcast %1 : vector<1x8xf32> to vector<8x8xf32>
    %109 = arith.addf %107, %108 : vector<8x8xf32>
    %110 = arith.addf %105, %109 : vector<8x8xf32>
    %cst_46 = arith.constant dense<0xFF800000> : vector<8xf32>
    %111 = vector.multi_reduction <maximumf>, %110, %cst_46 [1] : vector<8x8xf32> to vector<8xf32>
    %112 = vector.shape_cast %111 : vector<8xf32> to vector<8x1xf32>
    %113 = vector.broadcast %112 : vector<8x1xf32> to vector<8x8xf32>
    %114 = arith.subf %110, %113 : vector<8x8xf32>
    %115 = math.exp %114 : vector<8x8xf32>
    %cst_47 = arith.constant dense<0.000000e+00> : vector<8xf32>
    %116 = vector.multi_reduction <add>, %115, %cst_47 [1] : vector<8x8xf32> to vector<8xf32>
    %117 = vector.shape_cast %116 : vector<8xf32> to vector<8x1xf32>
    %118 = tpu.reciprocal %117 {approx = true} : vector<8x1xf32> -> vector<8x1xf32>
    %119 = vector.broadcast %118 : vector<8x1xf32> to vector<8x8xf32>
    %120 = arith.mulf %115, %119 : vector<8x8xf32>
    %121 = vector.extract_strided_slice %30 {offsets = [0, 48], sizes = [8, 16], strides = [1, 1]} : vector<8x64xf32> to vector<8x16xf32>
    %cst_48 = arith.constant dense<0.000000e+00> : vector<8x16xf32>
    %122 = tpu.matmul %120, %121, %cst_48 {dimension_numbers = #tpu.dot_dimension_numbers<[1], [0], [0], [1], [0, 0, 1, 1], [], []>} : vector<8x8xf32>, vector<8x16xf32>, vector<8x16xf32> -> vector<8x16xf32>
    %123 = vector.extract_strided_slice %32 {offsets = [48, 0], sizes = [16, 64], strides = [1, 1]} : vector<64x64xf32> to vector<16x64xf32>
    %cst_49 = arith.constant dense<0.000000e+00> : vector<8x64xf32>
    %124 = tpu.matmul %122, %123, %cst_49 {dimension_numbers = #tpu.dot_dimension_numbers<[1], [0], [0], [1], [0, 0, 1, 1], [], []>} : vector<8x16xf32>, vector<16x64xf32>, vector<8x64xf32> -> vector<8x64xf32>
    %125 = arith.addf %102, %124 : vector<8x64xf32>
    %126 = arith.addf %10, %125 : vector<8x64xf32>
    %c0_50 = arith.constant 0 : index
    %c0_51 = arith.constant 0 : index
    %c0_52 = arith.constant 0 : index
    %127 = vector.load %arg11[%c0_50, %c0_51, %c0_52] : memref<2x1x64xf32, #tpu.memory_space<vmem>>, vector<1x1x64xf32>
    %128 = vector.shape_cast %127 : vector<1x1x64xf32> to vector<1x64xf32>
    %129 = arith.mulf %126, %126 : vector<8x64xf32>
    %cst_53 = arith.constant dense<0.000000e+00> : vector<8xf32>
    %130 = vector.multi_reduction <add>, %129, %cst_53 [1] : vector<8x64xf32> to vector<8xf32>
    %131 = vector.shape_cast %130 : vector<8xf32> to vector<8x1xf32>
    %cst_54 = arith.constant 6.400000e+01 : f32
    %132 = vector.broadcast %cst_54 : f32 to vector<8x1xf32>
    %133 = arith.divf %131, %132 : vector<8x1xf32>
    %cst_55 = arith.constant 9.99999997E-7 : f32
    %134 = vector.broadcast %cst_55 : f32 to vector<8x1xf32>
    %135 = arith.addf %133, %134 : vector<8x1xf32>
    %136 = math.rsqrt %135 : vector<8x1xf32>
    %137 = vector.broadcast %136 : vector<8x1xf32> to vector<8x64xf32>
    %138 = arith.mulf %126, %137 : vector<8x64xf32>
    %139 = vector.broadcast %128 : vector<1x64xf32> to vector<8x64xf32>
    %140 = arith.mulf %138, %139 : vector<8x64xf32>
    %c0_56 = arith.constant 0 : index
    %c0_57 = arith.constant 0 : index
    %c0_58 = arith.constant 0 : index
    %141 = vector.load %arg12[%c0_56, %c0_57, %c0_58] : memref<2x64x128xf32, #tpu.memory_space<vmem>>, vector<1x64x128xf32>
    %142 = vector.shape_cast %141 : vector<1x64x128xf32> to vector<64x128xf32>
    %cst_59 = arith.constant dense<0.000000e+00> : vector<8x128xf32>
    %143 = tpu.matmul %140, %142, %cst_59 {dimension_numbers = #tpu.dot_dimension_numbers<[1], [0], [0], [1], [0, 0, 1, 1], [], []>} : vector<8x64xf32>, vector<64x128xf32>, vector<8x128xf32> -> vector<8x128xf32>
    %cst_60 = arith.constant 0.000000e+00 : f32
    %144 = vector.broadcast %cst_60 : f32 to vector<8x128xf32>
    %145 = arith.maximumf %143, %144 : vector<8x128xf32>
    %c0_61 = arith.constant 0 : index
    %c0_62 = arith.constant 0 : index
    %c0_63 = arith.constant 0 : index
    %146 = vector.load %arg13[%c0_61, %c0_62, %c0_63] : memref<2x128x64xf32, #tpu.memory_space<vmem>>, vector<1x128x64xf32>
    %147 = vector.shape_cast %146 : vector<1x128x64xf32> to vector<128x64xf32>
    %cst_64 = arith.constant dense<0.000000e+00> : vector<8x64xf32>
    %148 = tpu.matmul %145, %147, %cst_64 {dimension_numbers = #tpu.dot_dimension_numbers<[1], [0], [0], [1], [0, 0, 1, 1], [], []>} : vector<8x128xf32>, vector<128x64xf32>, vector<8x64xf32> -> vector<8x64xf32>
    %149 = arith.addf %126, %148 : vector<8x64xf32>
    %c1_65 = arith.constant 1 : index
    %c0_66 = arith.constant 0 : index
    %c0_67 = arith.constant 0 : index
    %150 = vector.load %arg8[%c1_65, %c0_66, %c0_67] : memref<2x1x64xf32, #tpu.memory_space<vmem>>, vector<1x1x64xf32>
    %151 = vector.shape_cast %150 : vector<1x1x64xf32> to vector<1x64xf32>
    %152 = arith.mulf %149, %149 : vector<8x64xf32>
    %cst_68 = arith.constant dense<0.000000e+00> : vector<8xf32>
    %153 = vector.multi_reduction <add>, %152, %cst_68 [1] : vector<8x64xf32> to vector<8xf32>
    %154 = vector.shape_cast %153 : vector<8xf32> to vector<8x1xf32>
    %cst_69 = arith.constant 6.400000e+01 : f32
    %155 = vector.broadcast %cst_69 : f32 to vector<8x1xf32>
    %156 = arith.divf %154, %155 : vector<8x1xf32>
    %cst_70 = arith.constant 9.99999997E-7 : f32
    %157 = vector.broadcast %cst_70 : f32 to vector<8x1xf32>
    %158 = arith.addf %156, %157 : vector<8x1xf32>
    %159 = math.rsqrt %158 : vector<8x1xf32>
    %160 = vector.broadcast %159 : vector<8x1xf32> to vector<8x64xf32>
    %161 = arith.mulf %149, %160 : vector<8x64xf32>
    %162 = vector.broadcast %151 : vector<1x64xf32> to vector<8x64xf32>
    %163 = arith.mulf %161, %162 : vector<8x64xf32>
    %c1_71 = arith.constant 1 : index
    %c0_72 = arith.constant 0 : index
    %c0_73 = arith.constant 0 : index
    %164 = vector.load %arg9[%c1_71, %c0_72, %c0_73] : memref<2x64x192xf32, #tpu.memory_space<vmem>>, vector<1x64x192xf32>
    %165 = vector.shape_cast %164 : vector<1x64x192xf32> to vector<64x192xf32>
    %cst_74 = arith.constant dense<0.000000e+00> : vector<8x192xf32>
    %166 = tpu.matmul %163, %165, %cst_74 {dimension_numbers = #tpu.dot_dimension_numbers<[1], [0], [0], [1], [0, 0, 1, 1], [], []>} : vector<8x64xf32>, vector<64x192xf32>, vector<8x192xf32> -> vector<8x192xf32>
    %167 = vector.extract_strided_slice %166 {offsets = [0, 0], sizes = [8, 64], strides = [1, 1]} : vector<8x192xf32> to vector<8x64xf32>
    %168 = vector.extract_strided_slice %166 {offsets = [0, 64], sizes = [8, 64], strides = [1, 1]} : vector<8x192xf32> to vector<8x64xf32>
    %169 = vector.extract_strided_slice %166 {offsets = [0, 128], sizes = [8, 64], strides = [1, 1]} : vector<8x192xf32> to vector<8x64xf32>
    %c1_75 = arith.constant 1 : index
    %c0_76 = arith.constant 0 : index
    %c0_77 = arith.constant 0 : index
    %170 = vector.load %arg10[%c1_75, %c0_76, %c0_77] : memref<2x64x64xf32, #tpu.memory_space<vmem>>, vector<1x64x64xf32>
    %171 = vector.shape_cast %170 : vector<1x64x64xf32> to vector<64x64xf32>
    %cst_78 = arith.constant 0.000000e+00 : f32
    %172 = vector.broadcast %cst_78 : f32 to vector<8x64xf32>
    %173 = vector.extract_strided_slice %167 {offsets = [0, 0], sizes = [8, 16], strides = [1, 1]} : vector<8x64xf32> to vector<8x16xf32>
    %174 = vector.extract_strided_slice %168 {offsets = [0, 0], sizes = [8, 16], strides = [1, 1]} : vector<8x64xf32> to vector<8x16xf32>
    %cst_79 = arith.constant dense<0.000000e+00> : vector<8x8xf32>
    %175 = tpu.matmul %173, %174, %cst_79 {dimension_numbers = #tpu.dot_dimension_numbers<[1], [1], [0], [0], [0, 0, 1, 0], [], []>} : vector<8x16xf32>, vector<8x16xf32>, vector<8x8xf32> -> vector<8x8xf32>
    %c0_80 = arith.constant 0 : index
    %c0_81 = arith.constant 0 : index
    %c0_82 = arith.constant 0 : index
    %176 = vector.load %arg5[%c0_80, %c0_81, %c0_82] : memref<4x8x8xf32, #tpu.memory_space<vmem>>, vector<1x8x8xf32>
    %177 = vector.shape_cast %176 : vector<1x8x8xf32> to vector<8x8xf32>
    %178 = vector.broadcast %1 : vector<1x8xf32> to vector<8x8xf32>
    %179 = arith.addf %177, %178 : vector<8x8xf32>
    %180 = arith.addf %175, %179 : vector<8x8xf32>
    %cst_83 = arith.constant dense<0xFF800000> : vector<8xf32>
    %181 = vector.multi_reduction <maximumf>, %180, %cst_83 [1] : vector<8x8xf32> to vector<8xf32>
    %182 = vector.shape_cast %181 : vector<8xf32> to vector<8x1xf32>
    %183 = vector.broadcast %182 : vector<8x1xf32> to vector<8x8xf32>
    %184 = arith.subf %180, %183 : vector<8x8xf32>
    %185 = math.exp %184 : vector<8x8xf32>
    %cst_84 = arith.constant dense<0.000000e+00> : vector<8xf32>
    %186 = vector.multi_reduction <add>, %185, %cst_84 [1] : vector<8x8xf32> to vector<8xf32>
    %187 = vector.shape_cast %186 : vector<8xf32> to vector<8x1xf32>
    %188 = tpu.reciprocal %187 {approx = true} : vector<8x1xf32> -> vector<8x1xf32>
    %189 = vector.broadcast %188 : vector<8x1xf32> to vector<8x8xf32>
    %190 = arith.mulf %185, %189 : vector<8x8xf32>
    %191 = vector.extract_strided_slice %169 {offsets = [0, 0], sizes = [8, 16], strides = [1, 1]} : vector<8x64xf32> to vector<8x16xf32>
    %cst_85 = arith.constant dense<0.000000e+00> : vector<8x16xf32>
    %192 = tpu.matmul %190, %191, %cst_85 {dimension_numbers = #tpu.dot_dimension_numbers<[1], [0], [0], [1], [0, 0, 1, 1], [], []>} : vector<8x8xf32>, vector<8x16xf32>, vector<8x16xf32> -> vector<8x16xf32>
    %193 = vector.extract_strided_slice %171 {offsets = [0, 0], sizes = [16, 64], strides = [1, 1]} : vector<64x64xf32> to vector<16x64xf32>
    %cst_86 = arith.constant dense<0.000000e+00> : vector<8x64xf32>
    %194 = tpu.matmul %192, %193, %cst_86 {dimension_numbers = #tpu.dot_dimension_numbers<[1], [0], [0], [1], [0, 0, 1, 1], [], []>} : vector<8x16xf32>, vector<16x64xf32>, vector<8x64xf32> -> vector<8x64xf32>
    %195 = arith.addf %172, %194 : vector<8x64xf32>
    %196 = vector.extract_strided_slice %167 {offsets = [0, 16], sizes = [8, 16], strides = [1, 1]} : vector<8x64xf32> to vector<8x16xf32>
    %197 = vector.extract_strided_slice %168 {offsets = [0, 16], sizes = [8, 16], strides = [1, 1]} : vector<8x64xf32> to vector<8x16xf32>
    %cst_87 = arith.constant dense<0.000000e+00> : vector<8x8xf32>
    %198 = tpu.matmul %196, %197, %cst_87 {dimension_numbers = #tpu.dot_dimension_numbers<[1], [1], [0], [0], [0, 0, 1, 0], [], []>} : vector<8x16xf32>, vector<8x16xf32>, vector<8x8xf32> -> vector<8x8xf32>
    %c1_88 = arith.constant 1 : index
    %c0_89 = arith.constant 0 : index
    %c0_90 = arith.constant 0 : index
    %199 = vector.load %arg5[%c1_88, %c0_89, %c0_90] : memref<4x8x8xf32, #tpu.memory_space<vmem>>, vector<1x8x8xf32>
    %200 = vector.shape_cast %199 : vector<1x8x8xf32> to vector<8x8xf32>
    %201 = vector.broadcast %1 : vector<1x8xf32> to vector<8x8xf32>
    %202 = arith.addf %200, %201 : vector<8x8xf32>
    %203 = arith.addf %198, %202 : vector<8x8xf32>
    %cst_91 = arith.constant dense<0xFF800000> : vector<8xf32>
    %204 = vector.multi_reduction <maximumf>, %203, %cst_91 [1] : vector<8x8xf32> to vector<8xf32>
    %205 = vector.shape_cast %204 : vector<8xf32> to vector<8x1xf32>
    %206 = vector.broadcast %205 : vector<8x1xf32> to vector<8x8xf32>
    %207 = arith.subf %203, %206 : vector<8x8xf32>
    %208 = math.exp %207 : vector<8x8xf32>
    %cst_92 = arith.constant dense<0.000000e+00> : vector<8xf32>
    %209 = vector.multi_reduction <add>, %208, %cst_92 [1] : vector<8x8xf32> to vector<8xf32>
    %210 = vector.shape_cast %209 : vector<8xf32> to vector<8x1xf32>
    %211 = tpu.reciprocal %210 {approx = true} : vector<8x1xf32> -> vector<8x1xf32>
    %212 = vector.broadcast %211 : vector<8x1xf32> to vector<8x8xf32>
    %213 = arith.mulf %208, %212 : vector<8x8xf32>
    %214 = vector.extract_strided_slice %169 {offsets = [0, 16], sizes = [8, 16], strides = [1, 1]} : vector<8x64xf32> to vector<8x16xf32>
    %cst_93 = arith.constant dense<0.000000e+00> : vector<8x16xf32>
    %215 = tpu.matmul %213, %214, %cst_93 {dimension_numbers = #tpu.dot_dimension_numbers<[1], [0], [0], [1], [0, 0, 1, 1], [], []>} : vector<8x8xf32>, vector<8x16xf32>, vector<8x16xf32> -> vector<8x16xf32>
    %216 = vector.extract_strided_slice %171 {offsets = [16, 0], sizes = [16, 64], strides = [1, 1]} : vector<64x64xf32> to vector<16x64xf32>
    %cst_94 = arith.constant dense<0.000000e+00> : vector<8x64xf32>
    %217 = tpu.matmul %215, %216, %cst_94 {dimension_numbers = #tpu.dot_dimension_numbers<[1], [0], [0], [1], [0, 0, 1, 1], [], []>} : vector<8x16xf32>, vector<16x64xf32>, vector<8x64xf32> -> vector<8x64xf32>
    %218 = arith.addf %195, %217 : vector<8x64xf32>
    %219 = vector.extract_strided_slice %167 {offsets = [0, 32], sizes = [8, 16], strides = [1, 1]} : vector<8x64xf32> to vector<8x16xf32>
    %220 = vector.extract_strided_slice %168 {offsets = [0, 32], sizes = [8, 16], strides = [1, 1]} : vector<8x64xf32> to vector<8x16xf32>
    %cst_95 = arith.constant dense<0.000000e+00> : vector<8x8xf32>
    %221 = tpu.matmul %219, %220, %cst_95 {dimension_numbers = #tpu.dot_dimension_numbers<[1], [1], [0], [0], [0, 0, 1, 0], [], []>} : vector<8x16xf32>, vector<8x16xf32>, vector<8x8xf32> -> vector<8x8xf32>
    %c2_96 = arith.constant 2 : index
    %c0_97 = arith.constant 0 : index
    %c0_98 = arith.constant 0 : index
    %222 = vector.load %arg5[%c2_96, %c0_97, %c0_98] : memref<4x8x8xf32, #tpu.memory_space<vmem>>, vector<1x8x8xf32>
    %223 = vector.shape_cast %222 : vector<1x8x8xf32> to vector<8x8xf32>
    %224 = vector.broadcast %1 : vector<1x8xf32> to vector<8x8xf32>
    %225 = arith.addf %223, %224 : vector<8x8xf32>
    %226 = arith.addf %221, %225 : vector<8x8xf32>
    %cst_99 = arith.constant dense<0xFF800000> : vector<8xf32>
    %227 = vector.multi_reduction <maximumf>, %226, %cst_99 [1] : vector<8x8xf32> to vector<8xf32>
    %228 = vector.shape_cast %227 : vector<8xf32> to vector<8x1xf32>
    %229 = vector.broadcast %228 : vector<8x1xf32> to vector<8x8xf32>
    %230 = arith.subf %226, %229 : vector<8x8xf32>
    %231 = math.exp %230 : vector<8x8xf32>
    %cst_100 = arith.constant dense<0.000000e+00> : vector<8xf32>
    %232 = vector.multi_reduction <add>, %231, %cst_100 [1] : vector<8x8xf32> to vector<8xf32>
    %233 = vector.shape_cast %232 : vector<8xf32> to vector<8x1xf32>
    %234 = tpu.reciprocal %233 {approx = true} : vector<8x1xf32> -> vector<8x1xf32>
    %235 = vector.broadcast %234 : vector<8x1xf32> to vector<8x8xf32>
    %236 = arith.mulf %231, %235 : vector<8x8xf32>
    %237 = vector.extract_strided_slice %169 {offsets = [0, 32], sizes = [8, 16], strides = [1, 1]} : vector<8x64xf32> to vector<8x16xf32>
    %cst_101 = arith.constant dense<0.000000e+00> : vector<8x16xf32>
    %238 = tpu.matmul %236, %237, %cst_101 {dimension_numbers = #tpu.dot_dimension_numbers<[1], [0], [0], [1], [0, 0, 1, 1], [], []>} : vector<8x8xf32>, vector<8x16xf32>, vector<8x16xf32> -> vector<8x16xf32>
    %239 = vector.extract_strided_slice %171 {offsets = [32, 0], sizes = [16, 64], strides = [1, 1]} : vector<64x64xf32> to vector<16x64xf32>
    %cst_102 = arith.constant dense<0.000000e+00> : vector<8x64xf32>
    %240 = tpu.matmul %238, %239, %cst_102 {dimension_numbers = #tpu.dot_dimension_numbers<[1], [0], [0], [1], [0, 0, 1, 1], [], []>} : vector<8x16xf32>, vector<16x64xf32>, vector<8x64xf32> -> vector<8x64xf32>
    %241 = arith.addf %218, %240 : vector<8x64xf32>
    %242 = vector.extract_strided_slice %167 {offsets = [0, 48], sizes = [8, 16], strides = [1, 1]} : vector<8x64xf32> to vector<8x16xf32>
    %243 = vector.extract_strided_slice %168 {offsets = [0, 48], sizes = [8, 16], strides = [1, 1]} : vector<8x64xf32> to vector<8x16xf32>
    %cst_103 = arith.constant dense<0.000000e+00> : vector<8x8xf32>
    %244 = tpu.matmul %242, %243, %cst_103 {dimension_numbers = #tpu.dot_dimension_numbers<[1], [1], [0], [0], [0, 0, 1, 0], [], []>} : vector<8x16xf32>, vector<8x16xf32>, vector<8x8xf32> -> vector<8x8xf32>
    %c3_104 = arith.constant 3 : index
    %c0_105 = arith.constant 0 : index
    %c0_106 = arith.constant 0 : index
    %245 = vector.load %arg5[%c3_104, %c0_105, %c0_106] : memref<4x8x8xf32, #tpu.memory_space<vmem>>, vector<1x8x8xf32>
    %246 = vector.shape_cast %245 : vector<1x8x8xf32> to vector<8x8xf32>
    %247 = vector.broadcast %1 : vector<1x8xf32> to vector<8x8xf32>
    %248 = arith.addf %246, %247 : vector<8x8xf32>
    %249 = arith.addf %244, %248 : vector<8x8xf32>
    %cst_107 = arith.constant dense<0xFF800000> : vector<8xf32>
    %250 = vector.multi_reduction <maximumf>, %249, %cst_107 [1] : vector<8x8xf32> to vector<8xf32>
    %251 = vector.shape_cast %250 : vector<8xf32> to vector<8x1xf32>
    %252 = vector.broadcast %251 : vector<8x1xf32> to vector<8x8xf32>
    %253 = arith.subf %249, %252 : vector<8x8xf32>
    %254 = math.exp %253 : vector<8x8xf32>
    %cst_108 = arith.constant dense<0.000000e+00> : vector<8xf32>
    %255 = vector.multi_reduction <add>, %254, %cst_108 [1] : vector<8x8xf32> to vector<8xf32>
    %256 = vector.shape_cast %255 : vector<8xf32> to vector<8x1xf32>
    %257 = tpu.reciprocal %256 {approx = true} : vector<8x1xf32> -> vector<8x1xf32>
    %258 = vector.broadcast %257 : vector<8x1xf32> to vector<8x8xf32>
    %259 = arith.mulf %254, %258 : vector<8x8xf32>
    %260 = vector.extract_strided_slice %169 {offsets = [0, 48], sizes = [8, 16], strides = [1, 1]} : vector<8x64xf32> to vector<8x16xf32>
    %cst_109 = arith.constant dense<0.000000e+00> : vector<8x16xf32>
    %261 = tpu.matmul %259, %260, %cst_109 {dimension_numbers = #tpu.dot_dimension_numbers<[1], [0], [0], [1], [0, 0, 1, 1], [], []>} : vector<8x8xf32>, vector<8x16xf32>, vector<8x16xf32> -> vector<8x16xf32>
    %262 = vector.extract_strided_slice %171 {offsets = [48, 0], sizes = [16, 64], strides = [1, 1]} : vector<64x64xf32> to vector<16x64xf32>
    %cst_110 = arith.constant dense<0.000000e+00> : vector<8x64xf32>
    %263 = tpu.matmul %261, %262, %cst_110 {dimension_numbers = #tpu.dot_dimension_numbers<[1], [0], [0], [1], [0, 0, 1, 1], [], []>} : vector<8x16xf32>, vector<16x64xf32>, vector<8x64xf32> -> vector<8x64xf32>
    %264 = arith.addf %241, %263 : vector<8x64xf32>
    %265 = arith.addf %149, %264 : vector<8x64xf32>
    %c1_111 = arith.constant 1 : index
    %c0_112 = arith.constant 0 : index
    %c0_113 = arith.constant 0 : index
    %266 = vector.load %arg11[%c1_111, %c0_112, %c0_113] : memref<2x1x64xf32, #tpu.memory_space<vmem>>, vector<1x1x64xf32>
    %267 = vector.shape_cast %266 : vector<1x1x64xf32> to vector<1x64xf32>
    %268 = arith.mulf %265, %265 : vector<8x64xf32>
    %cst_114 = arith.constant dense<0.000000e+00> : vector<8xf32>
    %269 = vector.multi_reduction <add>, %268, %cst_114 [1] : vector<8x64xf32> to vector<8xf32>
    %270 = vector.shape_cast %269 : vector<8xf32> to vector<8x1xf32>
    %cst_115 = arith.constant 6.400000e+01 : f32
    %271 = vector.broadcast %cst_115 : f32 to vector<8x1xf32>
    %272 = arith.divf %270, %271 : vector<8x1xf32>
    %cst_116 = arith.constant 9.99999997E-7 : f32
    %273 = vector.broadcast %cst_116 : f32 to vector<8x1xf32>
    %274 = arith.addf %272, %273 : vector<8x1xf32>
    %275 = math.rsqrt %274 : vector<8x1xf32>
    %276 = vector.broadcast %275 : vector<8x1xf32> to vector<8x64xf32>
    %277 = arith.mulf %265, %276 : vector<8x64xf32>
    %278 = vector.broadcast %267 : vector<1x64xf32> to vector<8x64xf32>
    %279 = arith.mulf %277, %278 : vector<8x64xf32>
    %c1_117 = arith.constant 1 : index
    %c0_118 = arith.constant 0 : index
    %c0_119 = arith.constant 0 : index
    %280 = vector.load %arg12[%c1_117, %c0_118, %c0_119] : memref<2x64x128xf32, #tpu.memory_space<vmem>>, vector<1x64x128xf32>
    %281 = vector.shape_cast %280 : vector<1x64x128xf32> to vector<64x128xf32>
    %cst_120 = arith.constant dense<0.000000e+00> : vector<8x128xf32>
    %282 = tpu.matmul %279, %281, %cst_120 {dimension_numbers = #tpu.dot_dimension_numbers<[1], [0], [0], [1], [0, 0, 1, 1], [], []>} : vector<8x64xf32>, vector<64x128xf32>, vector<8x128xf32> -> vector<8x128xf32>
    %cst_121 = arith.constant 0.000000e+00 : f32
    %283 = vector.broadcast %cst_121 : f32 to vector<8x128xf32>
    %284 = arith.maximumf %282, %283 : vector<8x128xf32>
    %c1_122 = arith.constant 1 : index
    %c0_123 = arith.constant 0 : index
    %c0_124 = arith.constant 0 : index
    %285 = vector.load %arg13[%c1_122, %c0_123, %c0_124] : memref<2x128x64xf32, #tpu.memory_space<vmem>>, vector<1x128x64xf32>
    %286 = vector.shape_cast %285 : vector<1x128x64xf32> to vector<128x64xf32>
    %cst_125 = arith.constant dense<0.000000e+00> : vector<8x64xf32>
    %287 = tpu.matmul %284, %286, %cst_125 {dimension_numbers = #tpu.dot_dimension_numbers<[1], [0], [0], [1], [0, 0, 1, 1], [], []>} : vector<8x128xf32>, vector<128x64xf32>, vector<8x64xf32> -> vector<8x64xf32>
    %288 = arith.addf %265, %287 : vector<8x64xf32>
    %c0_126 = arith.constant 0 : index
    %c0_127 = arith.constant 0 : index
    %289 = vector.load %arg24[%c0_126, %c0_127] : memref<1x64xf32, #tpu.memory_space<vmem>>, vector<1x64xf32>
    %290 = arith.mulf %288, %288 : vector<8x64xf32>
    %cst_128 = arith.constant dense<0.000000e+00> : vector<8xf32>
    %291 = vector.multi_reduction <add>, %290, %cst_128 [1] : vector<8x64xf32> to vector<8xf32>
    %292 = vector.shape_cast %291 : vector<8xf32> to vector<8x1xf32>
    %cst_129 = arith.constant 6.400000e+01 : f32
    %293 = vector.broadcast %cst_129 : f32 to vector<8x1xf32>
    %294 = arith.divf %292, %293 : vector<8x1xf32>
    %cst_130 = arith.constant 9.99999997E-7 : f32
    %295 = vector.broadcast %cst_130 : f32 to vector<8x1xf32>
    %296 = arith.addf %294, %295 : vector<8x1xf32>
    %297 = math.rsqrt %296 : vector<8x1xf32>
    %298 = vector.broadcast %297 : vector<8x1xf32> to vector<8x64xf32>
    %299 = arith.mulf %288, %298 : vector<8x64xf32>
    %300 = vector.broadcast %289 : vector<1x64xf32> to vector<8x64xf32>
    %301 = arith.mulf %299, %300 : vector<8x64xf32>
    %c0_131 = arith.constant 0 : index
    %c0_132 = arith.constant 0 : index
    %c0_133 = arith.constant 0 : index
    %302 = vector.load %arg2[%c0_131, %c0_132, %c0_133] : memref<1x8x1xi32, #tpu.memory_space<vmem>>, vector<1x8x1xi32>
    %303 = vector.shape_cast %302 : vector<1x8x1xi32> to vector<8x1xi32>
    %304 = tpu.iota {dimensions = array<i32: 1>} : vector<8x128xi32>
    %305 = vector.broadcast %303 : vector<8x1xi32> to vector<8x128xi32>
    %306 = arith.cmpi eq, %304, %305 : vector<8x128xi32>
    %307 = arith.extui %306 : vector<8x128xi1> to vector<8x128xi32>
    %308 = arith.sitofp %307 : vector<8x128xi32> to vector<8x128xf32>
    %c0_134 = arith.constant 0 : index
    %c0_135 = arith.constant 0 : index
    %309 = vector.load %arg7[%c0_134, %c0_135] : memref<128x64xf32, #tpu.memory_space<vmem>>, vector<128x64xf32>
    %cst_136 = arith.constant dense<0.000000e+00> : vector<8x64xf32>
    %310 = tpu.matmul %308, %309, %cst_136 {dimension_numbers = #tpu.dot_dimension_numbers<[1], [0], [0], [1], [0, 0, 1, 1], [], []>} : vector<8x128xf32>, vector<128x64xf32>, vector<8x64xf32> -> vector<8x64xf32>
    %c0_137 = arith.constant 0 : index
    %c0_138 = arith.constant 0 : index
    %c0_139 = arith.constant 0 : index
    %311 = vector.load %arg14[%c0_137, %c0_138, %c0_139] : memref<2x1x64xf32, #tpu.memory_space<vmem>>, vector<1x1x64xf32>
    %312 = vector.shape_cast %311 : vector<1x1x64xf32> to vector<1x64xf32>
    %313 = arith.mulf %310, %310 : vector<8x64xf32>
    %cst_140 = arith.constant dense<0.000000e+00> : vector<8xf32>
    %314 = vector.multi_reduction <add>, %313, %cst_140 [1] : vector<8x64xf32> to vector<8xf32>
    %315 = vector.shape_cast %314 : vector<8xf32> to vector<8x1xf32>
    %cst_141 = arith.constant 6.400000e+01 : f32
    %316 = vector.broadcast %cst_141 : f32 to vector<8x1xf32>
    %317 = arith.divf %315, %316 : vector<8x1xf32>
    %cst_142 = arith.constant 9.99999997E-7 : f32
    %318 = vector.broadcast %cst_142 : f32 to vector<8x1xf32>
    %319 = arith.addf %317, %318 : vector<8x1xf32>
    %320 = math.rsqrt %319 : vector<8x1xf32>
    %321 = vector.broadcast %320 : vector<8x1xf32> to vector<8x64xf32>
    %322 = arith.mulf %310, %321 : vector<8x64xf32>
    %323 = vector.broadcast %312 : vector<1x64xf32> to vector<8x64xf32>
    %324 = arith.mulf %322, %323 : vector<8x64xf32>
    %c0_143 = arith.constant 0 : index
    %c0_144 = arith.constant 0 : index
    %c0_145 = arith.constant 0 : index
    %325 = vector.load %arg15[%c0_143, %c0_144, %c0_145] : memref<2x64x192xf32, #tpu.memory_space<vmem>>, vector<1x64x192xf32>
    %326 = vector.shape_cast %325 : vector<1x64x192xf32> to vector<64x192xf32>
    %cst_146 = arith.constant dense<0.000000e+00> : vector<8x192xf32>
    %327 = tpu.matmul %324, %326, %cst_146 {dimension_numbers = #tpu.dot_dimension_numbers<[1], [0], [0], [1], [0, 0, 1, 1], [], []>} : vector<8x64xf32>, vector<64x192xf32>, vector<8x192xf32> -> vector<8x192xf32>
    %328 = vector.extract_strided_slice %327 {offsets = [0, 0], sizes = [8, 64], strides = [1, 1]} : vector<8x192xf32> to vector<8x64xf32>
    %329 = vector.extract_strided_slice %327 {offsets = [0, 64], sizes = [8, 64], strides = [1, 1]} : vector<8x192xf32> to vector<8x64xf32>
    %330 = vector.extract_strided_slice %327 {offsets = [0, 128], sizes = [8, 64], strides = [1, 1]} : vector<8x192xf32> to vector<8x64xf32>
    %c0_147 = arith.constant 0 : index
    %c0_148 = arith.constant 0 : index
    %c0_149 = arith.constant 0 : index
    %331 = vector.load %arg16[%c0_147, %c0_148, %c0_149] : memref<2x64x64xf32, #tpu.memory_space<vmem>>, vector<1x64x64xf32>
    %332 = vector.shape_cast %331 : vector<1x64x64xf32> to vector<64x64xf32>
    %cst_150 = arith.constant 0.000000e+00 : f32
    %333 = vector.broadcast %cst_150 : f32 to vector<8x64xf32>
    %334 = vector.extract_strided_slice %328 {offsets = [0, 0], sizes = [8, 16], strides = [1, 1]} : vector<8x64xf32> to vector<8x16xf32>
    %335 = vector.extract_strided_slice %329 {offsets = [0, 0], sizes = [8, 16], strides = [1, 1]} : vector<8x64xf32> to vector<8x16xf32>
    %cst_151 = arith.constant dense<0.000000e+00> : vector<8x8xf32>
    %336 = tpu.matmul %334, %335, %cst_151 {dimension_numbers = #tpu.dot_dimension_numbers<[1], [1], [0], [0], [0, 0, 1, 0], [], []>} : vector<8x16xf32>, vector<8x16xf32>, vector<8x8xf32> -> vector<8x8xf32>
    %c0_152 = arith.constant 0 : index
    %c0_153 = arith.constant 0 : index
    %c0_154 = arith.constant 0 : index
    %337 = vector.load %arg6[%c0_152, %c0_153, %c0_154] : memref<4x8x8xf32, #tpu.memory_space<vmem>>, vector<1x8x8xf32>
    %338 = vector.shape_cast %337 : vector<1x8x8xf32> to vector<8x8xf32>
    %339 = arith.addf %336, %338 : vector<8x8xf32>
    %cst_155 = arith.constant dense<0xFF800000> : vector<8xf32>
    %340 = vector.multi_reduction <maximumf>, %339, %cst_155 [1] : vector<8x8xf32> to vector<8xf32>
    %341 = vector.shape_cast %340 : vector<8xf32> to vector<8x1xf32>
    %342 = vector.broadcast %341 : vector<8x1xf32> to vector<8x8xf32>
    %343 = arith.subf %339, %342 : vector<8x8xf32>
    %344 = math.exp %343 : vector<8x8xf32>
    %cst_156 = arith.constant dense<0.000000e+00> : vector<8xf32>
    %345 = vector.multi_reduction <add>, %344, %cst_156 [1] : vector<8x8xf32> to vector<8xf32>
    %346 = vector.shape_cast %345 : vector<8xf32> to vector<8x1xf32>
    %347 = tpu.reciprocal %346 {approx = true} : vector<8x1xf32> -> vector<8x1xf32>
    %348 = vector.broadcast %347 : vector<8x1xf32> to vector<8x8xf32>
    %349 = arith.mulf %344, %348 : vector<8x8xf32>
    %350 = vector.extract_strided_slice %330 {offsets = [0, 0], sizes = [8, 16], strides = [1, 1]} : vector<8x64xf32> to vector<8x16xf32>
    %cst_157 = arith.constant dense<0.000000e+00> : vector<8x16xf32>
    %351 = tpu.matmul %349, %350, %cst_157 {dimension_numbers = #tpu.dot_dimension_numbers<[1], [0], [0], [1], [0, 0, 1, 1], [], []>} : vector<8x8xf32>, vector<8x16xf32>, vector<8x16xf32> -> vector<8x16xf32>
    %352 = vector.extract_strided_slice %332 {offsets = [0, 0], sizes = [16, 64], strides = [1, 1]} : vector<64x64xf32> to vector<16x64xf32>
    %cst_158 = arith.constant dense<0.000000e+00> : vector<8x64xf32>
    %353 = tpu.matmul %351, %352, %cst_158 {dimension_numbers = #tpu.dot_dimension_numbers<[1], [0], [0], [1], [0, 0, 1, 1], [], []>} : vector<8x16xf32>, vector<16x64xf32>, vector<8x64xf32> -> vector<8x64xf32>
    %354 = arith.addf %333, %353 : vector<8x64xf32>
    %355 = vector.extract_strided_slice %328 {offsets = [0, 16], sizes = [8, 16], strides = [1, 1]} : vector<8x64xf32> to vector<8x16xf32>
    %356 = vector.extract_strided_slice %329 {offsets = [0, 16], sizes = [8, 16], strides = [1, 1]} : vector<8x64xf32> to vector<8x16xf32>
    %cst_159 = arith.constant dense<0.000000e+00> : vector<8x8xf32>
    %357 = tpu.matmul %355, %356, %cst_159 {dimension_numbers = #tpu.dot_dimension_numbers<[1], [1], [0], [0], [0, 0, 1, 0], [], []>} : vector<8x16xf32>, vector<8x16xf32>, vector<8x8xf32> -> vector<8x8xf32>
    %c1_160 = arith.constant 1 : index
    %c0_161 = arith.constant 0 : index
    %c0_162 = arith.constant 0 : index
    %358 = vector.load %arg6[%c1_160, %c0_161, %c0_162] : memref<4x8x8xf32, #tpu.memory_space<vmem>>, vector<1x8x8xf32>
    %359 = vector.shape_cast %358 : vector<1x8x8xf32> to vector<8x8xf32>
    %360 = arith.addf %357, %359 : vector<8x8xf32>
    %cst_163 = arith.constant dense<0xFF800000> : vector<8xf32>
    %361 = vector.multi_reduction <maximumf>, %360, %cst_163 [1] : vector<8x8xf32> to vector<8xf32>
    %362 = vector.shape_cast %361 : vector<8xf32> to vector<8x1xf32>
    %363 = vector.broadcast %362 : vector<8x1xf32> to vector<8x8xf32>
    %364 = arith.subf %360, %363 : vector<8x8xf32>
    %365 = math.exp %364 : vector<8x8xf32>
    %cst_164 = arith.constant dense<0.000000e+00> : vector<8xf32>
    %366 = vector.multi_reduction <add>, %365, %cst_164 [1] : vector<8x8xf32> to vector<8xf32>
    %367 = vector.shape_cast %366 : vector<8xf32> to vector<8x1xf32>
    %368 = tpu.reciprocal %367 {approx = true} : vector<8x1xf32> -> vector<8x1xf32>
    %369 = vector.broadcast %368 : vector<8x1xf32> to vector<8x8xf32>
    %370 = arith.mulf %365, %369 : vector<8x8xf32>
    %371 = vector.extract_strided_slice %330 {offsets = [0, 16], sizes = [8, 16], strides = [1, 1]} : vector<8x64xf32> to vector<8x16xf32>
    %cst_165 = arith.constant dense<0.000000e+00> : vector<8x16xf32>
    %372 = tpu.matmul %370, %371, %cst_165 {dimension_numbers = #tpu.dot_dimension_numbers<[1], [0], [0], [1], [0, 0, 1, 1], [], []>} : vector<8x8xf32>, vector<8x16xf32>, vector<8x16xf32> -> vector<8x16xf32>
    %373 = vector.extract_strided_slice %332 {offsets = [16, 0], sizes = [16, 64], strides = [1, 1]} : vector<64x64xf32> to vector<16x64xf32>
    %cst_166 = arith.constant dense<0.000000e+00> : vector<8x64xf32>
    %374 = tpu.matmul %372, %373, %cst_166 {dimension_numbers = #tpu.dot_dimension_numbers<[1], [0], [0], [1], [0, 0, 1, 1], [], []>} : vector<8x16xf32>, vector<16x64xf32>, vector<8x64xf32> -> vector<8x64xf32>
    %375 = arith.addf %354, %374 : vector<8x64xf32>
    %376 = vector.extract_strided_slice %328 {offsets = [0, 32], sizes = [8, 16], strides = [1, 1]} : vector<8x64xf32> to vector<8x16xf32>
    %377 = vector.extract_strided_slice %329 {offsets = [0, 32], sizes = [8, 16], strides = [1, 1]} : vector<8x64xf32> to vector<8x16xf32>
    %cst_167 = arith.constant dense<0.000000e+00> : vector<8x8xf32>
    %378 = tpu.matmul %376, %377, %cst_167 {dimension_numbers = #tpu.dot_dimension_numbers<[1], [1], [0], [0], [0, 0, 1, 0], [], []>} : vector<8x16xf32>, vector<8x16xf32>, vector<8x8xf32> -> vector<8x8xf32>
    %c2_168 = arith.constant 2 : index
    %c0_169 = arith.constant 0 : index
    %c0_170 = arith.constant 0 : index
    %379 = vector.load %arg6[%c2_168, %c0_169, %c0_170] : memref<4x8x8xf32, #tpu.memory_space<vmem>>, vector<1x8x8xf32>
    %380 = vector.shape_cast %379 : vector<1x8x8xf32> to vector<8x8xf32>
    %381 = arith.addf %378, %380 : vector<8x8xf32>
    %cst_171 = arith.constant dense<0xFF800000> : vector<8xf32>
    %382 = vector.multi_reduction <maximumf>, %381, %cst_171 [1] : vector<8x8xf32> to vector<8xf32>
    %383 = vector.shape_cast %382 : vector<8xf32> to vector<8x1xf32>
    %384 = vector.broadcast %383 : vector<8x1xf32> to vector<8x8xf32>
    %385 = arith.subf %381, %384 : vector<8x8xf32>
    %386 = math.exp %385 : vector<8x8xf32>
    %cst_172 = arith.constant dense<0.000000e+00> : vector<8xf32>
    %387 = vector.multi_reduction <add>, %386, %cst_172 [1] : vector<8x8xf32> to vector<8xf32>
    %388 = vector.shape_cast %387 : vector<8xf32> to vector<8x1xf32>
    %389 = tpu.reciprocal %388 {approx = true} : vector<8x1xf32> -> vector<8x1xf32>
    %390 = vector.broadcast %389 : vector<8x1xf32> to vector<8x8xf32>
    %391 = arith.mulf %386, %390 : vector<8x8xf32>
    %392 = vector.extract_strided_slice %330 {offsets = [0, 32], sizes = [8, 16], strides = [1, 1]} : vector<8x64xf32> to vector<8x16xf32>
    %cst_173 = arith.constant dense<0.000000e+00> : vector<8x16xf32>
    %393 = tpu.matmul %391, %392, %cst_173 {dimension_numbers = #tpu.dot_dimension_numbers<[1], [0], [0], [1], [0, 0, 1, 1], [], []>} : vector<8x8xf32>, vector<8x16xf32>, vector<8x16xf32> -> vector<8x16xf32>
    %394 = vector.extract_strided_slice %332 {offsets = [32, 0], sizes = [16, 64], strides = [1, 1]} : vector<64x64xf32> to vector<16x64xf32>
    %cst_174 = arith.constant dense<0.000000e+00> : vector<8x64xf32>
    %395 = tpu.matmul %393, %394, %cst_174 {dimension_numbers = #tpu.dot_dimension_numbers<[1], [0], [0], [1], [0, 0, 1, 1], [], []>} : vector<8x16xf32>, vector<16x64xf32>, vector<8x64xf32> -> vector<8x64xf32>
    %396 = arith.addf %375, %395 : vector<8x64xf32>
    %397 = vector.extract_strided_slice %328 {offsets = [0, 48], sizes = [8, 16], strides = [1, 1]} : vector<8x64xf32> to vector<8x16xf32>
    %398 = vector.extract_strided_slice %329 {offsets = [0, 48], sizes = [8, 16], strides = [1, 1]} : vector<8x64xf32> to vector<8x16xf32>
    %cst_175 = arith.constant dense<0.000000e+00> : vector<8x8xf32>
    %399 = tpu.matmul %397, %398, %cst_175 {dimension_numbers = #tpu.dot_dimension_numbers<[1], [1], [0], [0], [0, 0, 1, 0], [], []>} : vector<8x16xf32>, vector<8x16xf32>, vector<8x8xf32> -> vector<8x8xf32>
    %c3_176 = arith.constant 3 : index
    %c0_177 = arith.constant 0 : index
    %c0_178 = arith.constant 0 : index
    %400 = vector.load %arg6[%c3_176, %c0_177, %c0_178] : memref<4x8x8xf32, #tpu.memory_space<vmem>>, vector<1x8x8xf32>
    %401 = vector.shape_cast %400 : vector<1x8x8xf32> to vector<8x8xf32>
    %402 = arith.addf %399, %401 : vector<8x8xf32>
    %cst_179 = arith.constant dense<0xFF800000> : vector<8xf32>
    %403 = vector.multi_reduction <maximumf>, %402, %cst_179 [1] : vector<8x8xf32> to vector<8xf32>
    %404 = vector.shape_cast %403 : vector<8xf32> to vector<8x1xf32>
    %405 = vector.broadcast %404 : vector<8x1xf32> to vector<8x8xf32>
    %406 = arith.subf %402, %405 : vector<8x8xf32>
    %407 = math.exp %406 : vector<8x8xf32>
    %cst_180 = arith.constant dense<0.000000e+00> : vector<8xf32>
    %408 = vector.multi_reduction <add>, %407, %cst_180 [1] : vector<8x8xf32> to vector<8xf32>
    %409 = vector.shape_cast %408 : vector<8xf32> to vector<8x1xf32>
    %410 = tpu.reciprocal %409 {approx = true} : vector<8x1xf32> -> vector<8x1xf32>
    %411 = vector.broadcast %410 : vector<8x1xf32> to vector<8x8xf32>
    %412 = arith.mulf %407, %411 : vector<8x8xf32>
    %413 = vector.extract_strided_slice %330 {offsets = [0, 48], sizes = [8, 16], strides = [1, 1]} : vector<8x64xf32> to vector<8x16xf32>
    %cst_181 = arith.constant dense<0.000000e+00> : vector<8x16xf32>
    %414 = tpu.matmul %412, %413, %cst_181 {dimension_numbers = #tpu.dot_dimension_numbers<[1], [0], [0], [1], [0, 0, 1, 1], [], []>} : vector<8x8xf32>, vector<8x16xf32>, vector<8x16xf32> -> vector<8x16xf32>
    %415 = vector.extract_strided_slice %332 {offsets = [48, 0], sizes = [16, 64], strides = [1, 1]} : vector<64x64xf32> to vector<16x64xf32>
    %cst_182 = arith.constant dense<0.000000e+00> : vector<8x64xf32>
    %416 = tpu.matmul %414, %415, %cst_182 {dimension_numbers = #tpu.dot_dimension_numbers<[1], [0], [0], [1], [0, 0, 1, 1], [], []>} : vector<8x16xf32>, vector<16x64xf32>, vector<8x64xf32> -> vector<8x64xf32>
    %417 = arith.addf %396, %416 : vector<8x64xf32>
    %418 = arith.addf %310, %417 : vector<8x64xf32>
    %c0_183 = arith.constant 0 : index
    %c0_184 = arith.constant 0 : index
    %c0_185 = arith.constant 0 : index
    %419 = vector.load %arg17[%c0_183, %c0_184, %c0_185] : memref<2x1x64xf32, #tpu.memory_space<vmem>>, vector<1x1x64xf32>
    %420 = vector.shape_cast %419 : vector<1x1x64xf32> to vector<1x64xf32>
    %421 = arith.mulf %418, %418 : vector<8x64xf32>
    %cst_186 = arith.constant dense<0.000000e+00> : vector<8xf32>
    %422 = vector.multi_reduction <add>, %421, %cst_186 [1] : vector<8x64xf32> to vector<8xf32>
    %423 = vector.shape_cast %422 : vector<8xf32> to vector<8x1xf32>
    %cst_187 = arith.constant 6.400000e+01 : f32
    %424 = vector.broadcast %cst_187 : f32 to vector<8x1xf32>
    %425 = arith.divf %423, %424 : vector<8x1xf32>
    %cst_188 = arith.constant 9.99999997E-7 : f32
    %426 = vector.broadcast %cst_188 : f32 to vector<8x1xf32>
    %427 = arith.addf %425, %426 : vector<8x1xf32>
    %428 = math.rsqrt %427 : vector<8x1xf32>
    %429 = vector.broadcast %428 : vector<8x1xf32> to vector<8x64xf32>
    %430 = arith.mulf %418, %429 : vector<8x64xf32>
    %431 = vector.broadcast %420 : vector<1x64xf32> to vector<8x64xf32>
    %432 = arith.mulf %430, %431 : vector<8x64xf32>
    %c0_189 = arith.constant 0 : index
    %c0_190 = arith.constant 0 : index
    %c0_191 = arith.constant 0 : index
    %433 = vector.load %arg18[%c0_189, %c0_190, %c0_191] : memref<2x64x64xf32, #tpu.memory_space<vmem>>, vector<1x64x64xf32>
    %434 = vector.shape_cast %433 : vector<1x64x64xf32> to vector<64x64xf32>
    %cst_192 = arith.constant dense<0.000000e+00> : vector<8x64xf32>
    %435 = tpu.matmul %432, %434, %cst_192 {dimension_numbers = #tpu.dot_dimension_numbers<[1], [0], [0], [1], [0, 0, 1, 1], [], []>} : vector<8x64xf32>, vector<64x64xf32>, vector<8x64xf32> -> vector<8x64xf32>
    %c0_193 = arith.constant 0 : index
    %c0_194 = arith.constant 0 : index
    %c0_195 = arith.constant 0 : index
    %436 = vector.load %arg19[%c0_193, %c0_194, %c0_195] : memref<2x64x128xf32, #tpu.memory_space<vmem>>, vector<1x64x128xf32>
    %437 = vector.shape_cast %436 : vector<1x64x128xf32> to vector<64x128xf32>
    %cst_196 = arith.constant dense<0.000000e+00> : vector<8x128xf32>
    %438 = tpu.matmul %301, %437, %cst_196 {dimension_numbers = #tpu.dot_dimension_numbers<[1], [0], [0], [1], [0, 0, 1, 1], [], []>} : vector<8x64xf32>, vector<64x128xf32>, vector<8x128xf32> -> vector<8x128xf32>
    %439 = vector.extract_strided_slice %438 {offsets = [0, 0], sizes = [8, 64], strides = [1, 1]} : vector<8x128xf32> to vector<8x64xf32>
    %440 = vector.extract_strided_slice %438 {offsets = [0, 64], sizes = [8, 64], strides = [1, 1]} : vector<8x128xf32> to vector<8x64xf32>
    %c0_197 = arith.constant 0 : index
    %c0_198 = arith.constant 0 : index
    %c0_199 = arith.constant 0 : index
    %441 = vector.load %arg20[%c0_197, %c0_198, %c0_199] : memref<2x64x64xf32, #tpu.memory_space<vmem>>, vector<1x64x64xf32>
    %442 = vector.shape_cast %441 : vector<1x64x64xf32> to vector<64x64xf32>
    %cst_200 = arith.constant 0.000000e+00 : f32
    %443 = vector.broadcast %cst_200 : f32 to vector<8x64xf32>
    %444 = vector.extract_strided_slice %435 {offsets = [0, 0], sizes = [8, 16], strides = [1, 1]} : vector<8x64xf32> to vector<8x16xf32>
    %445 = vector.extract_strided_slice %439 {offsets = [0, 0], sizes = [8, 16], strides = [1, 1]} : vector<8x64xf32> to vector<8x16xf32>
    %cst_201 = arith.constant dense<0.000000e+00> : vector<8x8xf32>
    %446 = tpu.matmul %444, %445, %cst_201 {dimension_numbers = #tpu.dot_dimension_numbers<[1], [1], [0], [0], [0, 0, 1, 0], [], []>} : vector<8x16xf32>, vector<8x16xf32>, vector<8x8xf32> -> vector<8x8xf32>
    %447 = vector.broadcast %1 : vector<1x8xf32> to vector<8x8xf32>
    %448 = arith.addf %446, %447 : vector<8x8xf32>
    %cst_202 = arith.constant dense<0xFF800000> : vector<8xf32>
    %449 = vector.multi_reduction <maximumf>, %448, %cst_202 [1] : vector<8x8xf32> to vector<8xf32>
    %450 = vector.shape_cast %449 : vector<8xf32> to vector<8x1xf32>
    %451 = vector.broadcast %450 : vector<8x1xf32> to vector<8x8xf32>
    %452 = arith.subf %448, %451 : vector<8x8xf32>
    %453 = math.exp %452 : vector<8x8xf32>
    %cst_203 = arith.constant dense<0.000000e+00> : vector<8xf32>
    %454 = vector.multi_reduction <add>, %453, %cst_203 [1] : vector<8x8xf32> to vector<8xf32>
    %455 = vector.shape_cast %454 : vector<8xf32> to vector<8x1xf32>
    %456 = tpu.reciprocal %455 {approx = true} : vector<8x1xf32> -> vector<8x1xf32>
    %457 = vector.broadcast %456 : vector<8x1xf32> to vector<8x8xf32>
    %458 = arith.mulf %453, %457 : vector<8x8xf32>
    %459 = vector.extract_strided_slice %440 {offsets = [0, 0], sizes = [8, 16], strides = [1, 1]} : vector<8x64xf32> to vector<8x16xf32>
    %cst_204 = arith.constant dense<0.000000e+00> : vector<8x16xf32>
    %460 = tpu.matmul %458, %459, %cst_204 {dimension_numbers = #tpu.dot_dimension_numbers<[1], [0], [0], [1], [0, 0, 1, 1], [], []>} : vector<8x8xf32>, vector<8x16xf32>, vector<8x16xf32> -> vector<8x16xf32>
    %461 = vector.extract_strided_slice %442 {offsets = [0, 0], sizes = [16, 64], strides = [1, 1]} : vector<64x64xf32> to vector<16x64xf32>
    %cst_205 = arith.constant dense<0.000000e+00> : vector<8x64xf32>
    %462 = tpu.matmul %460, %461, %cst_205 {dimension_numbers = #tpu.dot_dimension_numbers<[1], [0], [0], [1], [0, 0, 1, 1], [], []>} : vector<8x16xf32>, vector<16x64xf32>, vector<8x64xf32> -> vector<8x64xf32>
    %463 = arith.addf %443, %462 : vector<8x64xf32>
    %464 = vector.extract_strided_slice %435 {offsets = [0, 16], sizes = [8, 16], strides = [1, 1]} : vector<8x64xf32> to vector<8x16xf32>
    %465 = vector.extract_strided_slice %439 {offsets = [0, 16], sizes = [8, 16], strides = [1, 1]} : vector<8x64xf32> to vector<8x16xf32>
    %cst_206 = arith.constant dense<0.000000e+00> : vector<8x8xf32>
    %466 = tpu.matmul %464, %465, %cst_206 {dimension_numbers = #tpu.dot_dimension_numbers<[1], [1], [0], [0], [0, 0, 1, 0], [], []>} : vector<8x16xf32>, vector<8x16xf32>, vector<8x8xf32> -> vector<8x8xf32>
    %467 = vector.broadcast %1 : vector<1x8xf32> to vector<8x8xf32>
    %468 = arith.addf %466, %467 : vector<8x8xf32>
    %cst_207 = arith.constant dense<0xFF800000> : vector<8xf32>
    %469 = vector.multi_reduction <maximumf>, %468, %cst_207 [1] : vector<8x8xf32> to vector<8xf32>
    %470 = vector.shape_cast %469 : vector<8xf32> to vector<8x1xf32>
    %471 = vector.broadcast %470 : vector<8x1xf32> to vector<8x8xf32>
    %472 = arith.subf %468, %471 : vector<8x8xf32>
    %473 = math.exp %472 : vector<8x8xf32>
    %cst_208 = arith.constant dense<0.000000e+00> : vector<8xf32>
    %474 = vector.multi_reduction <add>, %473, %cst_208 [1] : vector<8x8xf32> to vector<8xf32>
    %475 = vector.shape_cast %474 : vector<8xf32> to vector<8x1xf32>
    %476 = tpu.reciprocal %475 {approx = true} : vector<8x1xf32> -> vector<8x1xf32>
    %477 = vector.broadcast %476 : vector<8x1xf32> to vector<8x8xf32>
    %478 = arith.mulf %473, %477 : vector<8x8xf32>
    %479 = vector.extract_strided_slice %440 {offsets = [0, 16], sizes = [8, 16], strides = [1, 1]} : vector<8x64xf32> to vector<8x16xf32>
    %cst_209 = arith.constant dense<0.000000e+00> : vector<8x16xf32>
    %480 = tpu.matmul %478, %479, %cst_209 {dimension_numbers = #tpu.dot_dimension_numbers<[1], [0], [0], [1], [0, 0, 1, 1], [], []>} : vector<8x8xf32>, vector<8x16xf32>, vector<8x16xf32> -> vector<8x16xf32>
    %481 = vector.extract_strided_slice %442 {offsets = [16, 0], sizes = [16, 64], strides = [1, 1]} : vector<64x64xf32> to vector<16x64xf32>
    %cst_210 = arith.constant dense<0.000000e+00> : vector<8x64xf32>
    %482 = tpu.matmul %480, %481, %cst_210 {dimension_numbers = #tpu.dot_dimension_numbers<[1], [0], [0], [1], [0, 0, 1, 1], [], []>} : vector<8x16xf32>, vector<16x64xf32>, vector<8x64xf32> -> vector<8x64xf32>
    %483 = arith.addf %463, %482 : vector<8x64xf32>
    %484 = vector.extract_strided_slice %435 {offsets = [0, 32], sizes = [8, 16], strides = [1, 1]} : vector<8x64xf32> to vector<8x16xf32>
    %485 = vector.extract_strided_slice %439 {offsets = [0, 32], sizes = [8, 16], strides = [1, 1]} : vector<8x64xf32> to vector<8x16xf32>
    %cst_211 = arith.constant dense<0.000000e+00> : vector<8x8xf32>
    %486 = tpu.matmul %484, %485, %cst_211 {dimension_numbers = #tpu.dot_dimension_numbers<[1], [1], [0], [0], [0, 0, 1, 0], [], []>} : vector<8x16xf32>, vector<8x16xf32>, vector<8x8xf32> -> vector<8x8xf32>
    %487 = vector.broadcast %1 : vector<1x8xf32> to vector<8x8xf32>
    %488 = arith.addf %486, %487 : vector<8x8xf32>
    %cst_212 = arith.constant dense<0xFF800000> : vector<8xf32>
    %489 = vector.multi_reduction <maximumf>, %488, %cst_212 [1] : vector<8x8xf32> to vector<8xf32>
    %490 = vector.shape_cast %489 : vector<8xf32> to vector<8x1xf32>
    %491 = vector.broadcast %490 : vector<8x1xf32> to vector<8x8xf32>
    %492 = arith.subf %488, %491 : vector<8x8xf32>
    %493 = math.exp %492 : vector<8x8xf32>
    %cst_213 = arith.constant dense<0.000000e+00> : vector<8xf32>
    %494 = vector.multi_reduction <add>, %493, %cst_213 [1] : vector<8x8xf32> to vector<8xf32>
    %495 = vector.shape_cast %494 : vector<8xf32> to vector<8x1xf32>
    %496 = tpu.reciprocal %495 {approx = true} : vector<8x1xf32> -> vector<8x1xf32>
    %497 = vector.broadcast %496 : vector<8x1xf32> to vector<8x8xf32>
    %498 = arith.mulf %493, %497 : vector<8x8xf32>
    %499 = vector.extract_strided_slice %440 {offsets = [0, 32], sizes = [8, 16], strides = [1, 1]} : vector<8x64xf32> to vector<8x16xf32>
    %cst_214 = arith.constant dense<0.000000e+00> : vector<8x16xf32>
    %500 = tpu.matmul %498, %499, %cst_214 {dimension_numbers = #tpu.dot_dimension_numbers<[1], [0], [0], [1], [0, 0, 1, 1], [], []>} : vector<8x8xf32>, vector<8x16xf32>, vector<8x16xf32> -> vector<8x16xf32>
    %501 = vector.extract_strided_slice %442 {offsets = [32, 0], sizes = [16, 64], strides = [1, 1]} : vector<64x64xf32> to vector<16x64xf32>
    %cst_215 = arith.constant dense<0.000000e+00> : vector<8x64xf32>
    %502 = tpu.matmul %500, %501, %cst_215 {dimension_numbers = #tpu.dot_dimension_numbers<[1], [0], [0], [1], [0, 0, 1, 1], [], []>} : vector<8x16xf32>, vector<16x64xf32>, vector<8x64xf32> -> vector<8x64xf32>
    %503 = arith.addf %483, %502 : vector<8x64xf32>
    %504 = vector.extract_strided_slice %435 {offsets = [0, 48], sizes = [8, 16], strides = [1, 1]} : vector<8x64xf32> to vector<8x16xf32>
    %505 = vector.extract_strided_slice %439 {offsets = [0, 48], sizes = [8, 16], strides = [1, 1]} : vector<8x64xf32> to vector<8x16xf32>
    %cst_216 = arith.constant dense<0.000000e+00> : vector<8x8xf32>
    %506 = tpu.matmul %504, %505, %cst_216 {dimension_numbers = #tpu.dot_dimension_numbers<[1], [1], [0], [0], [0, 0, 1, 0], [], []>} : vector<8x16xf32>, vector<8x16xf32>, vector<8x8xf32> -> vector<8x8xf32>
    %507 = vector.broadcast %1 : vector<1x8xf32> to vector<8x8xf32>
    %508 = arith.addf %506, %507 : vector<8x8xf32>
    %cst_217 = arith.constant dense<0xFF800000> : vector<8xf32>
    %509 = vector.multi_reduction <maximumf>, %508, %cst_217 [1] : vector<8x8xf32> to vector<8xf32>
    %510 = vector.shape_cast %509 : vector<8xf32> to vector<8x1xf32>
    %511 = vector.broadcast %510 : vector<8x1xf32> to vector<8x8xf32>
    %512 = arith.subf %508, %511 : vector<8x8xf32>
    %513 = math.exp %512 : vector<8x8xf32>
    %cst_218 = arith.constant dense<0.000000e+00> : vector<8xf32>
    %514 = vector.multi_reduction <add>, %513, %cst_218 [1] : vector<8x8xf32> to vector<8xf32>
    %515 = vector.shape_cast %514 : vector<8xf32> to vector<8x1xf32>
    %516 = tpu.reciprocal %515 {approx = true} : vector<8x1xf32> -> vector<8x1xf32>
    %517 = vector.broadcast %516 : vector<8x1xf32> to vector<8x8xf32>
    %518 = arith.mulf %513, %517 : vector<8x8xf32>
    %519 = vector.extract_strided_slice %440 {offsets = [0, 48], sizes = [8, 16], strides = [1, 1]} : vector<8x64xf32> to vector<8x16xf32>
    %cst_219 = arith.constant dense<0.000000e+00> : vector<8x16xf32>
    %520 = tpu.matmul %518, %519, %cst_219 {dimension_numbers = #tpu.dot_dimension_numbers<[1], [0], [0], [1], [0, 0, 1, 1], [], []>} : vector<8x8xf32>, vector<8x16xf32>, vector<8x16xf32> -> vector<8x16xf32>
    %521 = vector.extract_strided_slice %442 {offsets = [48, 0], sizes = [16, 64], strides = [1, 1]} : vector<64x64xf32> to vector<16x64xf32>
    %cst_220 = arith.constant dense<0.000000e+00> : vector<8x64xf32>
    %522 = tpu.matmul %520, %521, %cst_220 {dimension_numbers = #tpu.dot_dimension_numbers<[1], [0], [0], [1], [0, 0, 1, 1], [], []>} : vector<8x16xf32>, vector<16x64xf32>, vector<8x64xf32> -> vector<8x64xf32>
    %523 = arith.addf %503, %522 : vector<8x64xf32>
    %524 = arith.addf %418, %523 : vector<8x64xf32>
    %c0_221 = arith.constant 0 : index
    %c0_222 = arith.constant 0 : index
    %c0_223 = arith.constant 0 : index
    %525 = vector.load %arg21[%c0_221, %c0_222, %c0_223] : memref<2x1x64xf32, #tpu.memory_space<vmem>>, vector<1x1x64xf32>
    %526 = vector.shape_cast %525 : vector<1x1x64xf32> to vector<1x64xf32>
    %527 = arith.mulf %524, %524 : vector<8x64xf32>
    %cst_224 = arith.constant dense<0.000000e+00> : vector<8xf32>
    %528 = vector.multi_reduction <add>, %527, %cst_224 [1] : vector<8x64xf32> to vector<8xf32>
    %529 = vector.shape_cast %528 : vector<8xf32> to vector<8x1xf32>
    %cst_225 = arith.constant 6.400000e+01 : f32
    %530 = vector.broadcast %cst_225 : f32 to vector<8x1xf32>
    %531 = arith.divf %529, %530 : vector<8x1xf32>
    %cst_226 = arith.constant 9.99999997E-7 : f32
    %532 = vector.broadcast %cst_226 : f32 to vector<8x1xf32>
    %533 = arith.addf %531, %532 : vector<8x1xf32>
    %534 = math.rsqrt %533 : vector<8x1xf32>
    %535 = vector.broadcast %534 : vector<8x1xf32> to vector<8x64xf32>
    %536 = arith.mulf %524, %535 : vector<8x64xf32>
    %537 = vector.broadcast %526 : vector<1x64xf32> to vector<8x64xf32>
    %538 = arith.mulf %536, %537 : vector<8x64xf32>
    %c0_227 = arith.constant 0 : index
    %c0_228 = arith.constant 0 : index
    %c0_229 = arith.constant 0 : index
    %539 = vector.load %arg22[%c0_227, %c0_228, %c0_229] : memref<2x64x128xf32, #tpu.memory_space<vmem>>, vector<1x64x128xf32>
    %540 = vector.shape_cast %539 : vector<1x64x128xf32> to vector<64x128xf32>
    %cst_230 = arith.constant dense<0.000000e+00> : vector<8x128xf32>
    %541 = tpu.matmul %538, %540, %cst_230 {dimension_numbers = #tpu.dot_dimension_numbers<[1], [0], [0], [1], [0, 0, 1, 1], [], []>} : vector<8x64xf32>, vector<64x128xf32>, vector<8x128xf32> -> vector<8x128xf32>
    %cst_231 = arith.constant 0.000000e+00 : f32
    %542 = vector.broadcast %cst_231 : f32 to vector<8x128xf32>
    %543 = arith.maximumf %541, %542 : vector<8x128xf32>
    %c0_232 = arith.constant 0 : index
    %c0_233 = arith.constant 0 : index
    %c0_234 = arith.constant 0 : index
    %544 = vector.load %arg23[%c0_232, %c0_233, %c0_234] : memref<2x128x64xf32, #tpu.memory_space<vmem>>, vector<1x128x64xf32>
    %545 = vector.shape_cast %544 : vector<1x128x64xf32> to vector<128x64xf32>
    %cst_235 = arith.constant dense<0.000000e+00> : vector<8x64xf32>
    %546 = tpu.matmul %543, %545, %cst_235 {dimension_numbers = #tpu.dot_dimension_numbers<[1], [0], [0], [1], [0, 0, 1, 1], [], []>} : vector<8x128xf32>, vector<128x64xf32>, vector<8x64xf32> -> vector<8x64xf32>
    %547 = arith.addf %524, %546 : vector<8x64xf32>
    %c1_236 = arith.constant 1 : index
    %c0_237 = arith.constant 0 : index
    %c0_238 = arith.constant 0 : index
    %548 = vector.load %arg14[%c1_236, %c0_237, %c0_238] : memref<2x1x64xf32, #tpu.memory_space<vmem>>, vector<1x1x64xf32>
    %549 = vector.shape_cast %548 : vector<1x1x64xf32> to vector<1x64xf32>
    %550 = arith.mulf %547, %547 : vector<8x64xf32>
    %cst_239 = arith.constant dense<0.000000e+00> : vector<8xf32>
    %551 = vector.multi_reduction <add>, %550, %cst_239 [1] : vector<8x64xf32> to vector<8xf32>
    %552 = vector.shape_cast %551 : vector<8xf32> to vector<8x1xf32>
    %cst_240 = arith.constant 6.400000e+01 : f32
    %553 = vector.broadcast %cst_240 : f32 to vector<8x1xf32>
    %554 = arith.divf %552, %553 : vector<8x1xf32>
    %cst_241 = arith.constant 9.99999997E-7 : f32
    %555 = vector.broadcast %cst_241 : f32 to vector<8x1xf32>
    %556 = arith.addf %554, %555 : vector<8x1xf32>
    %557 = math.rsqrt %556 : vector<8x1xf32>
    %558 = vector.broadcast %557 : vector<8x1xf32> to vector<8x64xf32>
    %559 = arith.mulf %547, %558 : vector<8x64xf32>
    %560 = vector.broadcast %549 : vector<1x64xf32> to vector<8x64xf32>
    %561 = arith.mulf %559, %560 : vector<8x64xf32>
    %c1_242 = arith.constant 1 : index
    %c0_243 = arith.constant 0 : index
    %c0_244 = arith.constant 0 : index
    %562 = vector.load %arg15[%c1_242, %c0_243, %c0_244] : memref<2x64x192xf32, #tpu.memory_space<vmem>>, vector<1x64x192xf32>
    %563 = vector.shape_cast %562 : vector<1x64x192xf32> to vector<64x192xf32>
    %cst_245 = arith.constant dense<0.000000e+00> : vector<8x192xf32>
    %564 = tpu.matmul %561, %563, %cst_245 {dimension_numbers = #tpu.dot_dimension_numbers<[1], [0], [0], [1], [0, 0, 1, 1], [], []>} : vector<8x64xf32>, vector<64x192xf32>, vector<8x192xf32> -> vector<8x192xf32>
    %565 = vector.extract_strided_slice %564 {offsets = [0, 0], sizes = [8, 64], strides = [1, 1]} : vector<8x192xf32> to vector<8x64xf32>
    %566 = vector.extract_strided_slice %564 {offsets = [0, 64], sizes = [8, 64], strides = [1, 1]} : vector<8x192xf32> to vector<8x64xf32>
    %567 = vector.extract_strided_slice %564 {offsets = [0, 128], sizes = [8, 64], strides = [1, 1]} : vector<8x192xf32> to vector<8x64xf32>
    %c1_246 = arith.constant 1 : index
    %c0_247 = arith.constant 0 : index
    %c0_248 = arith.constant 0 : index
    %568 = vector.load %arg16[%c1_246, %c0_247, %c0_248] : memref<2x64x64xf32, #tpu.memory_space<vmem>>, vector<1x64x64xf32>
    %569 = vector.shape_cast %568 : vector<1x64x64xf32> to vector<64x64xf32>
    %cst_249 = arith.constant 0.000000e+00 : f32
    %570 = vector.broadcast %cst_249 : f32 to vector<8x64xf32>
    %571 = vector.extract_strided_slice %565 {offsets = [0, 0], sizes = [8, 16], strides = [1, 1]} : vector<8x64xf32> to vector<8x16xf32>
    %572 = vector.extract_strided_slice %566 {offsets = [0, 0], sizes = [8, 16], strides = [1, 1]} : vector<8x64xf32> to vector<8x16xf32>
    %cst_250 = arith.constant dense<0.000000e+00> : vector<8x8xf32>
    %573 = tpu.matmul %571, %572, %cst_250 {dimension_numbers = #tpu.dot_dimension_numbers<[1], [1], [0], [0], [0, 0, 1, 0], [], []>} : vector<8x16xf32>, vector<8x16xf32>, vector<8x8xf32> -> vector<8x8xf32>
    %c0_251 = arith.constant 0 : index
    %c0_252 = arith.constant 0 : index
    %c0_253 = arith.constant 0 : index
    %574 = vector.load %arg6[%c0_251, %c0_252, %c0_253] : memref<4x8x8xf32, #tpu.memory_space<vmem>>, vector<1x8x8xf32>
    %575 = vector.shape_cast %574 : vector<1x8x8xf32> to vector<8x8xf32>
    %576 = arith.addf %573, %575 : vector<8x8xf32>
    %cst_254 = arith.constant dense<0xFF800000> : vector<8xf32>
    %577 = vector.multi_reduction <maximumf>, %576, %cst_254 [1] : vector<8x8xf32> to vector<8xf32>
    %578 = vector.shape_cast %577 : vector<8xf32> to vector<8x1xf32>
    %579 = vector.broadcast %578 : vector<8x1xf32> to vector<8x8xf32>
    %580 = arith.subf %576, %579 : vector<8x8xf32>
    %581 = math.exp %580 : vector<8x8xf32>
    %cst_255 = arith.constant dense<0.000000e+00> : vector<8xf32>
    %582 = vector.multi_reduction <add>, %581, %cst_255 [1] : vector<8x8xf32> to vector<8xf32>
    %583 = vector.shape_cast %582 : vector<8xf32> to vector<8x1xf32>
    %584 = tpu.reciprocal %583 {approx = true} : vector<8x1xf32> -> vector<8x1xf32>
    %585 = vector.broadcast %584 : vector<8x1xf32> to vector<8x8xf32>
    %586 = arith.mulf %581, %585 : vector<8x8xf32>
    %587 = vector.extract_strided_slice %567 {offsets = [0, 0], sizes = [8, 16], strides = [1, 1]} : vector<8x64xf32> to vector<8x16xf32>
    %cst_256 = arith.constant dense<0.000000e+00> : vector<8x16xf32>
    %588 = tpu.matmul %586, %587, %cst_256 {dimension_numbers = #tpu.dot_dimension_numbers<[1], [0], [0], [1], [0, 0, 1, 1], [], []>} : vector<8x8xf32>, vector<8x16xf32>, vector<8x16xf32> -> vector<8x16xf32>
    %589 = vector.extract_strided_slice %569 {offsets = [0, 0], sizes = [16, 64], strides = [1, 1]} : vector<64x64xf32> to vector<16x64xf32>
    %cst_257 = arith.constant dense<0.000000e+00> : vector<8x64xf32>
    %590 = tpu.matmul %588, %589, %cst_257 {dimension_numbers = #tpu.dot_dimension_numbers<[1], [0], [0], [1], [0, 0, 1, 1], [], []>} : vector<8x16xf32>, vector<16x64xf32>, vector<8x64xf32> -> vector<8x64xf32>
    %591 = arith.addf %570, %590 : vector<8x64xf32>
    %592 = vector.extract_strided_slice %565 {offsets = [0, 16], sizes = [8, 16], strides = [1, 1]} : vector<8x64xf32> to vector<8x16xf32>
    %593 = vector.extract_strided_slice %566 {offsets = [0, 16], sizes = [8, 16], strides = [1, 1]} : vector<8x64xf32> to vector<8x16xf32>
    %cst_258 = arith.constant dense<0.000000e+00> : vector<8x8xf32>
    %594 = tpu.matmul %592, %593, %cst_258 {dimension_numbers = #tpu.dot_dimension_numbers<[1], [1], [0], [0], [0, 0, 1, 0], [], []>} : vector<8x16xf32>, vector<8x16xf32>, vector<8x8xf32> -> vector<8x8xf32>
    %c1_259 = arith.constant 1 : index
    %c0_260 = arith.constant 0 : index
    %c0_261 = arith.constant 0 : index
    %595 = vector.load %arg6[%c1_259, %c0_260, %c0_261] : memref<4x8x8xf32, #tpu.memory_space<vmem>>, vector<1x8x8xf32>
    %596 = vector.shape_cast %595 : vector<1x8x8xf32> to vector<8x8xf32>
    %597 = arith.addf %594, %596 : vector<8x8xf32>
    %cst_262 = arith.constant dense<0xFF800000> : vector<8xf32>
    %598 = vector.multi_reduction <maximumf>, %597, %cst_262 [1] : vector<8x8xf32> to vector<8xf32>
    %599 = vector.shape_cast %598 : vector<8xf32> to vector<8x1xf32>
    %600 = vector.broadcast %599 : vector<8x1xf32> to vector<8x8xf32>
    %601 = arith.subf %597, %600 : vector<8x8xf32>
    %602 = math.exp %601 : vector<8x8xf32>
    %cst_263 = arith.constant dense<0.000000e+00> : vector<8xf32>
    %603 = vector.multi_reduction <add>, %602, %cst_263 [1] : vector<8x8xf32> to vector<8xf32>
    %604 = vector.shape_cast %603 : vector<8xf32> to vector<8x1xf32>
    %605 = tpu.reciprocal %604 {approx = true} : vector<8x1xf32> -> vector<8x1xf32>
    %606 = vector.broadcast %605 : vector<8x1xf32> to vector<8x8xf32>
    %607 = arith.mulf %602, %606 : vector<8x8xf32>
    %608 = vector.extract_strided_slice %567 {offsets = [0, 16], sizes = [8, 16], strides = [1, 1]} : vector<8x64xf32> to vector<8x16xf32>
    %cst_264 = arith.constant dense<0.000000e+00> : vector<8x16xf32>
    %609 = tpu.matmul %607, %608, %cst_264 {dimension_numbers = #tpu.dot_dimension_numbers<[1], [0], [0], [1], [0, 0, 1, 1], [], []>} : vector<8x8xf32>, vector<8x16xf32>, vector<8x16xf32> -> vector<8x16xf32>
    %610 = vector.extract_strided_slice %569 {offsets = [16, 0], sizes = [16, 64], strides = [1, 1]} : vector<64x64xf32> to vector<16x64xf32>
    %cst_265 = arith.constant dense<0.000000e+00> : vector<8x64xf32>
    %611 = tpu.matmul %609, %610, %cst_265 {dimension_numbers = #tpu.dot_dimension_numbers<[1], [0], [0], [1], [0, 0, 1, 1], [], []>} : vector<8x16xf32>, vector<16x64xf32>, vector<8x64xf32> -> vector<8x64xf32>
    %612 = arith.addf %591, %611 : vector<8x64xf32>
    %613 = vector.extract_strided_slice %565 {offsets = [0, 32], sizes = [8, 16], strides = [1, 1]} : vector<8x64xf32> to vector<8x16xf32>
    %614 = vector.extract_strided_slice %566 {offsets = [0, 32], sizes = [8, 16], strides = [1, 1]} : vector<8x64xf32> to vector<8x16xf32>
    %cst_266 = arith.constant dense<0.000000e+00> : vector<8x8xf32>
    %615 = tpu.matmul %613, %614, %cst_266 {dimension_numbers = #tpu.dot_dimension_numbers<[1], [1], [0], [0], [0, 0, 1, 0], [], []>} : vector<8x16xf32>, vector<8x16xf32>, vector<8x8xf32> -> vector<8x8xf32>
    %c2_267 = arith.constant 2 : index
    %c0_268 = arith.constant 0 : index
    %c0_269 = arith.constant 0 : index
    %616 = vector.load %arg6[%c2_267, %c0_268, %c0_269] : memref<4x8x8xf32, #tpu.memory_space<vmem>>, vector<1x8x8xf32>
    %617 = vector.shape_cast %616 : vector<1x8x8xf32> to vector<8x8xf32>
    %618 = arith.addf %615, %617 : vector<8x8xf32>
    %cst_270 = arith.constant dense<0xFF800000> : vector<8xf32>
    %619 = vector.multi_reduction <maximumf>, %618, %cst_270 [1] : vector<8x8xf32> to vector<8xf32>
    %620 = vector.shape_cast %619 : vector<8xf32> to vector<8x1xf32>
    %621 = vector.broadcast %620 : vector<8x1xf32> to vector<8x8xf32>
    %622 = arith.subf %618, %621 : vector<8x8xf32>
    %623 = math.exp %622 : vector<8x8xf32>
    %cst_271 = arith.constant dense<0.000000e+00> : vector<8xf32>
    %624 = vector.multi_reduction <add>, %623, %cst_271 [1] : vector<8x8xf32> to vector<8xf32>
    %625 = vector.shape_cast %624 : vector<8xf32> to vector<8x1xf32>
    %626 = tpu.reciprocal %625 {approx = true} : vector<8x1xf32> -> vector<8x1xf32>
    %627 = vector.broadcast %626 : vector<8x1xf32> to vector<8x8xf32>
    %628 = arith.mulf %623, %627 : vector<8x8xf32>
    %629 = vector.extract_strided_slice %567 {offsets = [0, 32], sizes = [8, 16], strides = [1, 1]} : vector<8x64xf32> to vector<8x16xf32>
    %cst_272 = arith.constant dense<0.000000e+00> : vector<8x16xf32>
    %630 = tpu.matmul %628, %629, %cst_272 {dimension_numbers = #tpu.dot_dimension_numbers<[1], [0], [0], [1], [0, 0, 1, 1], [], []>} : vector<8x8xf32>, vector<8x16xf32>, vector<8x16xf32> -> vector<8x16xf32>
    %631 = vector.extract_strided_slice %569 {offsets = [32, 0], sizes = [16, 64], strides = [1, 1]} : vector<64x64xf32> to vector<16x64xf32>
    %cst_273 = arith.constant dense<0.000000e+00> : vector<8x64xf32>
    %632 = tpu.matmul %630, %631, %cst_273 {dimension_numbers = #tpu.dot_dimension_numbers<[1], [0], [0], [1], [0, 0, 1, 1], [], []>} : vector<8x16xf32>, vector<16x64xf32>, vector<8x64xf32> -> vector<8x64xf32>
    %633 = arith.addf %612, %632 : vector<8x64xf32>
    %634 = vector.extract_strided_slice %565 {offsets = [0, 48], sizes = [8, 16], strides = [1, 1]} : vector<8x64xf32> to vector<8x16xf32>
    %635 = vector.extract_strided_slice %566 {offsets = [0, 48], sizes = [8, 16], strides = [1, 1]} : vector<8x64xf32> to vector<8x16xf32>
    %cst_274 = arith.constant dense<0.000000e+00> : vector<8x8xf32>
    %636 = tpu.matmul %634, %635, %cst_274 {dimension_numbers = #tpu.dot_dimension_numbers<[1], [1], [0], [0], [0, 0, 1, 0], [], []>} : vector<8x16xf32>, vector<8x16xf32>, vector<8x8xf32> -> vector<8x8xf32>
    %c3_275 = arith.constant 3 : index
    %c0_276 = arith.constant 0 : index
    %c0_277 = arith.constant 0 : index
    %637 = vector.load %arg6[%c3_275, %c0_276, %c0_277] : memref<4x8x8xf32, #tpu.memory_space<vmem>>, vector<1x8x8xf32>
    %638 = vector.shape_cast %637 : vector<1x8x8xf32> to vector<8x8xf32>
    %639 = arith.addf %636, %638 : vector<8x8xf32>
    %cst_278 = arith.constant dense<0xFF800000> : vector<8xf32>
    %640 = vector.multi_reduction <maximumf>, %639, %cst_278 [1] : vector<8x8xf32> to vector<8xf32>
    %641 = vector.shape_cast %640 : vector<8xf32> to vector<8x1xf32>
    %642 = vector.broadcast %641 : vector<8x1xf32> to vector<8x8xf32>
    %643 = arith.subf %639, %642 : vector<8x8xf32>
    %644 = math.exp %643 : vector<8x8xf32>
    %cst_279 = arith.constant dense<0.000000e+00> : vector<8xf32>
    %645 = vector.multi_reduction <add>, %644, %cst_279 [1] : vector<8x8xf32> to vector<8xf32>
    %646 = vector.shape_cast %645 : vector<8xf32> to vector<8x1xf32>
    %647 = tpu.reciprocal %646 {approx = true} : vector<8x1xf32> -> vector<8x1xf32>
    %648 = vector.broadcast %647 : vector<8x1xf32> to vector<8x8xf32>
    %649 = arith.mulf %644, %648 : vector<8x8xf32>
    %650 = vector.extract_strided_slice %567 {offsets = [0, 48], sizes = [8, 16], strides = [1, 1]} : vector<8x64xf32> to vector<8x16xf32>
    %cst_280 = arith.constant dense<0.000000e+00> : vector<8x16xf32>
    %651 = tpu.matmul %649, %650, %cst_280 {dimension_numbers = #tpu.dot_dimension_numbers<[1], [0], [0], [1], [0, 0, 1, 1], [], []>} : vector<8x8xf32>, vector<8x16xf32>, vector<8x16xf32> -> vector<8x16xf32>
    %652 = vector.extract_strided_slice %569 {offsets = [48, 0], sizes = [16, 64], strides = [1, 1]} : vector<64x64xf32> to vector<16x64xf32>
    %cst_281 = arith.constant dense<0.000000e+00> : vector<8x64xf32>
    %653 = tpu.matmul %651, %652, %cst_281 {dimension_numbers = #tpu.dot_dimension_numbers<[1], [0], [0], [1], [0, 0, 1, 1], [], []>} : vector<8x16xf32>, vector<16x64xf32>, vector<8x64xf32> -> vector<8x64xf32>
    %654 = arith.addf %633, %653 : vector<8x64xf32>
    %655 = arith.addf %547, %654 : vector<8x64xf32>
    %c1_282 = arith.constant 1 : index
    %c0_283 = arith.constant 0 : index
    %c0_284 = arith.constant 0 : index
    %656 = vector.load %arg17[%c1_282, %c0_283, %c0_284] : memref<2x1x64xf32, #tpu.memory_space<vmem>>, vector<1x1x64xf32>
    %657 = vector.shape_cast %656 : vector<1x1x64xf32> to vector<1x64xf32>
    %658 = arith.mulf %655, %655 : vector<8x64xf32>
    %cst_285 = arith.constant dense<0.000000e+00> : vector<8xf32>
    %659 = vector.multi_reduction <add>, %658, %cst_285 [1] : vector<8x64xf32> to vector<8xf32>
    %660 = vector.shape_cast %659 : vector<8xf32> to vector<8x1xf32>
    %cst_286 = arith.constant 6.400000e+01 : f32
    %661 = vector.broadcast %cst_286 : f32 to vector<8x1xf32>
    %662 = arith.divf %660, %661 : vector<8x1xf32>
    %cst_287 = arith.constant 9.99999997E-7 : f32
    %663 = vector.broadcast %cst_287 : f32 to vector<8x1xf32>
    %664 = arith.addf %662, %663 : vector<8x1xf32>
    %665 = math.rsqrt %664 : vector<8x1xf32>
    %666 = vector.broadcast %665 : vector<8x1xf32> to vector<8x64xf32>
    %667 = arith.mulf %655, %666 : vector<8x64xf32>
    %668 = vector.broadcast %657 : vector<1x64xf32> to vector<8x64xf32>
    %669 = arith.mulf %667, %668 : vector<8x64xf32>
    %c1_288 = arith.constant 1 : index
    %c0_289 = arith.constant 0 : index
    %c0_290 = arith.constant 0 : index
    %670 = vector.load %arg18[%c1_288, %c0_289, %c0_290] : memref<2x64x64xf32, #tpu.memory_space<vmem>>, vector<1x64x64xf32>
    %671 = vector.shape_cast %670 : vector<1x64x64xf32> to vector<64x64xf32>
    %cst_291 = arith.constant dense<0.000000e+00> : vector<8x64xf32>
    %672 = tpu.matmul %669, %671, %cst_291 {dimension_numbers = #tpu.dot_dimension_numbers<[1], [0], [0], [1], [0, 0, 1, 1], [], []>} : vector<8x64xf32>, vector<64x64xf32>, vector<8x64xf32> -> vector<8x64xf32>
    %c1_292 = arith.constant 1 : index
    %c0_293 = arith.constant 0 : index
    %c0_294 = arith.constant 0 : index
    %673 = vector.load %arg19[%c1_292, %c0_293, %c0_294] : memref<2x64x128xf32, #tpu.memory_space<vmem>>, vector<1x64x128xf32>
    %674 = vector.shape_cast %673 : vector<1x64x128xf32> to vector<64x128xf32>
    %cst_295 = arith.constant dense<0.000000e+00> : vector<8x128xf32>
    %675 = tpu.matmul %301, %674, %cst_295 {dimension_numbers = #tpu.dot_dimension_numbers<[1], [0], [0], [1], [0, 0, 1, 1], [], []>} : vector<8x64xf32>, vector<64x128xf32>, vector<8x128xf32> -> vector<8x128xf32>
    %676 = vector.extract_strided_slice %675 {offsets = [0, 0], sizes = [8, 64], strides = [1, 1]} : vector<8x128xf32> to vector<8x64xf32>
    %677 = vector.extract_strided_slice %675 {offsets = [0, 64], sizes = [8, 64], strides = [1, 1]} : vector<8x128xf32> to vector<8x64xf32>
    %c1_296 = arith.constant 1 : index
    %c0_297 = arith.constant 0 : index
    %c0_298 = arith.constant 0 : index
    %678 = vector.load %arg20[%c1_296, %c0_297, %c0_298] : memref<2x64x64xf32, #tpu.memory_space<vmem>>, vector<1x64x64xf32>
    %679 = vector.shape_cast %678 : vector<1x64x64xf32> to vector<64x64xf32>
    %cst_299 = arith.constant 0.000000e+00 : f32
    %680 = vector.broadcast %cst_299 : f32 to vector<8x64xf32>
    %681 = vector.extract_strided_slice %672 {offsets = [0, 0], sizes = [8, 16], strides = [1, 1]} : vector<8x64xf32> to vector<8x16xf32>
    %682 = vector.extract_strided_slice %676 {offsets = [0, 0], sizes = [8, 16], strides = [1, 1]} : vector<8x64xf32> to vector<8x16xf32>
    %cst_300 = arith.constant dense<0.000000e+00> : vector<8x8xf32>
    %683 = tpu.matmul %681, %682, %cst_300 {dimension_numbers = #tpu.dot_dimension_numbers<[1], [1], [0], [0], [0, 0, 1, 0], [], []>} : vector<8x16xf32>, vector<8x16xf32>, vector<8x8xf32> -> vector<8x8xf32>
    %684 = vector.broadcast %1 : vector<1x8xf32> to vector<8x8xf32>
    %685 = arith.addf %683, %684 : vector<8x8xf32>
    %cst_301 = arith.constant dense<0xFF800000> : vector<8xf32>
    %686 = vector.multi_reduction <maximumf>, %685, %cst_301 [1] : vector<8x8xf32> to vector<8xf32>
    %687 = vector.shape_cast %686 : vector<8xf32> to vector<8x1xf32>
    %688 = vector.broadcast %687 : vector<8x1xf32> to vector<8x8xf32>
    %689 = arith.subf %685, %688 : vector<8x8xf32>
    %690 = math.exp %689 : vector<8x8xf32>
    %cst_302 = arith.constant dense<0.000000e+00> : vector<8xf32>
    %691 = vector.multi_reduction <add>, %690, %cst_302 [1] : vector<8x8xf32> to vector<8xf32>
    %692 = vector.shape_cast %691 : vector<8xf32> to vector<8x1xf32>
    %693 = tpu.reciprocal %692 {approx = true} : vector<8x1xf32> -> vector<8x1xf32>
    %694 = vector.broadcast %693 : vector<8x1xf32> to vector<8x8xf32>
    %695 = arith.mulf %690, %694 : vector<8x8xf32>
    %696 = vector.extract_strided_slice %677 {offsets = [0, 0], sizes = [8, 16], strides = [1, 1]} : vector<8x64xf32> to vector<8x16xf32>
    %cst_303 = arith.constant dense<0.000000e+00> : vector<8x16xf32>
    %697 = tpu.matmul %695, %696, %cst_303 {dimension_numbers = #tpu.dot_dimension_numbers<[1], [0], [0], [1], [0, 0, 1, 1], [], []>} : vector<8x8xf32>, vector<8x16xf32>, vector<8x16xf32> -> vector<8x16xf32>
    %698 = vector.extract_strided_slice %679 {offsets = [0, 0], sizes = [16, 64], strides = [1, 1]} : vector<64x64xf32> to vector<16x64xf32>
    %cst_304 = arith.constant dense<0.000000e+00> : vector<8x64xf32>
    %699 = tpu.matmul %697, %698, %cst_304 {dimension_numbers = #tpu.dot_dimension_numbers<[1], [0], [0], [1], [0, 0, 1, 1], [], []>} : vector<8x16xf32>, vector<16x64xf32>, vector<8x64xf32> -> vector<8x64xf32>
    %700 = arith.addf %680, %699 : vector<8x64xf32>
    %701 = vector.extract_strided_slice %672 {offsets = [0, 16], sizes = [8, 16], strides = [1, 1]} : vector<8x64xf32> to vector<8x16xf32>
    %702 = vector.extract_strided_slice %676 {offsets = [0, 16], sizes = [8, 16], strides = [1, 1]} : vector<8x64xf32> to vector<8x16xf32>
    %cst_305 = arith.constant dense<0.000000e+00> : vector<8x8xf32>
    %703 = tpu.matmul %701, %702, %cst_305 {dimension_numbers = #tpu.dot_dimension_numbers<[1], [1], [0], [0], [0, 0, 1, 0], [], []>} : vector<8x16xf32>, vector<8x16xf32>, vector<8x8xf32> -> vector<8x8xf32>
    %704 = vector.broadcast %1 : vector<1x8xf32> to vector<8x8xf32>
    %705 = arith.addf %703, %704 : vector<8x8xf32>
    %cst_306 = arith.constant dense<0xFF800000> : vector<8xf32>
    %706 = vector.multi_reduction <maximumf>, %705, %cst_306 [1] : vector<8x8xf32> to vector<8xf32>
    %707 = vector.shape_cast %706 : vector<8xf32> to vector<8x1xf32>
    %708 = vector.broadcast %707 : vector<8x1xf32> to vector<8x8xf32>
    %709 = arith.subf %705, %708 : vector<8x8xf32>
    %710 = math.exp %709 : vector<8x8xf32>
    %cst_307 = arith.constant dense<0.000000e+00> : vector<8xf32>
    %711 = vector.multi_reduction <add>, %710, %cst_307 [1] : vector<8x8xf32> to vector<8xf32>
    %712 = vector.shape_cast %711 : vector<8xf32> to vector<8x1xf32>
    %713 = tpu.reciprocal %712 {approx = true} : vector<8x1xf32> -> vector<8x1xf32>
    %714 = vector.broadcast %713 : vector<8x1xf32> to vector<8x8xf32>
    %715 = arith.mulf %710, %714 : vector<8x8xf32>
    %716 = vector.extract_strided_slice %677 {offsets = [0, 16], sizes = [8, 16], strides = [1, 1]} : vector<8x64xf32> to vector<8x16xf32>
    %cst_308 = arith.constant dense<0.000000e+00> : vector<8x16xf32>
    %717 = tpu.matmul %715, %716, %cst_308 {dimension_numbers = #tpu.dot_dimension_numbers<[1], [0], [0], [1], [0, 0, 1, 1], [], []>} : vector<8x8xf32>, vector<8x16xf32>, vector<8x16xf32> -> vector<8x16xf32>
    %718 = vector.extract_strided_slice %679 {offsets = [16, 0], sizes = [16, 64], strides = [1, 1]} : vector<64x64xf32> to vector<16x64xf32>
    %cst_309 = arith.constant dense<0.000000e+00> : vector<8x64xf32>
    %719 = tpu.matmul %717, %718, %cst_309 {dimension_numbers = #tpu.dot_dimension_numbers<[1], [0], [0], [1], [0, 0, 1, 1], [], []>} : vector<8x16xf32>, vector<16x64xf32>, vector<8x64xf32> -> vector<8x64xf32>
    %720 = arith.addf %700, %719 : vector<8x64xf32>
    %721 = vector.extract_strided_slice %672 {offsets = [0, 32], sizes = [8, 16], strides = [1, 1]} : vector<8x64xf32> to vector<8x16xf32>
    %722 = vector.extract_strided_slice %676 {offsets = [0, 32], sizes = [8, 16], strides = [1, 1]} : vector<8x64xf32> to vector<8x16xf32>
    %cst_310 = arith.constant dense<0.000000e+00> : vector<8x8xf32>
    %723 = tpu.matmul %721, %722, %cst_310 {dimension_numbers = #tpu.dot_dimension_numbers<[1], [1], [0], [0], [0, 0, 1, 0], [], []>} : vector<8x16xf32>, vector<8x16xf32>, vector<8x8xf32> -> vector<8x8xf32>
    %724 = vector.broadcast %1 : vector<1x8xf32> to vector<8x8xf32>
    %725 = arith.addf %723, %724 : vector<8x8xf32>
    %cst_311 = arith.constant dense<0xFF800000> : vector<8xf32>
    %726 = vector.multi_reduction <maximumf>, %725, %cst_311 [1] : vector<8x8xf32> to vector<8xf32>
    %727 = vector.shape_cast %726 : vector<8xf32> to vector<8x1xf32>
    %728 = vector.broadcast %727 : vector<8x1xf32> to vector<8x8xf32>
    %729 = arith.subf %725, %728 : vector<8x8xf32>
    %730 = math.exp %729 : vector<8x8xf32>
    %cst_312 = arith.constant dense<0.000000e+00> : vector<8xf32>
    %731 = vector.multi_reduction <add>, %730, %cst_312 [1] : vector<8x8xf32> to vector<8xf32>
    %732 = vector.shape_cast %731 : vector<8xf32> to vector<8x1xf32>
    %733 = tpu.reciprocal %732 {approx = true} : vector<8x1xf32> -> vector<8x1xf32>
    %734 = vector.broadcast %733 : vector<8x1xf32> to vector<8x8xf32>
    %735 = arith.mulf %730, %734 : vector<8x8xf32>
    %736 = vector.extract_strided_slice %677 {offsets = [0, 32], sizes = [8, 16], strides = [1, 1]} : vector<8x64xf32> to vector<8x16xf32>
    %cst_313 = arith.constant dense<0.000000e+00> : vector<8x16xf32>
    %737 = tpu.matmul %735, %736, %cst_313 {dimension_numbers = #tpu.dot_dimension_numbers<[1], [0], [0], [1], [0, 0, 1, 1], [], []>} : vector<8x8xf32>, vector<8x16xf32>, vector<8x16xf32> -> vector<8x16xf32>
    %738 = vector.extract_strided_slice %679 {offsets = [32, 0], sizes = [16, 64], strides = [1, 1]} : vector<64x64xf32> to vector<16x64xf32>
    %cst_314 = arith.constant dense<0.000000e+00> : vector<8x64xf32>
    %739 = tpu.matmul %737, %738, %cst_314 {dimension_numbers = #tpu.dot_dimension_numbers<[1], [0], [0], [1], [0, 0, 1, 1], [], []>} : vector<8x16xf32>, vector<16x64xf32>, vector<8x64xf32> -> vector<8x64xf32>
    %740 = arith.addf %720, %739 : vector<8x64xf32>
    %741 = vector.extract_strided_slice %672 {offsets = [0, 48], sizes = [8, 16], strides = [1, 1]} : vector<8x64xf32> to vector<8x16xf32>
    %742 = vector.extract_strided_slice %676 {offsets = [0, 48], sizes = [8, 16], strides = [1, 1]} : vector<8x64xf32> to vector<8x16xf32>
    %cst_315 = arith.constant dense<0.000000e+00> : vector<8x8xf32>
    %743 = tpu.matmul %741, %742, %cst_315 {dimension_numbers = #tpu.dot_dimension_numbers<[1], [1], [0], [0], [0, 0, 1, 0], [], []>} : vector<8x16xf32>, vector<8x16xf32>, vector<8x8xf32> -> vector<8x8xf32>
    %744 = vector.broadcast %1 : vector<1x8xf32> to vector<8x8xf32>
    %745 = arith.addf %743, %744 : vector<8x8xf32>
    %cst_316 = arith.constant dense<0xFF800000> : vector<8xf32>
    %746 = vector.multi_reduction <maximumf>, %745, %cst_316 [1] : vector<8x8xf32> to vector<8xf32>
    %747 = vector.shape_cast %746 : vector<8xf32> to vector<8x1xf32>
    %748 = vector.broadcast %747 : vector<8x1xf32> to vector<8x8xf32>
    %749 = arith.subf %745, %748 : vector<8x8xf32>
    %750 = math.exp %749 : vector<8x8xf32>
    %cst_317 = arith.constant dense<0.000000e+00> : vector<8xf32>
    %751 = vector.multi_reduction <add>, %750, %cst_317 [1] : vector<8x8xf32> to vector<8xf32>
    %752 = vector.shape_cast %751 : vector<8xf32> to vector<8x1xf32>
    %753 = tpu.reciprocal %752 {approx = true} : vector<8x1xf32> -> vector<8x1xf32>
    %754 = vector.broadcast %753 : vector<8x1xf32> to vector<8x8xf32>
    %755 = arith.mulf %750, %754 : vector<8x8xf32>
    %756 = vector.extract_strided_slice %677 {offsets = [0, 48], sizes = [8, 16], strides = [1, 1]} : vector<8x64xf32> to vector<8x16xf32>
    %cst_318 = arith.constant dense<0.000000e+00> : vector<8x16xf32>
    %757 = tpu.matmul %755, %756, %cst_318 {dimension_numbers = #tpu.dot_dimension_numbers<[1], [0], [0], [1], [0, 0, 1, 1], [], []>} : vector<8x8xf32>, vector<8x16xf32>, vector<8x16xf32> -> vector<8x16xf32>
    %758 = vector.extract_strided_slice %679 {offsets = [48, 0], sizes = [16, 64], strides = [1, 1]} : vector<64x64xf32> to vector<16x64xf32>
    %cst_319 = arith.constant dense<0.000000e+00> : vector<8x64xf32>
    %759 = tpu.matmul %757, %758, %cst_319 {dimension_numbers = #tpu.dot_dimension_numbers<[1], [0], [0], [1], [0, 0, 1, 1], [], []>} : vector<8x16xf32>, vector<16x64xf32>, vector<8x64xf32> -> vector<8x64xf32>
    %760 = arith.addf %740, %759 : vector<8x64xf32>
    %761 = arith.addf %655, %760 : vector<8x64xf32>
    %c1_320 = arith.constant 1 : index
    %c0_321 = arith.constant 0 : index
    %c0_322 = arith.constant 0 : index
    %762 = vector.load %arg21[%c1_320, %c0_321, %c0_322] : memref<2x1x64xf32, #tpu.memory_space<vmem>>, vector<1x1x64xf32>
    %763 = vector.shape_cast %762 : vector<1x1x64xf32> to vector<1x64xf32>
    %764 = arith.mulf %761, %761 : vector<8x64xf32>
    %cst_323 = arith.constant dense<0.000000e+00> : vector<8xf32>
    %765 = vector.multi_reduction <add>, %764, %cst_323 [1] : vector<8x64xf32> to vector<8xf32>
    %766 = vector.shape_cast %765 : vector<8xf32> to vector<8x1xf32>
    %cst_324 = arith.constant 6.400000e+01 : f32
    %767 = vector.broadcast %cst_324 : f32 to vector<8x1xf32>
    %768 = arith.divf %766, %767 : vector<8x1xf32>
    %cst_325 = arith.constant 9.99999997E-7 : f32
    %769 = vector.broadcast %cst_325 : f32 to vector<8x1xf32>
    %770 = arith.addf %768, %769 : vector<8x1xf32>
    %771 = math.rsqrt %770 : vector<8x1xf32>
    %772 = vector.broadcast %771 : vector<8x1xf32> to vector<8x64xf32>
    %773 = arith.mulf %761, %772 : vector<8x64xf32>
    %774 = vector.broadcast %763 : vector<1x64xf32> to vector<8x64xf32>
    %775 = arith.mulf %773, %774 : vector<8x64xf32>
    %c1_326 = arith.constant 1 : index
    %c0_327 = arith.constant 0 : index
    %c0_328 = arith.constant 0 : index
    %776 = vector.load %arg22[%c1_326, %c0_327, %c0_328] : memref<2x64x128xf32, #tpu.memory_space<vmem>>, vector<1x64x128xf32>
    %777 = vector.shape_cast %776 : vector<1x64x128xf32> to vector<64x128xf32>
    %cst_329 = arith.constant dense<0.000000e+00> : vector<8x128xf32>
    %778 = tpu.matmul %775, %777, %cst_329 {dimension_numbers = #tpu.dot_dimension_numbers<[1], [0], [0], [1], [0, 0, 1, 1], [], []>} : vector<8x64xf32>, vector<64x128xf32>, vector<8x128xf32> -> vector<8x128xf32>
    %cst_330 = arith.constant 0.000000e+00 : f32
    %779 = vector.broadcast %cst_330 : f32 to vector<8x128xf32>
    %780 = arith.maximumf %778, %779 : vector<8x128xf32>
    %c1_331 = arith.constant 1 : index
    %c0_332 = arith.constant 0 : index
    %c0_333 = arith.constant 0 : index
    %781 = vector.load %arg23[%c1_331, %c0_332, %c0_333] : memref<2x128x64xf32, #tpu.memory_space<vmem>>, vector<1x128x64xf32>
    %782 = vector.shape_cast %781 : vector<1x128x64xf32> to vector<128x64xf32>
    %cst_334 = arith.constant dense<0.000000e+00> : vector<8x64xf32>
    %783 = tpu.matmul %780, %782, %cst_334 {dimension_numbers = #tpu.dot_dimension_numbers<[1], [0], [0], [1], [0, 0, 1, 1], [], []>} : vector<8x128xf32>, vector<128x64xf32>, vector<8x64xf32> -> vector<8x64xf32>
    %784 = arith.addf %761, %783 : vector<8x64xf32>
    %c0_335 = arith.constant 0 : index
    %c0_336 = arith.constant 0 : index
    %785 = vector.load %arg25[%c0_335, %c0_336] : memref<1x64xf32, #tpu.memory_space<vmem>>, vector<1x64xf32>
    %786 = arith.mulf %784, %784 : vector<8x64xf32>
    %cst_337 = arith.constant dense<0.000000e+00> : vector<8xf32>
    %787 = vector.multi_reduction <add>, %786, %cst_337 [1] : vector<8x64xf32> to vector<8xf32>
    %788 = vector.shape_cast %787 : vector<8xf32> to vector<8x1xf32>
    %cst_338 = arith.constant 6.400000e+01 : f32
    %789 = vector.broadcast %cst_338 : f32 to vector<8x1xf32>
    %790 = arith.divf %788, %789 : vector<8x1xf32>
    %cst_339 = arith.constant 9.99999997E-7 : f32
    %791 = vector.broadcast %cst_339 : f32 to vector<8x1xf32>
    %792 = arith.addf %790, %791 : vector<8x1xf32>
    %793 = math.rsqrt %792 : vector<8x1xf32>
    %794 = vector.broadcast %793 : vector<8x1xf32> to vector<8x64xf32>
    %795 = arith.mulf %784, %794 : vector<8x64xf32>
    %796 = vector.broadcast %785 : vector<1x64xf32> to vector<8x64xf32>
    %797 = arith.mulf %795, %796 : vector<8x64xf32>
    %cst_340 = arith.constant 1.250000e-01 : f32
    %798 = vector.broadcast %cst_340 : f32 to vector<8x64xf32>
    %799 = arith.mulf %797, %798 : vector<8x64xf32>
    %c0_341 = arith.constant 0 : index
    %c0_342 = arith.constant 0 : index
    %800 = vector.load %arg7[%c0_341, %c0_342] : memref<128x64xf32, #tpu.memory_space<vmem>>, vector<128x64xf32>
    %cst_343 = arith.constant dense<0.000000e+00> : vector<8x128xf32>
    %801 = tpu.matmul %799, %800, %cst_343 {dimension_numbers = #tpu.dot_dimension_numbers<[1], [1], [0], [0], [0, 0, 1, 0], [], []>} : vector<8x64xf32>, vector<128x64xf32>, vector<8x128xf32> -> vector<8x128xf32>
    %c0_344 = arith.constant 0 : index
    %c0_345 = arith.constant 0 : index
    %c0_346 = arith.constant 0 : index
    %802 = vector.load %arg26[%c0_344, %c0_345, %c0_346] : memref<1x8x128xf32, #tpu.memory_space<vmem>>, vector<1x8x128xf32>
    %803 = vector.shape_cast %802 : vector<1x8x128xf32> to vector<8x128xf32>
    %804 = vector.shape_cast %801 : vector<8x128xf32> to vector<1x8x128xf32>
    tpu.vector_store %arg26[%c0_344, %c0_345, %c0_346], %804 {strides = array<i32>} : memref<1x8x128xf32, #tpu.memory_space<vmem>>, vector<1x8x128xf32>,
    %c0_347 = arith.constant 0 : index
    %c0_348 = arith.constant 0 : index
    %c0_349 = arith.constant 0 : index
    %805 = vector.load %arg3[%c0_347, %c0_348, %c0_349] : memref<1x8x1xi32, #tpu.memory_space<vmem>>, vector<1x8x1xi32>
    %806 = vector.shape_cast %805 : vector<1x8x1xi32> to vector<8x1xi32>
    %c-100_i32 = arith.constant -100 : i32
    %807 = vector.broadcast %c-100_i32 : i32 to vector<8x1xi32>
    %808 = arith.cmpi eq, %806, %807 : vector<8x1xi32>
    %c0_i32 = arith.constant 0 : i32
    %809 = vector.broadcast %c0_i32 : i32 to vector<8x1xi32>
    %810 = arith.select %808, %809, %806 : vector<8x1xi1>, vector<8x1xi32>
    %811 = tpu.iota {dimensions = array<i32: 1>} : vector<8x128xi32>
    %812 = vector.broadcast %810 : vector<8x1xi32> to vector<8x128xi32>
    %813 = arith.cmpi eq, %811, %812 : vector<8x128xi32>
    %814 = arith.extui %813 : vector<8x128xi1> to vector<8x128xi32>
    %815 = arith.sitofp %814 : vector<8x128xi32> to vector<8x128xf32>
    %cst_350 = arith.constant dense<0xFF800000> : vector<8xf32>
    %816 = vector.multi_reduction <maximumf>, %801, %cst_350 [1] : vector<8x128xf32> to vector<8xf32>
    %817 = vector.shape_cast %816 : vector<8xf32> to vector<8x1xf32>
    %818 = vector.broadcast %817 : vector<8x1xf32> to vector<8x128xf32>
    %819 = arith.subf %801, %818 : vector<8x128xf32>
    %820 = math.exp %819 : vector<8x128xf32>
    %cst_351 = arith.constant dense<0.000000e+00> : vector<8xf32>
    %821 = vector.multi_reduction <add>, %820, %cst_351 [1] : vector<8x128xf32> to vector<8xf32>
    %822 = vector.shape_cast %821 : vector<8xf32> to vector<8x1xf32>
    %823 = math.log %822 : vector<8x1xf32>
    %824 = arith.addf %823, %817 : vector<8x1xf32>
    %825 = vector.broadcast %824 : vector<8x1xf32> to vector<8x128xf32>
    %826 = arith.subf %825, %801 : vector<8x128xf32>
    %827 = arith.mulf %815, %826 : vector<8x128xf32>
    %cst_352 = arith.constant dense<0.000000e+00> : vector<8xf32>
    %828 = vector.multi_reduction <add>, %827, %cst_352 [1] : vector<8x128xf32> to vector<8xf32>
    %829 = vector.shape_cast %828 : vector<8xf32> to vector<8x1xf32>
    %c0_353 = arith.constant 0 : index
    %c0_354 = arith.constant 0 : index
    %c0_355 = arith.constant 0 : index
    %830 = vector.load %arg27[%c0_353, %c0_354, %c0_355] : memref<1x8x1xf32, #tpu.memory_space<vmem>>, vector<1x8x1xf32>
    %831 = vector.shape_cast %830 : vector<1x8x1xf32> to vector<8x1xf32>
    %832 = vector.shape_cast %829 : vector<8x1xf32> to vector<1x8x1xf32>
    tpu.vector_store %arg27[%c0_353, %c0_354, %c0_355], %832 {strides = array<i32>} : memref<1x8x1xf32, #tpu.memory_space<vmem>>, vector<1x8x1xf32>,
    return
  }
  func.func @transform_0(%arg0: i32) -> (i32, i32, i32) {
    %c0_i32 = arith.constant 0 : i32
    %c0_i32_0 = arith.constant 0 : i32
    %c0_i32_1 = arith.constant 0 : i32
    return %arg0, %c0_i32, %c0_i32_0 : i32, i32, i32
  }
  func.func @transform_1(%arg0: i32) -> (i32, i32, i32) {
    %c0_i32 = arith.constant 0 : i32
    %c0_i32_0 = arith.constant 0 : i32
    %c0_i32_1 = arith.constant 0 : i32
    return %arg0, %c0_i32, %c0_i32_0 : i32, i32, i32
  }
  func.func @transform_2(%arg0: i32) -> (i32, i32, i32) {
    %c0_i32 = arith.constant 0 : i32
    %c0_i32_0 = arith.constant 0 : i32
    %c0_i32_1 = arith.constant 0 : i32
    return %arg0, %c0_i32, %c0_i32_0 : i32, i32, i32
  }
  func.func @transform_3(%arg0: i32) -> (i32, i32, i32) {
    %c0_i32 = arith.constant 0 : i32
    %c0_i32_0 = arith.constant 0 : i32
    %c0_i32_1 = arith.constant 0 : i32
    return %arg0, %c0_i32, %c0_i32_0 : i32, i32, i32
  }
  func.func @transform_4(%arg0: i32) -> (i32, i32, i32) {
    %c0_i32 = arith.constant 0 : i32
    %c0_i32_0 = arith.constant 0 : i32
    %c0_i32_1 = arith.constant 0 : i32
    %c0_i32_2 = arith.constant 0 : i32
    return %c0_i32, %c0_i32_0, %c0_i32_1 : i32, i32, i32
  }
  func.func @transform_5(%arg0: i32) -> (i32, i32, i32) {
    %c0_i32 = arith.constant 0 : i32
    %c0_i32_0 = arith.constant 0 : i32
    %c0_i32_1 = arith.constant 0 : i32
    %c0_i32_2 = arith.constant 0 : i32
    return %c0_i32, %c0_i32_0, %c0_i32_1 : i32, i32, i32
  }
  func.func @transform_6(%arg0: i32) -> (i32, i32) {
    %c0_i32 = arith.constant 0 : i32
    %c0_i32_0 = arith.constant 0 : i32
    %c0_i32_1 = arith.constant 0 : i32
    return %c0_i32, %c0_i32_0 : i32, i32
  }
  func.func @transform_7(%arg0: i32) -> (i32, i32, i32) {
    %c0_i32 = arith.constant 0 : i32
    %c0_i32_0 = arith.constant 0 : i32
    %c0_i32_1 = arith.constant 0 : i32
    %c0_i32_2 = arith.constant 0 : i32
    return %c0_i32, %c0_i32_0, %c0_i32_1 : i32, i32, i32
  }
  func.func @transform_8(%arg0: i32) -> (i32, i32, i32) {
    %c0_i32 = arith.constant 0 : i32
    %c0_i32_0 = arith.constant 0 : i32
    %c0_i32_1 = arith.constant 0 : i32
    %c0_i32_2 = arith.constant 0 : i32
    return %c0_i32, %c0_i32_0, %c0_i32_1 : i32, i32, i32
  }
  func.func @transform_9(%arg0: i32) -> (i32, i32, i32) {
    %c0_i32 = arith.constant 0 : i32
    %c0_i32_0 = arith.constant 0 : i32
    %c0_i32_1 = arith.constant 0 : i32
    %c0_i32_2 = arith.constant 0 : i32
    return %c0_i32, %c0_i32_0, %c0_i32_1 : i32, i32, i32
  }
  func.func @transform_10(%arg0: i32) -> (i32, i32, i32) {
    %c0_i32 = arith.constant 0 : i32
    %c0_i32_0 = arith.constant 0 : i32
    %c0_i32_1 = arith.constant 0 : i32
    %c0_i32_2 = arith.constant 0 : i32
    return %c0_i32, %c0_i32_0, %c0_i32_1 : i32, i32, i32
  }
  func.func @transform_11(%arg0: i32) -> (i32, i32, i32) {
    %c0_i32 = arith.constant 0 : i32
    %c0_i32_0 = arith.constant 0 : i32
    %c0_i32_1 = arith.constant 0 : i32
    %c0_i32_2 = arith.constant 0 : i32
    return %c0_i32, %c0_i32_0, %c0_i32_1 : i32, i32, i32
  }
  func.func @transform_12(%arg0: i32) -> (i32, i32, i32) {
    %c0_i32 = arith.constant 0 : i32
    %c0_i32_0 = arith.constant 0 : i32
    %c0_i32_1 = arith.constant 0 : i32
    %c0_i32_2 = arith.constant 0 : i32
    return %c0_i32, %c0_i32_0, %c0_i32_1 : i32, i32, i32
  }
  func.func @transform_13(%arg0: i32) -> (i32, i32, i32) {
    %c0_i32 = arith.constant 0 : i32
    %c0_i32_0 = arith.constant 0 : i32
    %c0_i32_1 = arith.constant 0 : i32
    %c0_i32_2 = arith.constant 0 : i32
    return %c0_i32, %c0_i32_0, %c0_i32_1 : i32, i32, i32
  }
  func.func @transform_14(%arg0: i32) -> (i32, i32, i32) {
    %c0_i32 = arith.constant 0 : i32
    %c0_i32_0 = arith.constant 0 : i32
    %c0_i32_1 = arith.constant 0 : i32
    %c0_i32_2 = arith.constant 0 : i32
    return %c0_i32, %c0_i32_0, %c0_i32_1 : i32, i32, i32
  }
  func.func @transform_15(%arg0: i32) -> (i32, i32, i32) {
    %c0_i32 = arith.constant 0 : i32
    %c0_i32_0 = arith.constant 0 : i32
    %c0_i32_1 = arith.constant 0 : i32
    %c0_i32_2 = arith.constant 0 : i32
    return %c0_i32, %c0_i32_0, %c0_i32_1 : i32, i32, i32
  }
  func.func @transform_16(%arg0: i32) -> (i32, i32, i32) {
    %c0_i32 = arith.constant 0 : i32
    %c0_i32_0 = arith.constant 0 : i32
    %c0_i32_1 = arith.constant 0 : i32
    %c0_i32_2 = arith.constant 0 : i32
    return %c0_i32, %c0_i32_0, %c0_i32_1 : i32, i32, i32
  }
  func.func @transform_17(%arg0: i32) -> (i32, i32, i32) {
    %c0_i32 = arith.constant 0 : i32
    %c0_i32_0 = arith.constant 0 : i32
    %c0_i32_1 = arith.constant 0 : i32
    %c0_i32_2 = arith.constant 0 : i32
    return %c0_i32, %c0_i32_0, %c0_i32_1 : i32, i32, i32
  }
  func.func @transform_18(%arg0: i32) -> (i32, i32, i32) {
    %c0_i32 = arith.constant 0 : i32
    %c0_i32_0 = arith.constant 0 : i32
    %c0_i32_1 = arith.constant 0 : i32
    %c0_i32_2 = arith.constant 0 : i32
    return %c0_i32, %c0_i32_0, %c0_i32_1 : i32, i32, i32
  }
  func.func @transform_19(%arg0: i32) -> (i32, i32, i32) {
    %c0_i32 = arith.constant 0 : i32
    %c0_i32_0 = arith.constant 0 : i32
    %c0_i32_1 = arith.constant 0 : i32
    %c0_i32_2 = arith.constant 0 : i32
    return %c0_i32, %c0_i32_0, %c0_i32_1 : i32, i32, i32
  }
  func.func @transform_20(%arg0: i32) -> (i32, i32, i32) {
    %c0_i32 = arith.constant 0 : i32
    %c0_i32_0 = arith.constant 0 : i32
    %c0_i32_1 = arith.constant 0 : i32
    %c0_i32_2 = arith.constant 0 : i32
    return %c0_i32, %c0_i32_0, %c0_i32_1 : i32, i32, i32
  }
  func.func @transform_21(%arg0: i32) -> (i32, i32, i32) {
    %c0_i32 = arith.constant 0 : i32
    %c0_i32_0 = arith.constant 0 : i32
    %c0_i32_1 = arith.constant 0 : i32
    %c0_i32_2 = arith.constant 0 : i32
    return %c0_i32, %c0_i32_0, %c0_i32_1 : i32, i32, i32
  }
  func.func @transform_22(%arg0: i32) -> (i32, i32, i32) {
    %c0_i32 = arith.constant 0 : i32
    %c0_i32_0 = arith.constant 0 : i32
    %c0_i32_1 = arith.constant 0 : i32
    %c0_i32_2 = arith.constant 0 : i32
    return %c0_i32, %c0_i32_0, %c0_i32_1 : i32, i32, i32
  }
  func.func @transform_23(%arg0: i32) -> (i32, i32) {
    %c0_i32 = arith.constant 0 : i32
    %c0_i32_0 = arith.constant 0 : i32
    %c0_i32_1 = arith.constant 0 : i32
    return %c0_i32, %c0_i32_0 : i32, i32
  }
  func.func @transform_24(%arg0: i32) -> (i32, i32) {
    %c0_i32 = arith.constant 0 : i32
    %c0_i32_0 = arith.constant 0 : i32
    %c0_i32_1 = arith.constant 0 : i32
    return %c0_i32, %c0_i32_0 : i32, i32
  }
  func.func @transform_25(%arg0: i32) -> (i32, i32, i32) {
    %c0_i32 = arith.constant 0 : i32
    %c0_i32_0 = arith.constant 0 : i32
    %c0_i32_1 = arith.constant 0 : i32
    return %arg0, %c0_i32, %c0_i32_0 : i32, i32, i32
  }
  func.func @transform_26(%arg0: i32) -> (i32, i32, i32) {
    %c0_i32 = arith.constant 0 : i32
    %c0_i32_0 = arith.constant 0 : i32
    %c0_i32_1 = arith.constant 0 : i32
    return %arg0, %c0_i32, %c0_i32_0 : i32, i32, i32
  }
}

</mosaic_0001>

<llo_original>
// kernel: t5_forward.1
$region0: #{t5_forward.1}
  #allocation0 [shape = 'u32[]', space=smem, size = 0x4, offset = 0x4, fixed_abs, tag = 'smem constant byte address 0x4 - core index']
  #allocation1 [shape = 'u32[144,128]{1,0:T(1,128)}', space=vmem, size = 0x12000, scoped, tag = 'internal scratch']
  %s0 = inlined_call_operand.vmem [shape: s32[2,8,1], index: 0, kind: input, shape index: {}]
  %s1 = inlined_call_operand.vmem [shape: s32[2,8,1], index: 1, kind: input, shape index: {}]
  %s2 = inlined_call_operand.vmem [shape: s32[2,8,1], index: 2, kind: input, shape index: {}]
  %s3 = inlined_call_operand.vmem [shape: f32[2,1,8], index: 3, kind: input, shape index: {}]
  %s4 = inlined_call_operand.vmem [shape: f32[4,8,8], index: 4, kind: input, shape index: {}]
  %s5 = inlined_call_operand.vmem [shape: f32[4,8,8], index: 5, kind: input, shape index: {}]
  %s6 = inlined_call_operand.vmem [shape: f32[128,64], index: 6, kind: input, shape index: {}]
  %s7 = inlined_call_operand.vmem [shape: f32[2,1,64], index: 7, kind: input, shape index: {}]
  %s8 = inlined_call_operand.vmem [shape: f32[2,64,192], index: 8, kind: input, shape index: {}]
  %s9 = inlined_call_operand.vmem [shape: f32[2,64,64], index: 9, kind: input, shape index: {}]
  %s10 = inlined_call_operand.vmem [shape: f32[2,1,64], index: 10, kind: input, shape index: {}]
  %s11 = inlined_call_operand.vmem [shape: f32[2,64,128], index: 11, kind: input, shape index: {}]
  %s12 = inlined_call_operand.vmem [shape: f32[2,128,64], index: 12, kind: input, shape index: {}]
  %s13 = inlined_call_operand.vmem [shape: f32[2,1,64], index: 13, kind: input, shape index: {}]
  %s14 = inlined_call_operand.vmem [shape: f32[2,64,192], index: 14, kind: input, shape index: {}]
  %s15 = inlined_call_operand.vmem [shape: f32[2,64,64], index: 15, kind: input, shape index: {}]
  %s16 = inlined_call_operand.vmem [shape: f32[2,1,64], index: 16, kind: input, shape index: {}]
  %s17 = inlined_call_operand.vmem [shape: f32[2,64,64], index: 17, kind: input, shape index: {}]
  %s18 = inlined_call_operand.vmem [shape: f32[2,64,128], index: 18, kind: input, shape index: {}]
  %s19 = inlined_call_operand.vmem [shape: f32[2,64,64], index: 19, kind: input, shape index: {}]
  %s20 = inlined_call_operand.vmem [shape: f32[2,1,64], index: 20, kind: input, shape index: {}]
  %s21 = inlined_call_operand.vmem [shape: f32[2,64,128], index: 21, kind: input, shape index: {}]
  %s22 = inlined_call_operand.vmem [shape: f32[2,128,64], index: 22, kind: input, shape index: {}]
  %s23 = inlined_call_operand.vmem [shape: f32[1,64], index: 23, kind: input, shape index: {}]
  %s24 = inlined_call_operand.vmem [shape: f32[1,64], index: 24, kind: input, shape index: {}]
  %s25 = inlined_call_operand.hbm [shape: f32[2,8,128], index: 25, kind: output, shape index: {0}]
  %s26 = inlined_call_operand.vmem [shape: f32[2,8,1], index: 26, kind: output, shape index: {1}]
  %27 = xla_tuple %s25, %s26
  %s28 = sld [smem:[#allocation0]]
  $region141: #{t5_forward.1} parent=0
    _
  %s30 = ssub.s32 1, %s28
  %s31 = scalar_select 0, %s30, %s28
  $region1: #{t5_forward.1} parent=0
    #allocation2 [shape = 'u8[8192]{0}', space=vmem, size = 0x2000, scoped, tag = 'output window, operand 0']
    #allocation3 [shape = 's32[2]{0}', space=sflag, size = 0x8, scoped, tag = 'scoped memory for t5_forward.1']
    %32 = vsyncpa [#allocation3], 0
    %s33 = scalar_lea.sflag [#allocation3], 1
    %34 = vsyncpa %s33, 0
    loop: start=0, step=1, limit=4
    $region2: #{t5_forward.1} parent=1 // loop_pre_header
      _
    $region3: #{t5_forward.1} parent=1 // loop_header
      %s36 = sphi 0, %s40
      %p37 = scmp.ge.s32.totalorder %s36, 4
      %s46 = sphi 0, %s48
      %s49 = sphi 0, %s46
      %s50 = sphi 0, %s49
      %s66 = sphi 0, %s50
      %s72 = sphi 0, %s74
      %s75 = sphi 0, %s72
      %s76 = sphi 0, %s75
      %s92 = sphi 0, %s76
      %s98 = sphi 0, %s100
      %s101 = sphi 0, %s98
      %s102 = sphi 0, %s101
      %s118 = sphi 0, %s102
      %s124 = sphi 0, %s126
      %s127 = sphi 0, %s124
      %s128 = sphi 0, %s127
      %s144 = sphi 0, %s128
      %s148 = sphi 0, %s148
      %s150 = sphi 0, %s148
      %s151 = sphi 0, %s150
      %s165 = sphi 0, %s151
      %s169 = sphi 0, %s169
      %s171 = sphi 0, %s169
      %s172 = sphi 0, %s171
      %s186 = sphi 0, %s172
      %s190 = sphi 0, %s190
      %s192 = sphi 0, %s190
      %s193 = sphi 0, %s192
      %s207 = sphi 0, %s193
      %s211 = sphi 0, %s211
      %s213 = sphi 0, %s211
      %s214 = sphi 0, %s213
      %s228 = sphi 0, %s214
      %s232 = sphi 0, %s232
      %s234 = sphi 0, %s232
      %s235 = sphi 0, %s234
      %s249 = sphi 0, %s235
      %s253 = sphi 0, %s253
      %s255 = sphi 0, %s253
      %s256 = sphi 0, %s255
      %s270 = sphi 0, %s256
      %s274 = sphi 0, %s274
      %s276 = sphi 0, %s274
      %s277 = sphi 0, %s276
      %s291 = sphi 0, %s277
      %s295 = sphi 0, %s295
      %s297 = sphi 0, %s295
      %s298 = sphi 0, %s297
      %s312 = sphi 0, %s298
      %s316 = sphi 0, %s316
      %s318 = sphi 0, %s316
      %s319 = sphi 0, %s318
      %s333 = sphi 0, %s319
      %s337 = sphi 0, %s337
      %s339 = sphi 0, %s337
      %s340 = sphi 0, %s339
      %s354 = sphi 0, %s340
      %s358 = sphi 0, %s358
      %s360 = sphi 0, %s358
      %s361 = sphi 0, %s360
      %s375 = sphi 0, %s361
      %s379 = sphi 0, %s379
      %s381 = sphi 0, %s379
      %s382 = sphi 0, %s381
      %s396 = sphi 0, %s382
      %s400 = sphi 0, %s400
      %s402 = sphi 0, %s400
      %s403 = sphi 0, %s402
      %s417 = sphi 0, %s403
      %s421 = sphi 0, %s421
      %s423 = sphi 0, %s421
      %s424 = sphi 0, %s423
      %s438 = sphi 0, %s424
      %s442 = sphi 0, %s442
      %s444 = sphi 0, %s442
      %s445 = sphi 0, %s444
      %s459 = sphi 0, %s445
      %s463 = sphi 0, %s463
      %s465 = sphi 0, %s463
      %s466 = sphi 0, %s465
      %s480 = sphi 0, %s466
      %s484 = sphi 0, %s484
      %s486 = sphi 0, %s484
      %s487 = sphi 0, %s486
      %s501 = sphi 0, %s487
      %s505 = sphi 0, %s505
      %s507 = sphi 0, %s505
      %s508 = sphi 0, %s507
      %s522 = sphi 0, %s508
      %s526 = sphi 0, %s526
      %s528 = sphi 0, %s526
      %s529 = sphi 0, %s528
      %s543 = sphi 0, %s529
      %s547 = sphi 0, %s547
      %s549 = sphi 0, %s547
      %s550 = sphi 0, %s549
      %s564 = sphi 0, %s550
      %s568 = sphi 0, %s568
      %s570 = sphi 0, %s568
      %s571 = sphi 0, %s570
      %s585 = sphi 0, %s571
      %s591 = sphi 0, %s593
      %s594 = sphi 0, %s591
      %s595 = sphi 0, %s594
      %s611 = sphi 0, %s595
      %s617 = sphi 0, %s619
      %s620 = sphi 0, %s617
      %s621 = sphi 0, %s620
      %s637 = sphi 0, %s621
    $region4: #{t5_forward.1} parent=1 // loop_header_branch
      %39 = sbr.rel (%p37) target = $region8
    $region5: #{t5_forward.1} parent=1 // loop_body
      %s41 = ssub.s32 %s36, 1
      %s42 = ssub.s32 %s36, 2
      %s43 = sadd.s32 %s36, 1
      %s44 = ssub.s32 %s36, %s43
      %p45 = scmp.eq.s32.totalorder %s44, 0
      %s47 = sadd.s32 %s46, 1
      %s48 = scalar_select %p45, %s46, %s47
      %p51 = pneg %p45
      %p52 = scmp.eq.s32.totalorder %s36, 1
      %p53 = por %p51, %p52
      %p54 = scmp.ne.s32.totalorder %s46, %s49
      %p55 = scmp.eq.s32.totalorder %s36, 0
      %p56 = por %p54, %p55
      %p57 = scmp.ne.s32.totalorder %s46, %s49
      %p58 = scmp.eq.s32.totalorder %s41, 1
      %p59 = por %p57, %p58
      %p60 = scmp.ne.s32.totalorder %s49, %s50
      %p61 = scmp.eq.s32.totalorder %s41, 0
      %p62 = por %p60, %p61
      %p63 = scmp.ne.s32.totalorder %s49, %s50
      %p64 = scmp.eq.s32.totalorder %s42, 1
      %p65 = por %p63, %p64
      %p67 = scmp.ne.s32.totalorder %s50, %s66
      %p68 = scmp.eq.s32.totalorder %s42, 0
      %p69 = por %p67, %p68
      %s70 = ssub.s32 %s36, %s43
      %p71 = scmp.eq.s32.totalorder %s70, 0
      %s73 = sadd.s32 %s72, 1
      %s74 = scalar_select %p71, %s72, %s73
      %p77 = pneg %p71
      %p78 = scmp.eq.s32.totalorder %s36, 1
      %p79 = por %p77, %p78
      %p80 = scmp.ne.s32.totalorder %s72, %s75
      %p81 = scmp.eq.s32.totalorder %s36, 0
      %p82 = por %p80, %p81
      %p83 = scmp.ne.s32.totalorder %s72, %s75
      %p84 = scmp.eq.s32.totalorder %s41, 1
      %p85 = por %p83, %p84
      %p86 = scmp.ne.s32.totalorder %s75, %s76
      %p87 = scmp.eq.s32.totalorder %s41, 0
      %p88 = por %p86, %p87
      %p89 = scmp.ne.s32.totalorder %s75, %s76
      %p90 = scmp.eq.s32.totalorder %s42, 1
      %p91 = por %p89, %p90
      %p93 = scmp.ne.s32.totalorder %s76, %s92
      %p94 = scmp.eq.s32.totalorder %s42, 0
      %p95 = por %p93, %p94
      %s96 = ssub.s32 %s36, %s43
      %p97 = scmp.eq.s32.totalorder %s96, 0
      %s99 = sadd.s32 %s98, 1
      %s100 = scalar_select %p97, %s98, %s99
      %p103 = pneg %p97
      %p104 = scmp.eq.s32.totalorder %s36, 1
      %p105 = por %p103, %p104
      %p106 = scmp.ne.s32.totalorder %s98, %s101
      %p107 = scmp.eq.s32.totalorder %s36, 0
      %p108 = por %p106, %p107
      %p109 = scmp.ne.s32.totalorder %s98, %s101
      %p110 = scmp.eq.s32.totalorder %s41, 1
      %p111 = por %p109, %p110
      %p112 = scmp.ne.s32.totalorder %s101, %s102
      %p113 = scmp.eq.s32.totalorder %s41, 0
      %p114 = por %p112, %p113
      %p115 = scmp.ne.s32.totalorder %s101, %s102
      %p116 = scmp.eq.s32.totalorder %s42, 1
      %p117 = por %p115, %p116
      %p119 = scmp.ne.s32.totalorder %s102, %s118
      %p120 = scmp.eq.s32.totalorder %s42, 0
      %p121 = por %p119, %p120
      %s122 = ssub.s32 %s36, %s43
      %p123 = scmp.eq.s32.totalorder %s122, 0
      %s125 = sadd.s32 %s124, 1
      %s126 = scalar_select %p123, %s124, %s125
      %p129 = pneg %p123
      %p130 = scmp.eq.s32.totalorder %s36, 1
      %p131 = por %p129, %p130
      %p132 = scmp.ne.s32.totalorder %s124, %s127
      %p133 = scmp.eq.s32.totalorder %s36, 0
      %p134 = por %p132, %p133
      %p135 = scmp.ne.s32.totalorder %s124, %s127
      %p136 = scmp.eq.s32.totalorder %s41, 1
      %p137 = por %p135, %p136
      %p138 = scmp.ne.s32.totalorder %s127, %s128
      %p139 = scmp.eq.s32.totalorder %s41, 0
      %p140 = por %p138, %p139
      %p141 = scmp.ne.s32.totalorder %s127, %s128
      %p142 = scmp.eq.s32.totalorder %s42, 1
      %p143 = por %p141, %p142
      %p145 = scmp.ne.s32.totalorder %s128, %s144
      %p146 = scmp.eq.s32.totalorder %s42, 0
      %p147 = por %p145, %p146
      %s149 = sadd.s32 %s148, 1
      %p152 = scmp.eq.s32.totalorder %s36, 1
      %p153 = scmp.ne.s32.totalorder %s148, %s150
      %p154 = scmp.eq.s32.totalorder %s36, 0
      %p155 = por %p153, %p154
      %p156 = scmp.ne.s32.totalorder %s148, %s150
      %p157 = scmp.eq.s32.totalorder %s41, 1
      %p158 = por %p156, %p157
      %p159 = scmp.ne.s32.totalorder %s150, %s151
      %p160 = scmp.eq.s32.totalorder %s41, 0
      %p161 = por %p159, %p160
      %p162 = scmp.ne.s32.totalorder %s150, %s151
      %p163 = scmp.eq.s32.totalorder %s42, 1
      %p164 = por %p162, %p163
      %p166 = scmp.ne.s32.totalorder %s151, %s165
      %p167 = scmp.eq.s32.totalorder %s42, 0
      %p168 = por %p166, %p167
      %s170 = sadd.s32 %s169, 1
      %p173 = scmp.eq.s32.totalorder %s36, 1
      %p174 = scmp.ne.s32.totalorder %s169, %s171
      %p175 = scmp.eq.s32.totalorder %s36, 0
      %p176 = por %p174, %p175
      %p177 = scmp.ne.s32.totalorder %s169, %s171
      %p178 = scmp.eq.s32.totalorder %s41, 1
      %p179 = por %p177, %p178
      %p180 = scmp.ne.s32.totalorder %s171, %s172
      %p181 = scmp.eq.s32.totalorder %s41, 0
      %p182 = por %p180, %p181
      %p183 = scmp.ne.s32.totalorder %s171, %s172
      %p184 = scmp.eq.s32.totalorder %s42, 1
      %p185 = por %p183, %p184
      %p187 = scmp.ne.s32.totalorder %s172, %s186
      %p188 = scmp.eq.s32.totalorder %s42, 0
      %p189 = por %p187, %p188
      %s191 = sadd.s32 %s190, 1
      %p194 = scmp.eq.s32.totalorder %s36, 1
      %p195 = scmp.ne.s32.totalorder %s190, %s192
      %p196 = scmp.eq.s32.totalorder %s36, 0
      %p197 = por %p195, %p196
      %p198 = scmp.ne.s32.totalorder %s190, %s192
      %p199 = scmp.eq.s32.totalorder %s41, 1
      %p200 = por %p198, %p199
      %p201 = scmp.ne.s32.totalorder %s192, %s193
      %p202 = scmp.eq.s32.totalorder %s41, 0
      %p203 = por %p201, %p202
      %p204 = scmp.ne.s32.totalorder %s192, %s193
      %p205 = scmp.eq.s32.totalorder %s42, 1
      %p206 = por %p204, %p205
      %p208 = scmp.ne.s32.totalorder %s193, %s207
      %p209 = scmp.eq.s32.totalorder %s42, 0
      %p210 = por %p208, %p209
      %s212 = sadd.s32 %s211, 1
      %p215 = scmp.eq.s32.totalorder %s36, 1
      %p216 = scmp.ne.s32.totalorder %s211, %s213
      %p217 = scmp.eq.s32.totalorder %s36, 0
      %p218 = por %p216, %p217
      %p219 = scmp.ne.s32.totalorder %s211, %s213
      %p220 = scmp.eq.s32.totalorder %s41, 1
      %p221 = por %p219, %p220
      %p222 = scmp.ne.s32.totalorder %s213, %s214
      %p223 = scmp.eq.s32.totalorder %s41, 0
      %p224 = por %p222, %p223
      %p225 = scmp.ne.s32.totalorder %s213, %s214
      %p226 = scmp.eq.s32.totalorder %s42, 1
      %p227 = por %p225, %p226
      %p229 = scmp.ne.s32.totalorder %s214, %s228
      %p230 = scmp.eq.s32.totalorder %s42, 0
      %p231 = por %p229, %p230
      %s233 = sadd.s32 %s232, 1
      %p236 = scmp.eq.s32.totalorder %s36, 1
      %p237 = scmp.ne.s32.totalorder %s232, %s234
      %p238 = scmp.eq.s32.totalorder %s36, 0
      %p239 = por %p237, %p238
      %p240 = scmp.ne.s32.totalorder %s232, %s234
      %p241 = scmp.eq.s32.totalorder %s41, 1
      %p242 = por %p240, %p241
      %p243 = scmp.ne.s32.totalorder %s234, %s235
      %p244 = scmp.eq.s32.totalorder %s41, 0
      %p245 = por %p243, %p244
      %p246 = scmp.ne.s32.totalorder %s234, %s235
      %p247 = scmp.eq.s32.totalorder %s42, 1
      %p248 = por %p246, %p247
      %p250 = scmp.ne.s32.totalorder %s235, %s249
      %p251 = scmp.eq.s32.totalorder %s42, 0
      %p252 = por %p250, %p251
      %s254 = sadd.s32 %s253, 1
      %p257 = scmp.eq.s32.totalorder %s36, 1
      %p258 = scmp.ne.s32.totalorder %s253, %s255
      %p259 = scmp.eq.s32.totalorder %s36, 0
      %p260 = por %p258, %p259
      %p261 = scmp.ne.s32.totalorder %s253, %s255
      %p262 = scmp.eq.s32.totalorder %s41, 1
      %p263 = por %p261, %p262
      %p264 = scmp.ne.s32.totalorder %s255, %s256
      %p265 = scmp.eq.s32.totalorder %s41, 0
      %p266 = por %p264, %p265
      %p267 = scmp.ne.s32.totalorder %s255, %s256
      %p268 = scmp.eq.s32.totalorder %s42, 1
      %p269 = por %p267, %p268
      %p271 = scmp.ne.s32.totalorder %s256, %s270
      %p272 = scmp.eq.s32.totalorder %s42, 0
      %p273 = por %p271, %p272
      %s275 = sadd.s32 %s274, 1
      %p278 = scmp.eq.s32.totalorder %s36, 1
      %p279 = scmp.ne.s32.totalorder %s274, %s276
      %p280 = scmp.eq.s32.totalorder %s36, 0
      %p281 = por %p279, %p280
      %p282 = scmp.ne.s32.totalorder %s274, %s276
      %p283 = scmp.eq.s32.totalorder %s41, 1
      %p284 = por %p282, %p283
      %p285 = scmp.ne.s32.totalorder %s276, %s277
      %p286 = scmp.eq.s32.totalorder %s41, 0
      %p287 = por %p285, %p286
      %p288 = scmp.ne.s32.totalorder %s276, %s277
      %p289 = scmp.eq.s32.totalorder %s42, 1
      %p290 = por %p288, %p289
      %p292 = scmp.ne.s32.totalorder %s277, %s291
      %p293 = scmp.eq.s32.totalorder %s42, 0
      %p294 = por %p292, %p293
      %s296 = sadd.s32 %s295, 1
      %p299 = scmp.eq.s32.totalorder %s36, 1
      %p300 = scmp.ne.s32.totalorder %s295, %s297
      %p301 = scmp.eq.s32.totalorder %s36, 0
      %p302 = por %p300, %p301
      %p303 = scmp.ne.s32.totalorder %s295, %s297
      %p304 = scmp.eq.s32.totalorder %s41, 1
      %p305 = por %p303, %p304
      %p306 = scmp.ne.s32.totalorder %s297, %s298
      %p307 = scmp.eq.s32.totalorder %s41, 0
      %p308 = por %p306, %p307
      %p309 = scmp.ne.s32.totalorder %s297, %s298
      %p310 = scmp.eq.s32.totalorder %s42, 1
      %p311 = por %p309, %p310
      %p313 = scmp.ne.s32.totalorder %s298, %s312
      %p314 = scmp.eq.s32.totalorder %s42, 0
      %p315 = por %p313, %p314
      %s317 = sadd.s32 %s316, 1
      %p320 = scmp.eq.s32.totalorder %s36, 1
      %p321 = scmp.ne.s32.totalorder %s316, %s318
      %p322 = scmp.eq.s32.totalorder %s36, 0
      %p323 = por %p321, %p322
      %p324 = scmp.ne.s32.totalorder %s316, %s318
      %p325 = scmp.eq.s32.totalorder %s41, 1
      %p326 = por %p324, %p325
      %p327 = scmp.ne.s32.totalorder %s318, %s319
      %p328 = scmp.eq.s32.totalorder %s41, 0
      %p329 = por %p327, %p328
      %p330 = scmp.ne.s32.totalorder %s318, %s319
      %p331 = scmp.eq.s32.totalorder %s42, 1
      %p332 = por %p330, %p331
      %p334 = scmp.ne.s32.totalorder %s319, %s333
      %p335 = scmp.eq.s32.totalorder %s42, 0
      %p336 = por %p334, %p335
      %s338 = sadd.s32 %s337, 1
      %p341 = scmp.eq.s32.totalorder %s36, 1
      %p342 = scmp.ne.s32.totalorder %s337, %s339
      %p343 = scmp.eq.s32.totalorder %s36, 0
      %p344 = por %p342, %p343
      %p345 = scmp.ne.s32.totalorder %s337, %s339
      %p346 = scmp.eq.s32.totalorder %s41, 1
      %p347 = por %p345, %p346
      %p348 = scmp.ne.s32.totalorder %s339, %s340
      %p349 = scmp.eq.s32.totalorder %s41, 0
      %p350 = por %p348, %p349
      %p351 = scmp.ne.s32.totalorder %s339, %s340
      %p352 = scmp.eq.s32.totalorder %s42, 1
      %p353 = por %p351, %p352
      %p355 = scmp.ne.s32.totalorder %s340, %s354
      %p356 = scmp.eq.s32.totalorder %s42, 0
      %p357 = por %p355, %p356
      %s359 = sadd.s32 %s358, 1
      %p362 = scmp.eq.s32.totalorder %s36, 1
      %p363 = scmp.ne.s32.totalorder %s358, %s360
      %p364 = scmp.eq.s32.totalorder %s36, 0
      %p365 = por %p363, %p364
      %p366 = scmp.ne.s32.totalorder %s358, %s360
      %p367 = scmp.eq.s32.totalorder %s41, 1
      %p368 = por %p366, %p367
      %p369 = scmp.ne.s32.totalorder %s360, %s361
      %p370 = scmp.eq.s32.totalorder %s41, 0
      %p371 = por %p369, %p370
      %p372 = scmp.ne.s32.totalorder %s360, %s361
      %p373 = scmp.eq.s32.totalorder %s42, 1
      %p374 = por %p372, %p373
      %p376 = scmp.ne.s32.totalorder %s361, %s375
      %p377 = scmp.eq.s32.totalorder %s42, 0
      %p378 = por %p376, %p377
      %s380 = sadd.s32 %s379, 1
      %p383 = scmp.eq.s32.totalorder %s36, 1
      %p384 = scmp.ne.s32.totalorder %s379, %s381
      %p385 = scmp.eq.s32.totalorder %s36, 0
      %p386 = por %p384, %p385
      %p387 = scmp.ne.s32.totalorder %s379, %s381
      %p388 = scmp.eq.s32.totalorder %s41, 1
      %p389 = por %p387, %p388
      %p390 = scmp.ne.s32.totalorder %s381, %s382
      %p391 = scmp.eq.s32.totalorder %s41, 0
      %p392 = por %p390, %p391
      %p393 = scmp.ne.s32.totalorder %s381, %s382
      %p394 = scmp.eq.s32.totalorder %s42, 1
      %p395 = por %p393, %p394
      %p397 = scmp.ne.s32.totalorder %s382, %s396
      %p398 = scmp.eq.s32.totalorder %s42, 0
      %p399 = por %p397, %p398
      %s401 = sadd.s32 %s400, 1
      %p404 = scmp.eq.s32.totalorder %s36, 1
      %p405 = scmp.ne.s32.totalorder %s400, %s402
      %p406 = scmp.eq.s32.totalorder %s36, 0
      %p407 = por %p405, %p406
      %p408 = scmp.ne.s32.totalorder %s400, %s402
      %p409 = scmp.eq.s32.totalorder %s41, 1
      %p410 = por %p408, %p409
      %p411 = scmp.ne.s32.totalorder %s402, %s403
      %p412 = scmp.eq.s32.totalorder %s41, 0
      %p413 = por %p411, %p412
      %p414 = scmp.ne.s32.totalorder %s402, %s403
      %p415 = scmp.eq.s32.totalorder %s42, 1
      %p416 = por %p414, %p415
      %p418 = scmp.ne.s32.totalorder %s403, %s417
      %p419 = scmp.eq.s32.totalorder %s42, 0
      %p420 = por %p418, %p419
      %s422 = sadd.s32 %s421, 1
      %p425 = scmp.eq.s32.totalorder %s36, 1
      %p426 = scmp.ne.s32.totalorder %s421, %s423
      %p427 = scmp.eq.s32.totalorder %s36, 0
      %p428 = por %p426, %p427
      %p429 = scmp.ne.s32.totalorder %s421, %s423
      %p430 = scmp.eq.s32.totalorder %s41, 1
      %p431 = por %p429, %p430
      %p432 = scmp.ne.s32.totalorder %s423, %s424
      %p433 = scmp.eq.s32.totalorder %s41, 0
      %p434 = por %p432, %p433
      %p435 = scmp.ne.s32.totalorder %s423, %s424
      %p436 = scmp.eq.s32.totalorder %s42, 1
      %p437 = por %p435, %p436
      %p439 = scmp.ne.s32.totalorder %s424, %s438
      %p440 = scmp.eq.s32.totalorder %s42, 0
      %p441 = por %p439, %p440
      %s443 = sadd.s32 %s442, 1
      %p446 = scmp.eq.s32.totalorder %s36, 1
      %p447 = scmp.ne.s32.totalorder %s442, %s444
      %p448 = scmp.eq.s32.totalorder %s36, 0
      %p449 = por %p447, %p448
      %p450 = scmp.ne.s32.totalorder %s442, %s444
      %p451 = scmp.eq.s32.totalorder %s41, 1
      %p452 = por %p450, %p451
      %p453 = scmp.ne.s32.totalorder %s444, %s445
      %p454 = scmp.eq.s32.totalorder %s41, 0
      %p455 = por %p453, %p454
      %p456 = scmp.ne.s32.totalorder %s444, %s445
      %p457 = scmp.eq.s32.totalorder %s42, 1
      %p458 = por %p456, %p457
      %p460 = scmp.ne.s32.totalorder %s445, %s459
      %p461 = scmp.eq.s32.totalorder %s42, 0
      %p462 = por %p460, %p461
      %s464 = sadd.s32 %s463, 1
      %p467 = scmp.eq.s32.totalorder %s36, 1
      %p468 = scmp.ne.s32.totalorder %s463, %s465
      %p469 = scmp.eq.s32.totalorder %s36, 0
      %p470 = por %p468, %p469
      %p471 = scmp.ne.s32.totalorder %s463, %s465
      %p472 = scmp.eq.s32.totalorder %s41, 1
      %p473 = por %p471, %p472
      %p474 = scmp.ne.s32.totalorder %s465, %s466
      %p475 = scmp.eq.s32.totalorder %s41, 0
      %p476 = por %p474, %p475
      %p477 = scmp.ne.s32.totalorder %s465, %s466
      %p478 = scmp.eq.s32.totalorder %s42, 1
      %p479 = por %p477, %p478
      %p481 = scmp.ne.s32.totalorder %s466, %s480
      %p482 = scmp.eq.s32.totalorder %s42, 0
      %p483 = por %p481, %p482
      %s485 = sadd.s32 %s484, 1
      %p488 = scmp.eq.s32.totalorder %s36, 1
      %p489 = scmp.ne.s32.totalorder %s484, %s486
      %p490 = scmp.eq.s32.totalorder %s36, 0
      %p491 = por %p489, %p490
      %p492 = scmp.ne.s32.totalorder %s484, %s486
      %p493 = scmp.eq.s32.totalorder %s41, 1
      %p494 = por %p492, %p493
      %p495 = scmp.ne.s32.totalorder %s486, %s487
      %p496 = scmp.eq.s32.totalorder %s41, 0
      %p497 = por %p495, %p496
      %p498 = scmp.ne.s32.totalorder %s486, %s487
      %p499 = scmp.eq.s32.totalorder %s42, 1
      %p500 = por %p498, %p499
      %p502 = scmp.ne.s32.totalorder %s487, %s501
      %p503 = scmp.eq.s32.totalorder %s42, 0
      %p504 = por %p502, %p503
      %s506 = sadd.s32 %s505, 1
      %p509 = scmp.eq.s32.totalorder %s36, 1
      %p510 = scmp.ne.s32.totalorder %s505, %s507
      %p511 = scmp.eq.s32.totalorder %s36, 0
      %p512 = por %p510, %p511
      %p513 = scmp.ne.s32.totalorder %s505, %s507
      %p514 = scmp.eq.s32.totalorder %s41, 1
      %p515 = por %p513, %p514
      %p516 = scmp.ne.s32.totalorder %s507, %s508
      %p517 = scmp.eq.s32.totalorder %s41, 0
      %p518 = por %p516, %p517
      %p519 = scmp.ne.s32.totalorder %s507, %s508
      %p520 = scmp.eq.s32.totalorder %s42, 1
      %p521 = por %p519, %p520
      %p523 = scmp.ne.s32.totalorder %s508, %s522
      %p524 = scmp.eq.s32.totalorder %s42, 0
      %p525 = por %p523, %p524
      %s527 = sadd.s32 %s526, 1
      %p530 = scmp.eq.s32.totalorder %s36, 1
      %p531 = scmp.ne.s32.totalorder %s526, %s528
      %p532 = scmp.eq.s32.totalorder %s36, 0
      %p533 = por %p531, %p532
      %p534 = scmp.ne.s32.totalorder %s526, %s528
      %p535 = scmp.eq.s32.totalorder %s41, 1
      %p536 = por %p534, %p535
      %p537 = scmp.ne.s32.totalorder %s528, %s529
      %p538 = scmp.eq.s32.totalorder %s41, 0
      %p539 = por %p537, %p538
      %p540 = scmp.ne.s32.totalorder %s528, %s529
      %p541 = scmp.eq.s32.totalorder %s42, 1
      %p542 = por %p540, %p541
      %p544 = scmp.ne.s32.totalorder %s529, %s543
      %p545 = scmp.eq.s32.totalorder %s42, 0
      %p546 = por %p544, %p545
      %s548 = sadd.s32 %s547, 1
      %p551 = scmp.eq.s32.totalorder %s36, 1
      %p552 = scmp.ne.s32.totalorder %s547, %s549
      %p553 = scmp.eq.s32.totalorder %s36, 0
      %p554 = por %p552, %p553
      %p555 = scmp.ne.s32.totalorder %s547, %s549
      %p556 = scmp.eq.s32.totalorder %s41, 1
      %p557 = por %p555, %p556
      %p558 = scmp.ne.s32.totalorder %s549, %s550
      %p559 = scmp.eq.s32.totalorder %s41, 0
      %p560 = por %p558, %p559
      %p561 = scmp.ne.s32.totalorder %s549, %s550
      %p562 = scmp.eq.s32.totalorder %s42, 1
      %p563 = por %p561, %p562
      %p565 = scmp.ne.s32.totalorder %s550, %s564
      %p566 = scmp.eq.s32.totalorder %s42, 0
      %p567 = por %p565, %p566
      %s569 = sadd.s32 %s568, 1
      %p572 = scmp.eq.s32.totalorder %s36, 1
      %p573 = scmp.ne.s32.totalorder %s568, %s570
      %p574 = scmp.eq.s32.totalorder %s36, 0
      %p575 = por %p573, %p574
      %p576 = scmp.ne.s32.totalorder %s568, %s570
      %p577 = scmp.eq.s32.totalorder %s41, 1
      %p578 = por %p576, %p577
      %p579 = scmp.ne.s32.totalorder %s570, %s571
      %p580 = scmp.eq.s32.totalorder %s41, 0
      %p581 = por %p579, %p580
      %p582 = scmp.ne.s32.totalorder %s570, %s571
      %p583 = scmp.eq.s32.totalorder %s42, 1
      %p584 = por %p582, %p583
      %p586 = scmp.ne.s32.totalorder %s571, %s585
      %p587 = scmp.eq.s32.totalorder %s42, 0
      %p588 = por %p586, %p587
      %s589 = ssub.s32 %s36, %s43
      %p590 = scmp.eq.s32.totalorder %s589, 0
      %s592 = sadd.s32 %s591, 1
      %s593 = scalar_select %p590, %s591, %s592
      %p596 = pneg %p590
      %p597 = scmp.eq.s32.totalorder %s36, 1
      %p598 = por %p596, %p597
      %p599 = scmp.ne.s32.totalorder %s591, %s594
      %p600 = scmp.eq.s32.totalorder %s36, 0
      %p601 = por %p599, %p600
      %p602 = scmp.ne.s32.totalorder %s591, %s594
      %p603 = scmp.eq.s32.totalorder %s41, 1
      %p604 = por %p602, %p603
      %p605 = scmp.ne.s32.totalorder %s594, %s595
      %p606 = scmp.eq.s32.totalorder %s41, 0
      %p607 = por %p605, %p606
      %p608 = scmp.ne.s32.totalorder %s594, %s595
      %p609 = scmp.eq.s32.totalorder %s42, 1
      %p610 = por %p608, %p609
      %p612 = scmp.ne.s32.totalorder %s595, %s611
      %p613 = scmp.eq.s32.totalorder %s42, 0
      %p614 = por %p612, %p613
      %s615 = ssub.s32 %s36, %s43
      %p616 = scmp.eq.s32.totalorder %s615, 0
      %s618 = sadd.s32 %s617, 1
      %s619 = scalar_select %p616, %s617, %s618
      %p622 = pneg %p616
      %p623 = scmp.eq.s32.totalorder %s36, 1
      %p624 = por %p622, %p623
      %p625 = scmp.ne.s32.totalorder %s617, %s620
      %p626 = scmp.eq.s32.totalorder %s36, 0
      %p627 = por %p625, %p626
      %p628 = scmp.ne.s32.totalorder %s617, %s620
      %p629 = scmp.eq.s32.totalorder %s41, 1
      %p630 = por %p628, %p629
      %p631 = scmp.ne.s32.totalorder %s620, %s621
      %p632 = scmp.eq.s32.totalorder %s41, 0
      %p633 = por %p631, %p632
      %p634 = scmp.ne.s32.totalorder %s620, %s621
      %p635 = scmp.eq.s32.totalorder %s42, 1
      %p636 = por %p634, %p635
      %p638 = scmp.ne.s32.totalorder %s621, %s637
      %p639 = scmp.eq.s32.totalorder %s42, 0
      %p640 = por %p638, %p639
      %p641 = scmp.le.s32.totalorder 1, %s36
      %p642 = scmp.lt.s32.totalorder %s36, 3
      %p643 = pnand %p641, %p642
      %p644 = pneg %p643
      // Predicated region
      $region9: #{t5_forward.1} parent=5 // pred_check
        _
      $region10: #{t5_forward.1} parent=5 // pred_check_branch
        %646 = sbr.rel (%p643) target = $region12
      $region11: #{t5_forward.1} parent=5 // pred_region
        %s647 = ssub.s32 %s36, 1
        // Predicated region
        $region13: #{t5_forward.1} parent=11 // pred_check
          %p648 = pneg %p161
        $region14: #{t5_forward.1} parent=11 // pred_check_branch
          %650 = sbr.rel (%p648) target = $region16
        $region15: #{t5_forward.1} parent=11 // pred_region
          _
        $region16: #{t5_forward.1} parent=11 // pred_fallthru
          _
        // Predicated region
        $region17: #{t5_forward.1} parent=11 // pred_check
          %p651 = pneg %p182
        $region18: #{t5_forward.1} parent=11 // pred_check_branch
          %653 = sbr.rel (%p651) target = $region20
        $region19: #{t5_forward.1} parent=11 // pred_region
          _
        $region20: #{t5_forward.1} parent=11 // pred_fallthru
          _
        // Predicated region
        $region21: #{t5_forward.1} parent=11 // pred_check
          %p654 = pneg %p203
        $region22: #{t5_forward.1} parent=11 // pred_check_branch
          %656 = sbr.rel (%p654) target = $region24
        $region23: #{t5_forward.1} parent=11 // pred_region
          _
        $region24: #{t5_forward.1} parent=11 // pred_fallthru
          _
        // Predicated region
        $region25: #{t5_forward.1} parent=11 // pred_check
          %p657 = pneg %p224
        $region26: #{t5_forward.1} parent=11 // pred_check_branch
          %659 = sbr.rel (%p657) target = $region28
        $region27: #{t5_forward.1} parent=11 // pred_region
          _
        $region28: #{t5_forward.1} parent=11 // pred_fallthru
          _
        // Predicated region
        $region29: #{t5_forward.1} parent=11 // pred_check
          %p660 = pneg %p245
        $region30: #{t5_forward.1} parent=11 // pred_check_branch
          %662 = sbr.rel (%p660) target = $region32
        $region31: #{t5_forward.1} parent=11 // pred_region
          _
        $region32: #{t5_forward.1} parent=11 // pred_fallthru
          _
        // Predicated region
        $region33: #{t5_forward.1} parent=11 // pred_check
          %p663 = pneg %p266
        $region34: #{t5_forward.1} parent=11 // pred_check_branch
          %665 = sbr.rel (%p663) target = $region36
        $region35: #{t5_forward.1} parent=11 // pred_region
          _
        $region36: #{t5_forward.1} parent=11 // pred_fallthru
          _
        // Predicated region
        $region37: #{t5_forward.1} parent=11 // pred_check
          %p666 = pneg %p287
        $region38: #{t5_forward.1} parent=11 // pred_check_branch
          %668 = sbr.rel (%p666) target = $region40
        $region39: #{t5_forward.1} parent=11 // pred_region
          _
        $region40: #{t5_forward.1} parent=11 // pred_fallthru
          _
        // Predicated region
        $region41: #{t5_forward.1} parent=11 // pred_check
          %p669 = pneg %p308
        $region42: #{t5_forward.1} parent=11 // pred_check_branch
          %671 = sbr.rel (%p669) target = $region44
        $region43: #{t5_forward.1} parent=11 // pred_region
          _
        $region44: #{t5_forward.1} parent=11 // pred_fallthru
          _
        // Predicated region
        $region45: #{t5_forward.1} parent=11 // pred_check
          %p672 = pneg %p329
        $region46: #{t5_forward.1} parent=11 // pred_check_branch
          %674 = sbr.rel (%p672) target = $region48
        $region47: #{t5_forward.1} parent=11 // pred_region
          _
        $region48: #{t5_forward.1} parent=11 // pred_fallthru
          _
        // Predicated region
        $region49: #{t5_forward.1} parent=11 // pred_check
          %p675 = pneg %p350
        $region50: #{t5_forward.1} parent=11 // pred_check_branch
          %677 = sbr.rel (%p675) target = $region52
        $region51: #{t5_forward.1} parent=11 // pred_region
          _
        $region52: #{t5_forward.1} parent=11 // pred_fallthru
          _
        // Predicated region
        $region53: #{t5_forward.1} parent=11 // pred_check
          %p678 = pneg %p371
        $region54: #{t5_forward.1} parent=11 // pred_check_branch
          %680 = sbr.rel (%p678) target = $region56
        $region55: #{t5_forward.1} parent=11 // pred_region
          _
        $region56: #{t5_forward.1} parent=11 // pred_fallthru
          _
        // Predicated region
        $region57: #{t5_forward.1} parent=11 // pred_check
          %p681 = pneg %p392
        $region58: #{t5_forward.1} parent=11 // pred_check_branch
          %683 = sbr.rel (%p681) target = $region60
        $region59: #{t5_forward.1} parent=11 // pred_region
          _
        $region60: #{t5_forward.1} parent=11 // pred_fallthru
          _
        // Predicated region
        $region61: #{t5_forward.1} parent=11 // pred_check
          %p684 = pneg %p413
        $region62: #{t5_forward.1} parent=11 // pred_check_branch
          %686 = sbr.rel (%p684) target = $region64
        $region63: #{t5_forward.1} parent=11 // pred_region
          _
        $region64: #{t5_forward.1} parent=11 // pred_fallthru
          _
        // Predicated region
        $region65: #{t5_forward.1} parent=11 // pred_check
          %p687 = pneg %p434
        $region66: #{t5_forward.1} parent=11 // pred_check_branch
          %689 = sbr.rel (%p687) target = $region68
        $region67: #{t5_forward.1} parent=11 // pred_region
          _
        $region68: #{t5_forward.1} parent=11 // pred_fallthru
          _
        // Predicated region
        $region69: #{t5_forward.1} parent=11 // pred_check
          %p690 = pneg %p455
        $region70: #{t5_forward.1} parent=11 // pred_check_branch
          %692 = sbr.rel (%p690) target = $region72
        $region71: #{t5_forward.1} parent=11 // pred_region
          _
        $region72: #{t5_forward.1} parent=11 // pred_fallthru
          _
        // Predicated region
        $region73: #{t5_forward.1} parent=11 // pred_check
          %p693 = pneg %p476
        $region74: #{t5_forward.1} parent=11 // pred_check_branch
          %695 = sbr.rel (%p693) target = $region76
        $region75: #{t5_forward.1} parent=11 // pred_region
          _
        $region76: #{t5_forward.1} parent=11 // pred_fallthru
          _
        // Predicated region
        $region77: #{t5_forward.1} parent=11 // pred_check
          %p696 = pneg %p497
        $region78: #{t5_forward.1} parent=11 // pred_check_branch
          %698 = sbr.rel (%p696) target = $region80
        $region79: #{t5_forward.1} parent=11 // pred_region
          _
        $region80: #{t5_forward.1} parent=11 // pred_fallthru
          _
        // Predicated region
        $region81: #{t5_forward.1} parent=11 // pred_check
          %p699 = pneg %p518
        $region82: #{t5_forward.1} parent=11 // pred_check_branch
          %701 = sbr.rel (%p699) target = $region84
        $region83: #{t5_forward.1} parent=11 // pred_region
          _
        $region84: #{t5_forward.1} parent=11 // pred_fallthru
          _
        // Predicated region
        $region85: #{t5_forward.1} parent=11 // pred_check
          %p702 = pneg %p539
        $region86: #{t5_forward.1} parent=11 // pred_check_branch
          %704 = sbr.rel (%p702) target = $region88
        $region87: #{t5_forward.1} parent=11 // pred_region
          _
        $region88: #{t5_forward.1} parent=11 // pred_fallthru
          _
        // Predicated region
        $region89: #{t5_forward.1} parent=11 // pred_check
          %p705 = pneg %p560
        $region90: #{t5_forward.1} parent=11 // pred_check_branch
          %707 = sbr.rel (%p705) target = $region92
        $region91: #{t5_forward.1} parent=11 // pred_region
          _
        $region92: #{t5_forward.1} parent=11 // pred_fallthru
          _
        // Predicated region
        $region93: #{t5_forward.1} parent=11 // pred_check
          %p708 = pneg %p581
        $region94: #{t5_forward.1} parent=11 // pred_check_branch
          %710 = sbr.rel (%p708) target = $region96
        $region95: #{t5_forward.1} parent=11 // pred_region
          _
        $region96: #{t5_forward.1} parent=11 // pred_fallthru
          _
      $region12: #{t5_forward.1} parent=5 // pred_fallthru
        _
      %p711 = scmp.lt.s32.totalorder %s36, 2
      // Predicated region
      $region97: #{t5_forward.1} parent=5 // pred_check
        %p712 = pneg %p711
      $region98: #{t5_forward.1} parent=5 // pred_check_branch
        %714 = sbr.rel (%p712) target = $region100
      $region99: #{t5_forward.1} parent=5 // pred_region
        // Predicated region
        $region101: #{t5_forward.1} parent=99 // pred_check
          %p715 = pneg %p56
        $region102: #{t5_forward.1} parent=99 // pred_check_branch
          %717 = sbr.rel (%p715) target = $region104
        $region103: #{t5_forward.1} parent=99 // pred_region
          %p718 = scmp.lt.s32.totalorder %s36, 1
          %s719 = scalar_select %p718, %s36, 1
          %s720 = smul.addr %s719, 8
          %s721 = scalar_lea.vmem %s0, %s720
        $region104: #{t5_forward.1} parent=99 // pred_fallthru
          _
        // Predicated region
        $region105: #{t5_forward.1} parent=99 // pred_check
          %p722 = pneg %p82
        $region106: #{t5_forward.1} parent=99 // pred_check_branch
          %724 = sbr.rel (%p722) target = $region108
        $region107: #{t5_forward.1} parent=99 // pred_region
          %p725 = scmp.lt.s32.totalorder %s36, 1
          %s726 = scalar_select %p725, %s36, 1
          %s727 = smul.addr %s726, 8
          %s728 = scalar_lea.vmem %s1, %s727
        $region108: #{t5_forward.1} parent=99 // pred_fallthru
          _
        // Predicated region
        $region109: #{t5_forward.1} parent=99 // pred_check
          %p729 = pneg %p108
        $region110: #{t5_forward.1} parent=99 // pred_check_branch
          %731 = sbr.rel (%p729) target = $region112
        $region111: #{t5_forward.1} parent=99 // pred_region
          %p732 = scmp.lt.s32.totalorder %s36, 1
          %s733 = scalar_select %p732, %s36, 1
          %s734 = smul.addr %s733, 8
          %s735 = scalar_lea.vmem %s2, %s734
        $region112: #{t5_forward.1} parent=99 // pred_fallthru
          _
        // Predicated region
        $region113: #{t5_forward.1} parent=99 // pred_check
          %p736 = pneg %p134
        $region114: #{t5_forward.1} parent=99 // pred_check_branch
          %738 = sbr.rel (%p736) target = $region116
        $region115: #{t5_forward.1} parent=99 // pred_region
          %p739 = scmp.lt.s32.totalorder %s36, 1
          %s740 = scalar_select %p739, %s36, 1
          %s741 = scalar_lea.vmem %s3, %s740
        $region116: #{t5_forward.1} parent=99 // pred_fallthru
          _
      $region100: #{t5_forward.1} parent=5 // pred_fallthru
        _
      %p742 = scmp.le.s32.totalorder 1, %s36
      %p743 = scmp.lt.s32.totalorder %s36, 3
      %p744 = pnand %p742, %p743
      %p745 = pneg %p744
      // Predicated region
      $region117: #{t5_forward.1} parent=5 // pred_check
        _
      $region118: #{t5_forward.1} parent=5 // pred_check_branch
        %747 = sbr.rel (%p744) target = $region120
      $region119: #{t5_forward.1} parent=5 // pred_region
        %s748 = ssub.s32 %s36, 1
        %p749 = scmp.lt.s32.totalorder %s41, 1
        %s750 = scalar_select %p749, %s41, 1
        %s751 = smul.addr %s750, 8
        %s752 = scalar_lea.vmem %s0, %s751
        %p753 = pneg %p62
        %p754 = pneg %p59
        %p755 = scmp.lt.s32.totalorder %s41, 1
        %s756 = scalar_select %p755, %s41, 1
        %s757 = smul.addr %s756, 8
        %s758 = scalar_lea.vmem %s1, %s757
        %p759 = pneg %p88
        %p760 = pneg %p85
        %p761 = scmp.lt.s32.totalorder %s41, 1
        %s762 = scalar_select %p761, %s41, 1
        %s763 = smul.addr %s762, 8
        %s764 = scalar_lea.vmem %s2, %s763
        %p765 = pneg %p114
        %p766 = pneg %p111
        %p767 = scmp.lt.s32.totalorder %s41, 1
        %s768 = scalar_select %p767, %s41, 1
        %s769 = scalar_lea.vmem %s3, %s768
        %p770 = pneg %p140
        %p771 = pneg %p137
        %p772 = pneg %p161
        %p773 = pneg %p158
        %p774 = pneg %p182
        %p775 = pneg %p179
        %p776 = pneg %p203
        %p777 = pneg %p200
        %p778 = pneg %p224
        %p779 = pneg %p221
        %p780 = pneg %p245
        %p781 = pneg %p242
        %p782 = pneg %p266
        %p783 = pneg %p263
        %p784 = pneg %p287
        %p785 = pneg %p284
        %p786 = pneg %p308
        %p787 = pneg %p305
        %p788 = pneg %p329
        %p789 = pneg %p326
        %p790 = pneg %p350
        %p791 = pneg %p347
        %p792 = pneg %p371
        %p793 = pneg %p368
        %p794 = pneg %p392
        %p795 = pneg %p389
        %p796 = pneg %p413
        %p797 = pneg %p410
        %p798 = pneg %p434
        %p799 = pneg %p431
        %p800 = pneg %p455
        %p801 = pneg %p452
        %p802 = pneg %p476
        %p803 = pneg %p473
        %p804 = pneg %p497
        %p805 = pneg %p494
        %p806 = pneg %p518
        %p807 = pneg %p515
        %p808 = pneg %p539
        %p809 = pneg %p536
        %p810 = pneg %p560
        %p811 = pneg %p557
        %p812 = pneg %p581
        %p813 = pneg %p578
        %p814 = pneg %p607
        %p815 = pneg %p604
        %s816 = sand.u32 %s594, 1
        %s817 = scalar_lea.sflag [#allocation3], %s816
        %s818 = sand.u32 %s594, 1
        %s819 = smul.addr %s818, 8
        %s820 = scalar_lea.vmem [#allocation2], %s819
        %p821 = pneg %p633
        %p822 = pneg %p630
        %p823 = scmp.lt.s32.totalorder %s41, 1
        %s824 = scalar_select %p823, %s41, 1
        %s825 = smul.addr %s824, 8
        %s826 = scalar_lea.vmem %s26, %s825
        %p827 = scmp.lt.s32.totalorder %s41, 1
        %s828 = scalar_select %p827, %s41, 1
        %s829 = smul.addr %s828, 8
        %s830 = scalar_lea.vmem %s0, %s829
        %p831 = scmp.lt.s32.totalorder %s41, 1
        %s832 = scalar_select %p831, %s41, 1
        %s833 = smul.addr %s832, 8
        %s834 = scalar_lea.vmem %s1, %s833
        %p835 = scmp.lt.s32.totalorder %s41, 1
        %s836 = scalar_select %p835, %s41, 1
        %s837 = smul.addr %s836, 8
        %s838 = scalar_lea.vmem %s2, %s837
        %p839 = scmp.lt.s32.totalorder %s41, 1
        %s840 = scalar_select %p839, %s41, 1
        %s841 = scalar_lea.vmem %s3, %s840
        %p842 = scmp.lt.s32.totalorder %s41, 1
        %s843 = scalar_select %p842, %s41, 1
        %s844 = smul.addr %s843, 8
        %s845 = scalar_lea.vmem %s26, %s844
        %v846 = vld [vmem:[%s841] sm:$0x1]
        %v847 = vld [vmem:[%s830] sm:$0xff]
        %v848 = vlaneseq
        %v849 = vand.u32 %v848, 127
        %850 = vset.pattern.permute.xlu0 0
        %851 = vperm.xlu0 %850, %v847
        %v852 = vpop.permute.xlu0 %851
        %vm853 = vcmp.eq.s32.totalorder %v849, %v852
        %v854 = vsel %vm853, 1, 0
        %v855 = vcvt.s32.f32 %v854
        %v856 = vld [vmem:[%s6] sm:$0xff]
        %v857 = vld [vmem:[%s6 + $0x8] sm:$0xff]
        %v858 = vld [vmem:[%s6 + $0x10] sm:$0xff]
        %v859 = vld [vmem:[%s6 + $0x18] sm:$0xff]
        %v860 = vld [vmem:[%s6 + $0x20] sm:$0xff]
        %v861 = vld [vmem:[%s6 + $0x28] sm:$0xff]
        %v862 = vld [vmem:[%s6 + $0x30] sm:$0xff]
        %v863 = vld [vmem:[%s6 + $0x38] sm:$0xff]
        %v864 = vld [vmem:[%s6 + $0x40] sm:$0xff]
        %v865 = vld [vmem:[%s6 + $0x48] sm:$0xff]
        %v866 = vld [vmem:[%s6 + $0x50] sm:$0xff]
        %v867 = vld [vmem:[%s6 + $0x58] sm:$0xff]
        %v868 = vld [vmem:[%s6 + $0x60] sm:$0xff]
        %v869 = vld [vmem:[%s6 + $0x68] sm:$0xff]
        %v870 = vld [vmem:[%s6 + $0x70] sm:$0xff]
        %v871 = vld [vmem:[%s6 + $0x78] sm:$0xff]
        %872 = vmatprep.subr.mxu0 0.0
        %873 = vmatpush1.msra.mxu0 %v871
        %874 = vmatprep.subr.mxu0 0.0
        %875 = vmatpush1.msra.mxu0 %v870
        %876 = vmatprep.subr.mxu0 0.0
        %877 = vmatpush1.msra.mxu0 %v869
        %878 = vmatprep.subr.mxu0 0.0
        %879 = vmatpush1.msra.mxu0 %v868
        %880 = vmatprep.subr.mxu0 0.0
        %881 = vmatpush1.msra.mxu0 %v867
        %882 = vmatprep.subr.mxu0 0.0
        %883 = vmatpush1.msra.mxu0 %v866
        %884 = vmatprep.subr.mxu0 0.0
        %885 = vmatpush1.msra.mxu0 %v865
        %886 = vmatprep.subr.mxu0 0.0
        %887 = vmatpush1.msra.mxu0 %v864
        %888 = vmatprep.subr.mxu0 0.0
        %889 = vmatpush1.msra.mxu0 %v863
        %890 = vmatprep.subr.mxu0 0.0
        %891 = vmatpush1.msra.mxu0 %v862
        %892 = vmatprep.subr.mxu0 0.0
        %893 = vmatpush1.msra.mxu0 %v861
        %894 = vmatprep.subr.mxu0 0.0
        %895 = vmatpush1.msra.mxu0 %v860
        %896 = vmatprep.subr.mxu0 0.0
        %897 = vmatpush1.msra.mxu0 %v859
        %898 = vmatprep.subr.mxu0 0.0
        %899 = vmatpush1.msra.mxu0 %v858
        %900 = vmatprep.subr.mxu0 0.0
        %901 = vmatpush1.msra.mxu0 %v857
        %902 = vmatprep.subr.mxu0 0.0
        %903 = vmatpush1.msra.mxu0 %v856
        %904 = vmatprep.subr.mxu0 0.0
        %905 = vmatpush2.msra.mxu0 0.0
        %906 = vmatprep.subr.mxu0 0.0
        %907 = vmatpush2.msra.mxu0 0.0
        %908 = vmatprep.subr.mxu0 0.0
        %909 = vmatpush2.msra.mxu0 0.0
        %910 = vmatprep.subr.mxu0 0.0
        %911 = vmatpush2.msra.mxu0 0.0
        %912 = vmatprep.subr.mxu0 0.0
        %913 = vmatpush2.msra.mxu0 0.0
        %914 = vmatprep.subr.mxu0 0.0
        %915 = vmatpush2.msra.mxu0 0.0
        %916 = vmatprep.subr.mxu0 0.0
        %917 = vmatpush2.msra.mxu0 0.0
        %918 = vmatprep.subr.mxu0 0.0
        %919 = vmatpush2.msra.mxu0 0.0
        %920 = vmatprep.subr.mxu0 0.0
        %921 = vmatpush2.msra.mxu0 0.0
        %922 = vmatprep.subr.mxu0 0.0
        %923 = vmatpush2.msra.mxu0 0.0
        %924 = vmatprep.subr.mxu0 0.0
        %925 = vmatpush2.msra.mxu0 0.0
        %926 = vmatprep.subr.mxu0 0.0
        %927 = vmatpush2.msra.mxu0 0.0
        %928 = vmatprep.subr.mxu0 0.0
        %929 = vmatpush2.msra.mxu0 0.0
        %930 = vmatprep.subr.mxu0 0.0
        %931 = vmatpush2.msra.mxu0 0.0
        %932 = vmatprep.subr.mxu0 0.0
        %933 = vmatpush2.msra.mxu0 0.0
        %934 = vmatprep.subr.mxu0 0.0
        %935 = vmatpush2.msra.mxu0 0.0
        %936 = vmatprep.mubr.f32.mxu0 0.0
        %937 = vmatmul.mubr.f32.gmra.mxu0 %v855
        %v938 = vpop.f32.mrf.mxu0
        %v939 = vadd.f32 0.0, %v938
        %v940 = vpop.f32.mrf.mxu0
        %941 = vdwg.mxu0
        %v942 = vld [vmem:[%s7] sm:$0x1]
        %v943 = vmul.f32 %v939, %v939
        %vm944 = vcmask 523264
        %v945 = vsel %vm944, %v943, 0.0
        %946 = vadd.xlane.f32.xlu0 %v945
        %v947 = vpop.xlane.xlu0 %946
        %v948 = vrcp.pop 64.0
        %v949 = vmul.f32 %v947, %v948
        %v950 = vadd.f32 %v949, 1e-06
        %v951 = vrsqrt.pop %v950
        %v952 = vmul.f32 %v939, %v951
        %v954 = vlaneseq
        %v955 = vshrl.u32 %v954, 7
        %v956 = vsub.s32 0, %v955
        %v957 = vrot.slane %v942, %v956
        %v959 = vmul.f32 %v952, %v957
        %v960 = vld [vmem:[%s8] sm:$0xff]
        %v961 = vld [vmem:[%s8 + $0x8] sm:$0xff]
        %v962 = vld [vmem:[%s8 + $0x10] sm:$0xff]
        %v963 = vld [vmem:[%s8 + $0x18] sm:$0xff]
        %v964 = vld [vmem:[%s8 + $0x20] sm:$0xff]
        %v965 = vld [vmem:[%s8 + $0x28] sm:$0xff]
        %v966 = vld [vmem:[%s8 + $0x30] sm:$0xff]
        %v967 = vld [vmem:[%s8 + $0x38] sm:$0xff]
        %v968 = vld [vmem:[%s8 + $0x40] sm:$0xff]
        %v969 = vld [vmem:[%s8 + $0x48] sm:$0xff]
        %v970 = vld [vmem:[%s8 + $0x50] sm:$0xff]
        %v971 = vld [vmem:[%s8 + $0x58] sm:$0xff]
        %v972 = vld [vmem:[%s8 + $0x60] sm:$0xff]
        %v973 = vld [vmem:[%s8 + $0x68] sm:$0xff]
        %v974 = vld [vmem:[%s8 + $0x70] sm:$0xff]
        %v975 = vld [vmem:[%s8 + $0x78] sm:$0xff]
        %v977 = vsel %vm944, %v959, 0
        %979 = vmatprep.subr.mxu0 0.0
        %980 = vmatpush1.msra.mxu0 0.0
        %981 = vmatprep.subr.mxu0 0.0
        %982 = vmatpush1.msra.mxu0 0.0
        %983 = vmatprep.subr.mxu0 0.0
        %984 = vmatpush1.msra.mxu0 0.0
        %985 = vmatprep.subr.mxu0 0.0
        %986 = vmatpush1.msra.mxu0 0.0
        %987 = vmatprep.subr.mxu0 0.0
        %988 = vmatpush1.msra.mxu0 0.0
        %989 = vmatprep.subr.mxu0 0.0
        %990 = vmatpush1.msra.mxu0 0.0
        %991 = vmatprep.subr.mxu0 0.0
        %992 = vmatpush1.msra.mxu0 0.0
        %993 = vmatprep.subr.mxu0 0.0
        %994 = vmatpush1.msra.mxu0 0.0
        %995 = vmatprep.subr.mxu0 %v975
        %996 = vmatpush1.msra.mxu0 %v974
        %997 = vmatprep.subr.mxu0 %v973
        %998 = vmatpush1.msra.mxu0 %v972
        %999 = vmatprep.subr.mxu0 %v971
        %1000 = vmatpush1.msra.mxu0 %v970
        %1001 = vmatprep.subr.mxu0 %v969
        %1002 = vmatpush1.msra.mxu0 %v968
        %1003 = vmatprep.subr.mxu0 %v967
        %1004 = vmatpush1.msra.mxu0 %v966
        %1005 = vmatprep.subr.mxu0 %v965
        %1006 = vmatpush1.msra.mxu0 %v964
        %1007 = vmatprep.subr.mxu0 %v963
        %1008 = vmatpush1.msra.mxu0 %v962
        %1009 = vmatprep.subr.mxu0 %v961
        %1010 = vmatpush1.msra.mxu0 %v960
        %1011 = vmatprep.subr.mxu0 0.0
        %1012 = vmatpush2.msra.mxu0 0.0
        %1013 = vmatprep.subr.mxu0 0.0
        %1014 = vmatpush2.msra.mxu0 0.0
        %1015 = vmatprep.subr.mxu0 0.0
        %1016 = vmatpush2.msra.mxu0 0.0
        %1017 = vmatprep.subr.mxu0 0.0
        %1018 = vmatpush2.msra.mxu0 0.0
        %1019 = vmatprep.subr.mxu0 0.0
        %1020 = vmatpush2.msra.mxu0 0.0
        %1021 = vmatprep.subr.mxu0 0.0
        %1022 = vmatpush2.msra.mxu0 0.0
        %1023 = vmatprep.subr.mxu0 0.0
        %1024 = vmatpush2.msra.mxu0 0.0
        %1025 = vmatprep.subr.mxu0 0.0
        %1026 = vmatpush2.msra.mxu0 0.0
        %1027 = vmatprep.subr.mxu0 0.0
        %1028 = vmatpush2.msra.mxu0 0.0
        %1029 = vmatprep.subr.mxu0 0.0
        %1030 = vmatpush2.msra.mxu0 0.0
        %1031 = vmatprep.subr.mxu0 0.0
        %1032 = vmatpush2.msra.mxu0 0.0
        %1033 = vmatprep.subr.mxu0 0.0
        %1034 = vmatpush2.msra.mxu0 0.0
        %1035 = vmatprep.subr.mxu0 0.0
        %1036 = vmatpush2.msra.mxu0 0.0
        %1037 = vmatprep.subr.mxu0 0.0
        %1038 = vmatpush2.msra.mxu0 0.0
        %1039 = vmatprep.subr.mxu0 0.0
        %1040 = vmatpush2.msra.mxu0 0.0
        %1041 = vmatprep.subr.mxu0 0.0
        %1042 = vmatpush2.msra.mxu0 0.0
        %1043 = vmatprep.mubr.f32.mxu0 0.0
        %1044 = vmatmul.mubr.f32.gmra.mxu0 %v977
        %v1045 = vpop.f32.mrf.mxu0
        %v1046 = vadd.f32 0.0, %v1045
        %v1047 = vpop.f32.mrf.mxu0
        %v1048 = vadd.f32 0.0, %v1047
        %1049 = vdwg.mxu0
        %v1050 = vld [vmem:[%s9] sm:$0xff]
        %v1051 = vld [vmem:[%s9 + $0x8] sm:$0xff]
        %v1052 = vld [vmem:[%s9 + $0x10] sm:$0xff]
        %v1053 = vld [vmem:[%s9 + $0x18] sm:$0xff]
        %v1054 = vld [vmem:[%s9 + $0x20] sm:$0xff]
        %v1055 = vld [vmem:[%s9 + $0x28] sm:$0xff]
        %v1056 = vld [vmem:[%s9 + $0x30] sm:$0xff]
        %v1057 = vld [vmem:[%s9 + $0x38] sm:$0xff]
        %v1058 = vld [vmem:[%s4] sm:$0xff]
        %v1060 = vlaneseq
        %v1061 = vshrl.u32 %v1060, 7
        %v1062 = vsub.s32 0, %v1061
        %v1063 = vrot.slane %v846, %v1062
        %v1065 = vadd.f32 %v1058, %v1063
        %1067 = vrot.lane.b32.xlu0 %v1046, 64
        %v1068 = vpop.permute.xlu0 %1067
        %vm1069 = vcmask 130048
        %v1070 = vsel %vm1069, %v1046, 0
        %v1072 = vsel %vm1069, %v1068, 0
        %1074 = vmatprep.subr.mxu0 0.0
        %1075 = vmatpush1.xpose.msra.mxu0 0.0
        %1076 = vmatprep.subr.mxu0 0.0
        %1077 = vmatpush1.xpose.msra.mxu0 0.0
        %1078 = vmatprep.subr.mxu0 0.0
        %1079 = vmatpush1.xpose.msra.mxu0 0.0
        %1080 = vmatprep.subr.mxu0 0.0
        %1081 = vmatpush1.xpose.msra.mxu0 0.0
        %1082 = vmatprep.subr.mxu0 0.0
        %1083 = vmatpush1.xpose.msra.mxu0 0.0
        %1084 = vmatprep.subr.mxu0 0.0
        %1085 = vmatpush1.xpose.msra.mxu0 0.0
        %1086 = vmatprep.subr.mxu0 0.0
        %1087 = vmatpush1.xpose.msra.mxu0 0.0
        %1088 = vmatprep.subr.mxu0 0.0
        %1089 = vmatpush1.xpose.msra.mxu0 0.0
        %1090 = vmatprep.subr.mxu0 0.0
        %1091 = vmatpush1.xpose.msra.mxu0 0.0
        %1092 = vmatprep.subr.mxu0 0.0
        %1093 = vmatpush1.xpose.msra.mxu0 0.0
        %1094 = vmatprep.subr.mxu0 0.0
        %1095 = vmatpush1.xpose.msra.mxu0 0.0
        %1096 = vmatprep.subr.mxu0 0.0
        %1097 = vmatpush1.xpose.msra.mxu0 0.0
        %1098 = vmatprep.subr.mxu0 0.0
        %1099 = vmatpush1.xpose.msra.mxu0 0.0
        %1100 = vmatprep.subr.mxu0 0.0
        %1101 = vmatpush1.xpose.msra.mxu0 0.0
        %1102 = vmatprep.subr.mxu0 0.0
        %1103 = vmatpush1.xpose.msra.mxu0 0.0
        %1104 = vmatprep.subr.mxu0 0.0
        %1105 = vmatpush1.xpose.msra.mxu0 %v1072
        %1106 = vmatprep.subr.mxu0 0.0
        %1107 = vmatpush2.xpose.msra.mxu0 0.0
        %1108 = vmatprep.subr.mxu0 0.0
        %1109 = vmatpush2.xpose.msra.mxu0 0.0
        %1110 = vmatprep.subr.mxu0 0.0
        %1111 = vmatpush2.xpose.msra.mxu0 0.0
        %1112 = vmatprep.subr.mxu0 0.0
        %1113 = vmatpush2.xpose.msra.mxu0 0.0
        %1114 = vmatprep.subr.mxu0 0.0
        %1115 = vmatpush2.xpose.msra.mxu0 0.0
        %1116 = vmatprep.subr.mxu0 0.0
        %1117 = vmatpush2.xpose.msra.mxu0 0.0
        %1118 = vmatprep.subr.mxu0 0.0
        %1119 = vmatpush2.xpose.msra.mxu0 0.0
        %1120 = vmatprep.subr.mxu0 0.0
        %1121 = vmatpush2.xpose.msra.mxu0 0.0
        %1122 = vmatprep.subr.mxu0 0.0
        %1123 = vmatpush2.xpose.msra.mxu0 0.0
        %1124 = vmatprep.subr.mxu0 0.0
        %1125 = vmatpush2.xpose.msra.mxu0 0.0
        %1126 = vmatprep.subr.mxu0 0.0
        %1127 = vmatpush2.xpose.msra.mxu0 0.0
        %1128 = vmatprep.subr.mxu0 0.0
        %1129 = vmatpush2.xpose.msra.mxu0 0.0
        %1130 = vmatprep.subr.mxu0 0.0
        %1131 = vmatpush2.xpose.msra.mxu0 0.0
        %1132 = vmatprep.subr.mxu0 0.0
        %1133 = vmatpush2.xpose.msra.mxu0 0.0
        %1134 = vmatprep.subr.mxu0 0.0
        %1135 = vmatpush2.xpose.msra.mxu0 0.0
        %1136 = vmatprep.subr.mxu0 0.0
        %1137 = vmatpush2.xpose.msra.mxu0 0.0
        %1138 = vmatprep.mubr.f32.mxu0 0.0
        %1139 = vmatmul.mubr.f32.gmra.mxu0 %v1070
        %v1140 = vpop.f32.mrf.mxu0
        %v1141 = vadd.f32 %v1065, %v1140
        %v1142 = vpop.f32.mrf.mxu0
        %1143 = vdwg.mxu0
        %vm1144 = vcmask 64512
        %v1145 = vsel %vm1144, %v1141, -inf
        %1146 = vmax.xlane.f32.xlu0 %v1145
        %v1147 = vpop.xlane.xlu0 %1146
        %v1148 = vsub.f32 %v1141, %v1147
        %v1149 = vmul.f32 %v1148, 1.442695
        %v1150 = vpow.pop %v1149
        %v1151 = vsel %vm1144, %v1150, 0.0
        %1152 = vadd.xlane.f32.xlu0 %v1151
        %v1153 = vpop.xlane.xlu0 %1152
        %v1154 = vrcp.pop %v1153
        %v1155 = vmul.f32 %v1150, %v1154
        %v1157 = vsel %vm1144, %v1155, 0
        %1159 = vmatprep.subr.mxu0 0.0
        %1160 = vmatpush1.msra.mxu0 0.0
        %1161 = vmatprep.subr.mxu0 0.0
        %1162 = vmatpush1.msra.mxu0 0.0
        %1163 = vmatprep.subr.mxu0 0.0
        %1164 = vmatpush1.msra.mxu0 0.0
        %1165 = vmatprep.subr.mxu0 0.0
        %1166 = vmatpush1.msra.mxu0 0.0
        %1167 = vmatprep.subr.mxu0 0.0
        %1168 = vmatpush1.msra.mxu0 0.0
        %1169 = vmatprep.subr.mxu0 0.0
        %1170 = vmatpush1.msra.mxu0 0.0
        %1171 = vmatprep.subr.mxu0 0.0
        %1172 = vmatpush1.msra.mxu0 0.0
        %1173 = vmatprep.subr.mxu0 0.0
        %1174 = vmatpush1.msra.mxu0 0.0
        %1175 = vmatprep.subr.mxu0 0.0
        %1176 = vmatpush1.msra.mxu0 0.0
        %1177 = vmatprep.subr.mxu0 0.0
        %1178 = vmatpush1.msra.mxu0 0.0
        %1179 = vmatprep.subr.mxu0 0.0
        %1180 = vmatpush1.msra.mxu0 0.0
        %1181 = vmatprep.subr.mxu0 0.0
        %1182 = vmatpush1.msra.mxu0 0.0
        %1183 = vmatprep.subr.mxu0 0.0
        %1184 = vmatpush1.msra.mxu0 0.0
        %1185 = vmatprep.subr.mxu0 0.0
        %1186 = vmatpush1.msra.mxu0 0.0
        %1187 = vmatprep.subr.mxu0 0.0
        %1188 = vmatpush1.msra.mxu0 0.0
        %1189 = vmatprep.subr.mxu0 0.0
        %1190 = vmatpush1.msra.mxu0 %v1048
        %1191 = vmatprep.subr.mxu0 0.0
        %1192 = vmatpush2.msra.mxu0 0.0
        %1193 = vmatprep.subr.mxu0 0.0
        %1194 = vmatpush2.msra.mxu0 0.0
        %1195 = vmatprep.subr.mxu0 0.0
        %1196 = vmatpush2.msra.mxu0 0.0
        %1197 = vmatprep.subr.mxu0 0.0
        %1198 = vmatpush2.msra.mxu0 0.0
        %1199 = vmatprep.subr.mxu0 0.0
        %1200 = vmatpush2.msra.mxu0 0.0
        %1201 = vmatprep.subr.mxu0 0.0
        %1202 = vmatpush2.msra.mxu0 0.0
        %1203 = vmatprep.subr.mxu0 0.0
        %1204 = vmatpush2.msra.mxu0 0.0
        %1205 = vmatprep.subr.mxu0 0.0
        %1206 = vmatpush2.msra.mxu0 0.0
        %1207 = vmatprep.subr.mxu0 0.0
        %1208 = vmatpush2.msra.mxu0 0.0
        %1209 = vmatprep.subr.mxu0 0.0
        %1210 = vmatpush2.msra.mxu0 0.0
        %1211 = vmatprep.subr.mxu0 0.0
        %1212 = vmatpush2.msra.mxu0 0.0
        %1213 = vmatprep.subr.mxu0 0.0
        %1214 = vmatpush2.msra.mxu0 0.0
        %1215 = vmatprep.subr.mxu0 0.0
        %1216 = vmatpush2.msra.mxu0 0.0
        %1217 = vmatprep.subr.mxu0 0.0
        %1218 = vmatpush2.msra.mxu0 0.0
        %1219 = vmatprep.subr.mxu0 0.0
        %1220 = vmatpush2.msra.mxu0 0.0
        %1221 = vmatprep.subr.mxu0 0.0
        %1222 = vmatpush2.msra.mxu0 0.0
        %1223 = vmatprep.mubr.f32.mxu0 0.0
        %1224 = vmatmul.mubr.f32.gmra.mxu0 %v1157
        %v1225 = vpop.f32.mrf.mxu0
        %v1226 = vadd.f32 0.0, %v1225
        %v1227 = vpop.f32.mrf.mxu0
        %1228 = vdwg.mxu0
        %s1229 = scalar_lea.vmem %s4, 8
        %v1230 = vld [vmem:[%s1229] sm:$0xff]
        %v1231 = vadd.f32 %v1230, %v1063
        %1232 = vrot.lane.b32.xlu0 %v1046, 112
        %v1233 = vpop.permute.xlu0 %1232
        %1234 = vrot.lane.b32.xlu0 %v1046, 48
        %v1235 = vpop.permute.xlu0 %1234
        %v1236 = vsel %vm1069, %v1233, 0
        %v1238 = vsel %vm1069, %v1235, 0
        %1240 = vmatprep.subr.mxu0 0.0
        %1241 = vmatpush1.xpose.msra.mxu0 0.0
        %1242 = vmatprep.subr.mxu0 0.0
        %1243 = vmatpush1.xpose.msra.mxu0 0.0
        %1244 = vmatprep.subr.mxu0 0.0
        %1245 = vmatpush1.xpose.msra.mxu0 0.0
        %1246 = vmatprep.subr.mxu0 0.0
        %1247 = vmatpush1.xpose.msra.mxu0 0.0
        %1248 = vmatprep.subr.mxu0 0.0
        %1249 = vmatpush1.xpose.msra.mxu0 0.0
        %1250 = vmatprep.subr.mxu0 0.0
        %1251 = vmatpush1.xpose.msra.mxu0 0.0
        %1252 = vmatprep.subr.mxu0 0.0
        %1253 = vmatpush1.xpose.msra.mxu0 0.0
        %1254 = vmatprep.subr.mxu0 0.0
        %1255 = vmatpush1.xpose.msra.mxu0 0.0
        %1256 = vmatprep.subr.mxu0 0.0
        %1257 = vmatpush1.xpose.msra.mxu0 0.0
        %1258 = vmatprep.subr.mxu0 0.0
        %1259 = vmatpush1.xpose.msra.mxu0 0.0
        %1260 = vmatprep.subr.mxu0 0.0
        %1261 = vmatpush1.xpose.msra.mxu0 0.0
        %1262 = vmatprep.subr.mxu0 0.0
        %1263 = vmatpush1.xpose.msra.mxu0 0.0
        %1264 = vmatprep.subr.mxu0 0.0
        %1265 = vmatpush1.xpose.msra.mxu0 0.0
        %1266 = vmatprep.subr.mxu0 0.0
        %1267 = vmatpush1.xpose.msra.mxu0 0.0
        %1268 = vmatprep.subr.mxu0 0.0
        %1269 = vmatpush1.xpose.msra.mxu0 0.0
        %1270 = vmatprep.subr.mxu0 0.0
        %1271 = vmatpush1.xpose.msra.mxu0 %v1238
        %1272 = vmatprep.subr.mxu0 0.0
        %1273 = vmatpush2.xpose.msra.mxu0 0.0
        %1274 = vmatprep.subr.mxu0 0.0
        %1275 = vmatpush2.xpose.msra.mxu0 0.0
        %1276 = vmatprep.subr.mxu0 0.0
        %1277 = vmatpush2.xpose.msra.mxu0 0.0
        %1278 = vmatprep.subr.mxu0 0.0
        %1279 = vmatpush2.xpose.msra.mxu0 0.0
        %1280 = vmatprep.subr.mxu0 0.0
        %1281 = vmatpush2.xpose.msra.mxu0 0.0
        %1282 = vmatprep.subr.mxu0 0.0
        %1283 = vmatpush2.xpose.msra.mxu0 0.0
        %1284 = vmatprep.subr.mxu0 0.0
        %1285 = vmatpush2.xpose.msra.mxu0 0.0
        %1286 = vmatprep.subr.mxu0 0.0
        %1287 = vmatpush2.xpose.msra.mxu0 0.0
        %1288 = vmatprep.subr.mxu0 0.0
        %1289 = vmatpush2.xpose.msra.mxu0 0.0
        %1290 = vmatprep.subr.mxu0 0.0
        %1291 = vmatpush2.xpose.msra.mxu0 0.0
        %1292 = vmatprep.subr.mxu0 0.0
        %1293 = vmatpush2.xpose.msra.mxu0 0.0
        %1294 = vmatprep.subr.mxu0 0.0
        %1295 = vmatpush2.xpose.msra.mxu0 0.0
        %1296 = vmatprep.subr.mxu0 0.0
        %1297 = vmatpush2.xpose.msra.mxu0 0.0
        %1298 = vmatprep.subr.mxu0 0.0
        %1299 = vmatpush2.xpose.msra.mxu0 0.0
        %1300 = vmatprep.subr.mxu0 0.0
        %1301 = vmatpush2.xpose.msra.mxu0 0.0
        %1302 = vmatprep.subr.mxu0 0.0
        %1303 = vmatpush2.xpose.msra.mxu0 0.0
        %1304 = vmatprep.mubr.f32.mxu0 0.0
        %1305 = vmatmul.mubr.f32.gmra.mxu0 %v1236
        %v1306 = vpop.f32.mrf.mxu0
        %v1307 = vadd.f32 %v1231, %v1306
        %v1308 = vpop.f32.mrf.mxu0
        %1309 = vdwg.mxu0
        %v1310 = vsel %vm1144, %v1307, -inf
        %1311 = vmax.xlane.f32.xlu0 %v1310
        %v1312 = vpop.xlane.xlu0 %1311
        %v1313 = vsub.f32 %v1307, %v1312
        %v1314 = vmul.f32 %v1313, 1.442695
        %v1315 = vpow.pop %v1314
        %v1316 = vsel %vm1144, %v1315, 0.0
        %1317 = vadd.xlane.f32.xlu0 %v1316
        %v1318 = vpop.xlane.xlu0 %1317
        %v1319 = vrcp.pop %v1318
        %v1320 = vmul.f32 %v1315, %v1319
        %1322 = vrot.lane.b32.xlu0 %v1048, 112
        %v1323 = vpop.permute.xlu0 %1322
        %v1326 = vsel %vm1144, %v1320, 0
        %1328 = vmatprep.subr.mxu0 0.0
        %1329 = vmatpush1.msra.mxu0 0.0
        %1330 = vmatprep.subr.mxu0 0.0
        %1331 = vmatpush1.msra.mxu0 0.0
        %1332 = vmatprep.subr.mxu0 0.0
        %1333 = vmatpush1.msra.mxu0 0.0
        %1334 = vmatprep.subr.mxu0 0.0
        %1335 = vmatpush1.msra.mxu0 0.0
        %1336 = vmatprep.subr.mxu0 0.0
        %1337 = vmatpush1.msra.mxu0 0.0
        %1338 = vmatprep.subr.mxu0 0.0
        %1339 = vmatpush1.msra.mxu0 0.0
        %1340 = vmatprep.subr.mxu0 0.0
        %1341 = vmatpush1.msra.mxu0 0.0
        %1342 = vmatprep.subr.mxu0 0.0
        %1343 = vmatpush1.msra.mxu0 0.0
        %1344 = vmatprep.subr.mxu0 0.0
        %1345 = vmatpush1.msra.mxu0 0.0
        %1346 = vmatprep.subr.mxu0 0.0
        %1347 = vmatpush1.msra.mxu0 0.0
        %1348 = vmatprep.subr.mxu0 0.0
        %1349 = vmatpush1.msra.mxu0 0.0
        %1350 = vmatprep.subr.mxu0 0.0
        %1351 = vmatpush1.msra.mxu0 0.0
        %1352 = vmatprep.subr.mxu0 0.0
        %1353 = vmatpush1.msra.mxu0 0.0
        %1354 = vmatprep.subr.mxu0 0.0
        %1355 = vmatpush1.msra.mxu0 0.0
        %1356 = vmatprep.subr.mxu0 0.0
        %1357 = vmatpush1.msra.mxu0 0.0
        %1358 = vmatprep.subr.mxu0 0.0
        %1359 = vmatpush1.msra.mxu0 %v1323
        %1360 = vmatprep.subr.mxu0 0.0
        %1361 = vmatpush2.msra.mxu0 0.0
        %1362 = vmatprep.subr.mxu0 0.0
        %1363 = vmatpush2.msra.mxu0 0.0
        %1364 = vmatprep.subr.mxu0 0.0
        %1365 = vmatpush2.msra.mxu0 0.0
        %1366 = vmatprep.subr.mxu0 0.0
        %1367 = vmatpush2.msra.mxu0 0.0
        %1368 = vmatprep.subr.mxu0 0.0
        %1369 = vmatpush2.msra.mxu0 0.0
        %1370 = vmatprep.subr.mxu0 0.0
        %1371 = vmatpush2.msra.mxu0 0.0
        %1372 = vmatprep.subr.mxu0 0.0
        %1373 = vmatpush2.msra.mxu0 0.0
        %1374 = vmatprep.subr.mxu0 0.0
        %1375 = vmatpush2.msra.mxu0 0.0
        %1376 = vmatprep.subr.mxu0 0.0
        %1377 = vmatpush2.msra.mxu0 0.0
        %1378 = vmatprep.subr.mxu0 0.0
        %1379 = vmatpush2.msra.mxu0 0.0
        %1380 = vmatprep.subr.mxu0 0.0
        %1381 = vmatpush2.msra.mxu0 0.0
        %1382 = vmatprep.subr.mxu0 0.0
        %1383 = vmatpush2.msra.mxu0 0.0
        %1384 = vmatprep.subr.mxu0 0.0
        %1385 = vmatpush2.msra.mxu0 0.0
        %1386 = vmatprep.subr.mxu0 0.0
        %1387 = vmatpush2.msra.mxu0 0.0
        %1388 = vmatprep.subr.mxu0 0.0
        %1389 = vmatpush2.msra.mxu0 0.0
        %1390 = vmatprep.subr.mxu0 0.0
        %1391 = vmatpush2.msra.mxu0 0.0
        %1392 = vmatprep.mubr.f32.mxu0 0.0
        %1393 = vmatmul.mubr.f32.gmra.mxu0 %v1326
        %v1394 = vpop.f32.mrf.mxu0
        %v1395 = vadd.f32 0.0, %v1394
        %v1396 = vpop.f32.mrf.mxu0
        %1397 = vdwg.mxu0
        %v1399 = vsel %vm1069, %v1395, 0
        %1401 = vmatprep.subr.mxu0 0.0
        %1402 = vmatpush1.msra.mxu0 0.0
        %1403 = vmatprep.subr.mxu0 0.0
        %1404 = vmatpush1.msra.mxu0 0.0
        %1405 = vmatprep.subr.mxu0 0.0
        %1406 = vmatpush1.msra.mxu0 0.0
        %1407 = vmatprep.subr.mxu0 0.0
        %1408 = vmatpush1.msra.mxu0 0.0
        %1409 = vmatprep.subr.mxu0 0.0
        %1410 = vmatpush1.msra.mxu0 0.0
        %1411 = vmatprep.subr.mxu0 0.0
        %1412 = vmatpush1.msra.mxu0 0.0
        %1413 = vmatprep.subr.mxu0 0.0
        %1414 = vmatpush1.msra.mxu0 0.0
        %1415 = vmatprep.subr.mxu0 0.0
        %1416 = vmatpush1.msra.mxu0 0.0
        %1417 = vmatprep.subr.mxu0 0.0
        %1418 = vmatpush1.msra.mxu0 0.0
        %1419 = vmatprep.subr.mxu0 0.0
        %1420 = vmatpush1.msra.mxu0 0.0
        %1421 = vmatprep.subr.mxu0 0.0
        %1422 = vmatpush1.msra.mxu0 0.0
        %1423 = vmatprep.subr.mxu0 0.0
        %1424 = vmatpush1.msra.mxu0 0.0
        %1425 = vmatprep.subr.mxu0 0.0
        %1426 = vmatpush1.msra.mxu0 0.0
        %1427 = vmatprep.subr.mxu0 0.0
        %1428 = vmatpush1.msra.mxu0 0.0
        %1429 = vmatprep.subr.mxu0 0.0
        %1430 = vmatpush1.msra.mxu0 %v1053
        %1431 = vmatprep.subr.mxu0 0.0
        %1432 = vmatpush1.msra.mxu0 %v1052
        %1433 = vmatprep.subr.mxu0 0.0
        %1434 = vmatpush2.msra.mxu0 0.0
        %1435 = vmatprep.subr.mxu0 0.0
        %1436 = vmatpush2.msra.mxu0 0.0
        %1437 = vmatprep.subr.mxu0 0.0
        %1438 = vmatpush2.msra.mxu0 0.0
        %1439 = vmatprep.subr.mxu0 0.0
        %1440 = vmatpush2.msra.mxu0 0.0
        %1441 = vmatprep.subr.mxu0 0.0
        %1442 = vmatpush2.msra.mxu0 0.0
        %1443 = vmatprep.subr.mxu0 0.0
        %1444 = vmatpush2.msra.mxu0 0.0
        %1445 = vmatprep.subr.mxu0 0.0
        %1446 = vmatpush2.msra.mxu0 0.0
        %1447 = vmatprep.subr.mxu0 0.0
        %1448 = vmatpush2.msra.mxu0 0.0
        %1449 = vmatprep.subr.mxu0 0.0
        %1450 = vmatpush2.msra.mxu0 0.0
        %1451 = vmatprep.subr.mxu0 0.0
        %1452 = vmatpush2.msra.mxu0 0.0
        %1453 = vmatprep.subr.mxu0 0.0
        %1454 = vmatpush2.msra.mxu0 0.0
        %1455 = vmatprep.subr.mxu0 0.0
        %1456 = vmatpush2.msra.mxu0 0.0
        %1457 = vmatprep.subr.mxu0 0.0
        %1458 = vmatpush2.msra.mxu0 0.0
        %1459 = vmatprep.subr.mxu0 0.0
        %1460 = vmatpush2.msra.mxu0 0.0
        %1461 = vmatprep.subr.mxu0 0.0
        %1462 = vmatpush2.msra.mxu0 0.0
        %1463 = vmatprep.subr.mxu0 0.0
        %1464 = vmatpush2.msra.mxu0 0.0
        %1465 = vmatprep.mubr.f32.mxu0 0.0
        %1466 = vmatmul.mubr.f32.gmra.mxu0 %v1399
        %v1467 = vpop.f32.mrf.mxu0
        %v1468 = vadd.f32 0.0, %v1467
        %v1469 = vpop.f32.mrf.mxu0
        %1470 = vdwg.mxu0
        %v1472 = vsel %vm1069, %v1226, 0
        %1474 = vmatprep.subr.mxu0 0.0
        %1475 = vmatpush1.msra.mxu0 0.0
        %1476 = vmatprep.subr.mxu0 0.0
        %1477 = vmatpush1.msra.mxu0 0.0
        %1478 = vmatprep.subr.mxu0 0.0
        %1479 = vmatpush1.msra.mxu0 0.0
        %1480 = vmatprep.subr.mxu0 0.0
        %1481 = vmatpush1.msra.mxu0 0.0
        %1482 = vmatprep.subr.mxu0 0.0
        %1483 = vmatpush1.msra.mxu0 0.0
        %1484 = vmatprep.subr.mxu0 0.0
        %1485 = vmatpush1.msra.mxu0 0.0
        %1486 = vmatprep.subr.mxu0 0.0
        %1487 = vmatpush1.msra.mxu0 0.0
        %1488 = vmatprep.subr.mxu0 0.0
        %1489 = vmatpush1.msra.mxu0 0.0
        %1490 = vmatprep.subr.mxu0 0.0
        %1491 = vmatpush1.msra.mxu0 0.0
        %1492 = vmatprep.subr.mxu0 0.0
        %1493 = vmatpush1.msra.mxu0 0.0
        %1494 = vmatprep.subr.mxu0 0.0
        %1495 = vmatpush1.msra.mxu0 0.0
        %1496 = vmatprep.subr.mxu0 0.0
        %1497 = vmatpush1.msra.mxu0 0.0
        %1498 = vmatprep.subr.mxu0 0.0
        %1499 = vmatpush1.msra.mxu0 0.0
        %1500 = vmatprep.subr.mxu0 0.0
        %1501 = vmatpush1.msra.mxu0 0.0
        %1502 = vmatprep.subr.mxu0 0.0
        %1503 = vmatpush1.msra.mxu0 %v1051
        %1504 = vmatprep.subr.mxu0 0.0
        %1505 = vmatpush1.msra.mxu0 %v1050
        %1506 = vmatprep.subr.mxu0 0.0
        %1507 = vmatpush2.msra.mxu0 0.0
        %1508 = vmatprep.subr.mxu0 0.0
        %1509 = vmatpush2.msra.mxu0 0.0
        %1510 = vmatprep.subr.mxu0 0.0
        %1511 = vmatpush2.msra.mxu0 0.0
        %1512 = vmatprep.subr.mxu0 0.0
        %1513 = vmatpush2.msra.mxu0 0.0
        %1514 = vmatprep.subr.mxu0 0.0
        %1515 = vmatpush2.msra.mxu0 0.0
        %1516 = vmatprep.subr.mxu0 0.0
        %1517 = vmatpush2.msra.mxu0 0.0
        %1518 = vmatprep.subr.mxu0 0.0
        %1519 = vmatpush2.msra.mxu0 0.0
        %1520 = vmatprep.subr.mxu0 0.0
        %1521 = vmatpush2.msra.mxu0 0.0
        %1522 = vmatprep.subr.mxu0 0.0
        %1523 = vmatpush2.msra.mxu0 0.0
        %1524 = vmatprep.subr.mxu0 0.0
        %1525 = vmatpush2.msra.mxu0 0.0
        %1526 = vmatprep.subr.mxu0 0.0
        %1527 = vmatpush2.msra.mxu0 0.0
        %1528 = vmatprep.subr.mxu0 0.0
        %1529 = vmatpush2.msra.mxu0 0.0
        %1530 = vmatprep.subr.mxu0 0.0
        %1531 = vmatpush2.msra.mxu0 0.0
        %1532 = vmatprep.subr.mxu0 0.0
        %1533 = vmatpush2.msra.mxu0 0.0
        %1534 = vmatprep.subr.mxu0 0.0
        %1535 = vmatpush2.msra.mxu0 0.0
        %1536 = vmatprep.subr.mxu0 0.0
        %1537 = vmatpush2.msra.mxu0 0.0
        %1538 = vmatprep.mubr.f32.mxu0 0.0
        %1539 = vmatmul.mubr.f32.gmra.mxu0 %v1472
        %v1540 = vpop.f32.mrf.mxu0
        %v1541 = vadd.f32 %v1468, %v1540
        %v1542 = vpop.f32.mrf.mxu0
        %1543 = vdwg.mxu0
        %s1544 = scalar_lea.vmem %s4, 16
        %v1545 = vld [vmem:[%s1544] sm:$0xff]
        %v1546 = vadd.f32 %v1545, %v1063
        %1547 = vrot.lane.b32.xlu0 %v1046, 96
        %v1548 = vpop.permute.xlu0 %1547
        %1549 = vrot.lane.b32.xlu0 %v1046, 32
        %v1550 = vpop.permute.xlu0 %1549
        %v1551 = vsel %vm1069, %v1548, 0
        %v1553 = vsel %vm1069, %v1550, 0
        %1555 = vmatprep.subr.mxu0 0.0
        %1556 = vmatpush1.xpose.msra.mxu0 0.0
        %1557 = vmatprep.subr.mxu0 0.0
        %1558 = vmatpush1.xpose.msra.mxu0 0.0
        %1559 = vmatprep.subr.mxu0 0.0
        %1560 = vmatpush1.xpose.msra.mxu0 0.0
        %1561 = vmatprep.subr.mxu0 0.0
        %1562 = vmatpush1.xpose.msra.mxu0 0.0
        %1563 = vmatprep.subr.mxu0 0.0
        %1564 = vmatpush1.xpose.msra.mxu0 0.0
        %1565 = vmatprep.subr.mxu0 0.0
        %1566 = vmatpush1.xpose.msra.mxu0 0.0
        %1567 = vmatprep.subr.mxu0 0.0
        %1568 = vmatpush1.xpose.msra.mxu0 0.0
        %1569 = vmatprep.subr.mxu0 0.0
        %1570 = vmatpush1.xpose.msra.mxu0 0.0
        %1571 = vmatprep.subr.mxu0 0.0
        %1572 = vmatpush1.xpose.msra.mxu0 0.0
        %1573 = vmatprep.subr.mxu0 0.0
        %1574 = vmatpush1.xpose.msra.mxu0 0.0
        %1575 = vmatprep.subr.mxu0 0.0
        %1576 = vmatpush1.xpose.msra.mxu0 0.0
        %1577 = vmatprep.subr.mxu0 0.0
        %1578 = vmatpush1.xpose.msra.mxu0 0.0
        %1579 = vmatprep.subr.mxu0 0.0
        %1580 = vmatpush1.xpose.msra.mxu0 0.0
        %1581 = vmatprep.subr.mxu0 0.0
        %1582 = vmatpush1.xpose.msra.mxu0 0.0
        %1583 = vmatprep.subr.mxu0 0.0
        %1584 = vmatpush1.xpose.msra.mxu0 0.0
        %1585 = vmatprep.subr.mxu0 0.0
        %1586 = vmatpush1.xpose.msra.mxu0 %v1553
        %1587 = vmatprep.subr.mxu0 0.0
        %1588 = vmatpush2.xpose.msra.mxu0 0.0
        %1589 = vmatprep.subr.mxu0 0.0
        %1590 = vmatpush2.xpose.msra.mxu0 0.0
        %1591 = vmatprep.subr.mxu0 0.0
        %1592 = vmatpush2.xpose.msra.mxu0 0.0
        %1593 = vmatprep.subr.mxu0 0.0
        %1594 = vmatpush2.xpose.msra.mxu0 0.0
        %1595 = vmatprep.subr.mxu0 0.0
        %1596 = vmatpush2.xpose.msra.mxu0 0.0
        %1597 = vmatprep.subr.mxu0 0.0
        %1598 = vmatpush2.xpose.msra.mxu0 0.0
        %1599 = vmatprep.subr.mxu0 0.0
        %1600 = vmatpush2.xpose.msra.mxu0 0.0
        %1601 = vmatprep.subr.mxu0 0.0
        %1602 = vmatpush2.xpose.msra.mxu0 0.0
        %1603 = vmatprep.subr.mxu0 0.0
        %1604 = vmatpush2.xpose.msra.mxu0 0.0
        %1605 = vmatprep.subr.mxu0 0.0
        %1606 = vmatpush2.xpose.msra.mxu0 0.0
        %1607 = vmatprep.subr.mxu0 0.0
        %1608 = vmatpush2.xpose.msra.mxu0 0.0
        %1609 = vmatprep.subr.mxu0 0.0
        %1610 = vmatpush2.xpose.msra.mxu0 0.0
        %1611 = vmatprep.subr.mxu0 0.0
        %1612 = vmatpush2.xpose.msra.mxu0 0.0
        %1613 = vmatprep.subr.mxu0 0.0
        %1614 = vmatpush2.xpose.msra.mxu0 0.0
        %1615 = vmatprep.subr.mxu0 0.0
        %1616 = vmatpush2.xpose.msra.mxu0 0.0
        %1617 = vmatprep.subr.mxu0 0.0
        %1618 = vmatpush2.xpose.msra.mxu0 0.0
        %1619 = vmatprep.mubr.f32.mxu0 0.0
        %1620 = vmatmul.mubr.f32.gmra.mxu0 %v1551
        %v1621 = vpop.f32.mrf.mxu0
        %v1622 = vadd.f32 %v1546, %v1621
        %v1623 = vpop.f32.mrf.mxu0
        %1624 = vdwg.mxu0
        %v1625 = vsel %vm1144, %v1622, -inf
        %1626 = vmax.xlane.f32.xlu0 %v1625
        %v1627 = vpop.xlane.xlu0 %1626
        %v1628 = vsub.f32 %v1622, %v1627
        %v1629 = vmul.f32 %v1628, 1.442695
        %v1630 = vpow.pop %v1629
        %v1631 = vsel %vm1144, %v1630, 0.0
        %1632 = vadd.xlane.f32.xlu0 %v1631
        %v1633 = vpop.xlane.xlu0 %1632
        %v1634 = vrcp.pop %v1633
        %v1635 = vmul.f32 %v1630, %v1634
        %1636 = vrot.lane.b32.xlu0 %v1048, 96
        %v1637 = vpop.permute.xlu0 %1636
        %v1640 = vsel %vm1144, %v1635, 0
        %1642 = vmatprep.subr.mxu0 0.0
        %1643 = vmatpush1.msra.mxu0 0.0
        %1644 = vmatprep.subr.mxu0 0.0
        %1645 = vmatpush1.msra.mxu0 0.0
        %1646 = vmatprep.subr.mxu0 0.0
        %1647 = vmatpush1.msra.mxu0 0.0
        %1648 = vmatprep.subr.mxu0 0.0
        %1649 = vmatpush1.msra.mxu0 0.0
        %1650 = vmatprep.subr.mxu0 0.0
        %1651 = vmatpush1.msra.mxu0 0.0
        %1652 = vmatprep.subr.mxu0 0.0
        %1653 = vmatpush1.msra.mxu0 0.0
        %1654 = vmatprep.subr.mxu0 0.0
        %1655 = vmatpush1.msra.mxu0 0.0
        %1656 = vmatprep.subr.mxu0 0.0
        %1657 = vmatpush1.msra.mxu0 0.0
        %1658 = vmatprep.subr.mxu0 0.0
        %1659 = vmatpush1.msra.mxu0 0.0
        %1660 = vmatprep.subr.mxu0 0.0
        %1661 = vmatpush1.msra.mxu0 0.0
        %1662 = vmatprep.subr.mxu0 0.0
        %1663 = vmatpush1.msra.mxu0 0.0
        %1664 = vmatprep.subr.mxu0 0.0
        %1665 = vmatpush1.msra.mxu0 0.0
        %1666 = vmatprep.subr.mxu0 0.0
        %1667 = vmatpush1.msra.mxu0 0.0
        %1668 = vmatprep.subr.mxu0 0.0
        %1669 = vmatpush1.msra.mxu0 0.0
        %1670 = vmatprep.subr.mxu0 0.0
        %1671 = vmatpush1.msra.mxu0 0.0
        %1672 = vmatprep.subr.mxu0 0.0
        %1673 = vmatpush1.msra.mxu0 %v1637
        %1674 = vmatprep.subr.mxu0 0.0
        %1675 = vmatpush2.msra.mxu0 0.0
        %1676 = vmatprep.subr.mxu0 0.0
        %1677 = vmatpush2.msra.mxu0 0.0
        %1678 = vmatprep.subr.mxu0 0.0
        %1679 = vmatpush2.msra.mxu0 0.0
        %1680 = vmatprep.subr.mxu0 0.0
        %1681 = vmatpush2.msra.mxu0 0.0
        %1682 = vmatprep.subr.mxu0 0.0
        %1683 = vmatpush2.msra.mxu0 0.0
        %1684 = vmatprep.subr.mxu0 0.0
        %1685 = vmatpush2.msra.mxu0 0.0
        %1686 = vmatprep.subr.mxu0 0.0
        %1687 = vmatpush2.msra.mxu0 0.0
        %1688 = vmatprep.subr.mxu0 0.0
        %1689 = vmatpush2.msra.mxu0 0.0
        %1690 = vmatprep.subr.mxu0 0.0
        %1691 = vmatpush2.msra.mxu0 0.0
        %1692 = vmatprep.subr.mxu0 0.0
        %1693 = vmatpush2.msra.mxu0 0.0
        %1694 = vmatprep.subr.mxu0 0.0
        %1695 = vmatpush2.msra.mxu0 0.0
        %1696 = vmatprep.subr.mxu0 0.0
        %1697 = vmatpush2.msra.mxu0 0.0
        %1698 = vmatprep.subr.mxu0 0.0
        %1699 = vmatpush2.msra.mxu0 0.0
        %1700 = vmatprep.subr.mxu0 0.0
        %1701 = vmatpush2.msra.mxu0 0.0
        %1702 = vmatprep.subr.mxu0 0.0
        %1703 = vmatpush2.msra.mxu0 0.0
        %1704 = vmatprep.subr.mxu0 0.0
        %1705 = vmatpush2.msra.mxu0 0.0
        %1706 = vmatprep.mubr.f32.mxu0 0.0
        %1707 = vmatmul.mubr.f32.gmra.mxu0 %v1640
        %v1708 = vpop.f32.mrf.mxu0
        %v1709 = vadd.f32 0.0, %v1708
        %v1710 = vpop.f32.mrf.mxu0
        %1711 = vdwg.mxu0
        %v1713 = vsel %vm1069, %v1709, 0
        %1715 = vmatprep.subr.mxu0 0.0
        %1716 = vmatpush1.msra.mxu0 0.0
        %1717 = vmatprep.subr.mxu0 0.0
        %1718 = vmatpush1.msra.mxu0 0.0
        %1719 = vmatprep.subr.mxu0 0.0
        %1720 = vmatpush1.msra.mxu0 0.0
        %1721 = vmatprep.subr.mxu0 0.0
        %1722 = vmatpush1.msra.mxu0 0.0
        %1723 = vmatprep.subr.mxu0 0.0
        %1724 = vmatpush1.msra.mxu0 0.0
        %1725 = vmatprep.subr.mxu0 0.0
        %1726 = vmatpush1.msra.mxu0 0.0
        %1727 = vmatprep.subr.mxu0 0.0
        %1728 = vmatpush1.msra.mxu0 0.0
        %1729 = vmatprep.subr.mxu0 0.0
        %1730 = vmatpush1.msra.mxu0 0.0
        %1731 = vmatprep.subr.mxu0 0.0
        %1732 = vmatpush1.msra.mxu0 0.0
        %1733 = vmatprep.subr.mxu0 0.0
        %1734 = vmatpush1.msra.mxu0 0.0
        %1735 = vmatprep.subr.mxu0 0.0
        %1736 = vmatpush1.msra.mxu0 0.0
        %1737 = vmatprep.subr.mxu0 0.0
        %1738 = vmatpush1.msra.mxu0 0.0
        %1739 = vmatprep.subr.mxu0 0.0
        %1740 = vmatpush1.msra.mxu0 0.0
        %1741 = vmatprep.subr.mxu0 0.0
        %1742 = vmatpush1.msra.mxu0 0.0
        %1743 = vmatprep.subr.mxu0 0.0
        %1744 = vmatpush1.msra.mxu0 %v1055
        %1745 = vmatprep.subr.mxu0 0.0
        %1746 = vmatpush1.msra.mxu0 %v1054
        %1747 = vmatprep.subr.mxu0 0.0
        %1748 = vmatpush2.msra.mxu0 0.0
        %1749 = vmatprep.subr.mxu0 0.0
        %1750 = vmatpush2.msra.mxu0 0.0
        %1751 = vmatprep.subr.mxu0 0.0
        %1752 = vmatpush2.msra.mxu0 0.0
        %1753 = vmatprep.subr.mxu0 0.0
        %1754 = vmatpush2.msra.mxu0 0.0
        %1755 = vmatprep.subr.mxu0 0.0
        %1756 = vmatpush2.msra.mxu0 0.0
        %1757 = vmatprep.subr.mxu0 0.0
        %1758 = vmatpush2.msra.mxu0 0.0
        %1759 = vmatprep.subr.mxu0 0.0
        %1760 = vmatpush2.msra.mxu0 0.0
        %1761 = vmatprep.subr.mxu0 0.0
        %1762 = vmatpush2.msra.mxu0 0.0
        %1763 = vmatprep.subr.mxu0 0.0
        %1764 = vmatpush2.msra.mxu0 0.0
        %1765 = vmatprep.subr.mxu0 0.0
        %1766 = vmatpush2.msra.mxu0 0.0
        %1767 = vmatprep.subr.mxu0 0.0
        %1768 = vmatpush2.msra.mxu0 0.0
        %1769 = vmatprep.subr.mxu0 0.0
        %1770 = vmatpush2.msra.mxu0 0.0
        %1771 = vmatprep.subr.mxu0 0.0
        %1772 = vmatpush2.msra.mxu0 0.0
        %1773 = vmatprep.subr.mxu0 0.0
        %1774 = vmatpush2.msra.mxu0 0.0
        %1775 = vmatprep.subr.mxu0 0.0
        %1776 = vmatpush2.msra.mxu0 0.0
        %1777 = vmatprep.subr.mxu0 0.0
        %1778 = vmatpush2.msra.mxu0 0.0
        %1779 = vmatprep.mubr.f32.mxu0 0.0
        %1780 = vmatmul.mubr.f32.gmra.mxu0 %v1713
        %v1781 = vpop.f32.mrf.mxu0
        %v1782 = vadd.f32 0.0, %v1781
        %v1783 = vpop.f32.mrf.mxu0
        %1784 = vdwg.mxu0
        %v1785 = vadd.f32 %v1541, %v1782
        %s1786 = scalar_lea.vmem %s4, 24
        %v1787 = vld [vmem:[%s1786] sm:$0xff]
        %v1788 = vadd.f32 %v1787, %v1063
        %1789 = vrot.lane.b32.xlu0 %v1046, 80
        %v1790 = vpop.permute.xlu0 %1789
        %1791 = vrot.lane.b32.xlu0 %v1046, 16
        %v1792 = vpop.permute.xlu0 %1791
        %v1793 = vsel %vm1069, %v1790, 0
        %v1795 = vsel %vm1069, %v1792, 0
        %1797 = vmatprep.subr.mxu0 0.0
        %1798 = vmatpush1.xpose.msra.mxu0 0.0
        %1799 = vmatprep.subr.mxu0 0.0
        %1800 = vmatpush1.xpose.msra.mxu0 0.0
        %1801 = vmatprep.subr.mxu0 0.0
        %1802 = vmatpush1.xpose.msra.mxu0 0.0
        %1803 = vmatprep.subr.mxu0 0.0
        %1804 = vmatpush1.xpose.msra.mxu0 0.0
        %1805 = vmatprep.subr.mxu0 0.0
        %1806 = vmatpush1.xpose.msra.mxu0 0.0
        %1807 = vmatprep.subr.mxu0 0.0
        %1808 = vmatpush1.xpose.msra.mxu0 0.0
        %1809 = vmatprep.subr.mxu0 0.0
        %1810 = vmatpush1.xpose.msra.mxu0 0.0
        %1811 = vmatprep.subr.mxu0 0.0
        %1812 = vmatpush1.xpose.msra.mxu0 0.0
        %1813 = vmatprep.subr.mxu0 0.0
        %1814 = vmatpush1.xpose.msra.mxu0 0.0
        %1815 = vmatprep.subr.mxu0 0.0
        %1816 = vmatpush1.xpose.msra.mxu0 0.0
        %1817 = vmatprep.subr.mxu0 0.0
        %1818 = vmatpush1.xpose.msra.mxu0 0.0
        %1819 = vmatprep.subr.mxu0 0.0
        %1820 = vmatpush1.xpose.msra.mxu0 0.0
        %1821 = vmatprep.subr.mxu0 0.0
        %1822 = vmatpush1.xpose.msra.mxu0 0.0
        %1823 = vmatprep.subr.mxu0 0.0
        %1824 = vmatpush1.xpose.msra.mxu0 0.0
        %1825 = vmatprep.subr.mxu0 0.0
        %1826 = vmatpush1.xpose.msra.mxu0 0.0
        %1827 = vmatprep.subr.mxu0 0.0
        %1828 = vmatpush1.xpose.msra.mxu0 %v1795
        %1829 = vmatprep.subr.mxu0 0.0
        %1830 = vmatpush2.xpose.msra.mxu0 0.0
        %1831 = vmatprep.subr.mxu0 0.0
        %1832 = vmatpush2.xpose.msra.mxu0 0.0
        %1833 = vmatprep.subr.mxu0 0.0
        %1834 = vmatpush2.xpose.msra.mxu0 0.0
        %1835 = vmatprep.subr.mxu0 0.0
        %1836 = vmatpush2.xpose.msra.mxu0 0.0
        %1837 = vmatprep.subr.mxu0 0.0
        %1838 = vmatpush2.xpose.msra.mxu0 0.0
        %1839 = vmatprep.subr.mxu0 0.0
        %1840 = vmatpush2.xpose.msra.mxu0 0.0
        %1841 = vmatprep.subr.mxu0 0.0
        %1842 = vmatpush2.xpose.msra.mxu0 0.0
        %1843 = vmatprep.subr.mxu0 0.0
        %1844 = vmatpush2.xpose.msra.mxu0 0.0
        %1845 = vmatprep.subr.mxu0 0.0
        %1846 = vmatpush2.xpose.msra.mxu0 0.0
        %1847 = vmatprep.subr.mxu0 0.0
        %1848 = vmatpush2.xpose.msra.mxu0 0.0
        %1849 = vmatprep.subr.mxu0 0.0
        %1850 = vmatpush2.xpose.msra.mxu0 0.0
        %1851 = vmatprep.subr.mxu0 0.0
        %1852 = vmatpush2.xpose.msra.mxu0 0.0
        %1853 = vmatprep.subr.mxu0 0.0
        %1854 = vmatpush2.xpose.msra.mxu0 0.0
        %1855 = vmatprep.subr.mxu0 0.0
        %1856 = vmatpush2.xpose.msra.mxu0 0.0
        %1857 = vmatprep.subr.mxu0 0.0
        %1858 = vmatpush2.xpose.msra.mxu0 0.0
        %1859 = vmatprep.subr.mxu0 0.0
        %1860 = vmatpush2.xpose.msra.mxu0 0.0
        %1861 = vmatprep.mubr.f32.mxu0 0.0
        %1862 = vmatmul.mubr.f32.gmra.mxu0 %v1793
        %v1863 = vpop.f32.mrf.mxu0
        %v1864 = vadd.f32 %v1788, %v1863
        %v1865 = vpop.f32.mrf.mxu0
        %1866 = vdwg.mxu0
        %v1867 = vsel %vm1144, %v1864, -inf
        %1868 = vmax.xlane.f32.xlu0 %v1867
        %v1869 = vpop.xlane.xlu0 %1868
        %v1870 = vsub.f32 %v1864, %v1869
        %v1871 = vmul.f32 %v1870, 1.442695
        %v1872 = vpow.pop %v1871
        %v1873 = vsel %vm1144, %v1872, 0.0
        %1874 = vadd.xlane.f32.xlu0 %v1873
        %v1875 = vpop.xlane.xlu0 %1874
        %v1876 = vrcp.pop %v1875
        %v1877 = vmul.f32 %v1872, %v1876
        %1878 = vrot.lane.b32.xlu0 %v1048, 80
        %v1879 = vpop.permute.xlu0 %1878
        %v1882 = vsel %vm1144, %v1877, 0
        %1884 = vmatprep.subr.mxu0 0.0
        %1885 = vmatpush1.msra.mxu0 0.0
        %1886 = vmatprep.subr.mxu0 0.0
        %1887 = vmatpush1.msra.mxu0 0.0
        %1888 = vmatprep.subr.mxu0 0.0
        %1889 = vmatpush1.msra.mxu0 0.0
        %1890 = vmatprep.subr.mxu0 0.0
        %1891 = vmatpush1.msra.mxu0 0.0
        %1892 = vmatprep.subr.mxu0 0.0
        %1893 = vmatpush1.msra.mxu0 0.0
        %1894 = vmatprep.subr.mxu0 0.0
        %1895 = vmatpush1.msra.mxu0 0.0
        %1896 = vmatprep.subr.mxu0 0.0
        %1897 = vmatpush1.msra.mxu0 0.0
        %1898 = vmatprep.subr.mxu0 0.0
        %1899 = vmatpush1.msra.mxu0 0.0
        %1900 = vmatprep.subr.mxu0 0.0
        %1901 = vmatpush1.msra.mxu0 0.0
        %1902 = vmatprep.subr.mxu0 0.0
        %1903 = vmatpush1.msra.mxu0 0.0
        %1904 = vmatprep.subr.mxu0 0.0
        %1905 = vmatpush1.msra.mxu0 0.0
        %1906 = vmatprep.subr.mxu0 0.0
        %1907 = vmatpush1.msra.mxu0 0.0
        %1908 = vmatprep.subr.mxu0 0.0
        %1909 = vmatpush1.msra.mxu0 0.0
        %1910 = vmatprep.subr.mxu0 0.0
        %1911 = vmatpush1.msra.mxu0 0.0
        %1912 = vmatprep.subr.mxu0 0.0
        %1913 = vmatpush1.msra.mxu0 0.0
        %1914 = vmatprep.subr.mxu0 0.0
        %1915 = vmatpush1.msra.mxu0 %v1879
        %1916 = vmatprep.subr.mxu0 0.0
        %1917 = vmatpush2.msra.mxu0 0.0
        %1918 = vmatprep.subr.mxu0 0.0
        %1919 = vmatpush2.msra.mxu0 0.0
        %1920 = vmatprep.subr.mxu0 0.0
        %1921 = vmatpush2.msra.mxu0 0.0
        %1922 = vmatprep.subr.mxu0 0.0
        %1923 = vmatpush2.msra.mxu0 0.0
        %1924 = vmatprep.subr.mxu0 0.0
        %1925 = vmatpush2.msra.mxu0 0.0
        %1926 = vmatprep.subr.mxu0 0.0
        %1927 = vmatpush2.msra.mxu0 0.0
        %1928 = vmatprep.subr.mxu0 0.0
        %1929 = vmatpush2.msra.mxu0 0.0
        %1930 = vmatprep.subr.mxu0 0.0
        %1931 = vmatpush2.msra.mxu0 0.0
        %1932 = vmatprep.subr.mxu0 0.0
        %1933 = vmatpush2.msra.mxu0 0.0
        %1934 = vmatprep.subr.mxu0 0.0
        %1935 = vmatpush2.msra.mxu0 0.0
        %1936 = vmatprep.subr.mxu0 0.0
        %1937 = vmatpush2.msra.mxu0 0.0
        %1938 = vmatprep.subr.mxu0 0.0
        %1939 = vmatpush2.msra.mxu0 0.0
        %1940 = vmatprep.subr.mxu0 0.0
        %1941 = vmatpush2.msra.mxu0 0.0
        %1942 = vmatprep.subr.mxu0 0.0
        %1943 = vmatpush2.msra.mxu0 0.0
        %1944 = vmatprep.subr.mxu0 0.0
        %1945 = vmatpush2.msra.mxu0 0.0
        %1946 = vmatprep.subr.mxu0 0.0
        %1947 = vmatpush2.msra.mxu0 0.0
        %1948 = vmatprep.mubr.f32.mxu0 0.0
        %1949 = vmatmul.mubr.f32.gmra.mxu0 %v1882
        %v1950 = vpop.f32.mrf.mxu0
        %v1951 = vadd.f32 0.0, %v1950
        %v1952 = vpop.f32.mrf.mxu0
        %1953 = vdwg.mxu0
        %v1955 = vsel %vm1069, %v1951, 0
        %1957 = vmatprep.subr.mxu0 0.0
        %1958 = vmatpush1.msra.mxu0 0.0
        %1959 = vmatprep.subr.mxu0 0.0
        %1960 = vmatpush1.msra.mxu0 0.0
        %1961 = vmatprep.subr.mxu0 0.0
        %1962 = vmatpush1.msra.mxu0 0.0
        %1963 = vmatprep.subr.mxu0 0.0
        %1964 = vmatpush1.msra.mxu0 0.0
        %1965 = vmatprep.subr.mxu0 0.0
        %1966 = vmatpush1.msra.mxu0 0.0
        %1967 = vmatprep.subr.mxu0 0.0
        %1968 = vmatpush1.msra.mxu0 0.0
        %1969 = vmatprep.subr.mxu0 0.0
        %1970 = vmatpush1.msra.mxu0 0.0
        %1971 = vmatprep.subr.mxu0 0.0
        %1972 = vmatpush1.msra.mxu0 0.0
        %1973 = vmatprep.subr.mxu0 0.0
        %1974 = vmatpush1.msra.mxu0 0.0
        %1975 = vmatprep.subr.mxu0 0.0
        %1976 = vmatpush1.msra.mxu0 0.0
        %1977 = vmatprep.subr.mxu0 0.0
        %1978 = vmatpush1.msra.mxu0 0.0
        %1979 = vmatprep.subr.mxu0 0.0
        %1980 = vmatpush1.msra.mxu0 0.0
        %1981 = vmatprep.subr.mxu0 0.0
        %1982 = vmatpush1.msra.mxu0 0.0
        %1983 = vmatprep.subr.mxu0 0.0
        %1984 = vmatpush1.msra.mxu0 0.0
        %1985 = vmatprep.subr.mxu0 0.0
        %1986 = vmatpush1.msra.mxu0 %v1057
        %1987 = vmatprep.subr.mxu0 0.0
        %1988 = vmatpush1.msra.mxu0 %v1056
        %1989 = vmatprep.subr.mxu0 0.0
        %1990 = vmatpush2.msra.mxu0 0.0
        %1991 = vmatprep.subr.mxu0 0.0
        %1992 = vmatpush2.msra.mxu0 0.0
        %1993 = vmatprep.subr.mxu0 0.0
        %1994 = vmatpush2.msra.mxu0 0.0
        %1995 = vmatprep.subr.mxu0 0.0
        %1996 = vmatpush2.msra.mxu0 0.0
        %1997 = vmatprep.subr.mxu0 0.0
        %1998 = vmatpush2.msra.mxu0 0.0
        %1999 = vmatprep.subr.mxu0 0.0
        %2000 = vmatpush2.msra.mxu0 0.0
        %2001 = vmatprep.subr.mxu0 0.0
        %2002 = vmatpush2.msra.mxu0 0.0
        %2003 = vmatprep.subr.mxu0 0.0
        %2004 = vmatpush2.msra.mxu0 0.0
        %2005 = vmatprep.subr.mxu0 0.0
        %2006 = vmatpush2.msra.mxu0 0.0
        %2007 = vmatprep.subr.mxu0 0.0
        %2008 = vmatpush2.msra.mxu0 0.0
        %2009 = vmatprep.subr.mxu0 0.0
        %2010 = vmatpush2.msra.mxu0 0.0
        %2011 = vmatprep.subr.mxu0 0.0
        %2012 = vmatpush2.msra.mxu0 0.0
        %2013 = vmatprep.subr.mxu0 0.0
        %2014 = vmatpush2.msra.mxu0 0.0
        %2015 = vmatprep.subr.mxu0 0.0
        %2016 = vmatpush2.msra.mxu0 0.0
        %2017 = vmatprep.subr.mxu0 0.0
        %2018 = vmatpush2.msra.mxu0 0.0
        %2019 = vmatprep.subr.mxu0 0.0
        %2020 = vmatpush2.msra.mxu0 0.0
        %2021 = vmatprep.mubr.f32.mxu0 0.0
        %2022 = vmatmul.mubr.f32.gmra.mxu0 %v1955
        %v2023 = vpop.f32.mrf.mxu0
        %v2024 = vadd.f32 0.0, %v2023
        %v2025 = vpop.f32.mrf.mxu0
        %2026 = vdwg.mxu0
        %v2027 = vadd.f32 %v1785, %v2024
        %v2028 = vadd.f32 %v939, %v2027
        %v2029 = vld [vmem:[%s10] sm:$0x1]
        %v2030 = vmul.f32 %v2028, %v2028
        %v2031 = vsel %vm944, %v2030, 0.0
        %2032 = vadd.xlane.f32.xlu0 %v2031
        %v2033 = vpop.xlane.xlu0 %2032
        %v2034 = vmul.f32 %v2033, %v948
        %v2035 = vadd.f32 %v2034, 1e-06
        %v2036 = vrsqrt.pop %v2035
        %v2037 = vmul.f32 %v2028, %v2036
        %v2039 = vlaneseq
        %v2040 = vshrl.u32 %v2039, 7
        %v2041 = vsub.s32 0, %v2040
        %v2042 = vrot.slane %v2029, %v2041
        %v2044 = vmul.f32 %v2037, %v2042
        %v2045 = vld [vmem:[%s11] sm:$0xff]
        %v2046 = vld [vmem:[%s11 + $0x8] sm:$0xff]
        %v2047 = vld [vmem:[%s11 + $0x10] sm:$0xff]
        %v2048 = vld [vmem:[%s11 + $0x18] sm:$0xff]
        %v2049 = vld [vmem:[%s11 + $0x20] sm:$0xff]
        %v2050 = vld [vmem:[%s11 + $0x28] sm:$0xff]
        %v2051 = vld [vmem:[%s11 + $0x30] sm:$0xff]
        %v2052 = vld [vmem:[%s11 + $0x38] sm:$0xff]
        %v2054 = vsel %vm944, %v2044, 0
        %2056 = vmatprep.subr.mxu0 0.0
        %2057 = vmatpush1.msra.mxu0 0.0
        %2058 = vmatprep.subr.mxu0 0.0
        %2059 = vmatpush1.msra.mxu0 0.0
        %2060 = vmatprep.subr.mxu0 0.0
        %2061 = vmatpush1.msra.mxu0 0.0
        %2062 = vmatprep.subr.mxu0 0.0
        %2063 = vmatpush1.msra.mxu0 0.0
        %2064 = vmatprep.subr.mxu0 0.0
        %2065 = vmatpush1.msra.mxu0 0.0
        %2066 = vmatprep.subr.mxu0 0.0
        %2067 = vmatpush1.msra.mxu0 0.0
        %2068 = vmatprep.subr.mxu0 0.0
        %2069 = vmatpush1.msra.mxu0 0.0
        %2070 = vmatprep.subr.mxu0 0.0
        %2071 = vmatpush1.msra.mxu0 0.0
        %2072 = vmatprep.subr.mxu0 0.0
        %2073 = vmatpush1.msra.mxu0 %v2052
        %2074 = vmatprep.subr.mxu0 0.0
        %2075 = vmatpush1.msra.mxu0 %v2051
        %2076 = vmatprep.subr.mxu0 0.0
        %2077 = vmatpush1.msra.mxu0 %v2050
        %2078 = vmatprep.subr.mxu0 0.0
        %2079 = vmatpush1.msra.mxu0 %v2049
        %2080 = vmatprep.subr.mxu0 0.0
        %2081 = vmatpush1.msra.mxu0 %v2048
        %2082 = vmatprep.subr.mxu0 0.0
        %2083 = vmatpush1.msra.mxu0 %v2047
        %2084 = vmatprep.subr.mxu0 0.0
        %2085 = vmatpush1.msra.mxu0 %v2046
        %2086 = vmatprep.subr.mxu0 0.0
        %2087 = vmatpush1.msra.mxu0 %v2045
        %2088 = vmatprep.subr.mxu0 0.0
        %2089 = vmatpush2.msra.mxu0 0.0
        %2090 = vmatprep.subr.mxu0 0.0
        %2091 = vmatpush2.msra.mxu0 0.0
        %2092 = vmatprep.subr.mxu0 0.0
        %2093 = vmatpush2.msra.mxu0 0.0
        %2094 = vmatprep.subr.mxu0 0.0
        %2095 = vmatpush2.msra.mxu0 0.0
        %2096 = vmatprep.subr.mxu0 0.0
        %2097 = vmatpush2.msra.mxu0 0.0
        %2098 = vmatprep.subr.mxu0 0.0
        %2099 = vmatpush2.msra.mxu0 0.0
        %2100 = vmatprep.subr.mxu0 0.0
        %2101 = vmatpush2.msra.mxu0 0.0
        %2102 = vmatprep.subr.mxu0 0.0
        %2103 = vmatpush2.msra.mxu0 0.0
        %2104 = vmatprep.subr.mxu0 0.0
        %2105 = vmatpush2.msra.mxu0 0.0
        %2106 = vmatprep.subr.mxu0 0.0
        %2107 = vmatpush2.msra.mxu0 0.0
        %2108 = vmatprep.subr.mxu0 0.0
        %2109 = vmatpush2.msra.mxu0 0.0
        %2110 = vmatprep.subr.mxu0 0.0
        %2111 = vmatpush2.msra.mxu0 0.0
        %2112 = vmatprep.subr.mxu0 0.0
        %2113 = vmatpush2.msra.mxu0 0.0
        %2114 = vmatprep.subr.mxu0 0.0
        %2115 = vmatpush2.msra.mxu0 0.0
        %2116 = vmatprep.subr.mxu0 0.0
        %2117 = vmatpush2.msra.mxu0 0.0
        %2118 = vmatprep.subr.mxu0 0.0
        %2119 = vmatpush2.msra.mxu0 0.0
        %2120 = vmatprep.mubr.f32.mxu0 0.0
        %2121 = vmatmul.mubr.f32.gmra.mxu0 %v2054
        %v2122 = vpop.f32.mrf.mxu0
        %v2123 = vadd.f32 0.0, %v2122
        %v2124 = vpop.f32.mrf.mxu0
        %2125 = vdwg.mxu0
        %v2126 = vmax.f32 %v2123, 0.0
        %v2127 = vld [vmem:[%s12] sm:$0xff]
        %v2128 = vld [vmem:[%s12 + $0x8] sm:$0xff]
        %v2129 = vld [vmem:[%s12 + $0x10] sm:$0xff]
        %v2130 = vld [vmem:[%s12 + $0x18] sm:$0xff]
        %v2131 = vld [vmem:[%s12 + $0x20] sm:$0xff]
        %v2132 = vld [vmem:[%s12 + $0x28] sm:$0xff]
        %v2133 = vld [vmem:[%s12 + $0x30] sm:$0xff]
        %v2134 = vld [vmem:[%s12 + $0x38] sm:$0xff]
        %v2135 = vld [vmem:[%s12 + $0x40] sm:$0xff]
        %v2136 = vld [vmem:[%s12 + $0x48] sm:$0xff]
        %v2137 = vld [vmem:[%s12 + $0x50] sm:$0xff]
        %v2138 = vld [vmem:[%s12 + $0x58] sm:$0xff]
        %v2139 = vld [vmem:[%s12 + $0x60] sm:$0xff]
        %v2140 = vld [vmem:[%s12 + $0x68] sm:$0xff]
        %v2141 = vld [vmem:[%s12 + $0x70] sm:$0xff]
        %v2142 = vld [vmem:[%s12 + $0x78] sm:$0xff]
        %2143 = vmatprep.subr.mxu0 0.0
        %2144 = vmatpush1.msra.mxu0 %v2142
        %2145 = vmatprep.subr.mxu0 0.0
        %2146 = vmatpush1.msra.mxu0 %v2141
        %2147 = vmatprep.subr.mxu0 0.0
        %2148 = vmatpush1.msra.mxu0 %v2140
        %2149 = vmatprep.subr.mxu0 0.0
        %2150 = vmatpush1.msra.mxu0 %v2139
        %2151 = vmatprep.subr.mxu0 0.0
        %2152 = vmatpush1.msra.mxu0 %v2138
        %2153 = vmatprep.subr.mxu0 0.0
        %2154 = vmatpush1.msra.mxu0 %v2137
        %2155 = vmatprep.subr.mxu0 0.0
        %2156 = vmatpush1.msra.mxu0 %v2136
        %2157 = vmatprep.subr.mxu0 0.0
        %2158 = vmatpush1.msra.mxu0 %v2135
        %2159 = vmatprep.subr.mxu0 0.0
        %2160 = vmatpush1.msra.mxu0 %v2134
        %2161 = vmatprep.subr.mxu0 0.0
        %2162 = vmatpush1.msra.mxu0 %v2133
        %2163 = vmatprep.subr.mxu0 0.0
        %2164 = vmatpush1.msra.mxu0 %v2132
        %2165 = vmatprep.subr.mxu0 0.0
        %2166 = vmatpush1.msra.mxu0 %v2131
        %2167 = vmatprep.subr.mxu0 0.0
        %2168 = vmatpush1.msra.mxu0 %v2130
        %2169 = vmatprep.subr.mxu0 0.0
        %2170 = vmatpush1.msra.mxu0 %v2129
        %2171 = vmatprep.subr.mxu0 0.0
        %2172 = vmatpush1.msra.mxu0 %v2128
        %2173 = vmatprep.subr.mxu0 0.0
        %2174 = vmatpush1.msra.mxu0 %v2127
        %2175 = vmatprep.subr.mxu0 0.0
        %2176 = vmatpush2.msra.mxu0 0.0
        %2177 = vmatprep.subr.mxu0 0.0
        %2178 = vmatpush2.msra.mxu0 0.0
        %2179 = vmatprep.subr.mxu0 0.0
        %2180 = vmatpush2.msra.mxu0 0.0
        %2181 = vmatprep.subr.mxu0 0.0
        %2182 = vmatpush2.msra.mxu0 0.0
        %2183 = vmatprep.subr.mxu0 0.0
        %2184 = vmatpush2.msra.mxu0 0.0
        %2185 = vmatprep.subr.mxu0 0.0
        %2186 = vmatpush2.msra.mxu0 0.0
        %2187 = vmatprep.subr.mxu0 0.0
        %2188 = vmatpush2.msra.mxu0 0.0
        %2189 = vmatprep.subr.mxu0 0.0
        %2190 = vmatpush2.msra.mxu0 0.0
        %2191 = vmatprep.subr.mxu0 0.0
        %2192 = vmatpush2.msra.mxu0 0.0
        %2193 = vmatprep.subr.mxu0 0.0
        %2194 = vmatpush2.msra.mxu0 0.0
        %2195 = vmatprep.subr.mxu0 0.0
        %2196 = vmatpush2.msra.mxu0 0.0
        %2197 = vmatprep.subr.mxu0 0.0
        %2198 = vmatpush2.msra.mxu0 0.0
        %2199 = vmatprep.subr.mxu0 0.0
        %2200 = vmatpush2.msra.mxu0 0.0
        %2201 = vmatprep.subr.mxu0 0.0
        %2202 = vmatpush2.msra.mxu0 0.0
        %2203 = vmatprep.subr.mxu0 0.0
        %2204 = vmatpush2.msra.mxu0 0.0
        %2205 = vmatprep.subr.mxu0 0.0
        %2206 = vmatpush2.msra.mxu0 0.0
        %2207 = vmatprep.mubr.f32.mxu0 0.0
        %2208 = vmatmul.mubr.f32.gmra.mxu0 %v2126
        %v2209 = vpop.f32.mrf.mxu0
        %v2210 = vadd.f32 0.0, %v2209
        %v2211 = vpop.f32.mrf.mxu0
        %2212 = vdwg.mxu0
        %v2213 = vadd.f32 %v2028, %v2210
        %s2214 = scalar_lea.vmem %s7, 1
        %v2215 = vld [vmem:[%s2214] sm:$0x1]
        %v2216 = vmul.f32 %v2213, %v2213
        %v2217 = vsel %vm944, %v2216, 0.0
        %2218 = vadd.xlane.f32.xlu0 %v2217
        %v2219 = vpop.xlane.xlu0 %2218
        %v2220 = vmul.f32 %v2219, %v948
        %v2221 = vadd.f32 %v2220, 1e-06
        %v2222 = vrsqrt.pop %v2221
        %v2223 = vmul.f32 %v2213, %v2222
        %v2225 = vlaneseq
        %v2226 = vshrl.u32 %v2225, 7
        %v2227 = vsub.s32 0, %v2226
        %v2228 = vrot.slane %v2215, %v2227
        %v2230 = vmul.f32 %v2223, %v2228
        %s2231 = scalar_lea.vmem %s8, 128
        %v2232 = vld [vmem:[%s2231] sm:$0xff]
        %v2233 = vld [vmem:[%s2231 + $0x8] sm:$0xff]
        %v2234 = vld [vmem:[%s2231 + $0x10] sm:$0xff]
        %v2235 = vld [vmem:[%s2231 + $0x18] sm:$0xff]
        %v2236 = vld [vmem:[%s2231 + $0x20] sm:$0xff]
        %v2237 = vld [vmem:[%s2231 + $0x28] sm:$0xff]
        %v2238 = vld [vmem:[%s2231 + $0x30] sm:$0xff]
        %v2239 = vld [vmem:[%s2231 + $0x38] sm:$0xff]
        %v2240 = vld [vmem:[%s2231 + $0x40] sm:$0xff]
        %v2241 = vld [vmem:[%s2231 + $0x48] sm:$0xff]
        %v2242 = vld [vmem:[%s2231 + $0x50] sm:$0xff]
        %v2243 = vld [vmem:[%s2231 + $0x58] sm:$0xff]
        %v2244 = vld [vmem:[%s2231 + $0x60] sm:$0xff]
        %v2245 = vld [vmem:[%s2231 + $0x68] sm:$0xff]
        %v2246 = vld [vmem:[%s2231 + $0x70] sm:$0xff]
        %v2247 = vld [vmem:[%s2231 + $0x78] sm:$0xff]
        %v2249 = vsel %vm944, %v2230, 0
        %2251 = vmatprep.subr.mxu0 0.0
        %2252 = vmatpush1.msra.mxu0 0.0
        %2253 = vmatprep.subr.mxu0 0.0
        %2254 = vmatpush1.msra.mxu0 0.0
        %2255 = vmatprep.subr.mxu0 0.0
        %2256 = vmatpush1.msra.mxu0 0.0
        %2257 = vmatprep.subr.mxu0 0.0
        %2258 = vmatpush1.msra.mxu0 0.0
        %2259 = vmatprep.subr.mxu0 0.0
        %2260 = vmatpush1.msra.mxu0 0.0
        %2261 = vmatprep.subr.mxu0 0.0
        %2262 = vmatpush1.msra.mxu0 0.0
        %2263 = vmatprep.subr.mxu0 0.0
        %2264 = vmatpush1.msra.mxu0 0.0
        %2265 = vmatprep.subr.mxu0 0.0
        %2266 = vmatpush1.msra.mxu0 0.0
        %2267 = vmatprep.subr.mxu0 %v2247
        %2268 = vmatpush1.msra.mxu0 %v2246
        %2269 = vmatprep.subr.mxu0 %v2245
        %2270 = vmatpush1.msra.mxu0 %v2244
        %2271 = vmatprep.subr.mxu0 %v2243
        %2272 = vmatpush1.msra.mxu0 %v2242
        %2273 = vmatprep.subr.mxu0 %v2241
        %2274 = vmatpush1.msra.mxu0 %v2240
        %2275 = vmatprep.subr.mxu0 %v2239
        %2276 = vmatpush1.msra.mxu0 %v2238
        %2277 = vmatprep.subr.mxu0 %v2237
        %2278 = vmatpush1.msra.mxu0 %v2236
        %2279 = vmatprep.subr.mxu0 %v2235
        %2280 = vmatpush1.msra.mxu0 %v2234
        %2281 = vmatprep.subr.mxu0 %v2233
        %2282 = vmatpush1.msra.mxu0 %v2232
        %2283 = vmatprep.subr.mxu0 0.0
        %2284 = vmatpush2.msra.mxu0 0.0
        %2285 = vmatprep.subr.mxu0 0.0
        %2286 = vmatpush2.msra.mxu0 0.0
        %2287 = vmatprep.subr.mxu0 0.0
        %2288 = vmatpush2.msra.mxu0 0.0
        %2289 = vmatprep.subr.mxu0 0.0
        %2290 = vmatpush2.msra.mxu0 0.0
        %2291 = vmatprep.subr.mxu0 0.0
        %2292 = vmatpush2.msra.mxu0 0.0
        %2293 = vmatprep.subr.mxu0 0.0
        %2294 = vmatpush2.msra.mxu0 0.0
        %2295 = vmatprep.subr.mxu0 0.0
        %2296 = vmatpush2.msra.mxu0 0.0
        %2297 = vmatprep.subr.mxu0 0.0
        %2298 = vmatpush2.msra.mxu0 0.0
        %2299 = vmatprep.subr.mxu0 0.0
        %2300 = vmatpush2.msra.mxu0 0.0
        %2301 = vmatprep.subr.mxu0 0.0
        %2302 = vmatpush2.msra.mxu0 0.0
        %2303 = vmatprep.subr.mxu0 0.0
        %2304 = vmatpush2.msra.mxu0 0.0
        %2305 = vmatprep.subr.mxu0 0.0
        %2306 = vmatpush2.msra.mxu0 0.0
        %2307 = vmatprep.subr.mxu0 0.0
        %2308 = vmatpush2.msra.mxu0 0.0
        %2309 = vmatprep.subr.mxu0 0.0
        %2310 = vmatpush2.msra.mxu0 0.0
        %2311 = vmatprep.subr.mxu0 0.0
        %2312 = vmatpush2.msra.mxu0 0.0
        %2313 = vmatprep.subr.mxu0 0.0
        %2314 = vmatpush2.msra.mxu0 0.0
        %2315 = vmatprep.mubr.f32.mxu0 0.0
        %2316 = vmatmul.mubr.f32.gmra.mxu0 %v2249
        %v2317 = vpop.f32.mrf.mxu0
        %v2318 = vadd.f32 0.0, %v2317
        %v2319 = vpop.f32.mrf.mxu0
        %v2320 = vadd.f32 0.0, %v2319
        %2321 = vdwg.mxu0
        %s2322 = scalar_lea.vmem %s9, 64
        %v2323 = vld [vmem:[%s2322] sm:$0xff]
        %v2324 = vld [vmem:[%s2322 + $0x8] sm:$0xff]
        %v2325 = vld [vmem:[%s2322 + $0x10] sm:$0xff]
        %v2326 = vld [vmem:[%s2322 + $0x18] sm:$0xff]
        %v2327 = vld [vmem:[%s2322 + $0x20] sm:$0xff]
        %v2328 = vld [vmem:[%s2322 + $0x28] sm:$0xff]
        %v2329 = vld [vmem:[%s2322 + $0x30] sm:$0xff]
        %v2330 = vld [vmem:[%s2322 + $0x38] sm:$0xff]
        %2332 = vrot.lane.b32.xlu0 %v2318, 64
        %v2333 = vpop.permute.xlu0 %2332
        %v2334 = vsel %vm1069, %v2318, 0
        %v2336 = vsel %vm1069, %v2333, 0
        %2338 = vmatprep.subr.mxu0 0.0
        %2339 = vmatpush1.xpose.msra.mxu0 0.0
        %2340 = vmatprep.subr.mxu0 0.0
        %2341 = vmatpush1.xpose.msra.mxu0 0.0
        %2342 = vmatprep.subr.mxu0 0.0
        %2343 = vmatpush1.xpose.msra.mxu0 0.0
        %2344 = vmatprep.subr.mxu0 0.0
        %2345 = vmatpush1.xpose.msra.mxu0 0.0
        %2346 = vmatprep.subr.mxu0 0.0
        %2347 = vmatpush1.xpose.msra.mxu0 0.0
        %2348 = vmatprep.subr.mxu0 0.0
        %2349 = vmatpush1.xpose.msra.mxu0 0.0
        %2350 = vmatprep.subr.mxu0 0.0
        %2351 = vmatpush1.xpose.msra.mxu0 0.0
        %2352 = vmatprep.subr.mxu0 0.0
        %2353 = vmatpush1.xpose.msra.mxu0 0.0
        %2354 = vmatprep.subr.mxu0 0.0
        %2355 = vmatpush1.xpose.msra.mxu0 0.0
        %2356 = vmatprep.subr.mxu0 0.0
        %2357 = vmatpush1.xpose.msra.mxu0 0.0
        %2358 = vmatprep.subr.mxu0 0.0
        %2359 = vmatpush1.xpose.msra.mxu0 0.0
        %2360 = vmatprep.subr.mxu0 0.0
        %2361 = vmatpush1.xpose.msra.mxu0 0.0
        %2362 = vmatprep.subr.mxu0 0.0
        %2363 = vmatpush1.xpose.msra.mxu0 0.0
        %2364 = vmatprep.subr.mxu0 0.0
        %2365 = vmatpush1.xpose.msra.mxu0 0.0
        %2366 = vmatprep.subr.mxu0 0.0
        %2367 = vmatpush1.xpose.msra.mxu0 0.0
        %2368 = vmatprep.subr.mxu0 0.0
        %2369 = vmatpush1.xpose.msra.mxu0 %v2336
        %2370 = vmatprep.subr.mxu0 0.0
        %2371 = vmatpush2.xpose.msra.mxu0 0.0
        %2372 = vmatprep.subr.mxu0 0.0
        %2373 = vmatpush2.xpose.msra.mxu0 0.0
        %2374 = vmatprep.subr.mxu0 0.0
        %2375 = vmatpush2.xpose.msra.mxu0 0.0
        %2376 = vmatprep.subr.mxu0 0.0
        %2377 = vmatpush2.xpose.msra.mxu0 0.0
        %2378 = vmatprep.subr.mxu0 0.0
        %2379 = vmatpush2.xpose.msra.mxu0 0.0
        %2380 = vmatprep.subr.mxu0 0.0
        %2381 = vmatpush2.xpose.msra.mxu0 0.0
        %2382 = vmatprep.subr.mxu0 0.0
        %2383 = vmatpush2.xpose.msra.mxu0 0.0
        %2384 = vmatprep.subr.mxu0 0.0
        %2385 = vmatpush2.xpose.msra.mxu0 0.0
        %2386 = vmatprep.subr.mxu0 0.0
        %2387 = vmatpush2.xpose.msra.mxu0 0.0
        %2388 = vmatprep.subr.mxu0 0.0
        %2389 = vmatpush2.xpose.msra.mxu0 0.0
        %2390 = vmatprep.subr.mxu0 0.0
        %2391 = vmatpush2.xpose.msra.mxu0 0.0
        %2392 = vmatprep.subr.mxu0 0.0
        %2393 = vmatpush2.xpose.msra.mxu0 0.0
        %2394 = vmatprep.subr.mxu0 0.0
        %2395 = vmatpush2.xpose.msra.mxu0 0.0
        %2396 = vmatprep.subr.mxu0 0.0
        %2397 = vmatpush2.xpose.msra.mxu0 0.0
        %2398 = vmatprep.subr.mxu0 0.0
        %2399 = vmatpush2.xpose.msra.mxu0 0.0
        %2400 = vmatprep.subr.mxu0 0.0
        %2401 = vmatpush2.xpose.msra.mxu0 0.0
        %2402 = vmatprep.mubr.f32.mxu0 0.0
        %2403 = vmatmul.mubr.f32.gmra.mxu0 %v2334
        %v2404 = vpop.f32.mrf.mxu0
        %v2405 = vadd.f32 %v1065, %v2404
        %v2406 = vpop.f32.mrf.mxu0
        %2407 = vdwg.mxu0
        %v2408 = vsel %vm1144, %v2405, -inf
        %2409 = vmax.xlane.f32.xlu0 %v2408
        %v2410 = vpop.xlane.xlu0 %2409
        %v2411 = vsub.f32 %v2405, %v2410
        %v2412 = vmul.f32 %v2411, 1.442695
        %v2413 = vpow.pop %v2412
        %v2414 = vsel %vm1144, %v2413, 0.0
        %2415 = vadd.xlane.f32.xlu0 %v2414
        %v2416 = vpop.xlane.xlu0 %2415
        %v2417 = vrcp.pop %v2416
        %v2418 = vmul.f32 %v2413, %v2417
        %v2420 = vsel %vm1144, %v2418, 0
        %2422 = vmatprep.subr.mxu0 0.0
        %2423 = vmatpush1.msra.mxu0 0.0
        %2424 = vmatprep.subr.mxu0 0.0
        %2425 = vmatpush1.msra.mxu0 0.0
        %2426 = vmatprep.subr.mxu0 0.0
        %2427 = vmatpush1.msra.mxu0 0.0
        %2428 = vmatprep.subr.mxu0 0.0
        %2429 = vmatpush1.msra.mxu0 0.0
        %2430 = vmatprep.subr.mxu0 0.0
        %2431 = vmatpush1.msra.mxu0 0.0
        %2432 = vmatprep.subr.mxu0 0.0
        %2433 = vmatpush1.msra.mxu0 0.0
        %2434 = vmatprep.subr.mxu0 0.0
        %2435 = vmatpush1.msra.mxu0 0.0
        %2436 = vmatprep.subr.mxu0 0.0
        %2437 = vmatpush1.msra.mxu0 0.0
        %2438 = vmatprep.subr.mxu0 0.0
        %2439 = vmatpush1.msra.mxu0 0.0
        %2440 = vmatprep.subr.mxu0 0.0
        %2441 = vmatpush1.msra.mxu0 0.0
        %2442 = vmatprep.subr.mxu0 0.0
        %2443 = vmatpush1.msra.mxu0 0.0
        %2444 = vmatprep.subr.mxu0 0.0
        %2445 = vmatpush1.msra.mxu0 0.0
        %2446 = vmatprep.subr.mxu0 0.0
        %2447 = vmatpush1.msra.mxu0 0.0
        %2448 = vmatprep.subr.mxu0 0.0
        %2449 = vmatpush1.msra.mxu0 0.0
        %2450 = vmatprep.subr.mxu0 0.0
        %2451 = vmatpush1.msra.mxu0 0.0
        %2452 = vmatprep.subr.mxu0 0.0
        %2453 = vmatpush1.msra.mxu0 %v2320
        %2454 = vmatprep.subr.mxu0 0.0
        %2455 = vmatpush2.msra.mxu0 0.0
        %2456 = vmatprep.subr.mxu0 0.0
        %2457 = vmatpush2.msra.mxu0 0.0
        %2458 = vmatprep.subr.mxu0 0.0
        %2459 = vmatpush2.msra.mxu0 0.0
        %2460 = vmatprep.subr.mxu0 0.0
        %2461 = vmatpush2.msra.mxu0 0.0
        %2462 = vmatprep.subr.mxu0 0.0
        %2463 = vmatpush2.msra.mxu0 0.0
        %2464 = vmatprep.subr.mxu0 0.0
        %2465 = vmatpush2.msra.mxu0 0.0
        %2466 = vmatprep.subr.mxu0 0.0
        %2467 = vmatpush2.msra.mxu0 0.0
        %2468 = vmatprep.subr.mxu0 0.0
        %2469 = vmatpush2.msra.mxu0 0.0
        %2470 = vmatprep.subr.mxu0 0.0
        %2471 = vmatpush2.msra.mxu0 0.0
        %2472 = vmatprep.subr.mxu0 0.0
        %2473 = vmatpush2.msra.mxu0 0.0
        %2474 = vmatprep.subr.mxu0 0.0
        %2475 = vmatpush2.msra.mxu0 0.0
        %2476 = vmatprep.subr.mxu0 0.0
        %2477 = vmatpush2.msra.mxu0 0.0
        %2478 = vmatprep.subr.mxu0 0.0
        %2479 = vmatpush2.msra.mxu0 0.0
        %2480 = vmatprep.subr.mxu0 0.0
        %2481 = vmatpush2.msra.mxu0 0.0
        %2482 = vmatprep.subr.mxu0 0.0
        %2483 = vmatpush2.msra.mxu0 0.0
        %2484 = vmatprep.subr.mxu0 0.0
        %2485 = vmatpush2.msra.mxu0 0.0
        %2486 = vmatprep.mubr.f32.mxu0 0.0
        %2487 = vmatmul.mubr.f32.gmra.mxu0 %v2420
        %v2488 = vpop.f32.mrf.mxu0
        %v2489 = vadd.f32 0.0, %v2488
        %v2490 = vpop.f32.mrf.mxu0
        %2491 = vdwg.mxu0
        %2492 = vrot.lane.b32.xlu0 %v2318, 112
        %v2493 = vpop.permute.xlu0 %2492
        %2494 = vrot.lane.b32.xlu0 %v2318, 48
        %v2495 = vpop.permute.xlu0 %2494
        %v2496 = vsel %vm1069, %v2493, 0
        %v2498 = vsel %vm1069, %v2495, 0
        %2500 = vmatprep.subr.mxu0 0.0
        %2501 = vmatpush1.xpose.msra.mxu0 0.0
        %2502 = vmatprep.subr.mxu0 0.0
        %2503 = vmatpush1.xpose.msra.mxu0 0.0
        %2504 = vmatprep.subr.mxu0 0.0
        %2505 = vmatpush1.xpose.msra.mxu0 0.0
        %2506 = vmatprep.subr.mxu0 0.0
        %2507 = vmatpush1.xpose.msra.mxu0 0.0
        %2508 = vmatprep.subr.mxu0 0.0
        %2509 = vmatpush1.xpose.msra.mxu0 0.0
        %2510 = vmatprep.subr.mxu0 0.0
        %2511 = vmatpush1.xpose.msra.mxu0 0.0
        %2512 = vmatprep.subr.mxu0 0.0
        %2513 = vmatpush1.xpose.msra.mxu0 0.0
        %2514 = vmatprep.subr.mxu0 0.0
        %2515 = vmatpush1.xpose.msra.mxu0 0.0
        %2516 = vmatprep.subr.mxu0 0.0
        %2517 = vmatpush1.xpose.msra.mxu0 0.0
        %2518 = vmatprep.subr.mxu0 0.0
        %2519 = vmatpush1.xpose.msra.mxu0 0.0
        %2520 = vmatprep.subr.mxu0 0.0
        %2521 = vmatpush1.xpose.msra.mxu0 0.0
        %2522 = vmatprep.subr.mxu0 0.0
        %2523 = vmatpush1.xpose.msra.mxu0 0.0
        %2524 = vmatprep.subr.mxu0 0.0
        %2525 = vmatpush1.xpose.msra.mxu0 0.0
        %2526 = vmatprep.subr.mxu0 0.0
        %2527 = vmatpush1.xpose.msra.mxu0 0.0
        %2528 = vmatprep.subr.mxu0 0.0
        %2529 = vmatpush1.xpose.msra.mxu0 0.0
        %2530 = vmatprep.subr.mxu0 0.0
        %2531 = vmatpush1.xpose.msra.mxu0 %v2498
        %2532 = vmatprep.subr.mxu0 0.0
        %2533 = vmatpush2.xpose.msra.mxu0 0.0
        %2534 = vmatprep.subr.mxu0 0.0
        %2535 = vmatpush2.xpose.msra.mxu0 0.0
        %2536 = vmatprep.subr.mxu0 0.0
        %2537 = vmatpush2.xpose.msra.mxu0 0.0
        %2538 = vmatprep.subr.mxu0 0.0
        %2539 = vmatpush2.xpose.msra.mxu0 0.0
        %2540 = vmatprep.subr.mxu0 0.0
        %2541 = vmatpush2.xpose.msra.mxu0 0.0
        %2542 = vmatprep.subr.mxu0 0.0
        %2543 = vmatpush2.xpose.msra.mxu0 0.0
        %2544 = vmatprep.subr.mxu0 0.0
        %2545 = vmatpush2.xpose.msra.mxu0 0.0
        %2546 = vmatprep.subr.mxu0 0.0
        %2547 = vmatpush2.xpose.msra.mxu0 0.0
        %2548 = vmatprep.subr.mxu0 0.0
        %2549 = vmatpush2.xpose.msra.mxu0 0.0
        %2550 = vmatprep.subr.mxu0 0.0
        %2551 = vmatpush2.xpose.msra.mxu0 0.0
        %2552 = vmatprep.subr.mxu0 0.0
        %2553 = vmatpush2.xpose.msra.mxu0 0.0
        %2554 = vmatprep.subr.mxu0 0.0
        %2555 = vmatpush2.xpose.msra.mxu0 0.0
        %2556 = vmatprep.subr.mxu0 0.0
        %2557 = vmatpush2.xpose.msra.mxu0 0.0
        %2558 = vmatprep.subr.mxu0 0.0
        %2559 = vmatpush2.xpose.msra.mxu0 0.0
        %2560 = vmatprep.subr.mxu0 0.0
        %2561 = vmatpush2.xpose.msra.mxu0 0.0
        %2562 = vmatprep.subr.mxu0 0.0
        %2563 = vmatpush2.xpose.msra.mxu0 0.0
        %2564 = vmatprep.mubr.f32.mxu0 0.0
        %2565 = vmatmul.mubr.f32.gmra.mxu0 %v2496
        %v2566 = vpop.f32.mrf.mxu0
        %v2567 = vadd.f32 %v1231, %v2566
        %v2568 = vpop.f32.mrf.mxu0
        %2569 = vdwg.mxu0
        %v2570 = vsel %vm1144, %v2567, -inf
        %2571 = vmax.xlane.f32.xlu0 %v2570
        %v2572 = vpop.xlane.xlu0 %2571
        %v2573 = vsub.f32 %v2567, %v2572
        %v2574 = vmul.f32 %v2573, 1.442695
        %v2575 = vpow.pop %v2574
        %v2576 = vsel %vm1144, %v2575, 0.0
        %2577 = vadd.xlane.f32.xlu0 %v2576
        %v2578 = vpop.xlane.xlu0 %2577
        %v2579 = vrcp.pop %v2578
        %v2580 = vmul.f32 %v2575, %v2579
        %2582 = vrot.lane.b32.xlu0 %v2320, 112
        %v2583 = vpop.permute.xlu0 %2582
        %v2586 = vsel %vm1144, %v2580, 0
        %2588 = vmatprep.subr.mxu0 0.0
        %2589 = vmatpush1.msra.mxu0 0.0
        %2590 = vmatprep.subr.mxu0 0.0
        %2591 = vmatpush1.msra.mxu0 0.0
        %2592 = vmatprep.subr.mxu0 0.0
        %2593 = vmatpush1.msra.mxu0 0.0
        %2594 = vmatprep.subr.mxu0 0.0
        %2595 = vmatpush1.msra.mxu0 0.0
        %2596 = vmatprep.subr.mxu0 0.0
        %2597 = vmatpush1.msra.mxu0 0.0
        %2598 = vmatprep.subr.mxu0 0.0
        %2599 = vmatpush1.msra.mxu0 0.0
        %2600 = vmatprep.subr.mxu0 0.0
        %2601 = vmatpush1.msra.mxu0 0.0
        %2602 = vmatprep.subr.mxu0 0.0
        %2603 = vmatpush1.msra.mxu0 0.0
        %2604 = vmatprep.subr.mxu0 0.0
        %2605 = vmatpush1.msra.mxu0 0.0
        %2606 = vmatprep.subr.mxu0 0.0
        %2607 = vmatpush1.msra.mxu0 0.0
        %2608 = vmatprep.subr.mxu0 0.0
        %2609 = vmatpush1.msra.mxu0 0.0
        %2610 = vmatprep.subr.mxu0 0.0
        %2611 = vmatpush1.msra.mxu0 0.0
        %2612 = vmatprep.subr.mxu0 0.0
        %2613 = vmatpush1.msra.mxu0 0.0
        %2614 = vmatprep.subr.mxu0 0.0
        %2615 = vmatpush1.msra.mxu0 0.0
        %2616 = vmatprep.subr.mxu0 0.0
        %2617 = vmatpush1.msra.mxu0 0.0
        %2618 = vmatprep.subr.mxu0 0.0
        %2619 = vmatpush1.msra.mxu0 %v2583
        %2620 = vmatprep.subr.mxu0 0.0
        %2621 = vmatpush2.msra.mxu0 0.0
        %2622 = vmatprep.subr.mxu0 0.0
        %2623 = vmatpush2.msra.mxu0 0.0
        %2624 = vmatprep.subr.mxu0 0.0
        %2625 = vmatpush2.msra.mxu0 0.0
        %2626 = vmatprep.subr.mxu0 0.0
        %2627 = vmatpush2.msra.mxu0 0.0
        %2628 = vmatprep.subr.mxu0 0.0
        %2629 = vmatpush2.msra.mxu0 0.0
        %2630 = vmatprep.subr.mxu0 0.0
        %2631 = vmatpush2.msra.mxu0 0.0
        %2632 = vmatprep.subr.mxu0 0.0
        %2633 = vmatpush2.msra.mxu0 0.0
        %2634 = vmatprep.subr.mxu0 0.0
        %2635 = vmatpush2.msra.mxu0 0.0
        %2636 = vmatprep.subr.mxu0 0.0
        %2637 = vmatpush2.msra.mxu0 0.0
        %2638 = vmatprep.subr.mxu0 0.0
        %2639 = vmatpush2.msra.mxu0 0.0
        %2640 = vmatprep.subr.mxu0 0.0
        %2641 = vmatpush2.msra.mxu0 0.0
        %2642 = vmatprep.subr.mxu0 0.0
        %2643 = vmatpush2.msra.mxu0 0.0
        %2644 = vmatprep.subr.mxu0 0.0
        %2645 = vmatpush2.msra.mxu0 0.0
        %2646 = vmatprep.subr.mxu0 0.0
        %2647 = vmatpush2.msra.mxu0 0.0
        %2648 = vmatprep.subr.mxu0 0.0
        %2649 = vmatpush2.msra.mxu0 0.0
        %2650 = vmatprep.subr.mxu0 0.0
        %2651 = vmatpush2.msra.mxu0 0.0
        %2652 = vmatprep.mubr.f32.mxu0 0.0
        %2653 = vmatmul.mubr.f32.gmra.mxu0 %v2586
        %v2654 = vpop.f32.mrf.mxu0
        %v2655 = vadd.f32 0.0, %v2654
        %v2656 = vpop.f32.mrf.mxu0
        %2657 = vdwg.mxu0
        %v2659 = vsel %vm1069, %v2655, 0
        %2661 = vmatprep.subr.mxu0 0.0
        %2662 = vmatpush1.msra.mxu0 0.0
        %2663 = vmatprep.subr.mxu0 0.0
        %2664 = vmatpush1.msra.mxu0 0.0
        %2665 = vmatprep.subr.mxu0 0.0
        %2666 = vmatpush1.msra.mxu0 0.0
        %2667 = vmatprep.subr.mxu0 0.0
        %2668 = vmatpush1.msra.mxu0 0.0
        %2669 = vmatprep.subr.mxu0 0.0
        %2670 = vmatpush1.msra.mxu0 0.0
        %2671 = vmatprep.subr.mxu0 0.0
        %2672 = vmatpush1.msra.mxu0 0.0
        %2673 = vmatprep.subr.mxu0 0.0
        %2674 = vmatpush1.msra.mxu0 0.0
        %2675 = vmatprep.subr.mxu0 0.0
        %2676 = vmatpush1.msra.mxu0 0.0
        %2677 = vmatprep.subr.mxu0 0.0
        %2678 = vmatpush1.msra.mxu0 0.0
        %2679 = vmatprep.subr.mxu0 0.0
        %2680 = vmatpush1.msra.mxu0 0.0
        %2681 = vmatprep.subr.mxu0 0.0
        %2682 = vmatpush1.msra.mxu0 0.0
        %2683 = vmatprep.subr.mxu0 0.0
        %2684 = vmatpush1.msra.mxu0 0.0
        %2685 = vmatprep.subr.mxu0 0.0
        %2686 = vmatpush1.msra.mxu0 0.0
        %2687 = vmatprep.subr.mxu0 0.0
        %2688 = vmatpush1.msra.mxu0 0.0
        %2689 = vmatprep.subr.mxu0 0.0
        %2690 = vmatpush1.msra.mxu0 %v2326
        %2691 = vmatprep.subr.mxu0 0.0
        %2692 = vmatpush1.msra.mxu0 %v2325
        %2693 = vmatprep.subr.mxu0 0.0
        %2694 = vmatpush2.msra.mxu0 0.0
        %2695 = vmatprep.subr.mxu0 0.0
        %2696 = vmatpush2.msra.mxu0 0.0
        %2697 = vmatprep.subr.mxu0 0.0
        %2698 = vmatpush2.msra.mxu0 0.0
        %2699 = vmatprep.subr.mxu0 0.0
        %2700 = vmatpush2.msra.mxu0 0.0
        %2701 = vmatprep.subr.mxu0 0.0
        %2702 = vmatpush2.msra.mxu0 0.0
        %2703 = vmatprep.subr.mxu0 0.0
        %2704 = vmatpush2.msra.mxu0 0.0
        %2705 = vmatprep.subr.mxu0 0.0
        %2706 = vmatpush2.msra.mxu0 0.0
        %2707 = vmatprep.subr.mxu0 0.0
        %2708 = vmatpush2.msra.mxu0 0.0
        %2709 = vmatprep.subr.mxu0 0.0
        %2710 = vmatpush2.msra.mxu0 0.0
        %2711 = vmatprep.subr.mxu0 0.0
        %2712 = vmatpush2.msra.mxu0 0.0
        %2713 = vmatprep.subr.mxu0 0.0
        %2714 = vmatpush2.msra.mxu0 0.0
        %2715 = vmatprep.subr.mxu0 0.0
        %2716 = vmatpush2.msra.mxu0 0.0
        %2717 = vmatprep.subr.mxu0 0.0
        %2718 = vmatpush2.msra.mxu0 0.0
        %2719 = vmatprep.subr.mxu0 0.0
        %2720 = vmatpush2.msra.mxu0 0.0
        %2721 = vmatprep.subr.mxu0 0.0
        %2722 = vmatpush2.msra.mxu0 0.0
        %2723 = vmatprep.subr.mxu0 0.0
        %2724 = vmatpush2.msra.mxu0 0.0
        %2725 = vmatprep.mubr.f32.mxu0 0.0
        %2726 = vmatmul.mubr.f32.gmra.mxu0 %v2659
        %v2727 = vpop.f32.mrf.mxu0
        %v2728 = vadd.f32 0.0, %v2727
        %v2729 = vpop.f32.mrf.mxu0
        %2730 = vdwg.mxu0
        %v2732 = vsel %vm1069, %v2489, 0
        %2734 = vmatprep.subr.mxu0 0.0
        %2735 = vmatpush1.msra.mxu0 0.0
        %2736 = vmatprep.subr.mxu0 0.0
        %2737 = vmatpush1.msra.mxu0 0.0
        %2738 = vmatprep.subr.mxu0 0.0
        %2739 = vmatpush1.msra.mxu0 0.0
        %2740 = vmatprep.subr.mxu0 0.0
        %2741 = vmatpush1.msra.mxu0 0.0
        %2742 = vmatprep.subr.mxu0 0.0
        %2743 = vmatpush1.msra.mxu0 0.0
        %2744 = vmatprep.subr.mxu0 0.0
        %2745 = vmatpush1.msra.mxu0 0.0
        %2746 = vmatprep.subr.mxu0 0.0
        %2747 = vmatpush1.msra.mxu0 0.0
        %2748 = vmatprep.subr.mxu0 0.0
        %2749 = vmatpush1.msra.mxu0 0.0
        %2750 = vmatprep.subr.mxu0 0.0
        %2751 = vmatpush1.msra.mxu0 0.0
        %2752 = vmatprep.subr.mxu0 0.0
        %2753 = vmatpush1.msra.mxu0 0.0
        %2754 = vmatprep.subr.mxu0 0.0
        %2755 = vmatpush1.msra.mxu0 0.0
        %2756 = vmatprep.subr.mxu0 0.0
        %2757 = vmatpush1.msra.mxu0 0.0
        %2758 = vmatprep.subr.mxu0 0.0
        %2759 = vmatpush1.msra.mxu0 0.0
        %2760 = vmatprep.subr.mxu0 0.0
        %2761 = vmatpush1.msra.mxu0 0.0
        %2762 = vmatprep.subr.mxu0 0.0
        %2763 = vmatpush1.msra.mxu0 %v2324
        %2764 = vmatprep.subr.mxu0 0.0
        %2765 = vmatpush1.msra.mxu0 %v2323
        %2766 = vmatprep.subr.mxu0 0.0
        %2767 = vmatpush2.msra.mxu0 0.0
        %2768 = vmatprep.subr.mxu0 0.0
        %2769 = vmatpush2.msra.mxu0 0.0
        %2770 = vmatprep.subr.mxu0 0.0
        %2771 = vmatpush2.msra.mxu0 0.0
        %2772 = vmatprep.subr.mxu0 0.0
        %2773 = vmatpush2.msra.mxu0 0.0
        %2774 = vmatprep.subr.mxu0 0.0
        %2775 = vmatpush2.msra.mxu0 0.0
        %2776 = vmatprep.subr.mxu0 0.0
        %2777 = vmatpush2.msra.mxu0 0.0
        %2778 = vmatprep.subr.mxu0 0.0
        %2779 = vmatpush2.msra.mxu0 0.0
        %2780 = vmatprep.subr.mxu0 0.0
        %2781 = vmatpush2.msra.mxu0 0.0
        %2782 = vmatprep.subr.mxu0 0.0
        %2783 = vmatpush2.msra.mxu0 0.0
        %2784 = vmatprep.subr.mxu0 0.0
        %2785 = vmatpush2.msra.mxu0 0.0
        %2786 = vmatprep.subr.mxu0 0.0
        %2787 = vmatpush2.msra.mxu0 0.0
        %2788 = vmatprep.subr.mxu0 0.0
        %2789 = vmatpush2.msra.mxu0 0.0
        %2790 = vmatprep.subr.mxu0 0.0
        %2791 = vmatpush2.msra.mxu0 0.0
        %2792 = vmatprep.subr.mxu0 0.0
        %2793 = vmatpush2.msra.mxu0 0.0
        %2794 = vmatprep.subr.mxu0 0.0
        %2795 = vmatpush2.msra.mxu0 0.0
        %2796 = vmatprep.subr.mxu0 0.0
        %2797 = vmatpush2.msra.mxu0 0.0
        %2798 = vmatprep.mubr.f32.mxu0 0.0
        %2799 = vmatmul.mubr.f32.gmra.mxu0 %v2732
        %v2800 = vpop.f32.mrf.mxu0
        %v2801 = vadd.f32 %v2728, %v2800
        %v2802 = vpop.f32.mrf.mxu0
        %2803 = vdwg.mxu0
        %2804 = vrot.lane.b32.xlu0 %v2318, 96
        %v2805 = vpop.permute.xlu0 %2804
        %2806 = vrot.lane.b32.xlu0 %v2318, 32
        %v2807 = vpop.permute.xlu0 %2806
        %v2808 = vsel %vm1069, %v2805, 0
        %v2810 = vsel %vm1069, %v2807, 0
        %2812 = vmatprep.subr.mxu0 0.0
        %2813 = vmatpush1.xpose.msra.mxu0 0.0
        %2814 = vmatprep.subr.mxu0 0.0
        %2815 = vmatpush1.xpose.msra.mxu0 0.0
        %2816 = vmatprep.subr.mxu0 0.0
        %2817 = vmatpush1.xpose.msra.mxu0 0.0
        %2818 = vmatprep.subr.mxu0 0.0
        %2819 = vmatpush1.xpose.msra.mxu0 0.0
        %2820 = vmatprep.subr.mxu0 0.0
        %2821 = vmatpush1.xpose.msra.mxu0 0.0
        %2822 = vmatprep.subr.mxu0 0.0
        %2823 = vmatpush1.xpose.msra.mxu0 0.0
        %2824 = vmatprep.subr.mxu0 0.0
        %2825 = vmatpush1.xpose.msra.mxu0 0.0
        %2826 = vmatprep.subr.mxu0 0.0
        %2827 = vmatpush1.xpose.msra.mxu0 0.0
        %2828 = vmatprep.subr.mxu0 0.0
        %2829 = vmatpush1.xpose.msra.mxu0 0.0
        %2830 = vmatprep.subr.mxu0 0.0
        %2831 = vmatpush1.xpose.msra.mxu0 0.0
        %2832 = vmatprep.subr.mxu0 0.0
        %2833 = vmatpush1.xpose.msra.mxu0 0.0
        %2834 = vmatprep.subr.mxu0 0.0
        %2835 = vmatpush1.xpose.msra.mxu0 0.0
        %2836 = vmatprep.subr.mxu0 0.0
        %2837 = vmatpush1.xpose.msra.mxu0 0.0
        %2838 = vmatprep.subr.mxu0 0.0
        %2839 = vmatpush1.xpose.msra.mxu0 0.0
        %2840 = vmatprep.subr.mxu0 0.0
        %2841 = vmatpush1.xpose.msra.mxu0 0.0
        %2842 = vmatprep.subr.mxu0 0.0
        %2843 = vmatpush1.xpose.msra.mxu0 %v2810
        %2844 = vmatprep.subr.mxu0 0.0
        %2845 = vmatpush2.xpose.msra.mxu0 0.0
        %2846 = vmatprep.subr.mxu0 0.0
        %2847 = vmatpush2.xpose.msra.mxu0 0.0
        %2848 = vmatprep.subr.mxu0 0.0
        %2849 = vmatpush2.xpose.msra.mxu0 0.0
        %2850 = vmatprep.subr.mxu0 0.0
        %2851 = vmatpush2.xpose.msra.mxu0 0.0
        %2852 = vmatprep.subr.mxu0 0.0
        %2853 = vmatpush2.xpose.msra.mxu0 0.0
        %2854 = vmatprep.subr.mxu0 0.0
        %2855 = vmatpush2.xpose.msra.mxu0 0.0
        %2856 = vmatprep.subr.mxu0 0.0
        %2857 = vmatpush2.xpose.msra.mxu0 0.0
        %2858 = vmatprep.subr.mxu0 0.0
        %2859 = vmatpush2.xpose.msra.mxu0 0.0
        %2860 = vmatprep.subr.mxu0 0.0
        %2861 = vmatpush2.xpose.msra.mxu0 0.0
        %2862 = vmatprep.subr.mxu0 0.0
        %2863 = vmatpush2.xpose.msra.mxu0 0.0
        %2864 = vmatprep.subr.mxu0 0.0
        %2865 = vmatpush2.xpose.msra.mxu0 0.0
        %2866 = vmatprep.subr.mxu0 0.0
        %2867 = vmatpush2.xpose.msra.mxu0 0.0
        %2868 = vmatprep.subr.mxu0 0.0
        %2869 = vmatpush2.xpose.msra.mxu0 0.0
        %2870 = vmatprep.subr.mxu0 0.0
        %2871 = vmatpush2.xpose.msra.mxu0 0.0
        %2872 = vmatprep.subr.mxu0 0.0
        %2873 = vmatpush2.xpose.msra.mxu0 0.0
        %2874 = vmatprep.subr.mxu0 0.0
        %2875 = vmatpush2.xpose.msra.mxu0 0.0
        %2876 = vmatprep.mubr.f32.mxu0 0.0
        %2877 = vmatmul.mubr.f32.gmra.mxu0 %v2808
        %v2878 = vpop.f32.mrf.mxu0
        %v2879 = vadd.f32 %v1546, %v2878
        %v2880 = vpop.f32.mrf.mxu0
        %2881 = vdwg.mxu0
        %v2882 = vsel %vm1144, %v2879, -inf
        %2883 = vmax.xlane.f32.xlu0 %v2882
        %v2884 = vpop.xlane.xlu0 %2883
        %v2885 = vsub.f32 %v2879, %v2884
        %v2886 = vmul.f32 %v2885, 1.442695
        %v2887 = vpow.pop %v2886
        %v2888 = vsel %vm1144, %v2887, 0.0
        %2889 = vadd.xlane.f32.xlu0 %v2888
        %v2890 = vpop.xlane.xlu0 %2889
        %v2891 = vrcp.pop %v2890
        %v2892 = vmul.f32 %v2887, %v2891
        %2893 = vrot.lane.b32.xlu0 %v2320, 96
        %v2894 = vpop.permute.xlu0 %2893
        %v2897 = vsel %vm1144, %v2892, 0
        %2899 = vmatprep.subr.mxu0 0.0
        %2900 = vmatpush1.msra.mxu0 0.0
        %2901 = vmatprep.subr.mxu0 0.0
        %2902 = vmatpush1.msra.mxu0 0.0
        %2903 = vmatprep.subr.mxu0 0.0
        %2904 = vmatpush1.msra.mxu0 0.0
        %2905 = vmatprep.subr.mxu0 0.0
        %2906 = vmatpush1.msra.mxu0 0.0
        %2907 = vmatprep.subr.mxu0 0.0
        %2908 = vmatpush1.msra.mxu0 0.0
        %2909 = vmatprep.subr.mxu0 0.0
        %2910 = vmatpush1.msra.mxu0 0.0
        %2911 = vmatprep.subr.mxu0 0.0
        %2912 = vmatpush1.msra.mxu0 0.0
        %2913 = vmatprep.subr.mxu0 0.0
        %2914 = vmatpush1.msra.mxu0 0.0
        %2915 = vmatprep.subr.mxu0 0.0
        %2916 = vmatpush1.msra.mxu0 0.0
        %2917 = vmatprep.subr.mxu0 0.0
        %2918 = vmatpush1.msra.mxu0 0.0
        %2919 = vmatprep.subr.mxu0 0.0
        %2920 = vmatpush1.msra.mxu0 0.0
        %2921 = vmatprep.subr.mxu0 0.0
        %2922 = vmatpush1.msra.mxu0 0.0
        %2923 = vmatprep.subr.mxu0 0.0
        %2924 = vmatpush1.msra.mxu0 0.0
        %2925 = vmatprep.subr.mxu0 0.0
        %2926 = vmatpush1.msra.mxu0 0.0
        %2927 = vmatprep.subr.mxu0 0.0
        %2928 = vmatpush1.msra.mxu0 0.0
        %2929 = vmatprep.subr.mxu0 0.0
        %2930 = vmatpush1.msra.mxu0 %v2894
        %2931 = vmatprep.subr.mxu0 0.0
        %2932 = vmatpush2.msra.mxu0 0.0
        %2933 = vmatprep.subr.mxu0 0.0
        %2934 = vmatpush2.msra.mxu0 0.0
        %2935 = vmatprep.subr.mxu0 0.0
        %2936 = vmatpush2.msra.mxu0 0.0
        %2937 = vmatprep.subr.mxu0 0.0
        %2938 = vmatpush2.msra.mxu0 0.0
        %2939 = vmatprep.subr.mxu0 0.0
        %2940 = vmatpush2.msra.mxu0 0.0
        %2941 = vmatprep.subr.mxu0 0.0
        %2942 = vmatpush2.msra.mxu0 0.0
        %2943 = vmatprep.subr.mxu0 0.0
        %2944 = vmatpush2.msra.mxu0 0.0
        %2945 = vmatprep.subr.mxu0 0.0
        %2946 = vmatpush2.msra.mxu0 0.0
        %2947 = vmatprep.subr.mxu0 0.0
        %2948 = vmatpush2.msra.mxu0 0.0
        %2949 = vmatprep.subr.mxu0 0.0
        %2950 = vmatpush2.msra.mxu0 0.0
        %2951 = vmatprep.subr.mxu0 0.0
        %2952 = vmatpush2.msra.mxu0 0.0
        %2953 = vmatprep.subr.mxu0 0.0
        %2954 = vmatpush2.msra.mxu0 0.0
        %2955 = vmatprep.subr.mxu0 0.0
        %2956 = vmatpush2.msra.mxu0 0.0
        %2957 = vmatprep.subr.mxu0 0.0
        %2958 = vmatpush2.msra.mxu0 0.0
        %2959 = vmatprep.subr.mxu0 0.0
        %2960 = vmatpush2.msra.mxu0 0.0
        %2961 = vmatprep.subr.mxu0 0.0
        %2962 = vmatpush2.msra.mxu0 0.0
        %2963 = vmatprep.mubr.f32.mxu0 0.0
        %2964 = vmatmul.mubr.f32.gmra.mxu0 %v2897
        %v2965 = vpop.f32.mrf.mxu0
        %v2966 = vadd.f32 0.0, %v2965
        %v2967 = vpop.f32.mrf.mxu0
        %2968 = vdwg.mxu0
        %v2970 = vsel %vm1069, %v2966, 0
        %2972 = vmatprep.subr.mxu0 0.0
        %2973 = vmatpush1.msra.mxu0 0.0
        %2974 = vmatprep.subr.mxu0 0.0
        %2975 = vmatpush1.msra.mxu0 0.0
        %2976 = vmatprep.subr.mxu0 0.0
        %2977 = vmatpush1.msra.mxu0 0.0
        %2978 = vmatprep.subr.mxu0 0.0
        %2979 = vmatpush1.msra.mxu0 0.0
        %2980 = vmatprep.subr.mxu0 0.0
        %2981 = vmatpush1.msra.mxu0 0.0
        %2982 = vmatprep.subr.mxu0 0.0
        %2983 = vmatpush1.msra.mxu0 0.0
        %2984 = vmatprep.subr.mxu0 0.0
        %2985 = vmatpush1.msra.mxu0 0.0
        %2986 = vmatprep.subr.mxu0 0.0
        %2987 = vmatpush1.msra.mxu0 0.0
        %2988 = vmatprep.subr.mxu0 0.0
        %2989 = vmatpush1.msra.mxu0 0.0
        %2990 = vmatprep.subr.mxu0 0.0
        %2991 = vmatpush1.msra.mxu0 0.0
        %2992 = vmatprep.subr.mxu0 0.0
        %2993 = vmatpush1.msra.mxu0 0.0
        %2994 = vmatprep.subr.mxu0 0.0
        %2995 = vmatpush1.msra.mxu0 0.0
        %2996 = vmatprep.subr.mxu0 0.0
        %2997 = vmatpush1.msra.mxu0 0.0
        %2998 = vmatprep.subr.mxu0 0.0
        %2999 = vmatpush1.msra.mxu0 0.0
        %3000 = vmatprep.subr.mxu0 0.0
        %3001 = vmatpush1.msra.mxu0 %v2328
        %3002 = vmatprep.subr.mxu0 0.0
        %3003 = vmatpush1.msra.mxu0 %v2327
        %3004 = vmatprep.subr.mxu0 0.0
        %3005 = vmatpush2.msra.mxu0 0.0
        %3006 = vmatprep.subr.mxu0 0.0
        %3007 = vmatpush2.msra.mxu0 0.0
        %3008 = vmatprep.subr.mxu0 0.0
        %3009 = vmatpush2.msra.mxu0 0.0
        %3010 = vmatprep.subr.mxu0 0.0
        %3011 = vmatpush2.msra.mxu0 0.0
        %3012 = vmatprep.subr.mxu0 0.0
        %3013 = vmatpush2.msra.mxu0 0.0
        %3014 = vmatprep.subr.mxu0 0.0
        %3015 = vmatpush2.msra.mxu0 0.0
        %3016 = vmatprep.subr.mxu0 0.0
        %3017 = vmatpush2.msra.mxu0 0.0
        %3018 = vmatprep.subr.mxu0 0.0
        %3019 = vmatpush2.msra.mxu0 0.0
        %3020 = vmatprep.subr.mxu0 0.0
        %3021 = vmatpush2.msra.mxu0 0.0
        %3022 = vmatprep.subr.mxu0 0.0
        %3023 = vmatpush2.msra.mxu0 0.0
        %3024 = vmatprep.subr.mxu0 0.0
        %3025 = vmatpush2.msra.mxu0 0.0
        %3026 = vmatprep.subr.mxu0 0.0
        %3027 = vmatpush2.msra.mxu0 0.0
        %3028 = vmatprep.subr.mxu0 0.0
        %3029 = vmatpush2.msra.mxu0 0.0
        %3030 = vmatprep.subr.mxu0 0.0
        %3031 = vmatpush2.msra.mxu0 0.0
        %3032 = vmatprep.subr.mxu0 0.0
        %3033 = vmatpush2.msra.mxu0 0.0
        %3034 = vmatprep.subr.mxu0 0.0
        %3035 = vmatpush2.msra.mxu0 0.0
        %3036 = vmatprep.mubr.f32.mxu0 0.0
        %3037 = vmatmul.mubr.f32.gmra.mxu0 %v2970
        %v3038 = vpop.f32.mrf.mxu0
        %v3039 = vadd.f32 0.0, %v3038
        %v3040 = vpop.f32.mrf.mxu0
        %3041 = vdwg.mxu0
        %v3042 = vadd.f32 %v2801, %v3039
        %3043 = vrot.lane.b32.xlu0 %v2318, 80
        %v3044 = vpop.permute.xlu0 %3043
        %3045 = vrot.lane.b32.xlu0 %v2318, 16
        %v3046 = vpop.permute.xlu0 %3045
        %v3047 = vsel %vm1069, %v3044, 0
        %v3049 = vsel %vm1069, %v3046, 0
        %3051 = vmatprep.subr.mxu0 0.0
        %3052 = vmatpush1.xpose.msra.mxu0 0.0
        %3053 = vmatprep.subr.mxu0 0.0
        %3054 = vmatpush1.xpose.msra.mxu0 0.0
        %3055 = vmatprep.subr.mxu0 0.0
        %3056 = vmatpush1.xpose.msra.mxu0 0.0
        %3057 = vmatprep.subr.mxu0 0.0
        %3058 = vmatpush1.xpose.msra.mxu0 0.0
        %3059 = vmatprep.subr.mxu0 0.0
        %3060 = vmatpush1.xpose.msra.mxu0 0.0
        %3061 = vmatprep.subr.mxu0 0.0
        %3062 = vmatpush1.xpose.msra.mxu0 0.0
        %3063 = vmatprep.subr.mxu0 0.0
        %3064 = vmatpush1.xpose.msra.mxu0 0.0
        %3065 = vmatprep.subr.mxu0 0.0
        %3066 = vmatpush1.xpose.msra.mxu0 0.0
        %3067 = vmatprep.subr.mxu0 0.0
        %3068 = vmatpush1.xpose.msra.mxu0 0.0
        %3069 = vmatprep.subr.mxu0 0.0
        %3070 = vmatpush1.xpose.msra.mxu0 0.0
        %3071 = vmatprep.subr.mxu0 0.0
        %3072 = vmatpush1.xpose.msra.mxu0 0.0
        %3073 = vmatprep.subr.mxu0 0.0
        %3074 = vmatpush1.xpose.msra.mxu0 0.0
        %3075 = vmatprep.subr.mxu0 0.0
        %3076 = vmatpush1.xpose.msra.mxu0 0.0
        %3077 = vmatprep.subr.mxu0 0.0
        %3078 = vmatpush1.xpose.msra.mxu0 0.0
        %3079 = vmatprep.subr.mxu0 0.0
        %3080 = vmatpush1.xpose.msra.mxu0 0.0
        %3081 = vmatprep.subr.mxu0 0.0
        %3082 = vmatpush1.xpose.msra.mxu0 %v3049
        %3083 = vmatprep.subr.mxu0 0.0
        %3084 = vmatpush2.xpose.msra.mxu0 0.0
        %3085 = vmatprep.subr.mxu0 0.0
        %3086 = vmatpush2.xpose.msra.mxu0 0.0
        %3087 = vmatprep.subr.mxu0 0.0
        %3088 = vmatpush2.xpose.msra.mxu0 0.0
        %3089 = vmatprep.subr.mxu0 0.0
        %3090 = vmatpush2.xpose.msra.mxu0 0.0
        %3091 = vmatprep.subr.mxu0 0.0
        %3092 = vmatpush2.xpose.msra.mxu0 0.0
        %3093 = vmatprep.subr.mxu0 0.0
        %3094 = vmatpush2.xpose.msra.mxu0 0.0
        %3095 = vmatprep.subr.mxu0 0.0
        %3096 = vmatpush2.xpose.msra.mxu0 0.0
        %3097 = vmatprep.subr.mxu0 0.0
        %3098 = vmatpush2.xpose.msra.mxu0 0.0
        %3099 = vmatprep.subr.mxu0 0.0
        %3100 = vmatpush2.xpose.msra.mxu0 0.0
        %3101 = vmatprep.subr.mxu0 0.0
        %3102 = vmatpush2.xpose.msra.mxu0 0.0
        %3103 = vmatprep.subr.mxu0 0.0
        %3104 = vmatpush2.xpose.msra.mxu0 0.0
        %3105 = vmatprep.subr.mxu0 0.0
        %3106 = vmatpush2.xpose.msra.mxu0 0.0
        %3107 = vmatprep.subr.mxu0 0.0
        %3108 = vmatpush2.xpose.msra.mxu0 0.0
        %3109 = vmatprep.subr.mxu0 0.0
        %3110 = vmatpush2.xpose.msra.mxu0 0.0
        %3111 = vmatprep.subr.mxu0 0.0
        %3112 = vmatpush2.xpose.msra.mxu0 0.0
        %3113 = vmatprep.subr.mxu0 0.0
        %3114 = vmatpush2.xpose.msra.mxu0 0.0
        %3115 = vmatprep.mubr.f32.mxu0 0.0
        %3116 = vmatmul.mubr.f32.gmra.mxu0 %v3047
        %v3117 = vpop.f32.mrf.mxu0
        %v3118 = vadd.f32 %v1788, %v3117
        %v3119 = vpop.f32.mrf.mxu0
        %3120 = vdwg.mxu0
        %v3121 = vsel %vm1144, %v3118, -inf
        %3122 = vmax.xlane.f32.xlu0 %v3121
        %v3123 = vpop.xlane.xlu0 %3122
        %v3124 = vsub.f32 %v3118, %v3123
        %v3125 = vmul.f32 %v3124, 1.442695
        %v3126 = vpow.pop %v3125
        %v3127 = vsel %vm1144, %v3126, 0.0
        %3128 = vadd.xlane.f32.xlu0 %v3127
        %v3129 = vpop.xlane.xlu0 %3128
        %v3130 = vrcp.pop %v3129
        %v3131 = vmul.f32 %v3126, %v3130
        %3132 = vrot.lane.b32.xlu0 %v2320, 80
        %v3133 = vpop.permute.xlu0 %3132
        %v3136 = vsel %vm1144, %v3131, 0
        %3138 = vmatprep.subr.mxu0 0.0
        %3139 = vmatpush1.msra.mxu0 0.0
        %3140 = vmatprep.subr.mxu0 0.0
        %3141 = vmatpush1.msra.mxu0 0.0
        %3142 = vmatprep.subr.mxu0 0.0
        %3143 = vmatpush1.msra.mxu0 0.0
        %3144 = vmatprep.subr.mxu0 0.0
        %3145 = vmatpush1.msra.mxu0 0.0
        %3146 = vmatprep.subr.mxu0 0.0
        %3147 = vmatpush1.msra.mxu0 0.0
        %3148 = vmatprep.subr.mxu0 0.0
        %3149 = vmatpush1.msra.mxu0 0.0
        %3150 = vmatprep.subr.mxu0 0.0
        %3151 = vmatpush1.msra.mxu0 0.0
        %3152 = vmatprep.subr.mxu0 0.0
        %3153 = vmatpush1.msra.mxu0 0.0
        %3154 = vmatprep.subr.mxu0 0.0
        %3155 = vmatpush1.msra.mxu0 0.0
        %3156 = vmatprep.subr.mxu0 0.0
        %3157 = vmatpush1.msra.mxu0 0.0
        %3158 = vmatprep.subr.mxu0 0.0
        %3159 = vmatpush1.msra.mxu0 0.0
        %3160 = vmatprep.subr.mxu0 0.0
        %3161 = vmatpush1.msra.mxu0 0.0
        %3162 = vmatprep.subr.mxu0 0.0
        %3163 = vmatpush1.msra.mxu0 0.0
        %3164 = vmatprep.subr.mxu0 0.0
        %3165 = vmatpush1.msra.mxu0 0.0
        %3166 = vmatprep.subr.mxu0 0.0
        %3167 = vmatpush1.msra.mxu0 0.0
        %3168 = vmatprep.subr.mxu0 0.0
        %3169 = vmatpush1.msra.mxu0 %v3133
        %3170 = vmatprep.subr.mxu0 0.0
        %3171 = vmatpush2.msra.mxu0 0.0
        %3172 = vmatprep.subr.mxu0 0.0
        %3173 = vmatpush2.msra.mxu0 0.0
        %3174 = vmatprep.subr.mxu0 0.0
        %3175 = vmatpush2.msra.mxu0 0.0
        %3176 = vmatprep.subr.mxu0 0.0
        %3177 = vmatpush2.msra.mxu0 0.0
        %3178 = vmatprep.subr.mxu0 0.0
        %3179 = vmatpush2.msra.mxu0 0.0
        %3180 = vmatprep.subr.mxu0 0.0
        %3181 = vmatpush2.msra.mxu0 0.0
        %3182 = vmatprep.subr.mxu0 0.0
        %3183 = vmatpush2.msra.mxu0 0.0
        %3184 = vmatprep.subr.mxu0 0.0
        %3185 = vmatpush2.msra.mxu0 0.0
        %3186 = vmatprep.subr.mxu0 0.0
        %3187 = vmatpush2.msra.mxu0 0.0
        %3188 = vmatprep.subr.mxu0 0.0
        %3189 = vmatpush2.msra.mxu0 0.0
        %3190 = vmatprep.subr.mxu0 0.0
        %3191 = vmatpush2.msra.mxu0 0.0
        %3192 = vmatprep.subr.mxu0 0.0
        %3193 = vmatpush2.msra.mxu0 0.0
        %3194 = vmatprep.subr.mxu0 0.0
        %3195 = vmatpush2.msra.mxu0 0.0
        %3196 = vmatprep.subr.mxu0 0.0
        %3197 = vmatpush2.msra.mxu0 0.0
        %3198 = vmatprep.subr.mxu0 0.0
        %3199 = vmatpush2.msra.mxu0 0.0
        %3200 = vmatprep.subr.mxu0 0.0
        %3201 = vmatpush2.msra.mxu0 0.0
        %3202 = vmatprep.mubr.f32.mxu0 0.0
        %3203 = vmatmul.mubr.f32.gmra.mxu0 %v3136
        %v3204 = vpop.f32.mrf.mxu0
        %v3205 = vadd.f32 0.0, %v3204
        %v3206 = vpop.f32.mrf.mxu0
        %3207 = vdwg.mxu0
        %v3209 = vsel %vm1069, %v3205, 0
        %3211 = vmatprep.subr.mxu0 0.0
        %3212 = vmatpush1.msra.mxu0 0.0
        %3213 = vmatprep.subr.mxu0 0.0
        %3214 = vmatpush1.msra.mxu0 0.0
        %3215 = vmatprep.subr.mxu0 0.0
        %3216 = vmatpush1.msra.mxu0 0.0
        %3217 = vmatprep.subr.mxu0 0.0
        %3218 = vmatpush1.msra.mxu0 0.0
        %3219 = vmatprep.subr.mxu0 0.0
        %3220 = vmatpush1.msra.mxu0 0.0
        %3221 = vmatprep.subr.mxu0 0.0
        %3222 = vmatpush1.msra.mxu0 0.0
        %3223 = vmatprep.subr.mxu0 0.0
        %3224 = vmatpush1.msra.mxu0 0.0
        %3225 = vmatprep.subr.mxu0 0.0
        %3226 = vmatpush1.msra.mxu0 0.0
        %3227 = vmatprep.subr.mxu0 0.0
        %3228 = vmatpush1.msra.mxu0 0.0
        %3229 = vmatprep.subr.mxu0 0.0
        %3230 = vmatpush1.msra.mxu0 0.0
        %3231 = vmatprep.subr.mxu0 0.0
        %3232 = vmatpush1.msra.mxu0 0.0
        %3233 = vmatprep.subr.mxu0 0.0
        %3234 = vmatpush1.msra.mxu0 0.0
        %3235 = vmatprep.subr.mxu0 0.0
        %3236 = vmatpush1.msra.mxu0 0.0
        %3237 = vmatprep.subr.mxu0 0.0
        %3238 = vmatpush1.msra.mxu0 0.0
        %3239 = vmatprep.subr.mxu0 0.0
        %3240 = vmatpush1.msra.mxu0 %v2330
        %3241 = vmatprep.subr.mxu0 0.0
        %3242 = vmatpush1.msra.mxu0 %v2329
        %3243 = vmatprep.subr.mxu0 0.0
        %3244 = vmatpush2.msra.mxu0 0.0
        %3245 = vmatprep.subr.mxu0 0.0
        %3246 = vmatpush2.msra.mxu0 0.0
        %3247 = vmatprep.subr.mxu0 0.0
        %3248 = vmatpush2.msra.mxu0 0.0
        %3249 = vmatprep.subr.mxu0 0.0
        %3250 = vmatpush2.msra.mxu0 0.0
        %3251 = vmatprep.subr.mxu0 0.0
        %3252 = vmatpush2.msra.mxu0 0.0
        %3253 = vmatprep.subr.mxu0 0.0
        %3254 = vmatpush2.msra.mxu0 0.0
        %3255 = vmatprep.subr.mxu0 0.0
        %3256 = vmatpush2.msra.mxu0 0.0
        %3257 = vmatprep.subr.mxu0 0.0
        %3258 = vmatpush2.msra.mxu0 0.0
        %3259 = vmatprep.subr.mxu0 0.0
        %3260 = vmatpush2.msra.mxu0 0.0
        %3261 = vmatprep.subr.mxu0 0.0
        %3262 = vmatpush2.msra.mxu0 0.0
        %3263 = vmatprep.subr.mxu0 0.0
        %3264 = vmatpush2.msra.mxu0 0.0
        %3265 = vmatprep.subr.mxu0 0.0
        %3266 = vmatpush2.msra.mxu0 0.0
        %3267 = vmatprep.subr.mxu0 0.0
        %3268 = vmatpush2.msra.mxu0 0.0
        %3269 = vmatprep.subr.mxu0 0.0
        %3270 = vmatpush2.msra.mxu0 0.0
        %3271 = vmatprep.subr.mxu0 0.0
        %3272 = vmatpush2.msra.mxu0 0.0
        %3273 = vmatprep.subr.mxu0 0.0
        %3274 = vmatpush2.msra.mxu0 0.0
        %3275 = vmatprep.mubr.f32.mxu0 0.0
        %3276 = vmatmul.mubr.f32.gmra.mxu0 %v3209
        %v3277 = vpop.f32.mrf.mxu0
        %v3278 = vadd.f32 0.0, %v3277
        %v3279 = vpop.f32.mrf.mxu0
        %3280 = vdwg.mxu0
        %v3281 = vadd.f32 %v3042, %v3278
        %v3282 = vadd.f32 %v2213, %v3281
        %s3283 = scalar_lea.vmem %s10, 1
        %v3284 = vld [vmem:[%s3283] sm:$0x1]
        %v3285 = vmul.f32 %v3282, %v3282
        %v3286 = vsel %vm944, %v3285, 0.0
        %3287 = vadd.xlane.f32.xlu0 %v3286
        %v3288 = vpop.xlane.xlu0 %3287
        %v3289 = vmul.f32 %v3288, %v948
        %v3290 = vadd.f32 %v3289, 1e-06
        %v3291 = vrsqrt.pop %v3290
        %v3292 = vmul.f32 %v3282, %v3291
        %v3294 = vlaneseq
        %v3295 = vshrl.u32 %v3294, 7
        %v3296 = vsub.s32 0, %v3295
        %v3297 = vrot.slane %v3284, %v3296
        %v3299 = vmul.f32 %v3292, %v3297
        %s3300 = scalar_lea.vmem %s11, 64
        %v3301 = vld [vmem:[%s3300] sm:$0xff]
        %v3302 = vld [vmem:[%s3300 + $0x8] sm:$0xff]
        %v3303 = vld [vmem:[%s3300 + $0x10] sm:$0xff]
        %v3304 = vld [vmem:[%s3300 + $0x18] sm:$0xff]
        %v3305 = vld [vmem:[%s3300 + $0x20] sm:$0xff]
        %v3306 = vld [vmem:[%s3300 + $0x28] sm:$0xff]
        %v3307 = vld [vmem:[%s3300 + $0x30] sm:$0xff]
        %v3308 = vld [vmem:[%s3300 + $0x38] sm:$0xff]
        %v3310 = vsel %vm944, %v3299, 0
        %3312 = vmatprep.subr.mxu0 0.0
        %3313 = vmatpush1.msra.mxu0 0.0
        %3314 = vmatprep.subr.mxu0 0.0
        %3315 = vmatpush1.msra.mxu0 0.0
        %3316 = vmatprep.subr.mxu0 0.0
        %3317 = vmatpush1.msra.mxu0 0.0
        %3318 = vmatprep.subr.mxu0 0.0
        %3319 = vmatpush1.msra.mxu0 0.0
        %3320 = vmatprep.subr.mxu0 0.0
        %3321 = vmatpush1.msra.mxu0 0.0
        %3322 = vmatprep.subr.mxu0 0.0
        %3323 = vmatpush1.msra.mxu0 0.0
        %3324 = vmatprep.subr.mxu0 0.0
        %3325 = vmatpush1.msra.mxu0 0.0
        %3326 = vmatprep.subr.mxu0 0.0
        %3327 = vmatpush1.msra.mxu0 0.0
        %3328 = vmatprep.subr.mxu0 0.0
        %3329 = vmatpush1.msra.mxu0 %v3308
        %3330 = vmatprep.subr.mxu0 0.0
        %3331 = vmatpush1.msra.mxu0 %v3307
        %3332 = vmatprep.subr.mxu0 0.0
        %3333 = vmatpush1.msra.mxu0 %v3306
        %3334 = vmatprep.subr.mxu0 0.0
        %3335 = vmatpush1.msra.mxu0 %v3305
        %3336 = vmatprep.subr.mxu0 0.0
        %3337 = vmatpush1.msra.mxu0 %v3304
        %3338 = vmatprep.subr.mxu0 0.0
        %3339 = vmatpush1.msra.mxu0 %v3303
        %3340 = vmatprep.subr.mxu0 0.0
        %3341 = vmatpush1.msra.mxu0 %v3302
        %3342 = vmatprep.subr.mxu0 0.0
        %3343 = vmatpush1.msra.mxu0 %v3301
        %3344 = vmatprep.subr.mxu0 0.0
        %3345 = vmatpush2.msra.mxu0 0.0
        %3346 = vmatprep.subr.mxu0 0.0
        %3347 = vmatpush2.msra.mxu0 0.0
        %3348 = vmatprep.subr.mxu0 0.0
        %3349 = vmatpush2.msra.mxu0 0.0
        %3350 = vmatprep.subr.mxu0 0.0
        %3351 = vmatpush2.msra.mxu0 0.0
        %3352 = vmatprep.subr.mxu0 0.0
        %3353 = vmatpush2.msra.mxu0 0.0
        %3354 = vmatprep.subr.mxu0 0.0
        %3355 = vmatpush2.msra.mxu0 0.0
        %3356 = vmatprep.subr.mxu0 0.0
        %3357 = vmatpush2.msra.mxu0 0.0
        %3358 = vmatprep.subr.mxu0 0.0
        %3359 = vmatpush2.msra.mxu0 0.0
        %3360 = vmatprep.subr.mxu0 0.0
        %3361 = vmatpush2.msra.mxu0 0.0
        %3362 = vmatprep.subr.mxu0 0.0
        %3363 = vmatpush2.msra.mxu0 0.0
        %3364 = vmatprep.subr.mxu0 0.0
        %3365 = vmatpush2.msra.mxu0 0.0
        %3366 = vmatprep.subr.mxu0 0.0
        %3367 = vmatpush2.msra.mxu0 0.0
        %3368 = vmatprep.subr.mxu0 0.0
        %3369 = vmatpush2.msra.mxu0 0.0
        %3370 = vmatprep.subr.mxu0 0.0
        %3371 = vmatpush2.msra.mxu0 0.0
        %3372 = vmatprep.subr.mxu0 0.0
        %3373 = vmatpush2.msra.mxu0 0.0
        %3374 = vmatprep.subr.mxu0 0.0
        %3375 = vmatpush2.msra.mxu0 0.0
        %3376 = vmatprep.mubr.f32.mxu0 0.0
        %3377 = vmatmul.mubr.f32.gmra.mxu0 %v3310
        %v3378 = vpop.f32.mrf.mxu0
        %v3379 = vadd.f32 0.0, %v3378
        %v3380 = vpop.f32.mrf.mxu0
        %3381 = vdwg.mxu0
        %v3382 = vmax.f32 %v3379, 0.0
        %s3383 = scalar_lea.vmem %s12, 128
        %v3384 = vld [vmem:[%s3383] sm:$0xff]
        %v3385 = vld [vmem:[%s3383 + $0x8] sm:$0xff]
        %v3386 = vld [vmem:[%s3383 + $0x10] sm:$0xff]
        %v3387 = vld [vmem:[%s3383 + $0x18] sm:$0xff]
        %v3388 = vld [vmem:[%s3383 + $0x20] sm:$0xff]
        %v3389 = vld [vmem:[%s3383 + $0x28] sm:$0xff]
        %v3390 = vld [vmem:[%s3383 + $0x30] sm:$0xff]
        %v3391 = vld [vmem:[%s3383 + $0x38] sm:$0xff]
        %v3392 = vld [vmem:[%s3383 + $0x40] sm:$0xff]
        %v3393 = vld [vmem:[%s3383 + $0x48] sm:$0xff]
        %v3394 = vld [vmem:[%s3383 + $0x50] sm:$0xff]
        %v3395 = vld [vmem:[%s3383 + $0x58] sm:$0xff]
        %v3396 = vld [vmem:[%s3383 + $0x60] sm:$0xff]
        %v3397 = vld [vmem:[%s3383 + $0x68] sm:$0xff]
        %v3398 = vld [vmem:[%s3383 + $0x70] sm:$0xff]
        %v3399 = vld [vmem:[%s3383 + $0x78] sm:$0xff]
        %3400 = vmatprep.subr.mxu0 0.0
        %3401 = vmatpush1.msra.mxu0 %v3399
        %3402 = vmatprep.subr.mxu0 0.0
        %3403 = vmatpush1.msra.mxu0 %v3398
        %3404 = vmatprep.subr.mxu0 0.0
        %3405 = vmatpush1.msra.mxu0 %v3397
        %3406 = vmatprep.subr.mxu0 0.0
        %3407 = vmatpush1.msra.mxu0 %v3396
        %3408 = vmatprep.subr.mxu0 0.0
        %3409 = vmatpush1.msra.mxu0 %v3395
        %3410 = vmatprep.subr.mxu0 0.0
        %3411 = vmatpush1.msra.mxu0 %v3394
        %3412 = vmatprep.subr.mxu0 0.0
        %3413 = vmatpush1.msra.mxu0 %v3393
        %3414 = vmatprep.subr.mxu0 0.0
        %3415 = vmatpush1.msra.mxu0 %v3392
        %3416 = vmatprep.subr.mxu0 0.0
        %3417 = vmatpush1.msra.mxu0 %v3391
        %3418 = vmatprep.subr.mxu0 0.0
        %3419 = vmatpush1.msra.mxu0 %v3390
        %3420 = vmatprep.subr.mxu0 0.0
        %3421 = vmatpush1.msra.mxu0 %v3389
        %3422 = vmatprep.subr.mxu0 0.0
        %3423 = vmatpush1.msra.mxu0 %v3388
        %3424 = vmatprep.subr.mxu0 0.0
        %3425 = vmatpush1.msra.mxu0 %v3387
        %3426 = vmatprep.subr.mxu0 0.0
        %3427 = vmatpush1.msra.mxu0 %v3386
        %3428 = vmatprep.subr.mxu0 0.0
        %3429 = vmatpush1.msra.mxu0 %v3385
        %3430 = vmatprep.subr.mxu0 0.0
        %3431 = vmatpush1.msra.mxu0 %v3384
        %3432 = vmatprep.subr.mxu0 0.0
        %3433 = vmatpush2.msra.mxu0 0.0
        %3434 = vmatprep.subr.mxu0 0.0
        %3435 = vmatpush2.msra.mxu0 0.0
        %3436 = vmatprep.subr.mxu0 0.0
        %3437 = vmatpush2.msra.mxu0 0.0
        %3438 = vmatprep.subr.mxu0 0.0
        %3439 = vmatpush2.msra.mxu0 0.0
        %3440 = vmatprep.subr.mxu0 0.0
        %3441 = vmatpush2.msra.mxu0 0.0
        %3442 = vmatprep.subr.mxu0 0.0
        %3443 = vmatpush2.msra.mxu0 0.0
        %3444 = vmatprep.subr.mxu0 0.0
        %3445 = vmatpush2.msra.mxu0 0.0
        %3446 = vmatprep.subr.mxu0 0.0
        %3447 = vmatpush2.msra.mxu0 0.0
        %3448 = vmatprep.subr.mxu0 0.0
        %3449 = vmatpush2.msra.mxu0 0.0
        %3450 = vmatprep.subr.mxu0 0.0
        %3451 = vmatpush2.msra.mxu0 0.0
        %3452 = vmatprep.subr.mxu0 0.0
        %3453 = vmatpush2.msra.mxu0 0.0
        %3454 = vmatprep.subr.mxu0 0.0
        %3455 = vmatpush2.msra.mxu0 0.0
        %3456 = vmatprep.subr.mxu0 0.0
        %3457 = vmatpush2.msra.mxu0 0.0
        %3458 = vmatprep.subr.mxu0 0.0
        %3459 = vmatpush2.msra.mxu0 0.0
        %3460 = vmatprep.subr.mxu0 0.0
        %3461 = vmatpush2.msra.mxu0 0.0
        %3462 = vmatprep.subr.mxu0 0.0
        %3463 = vmatpush2.msra.mxu0 0.0
        %3464 = vmatprep.mubr.f32.mxu0 0.0
        %3465 = vmatmul.mubr.f32.gmra.mxu0 %v3382
        %v3466 = vpop.f32.mrf.mxu0
        %v3467 = vadd.f32 0.0, %v3466
        %v3468 = vpop.f32.mrf.mxu0
        %3469 = vdwg.mxu0
        %v3470 = vadd.f32 %v3282, %v3467
        %v3471 = vld [vmem:[%s23] sm:$0x1]
        %v3472 = vmul.f32 %v3470, %v3470
        %v3473 = vsel %vm944, %v3472, 0.0
        %3474 = vadd.xlane.f32.xlu0 %v3473
        %v3475 = vpop.xlane.xlu0 %3474
        %v3476 = vmul.f32 %v3475, %v948
        %v3477 = vadd.f32 %v3476, 1e-06
        %v3478 = vrsqrt.pop %v3477
        %v3479 = vmul.f32 %v3470, %v3478
        %v3481 = vlaneseq
        %v3482 = vshrl.u32 %v3481, 7
        %v3483 = vsub.s32 0, %v3482
        %v3484 = vrot.slane %v3471, %v3483
        %v3486 = vmul.f32 %v3479, %v3484
        %v3487 = vld [vmem:[%s834] sm:$0xff]
        %3488 = vset.pattern.permute.xlu0 0
        %3489 = vperm.xlu0 %3488, %v3487
        %v3490 = vpop.permute.xlu0 %3489
        %vm3491 = vcmp.eq.s32.totalorder %v849, %v3490
        %v3492 = vsel %vm3491, 1, 0
        %v3493 = vcvt.s32.f32 %v3492
        %3494 = vmatprep.subr.mxu0 0.0
        %3495 = vmatpush1.msra.mxu0 %v871
        %3496 = vmatprep.subr.mxu0 0.0
        %3497 = vmatpush1.msra.mxu0 %v870
        %3498 = vmatprep.subr.mxu0 0.0
        %3499 = vmatpush1.msra.mxu0 %v869
        %3500 = vmatprep.subr.mxu0 0.0
        %3501 = vmatpush1.msra.mxu0 %v868
        %3502 = vmatprep.subr.mxu0 0.0
        %3503 = vmatpush1.msra.mxu0 %v867
        %3504 = vmatprep.subr.mxu0 0.0
        %3505 = vmatpush1.msra.mxu0 %v866
        %3506 = vmatprep.subr.mxu0 0.0
        %3507 = vmatpush1.msra.mxu0 %v865
        %3508 = vmatprep.subr.mxu0 0.0
        %3509 = vmatpush1.msra.mxu0 %v864
        %3510 = vmatprep.subr.mxu0 0.0
        %3511 = vmatpush1.msra.mxu0 %v863
        %3512 = vmatprep.subr.mxu0 0.0
        %3513 = vmatpush1.msra.mxu0 %v862
        %3514 = vmatprep.subr.mxu0 0.0
        %3515 = vmatpush1.msra.mxu0 %v861
        %3516 = vmatprep.subr.mxu0 0.0
        %3517 = vmatpush1.msra.mxu0 %v860
        %3518 = vmatprep.subr.mxu0 0.0
        %3519 = vmatpush1.msra.mxu0 %v859
        %3520 = vmatprep.subr.mxu0 0.0
        %3521 = vmatpush1.msra.mxu0 %v858
        %3522 = vmatprep.subr.mxu0 0.0
        %3523 = vmatpush1.msra.mxu0 %v857
        %3524 = vmatprep.subr.mxu0 0.0
        %3525 = vmatpush1.msra.mxu0 %v856
        %3526 = vmatprep.subr.mxu0 0.0
        %3527 = vmatpush2.msra.mxu0 0.0
        %3528 = vmatprep.subr.mxu0 0.0
        %3529 = vmatpush2.msra.mxu0 0.0
        %3530 = vmatprep.subr.mxu0 0.0
        %3531 = vmatpush2.msra.mxu0 0.0
        %3532 = vmatprep.subr.mxu0 0.0
        %3533 = vmatpush2.msra.mxu0 0.0
        %3534 = vmatprep.subr.mxu0 0.0
        %3535 = vmatpush2.msra.mxu0 0.0
        %3536 = vmatprep.subr.mxu0 0.0
        %3537 = vmatpush2.msra.mxu0 0.0
        %3538 = vmatprep.subr.mxu0 0.0
        %3539 = vmatpush2.msra.mxu0 0.0
        %3540 = vmatprep.subr.mxu0 0.0
        %3541 = vmatpush2.msra.mxu0 0.0
        %3542 = vmatprep.subr.mxu0 0.0
        %3543 = vmatpush2.msra.mxu0 0.0
        %3544 = vmatprep.subr.mxu0 0.0
        %3545 = vmatpush2.msra.mxu0 0.0
        %3546 = vmatprep.subr.mxu0 0.0
        %3547 = vmatpush2.msra.mxu0 0.0
        %3548 = vmatprep.subr.mxu0 0.0
        %3549 = vmatpush2.msra.mxu0 0.0
        %3550 = vmatprep.subr.mxu0 0.0
        %3551 = vmatpush2.msra.mxu0 0.0
        %3552 = vmatprep.subr.mxu0 0.0
        %3553 = vmatpush2.msra.mxu0 0.0
        %3554 = vmatprep.subr.mxu0 0.0
        %3555 = vmatpush2.msra.mxu0 0.0
        %3556 = vmatprep.subr.mxu0 0.0
        %3557 = vmatpush2.msra.mxu0 0.0
        %3558 = vmatprep.mubr.f32.mxu0 0.0
        %3559 = vmatmul.mubr.f32.gmra.mxu0 %v3493
        %v3560 = vpop.f32.mrf.mxu0
        %v3561 = vadd.f32 0.0, %v3560
        %v3562 = vpop.f32.mrf.mxu0
        %3563 = vdwg.mxu0
        %v3564 = vld [vmem:[%s13] sm:$0x1]
        %v3565 = vmul.f32 %v3561, %v3561
        %v3566 = vsel %vm944, %v3565, 0.0
        %3567 = vadd.xlane.f32.xlu0 %v3566
        %v3568 = vpop.xlane.xlu0 %3567
        %v3569 = vmul.f32 %v3568, %v948
        %v3570 = vadd.f32 %v3569, 1e-06
        %v3571 = vrsqrt.pop %v3570
        %v3572 = vmul.f32 %v3561, %v3571
        %v3574 = vlaneseq
        %v3575 = vshrl.u32 %v3574, 7
        %v3576 = vsub.s32 0, %v3575
        %v3577 = vrot.slane %v3564, %v3576
        %v3579 = vmul.f32 %v3572, %v3577
        %v3580 = vld [vmem:[%s14] sm:$0xff]
        %v3581 = vld [vmem:[%s14 + $0x8] sm:$0xff]
        %v3582 = vld [vmem:[%s14 + $0x10] sm:$0xff]
        %v3583 = vld [vmem:[%s14 + $0x18] sm:$0xff]
        %v3584 = vld [vmem:[%s14 + $0x20] sm:$0xff]
        %v3585 = vld [vmem:[%s14 + $0x28] sm:$0xff]
        %v3586 = vld [vmem:[%s14 + $0x30] sm:$0xff]
        %v3587 = vld [vmem:[%s14 + $0x38] sm:$0xff]
        %v3588 = vld [vmem:[%s14 + $0x40] sm:$0xff]
        %v3589 = vld [vmem:[%s14 + $0x48] sm:$0xff]
        %v3590 = vld [vmem:[%s14 + $0x50] sm:$0xff]
        %v3591 = vld [vmem:[%s14 + $0x58] sm:$0xff]
        %v3592 = vld [vmem:[%s14 + $0x60] sm:$0xff]
        %v3593 = vld [vmem:[%s14 + $0x68] sm:$0xff]
        %v3594 = vld [vmem:[%s14 + $0x70] sm:$0xff]
        %v3595 = vld [vmem:[%s14 + $0x78] sm:$0xff]
        %v3597 = vsel %vm944, %v3579, 0
        %3599 = vmatprep.subr.mxu0 0.0
        %3600 = vmatpush1.msra.mxu0 0.0
        %3601 = vmatprep.subr.mxu0 0.0
        %3602 = vmatpush1.msra.mxu0 0.0
        %3603 = vmatprep.subr.mxu0 0.0
        %3604 = vmatpush1.msra.mxu0 0.0
        %3605 = vmatprep.subr.mxu0 0.0
        %3606 = vmatpush1.msra.mxu0 0.0
        %3607 = vmatprep.subr.mxu0 0.0
        %3608 = vmatpush1.msra.mxu0 0.0
        %3609 = vmatprep.subr.mxu0 0.0
        %3610 = vmatpush1.msra.mxu0 0.0
        %3611 = vmatprep.subr.mxu0 0.0
        %3612 = vmatpush1.msra.mxu0 0.0
        %3613 = vmatprep.subr.mxu0 0.0
        %3614 = vmatpush1.msra.mxu0 0.0
        %3615 = vmatprep.subr.mxu0 %v3595
        %3616 = vmatpush1.msra.mxu0 %v3594
        %3617 = vmatprep.subr.mxu0 %v3593
        %3618 = vmatpush1.msra.mxu0 %v3592
        %3619 = vmatprep.subr.mxu0 %v3591
        %3620 = vmatpush1.msra.mxu0 %v3590
        %3621 = vmatprep.subr.mxu0 %v3589
        %3622 = vmatpush1.msra.mxu0 %v3588
        %3623 = vmatprep.subr.mxu0 %v3587
        %3624 = vmatpush1.msra.mxu0 %v3586
        %3625 = vmatprep.subr.mxu0 %v3585
        %3626 = vmatpush1.msra.mxu0 %v3584
        %3627 = vmatprep.subr.mxu0 %v3583
        %3628 = vmatpush1.msra.mxu0 %v3582
        %3629 = vmatprep.subr.mxu0 %v3581
        %3630 = vmatpush1.msra.mxu0 %v3580
        %3631 = vmatprep.subr.mxu0 0.0
        %3632 = vmatpush2.msra.mxu0 0.0
        %3633 = vmatprep.subr.mxu0 0.0
        %3634 = vmatpush2.msra.mxu0 0.0
        %3635 = vmatprep.subr.mxu0 0.0
        %3636 = vmatpush2.msra.mxu0 0.0
        %3637 = vmatprep.subr.mxu0 0.0
        %3638 = vmatpush2.msra.mxu0 0.0
        %3639 = vmatprep.subr.mxu0 0.0
        %3640 = vmatpush2.msra.mxu0 0.0
        %3641 = vmatprep.subr.mxu0 0.0
        %3642 = vmatpush2.msra.mxu0 0.0
        %3643 = vmatprep.subr.mxu0 0.0
        %3644 = vmatpush2.msra.mxu0 0.0
        %3645 = vmatprep.subr.mxu0 0.0
        %3646 = vmatpush2.msra.mxu0 0.0
        %3647 = vmatprep.subr.mxu0 0.0
        %3648 = vmatpush2.msra.mxu0 0.0
        %3649 = vmatprep.subr.mxu0 0.0
        %3650 = vmatpush2.msra.mxu0 0.0
        %3651 = vmatprep.subr.mxu0 0.0
        %3652 = vmatpush2.msra.mxu0 0.0
        %3653 = vmatprep.subr.mxu0 0.0
        %3654 = vmatpush2.msra.mxu0 0.0
        %3655 = vmatprep.subr.mxu0 0.0
        %3656 = vmatpush2.msra.mxu0 0.0
        %3657 = vmatprep.subr.mxu0 0.0
        %3658 = vmatpush2.msra.mxu0 0.0
        %3659 = vmatprep.subr.mxu0 0.0
        %3660 = vmatpush2.msra.mxu0 0.0
        %3661 = vmatprep.subr.mxu0 0.0
        %3662 = vmatpush2.msra.mxu0 0.0
        %3663 = vmatprep.mubr.f32.mxu0 0.0
        %3664 = vmatmul.mubr.f32.gmra.mxu0 %v3597
        %v3665 = vpop.f32.mrf.mxu0
        %v3666 = vadd.f32 0.0, %v3665
        %v3667 = vpop.f32.mrf.mxu0
        %v3668 = vadd.f32 0.0, %v3667
        %3669 = vdwg.mxu0
        %v3670 = vld [vmem:[%s15] sm:$0xff]
        %v3671 = vld [vmem:[%s15 + $0x8] sm:$0xff]
        %v3672 = vld [vmem:[%s15 + $0x10] sm:$0xff]
        %v3673 = vld [vmem:[%s15 + $0x18] sm:$0xff]
        %v3674 = vld [vmem:[%s15 + $0x20] sm:$0xff]
        %v3675 = vld [vmem:[%s15 + $0x28] sm:$0xff]
        %v3676 = vld [vmem:[%s15 + $0x30] sm:$0xff]
        %v3677 = vld [vmem:[%s15 + $0x38] sm:$0xff]
        %v3678 = vld [vmem:[%s5] sm:$0xff]
        %3680 = vrot.lane.b32.xlu0 %v3666, 64
        %v3681 = vpop.permute.xlu0 %3680
        %v3682 = vsel %vm1069, %v3666, 0
        %v3684 = vsel %vm1069, %v3681, 0
        %3686 = vmatprep.subr.mxu0 0.0
        %3687 = vmatpush1.xpose.msra.mxu0 0.0
        %3688 = vmatprep.subr.mxu0 0.0
        %3689 = vmatpush1.xpose.msra.mxu0 0.0
        %3690 = vmatprep.subr.mxu0 0.0
        %3691 = vmatpush1.xpose.msra.mxu0 0.0
        %3692 = vmatprep.subr.mxu0 0.0
        %3693 = vmatpush1.xpose.msra.mxu0 0.0
        %3694 = vmatprep.subr.mxu0 0.0
        %3695 = vmatpush1.xpose.msra.mxu0 0.0
        %3696 = vmatprep.subr.mxu0 0.0
        %3697 = vmatpush1.xpose.msra.mxu0 0.0
        %3698 = vmatprep.subr.mxu0 0.0
        %3699 = vmatpush1.xpose.msra.mxu0 0.0
        %3700 = vmatprep.subr.mxu0 0.0
        %3701 = vmatpush1.xpose.msra.mxu0 0.0
        %3702 = vmatprep.subr.mxu0 0.0
        %3703 = vmatpush1.xpose.msra.mxu0 0.0
        %3704 = vmatprep.subr.mxu0 0.0
        %3705 = vmatpush1.xpose.msra.mxu0 0.0
        %3706 = vmatprep.subr.mxu0 0.0
        %3707 = vmatpush1.xpose.msra.mxu0 0.0
        %3708 = vmatprep.subr.mxu0 0.0
        %3709 = vmatpush1.xpose.msra.mxu0 0.0
        %3710 = vmatprep.subr.mxu0 0.0
        %3711 = vmatpush1.xpose.msra.mxu0 0.0
        %3712 = vmatprep.subr.mxu0 0.0
        %3713 = vmatpush1.xpose.msra.mxu0 0.0
        %3714 = vmatprep.subr.mxu0 0.0
        %3715 = vmatpush1.xpose.msra.mxu0 0.0
        %3716 = vmatprep.subr.mxu0 0.0
        %3717 = vmatpush1.xpose.msra.mxu0 %v3684
        %3718 = vmatprep.subr.mxu0 0.0
        %3719 = vmatpush2.xpose.msra.mxu0 0.0
        %3720 = vmatprep.subr.mxu0 0.0
        %3721 = vmatpush2.xpose.msra.mxu0 0.0
        %3722 = vmatprep.subr.mxu0 0.0
        %3723 = vmatpush2.xpose.msra.mxu0 0.0
        %3724 = vmatprep.subr.mxu0 0.0
        %3725 = vmatpush2.xpose.msra.mxu0 0.0
        %3726 = vmatprep.subr.mxu0 0.0
        %3727 = vmatpush2.xpose.msra.mxu0 0.0
        %3728 = vmatprep.subr.mxu0 0.0
        %3729 = vmatpush2.xpose.msra.mxu0 0.0
        %3730 = vmatprep.subr.mxu0 0.0
        %3731 = vmatpush2.xpose.msra.mxu0 0.0
        %3732 = vmatprep.subr.mxu0 0.0
        %3733 = vmatpush2.xpose.msra.mxu0 0.0
        %3734 = vmatprep.subr.mxu0 0.0
        %3735 = vmatpush2.xpose.msra.mxu0 0.0
        %3736 = vmatprep.subr.mxu0 0.0
        %3737 = vmatpush2.xpose.msra.mxu0 0.0
        %3738 = vmatprep.subr.mxu0 0.0
        %3739 = vmatpush2.xpose.msra.mxu0 0.0
        %3740 = vmatprep.subr.mxu0 0.0
        %3741 = vmatpush2.xpose.msra.mxu0 0.0
        %3742 = vmatprep.subr.mxu0 0.0
        %3743 = vmatpush2.xpose.msra.mxu0 0.0
        %3744 = vmatprep.subr.mxu0 0.0
        %3745 = vmatpush2.xpose.msra.mxu0 0.0
        %3746 = vmatprep.subr.mxu0 0.0
        %3747 = vmatpush2.xpose.msra.mxu0 0.0
        %3748 = vmatprep.subr.mxu0 0.0
        %3749 = vmatpush2.xpose.msra.mxu0 0.0
        %3750 = vmatprep.mubr.f32.mxu0 0.0
        %3751 = vmatmul.mubr.f32.gmra.mxu0 %v3682
        %v3752 = vpop.f32.mrf.mxu0
        %v3753 = vadd.f32 %v3678, %v3752
        %v3754 = vpop.f32.mrf.mxu0
        %3755 = vdwg.mxu0
        %v3756 = vsel %vm1144, %v3753, -inf
        %3757 = vmax.xlane.f32.xlu0 %v3756
        %v3758 = vpop.xlane.xlu0 %3757
        %v3759 = vsub.f32 %v3753, %v3758
        %v3760 = vmul.f32 %v3759, 1.442695
        %v3761 = vpow.pop %v3760
        %v3762 = vsel %vm1144, %v3761, 0.0
        %3763 = vadd.xlane.f32.xlu0 %v3762
        %v3764 = vpop.xlane.xlu0 %3763
        %v3765 = vrcp.pop %v3764
        %v3766 = vmul.f32 %v3761, %v3765
        %v3768 = vsel %vm1144, %v3766, 0
        %3770 = vmatprep.subr.mxu0 0.0
        %3771 = vmatpush1.msra.mxu0 0.0
        %3772 = vmatprep.subr.mxu0 0.0
        %3773 = vmatpush1.msra.mxu0 0.0
        %3774 = vmatprep.subr.mxu0 0.0
        %3775 = vmatpush1.msra.mxu0 0.0
        %3776 = vmatprep.subr.mxu0 0.0
        %3777 = vmatpush1.msra.mxu0 0.0
        %3778 = vmatprep.subr.mxu0 0.0
        %3779 = vmatpush1.msra.mxu0 0.0
        %3780 = vmatprep.subr.mxu0 0.0
        %3781 = vmatpush1.msra.mxu0 0.0
        %3782 = vmatprep.subr.mxu0 0.0
        %3783 = vmatpush1.msra.mxu0 0.0
        %3784 = vmatprep.subr.mxu0 0.0
        %3785 = vmatpush1.msra.mxu0 0.0
        %3786 = vmatprep.subr.mxu0 0.0
        %3787 = vmatpush1.msra.mxu0 0.0
        %3788 = vmatprep.subr.mxu0 0.0
        %3789 = vmatpush1.msra.mxu0 0.0
        %3790 = vmatprep.subr.mxu0 0.0
        %3791 = vmatpush1.msra.mxu0 0.0
        %3792 = vmatprep.subr.mxu0 0.0
        %3793 = vmatpush1.msra.mxu0 0.0
        %3794 = vmatprep.subr.mxu0 0.0
        %3795 = vmatpush1.msra.mxu0 0.0
        %3796 = vmatprep.subr.mxu0 0.0
        %3797 = vmatpush1.msra.mxu0 0.0
        %3798 = vmatprep.subr.mxu0 0.0
        %3799 = vmatpush1.msra.mxu0 0.0
        %3800 = vmatprep.subr.mxu0 0.0
        %3801 = vmatpush1.msra.mxu0 %v3668
        %3802 = vmatprep.subr.mxu0 0.0
        %3803 = vmatpush2.msra.mxu0 0.0
        %3804 = vmatprep.subr.mxu0 0.0
        %3805 = vmatpush2.msra.mxu0 0.0
        %3806 = vmatprep.subr.mxu0 0.0
        %3807 = vmatpush2.msra.mxu0 0.0
        %3808 = vmatprep.subr.mxu0 0.0
        %3809 = vmatpush2.msra.mxu0 0.0
        %3810 = vmatprep.subr.mxu0 0.0
        %3811 = vmatpush2.msra.mxu0 0.0
        %3812 = vmatprep.subr.mxu0 0.0
        %3813 = vmatpush2.msra.mxu0 0.0
        %3814 = vmatprep.subr.mxu0 0.0
        %3815 = vmatpush2.msra.mxu0 0.0
        %3816 = vmatprep.subr.mxu0 0.0
        %3817 = vmatpush2.msra.mxu0 0.0
        %3818 = vmatprep.subr.mxu0 0.0
        %3819 = vmatpush2.msra.mxu0 0.0
        %3820 = vmatprep.subr.mxu0 0.0
        %3821 = vmatpush2.msra.mxu0 0.0
        %3822 = vmatprep.subr.mxu0 0.0
        %3823 = vmatpush2.msra.mxu0 0.0
        %3824 = vmatprep.subr.mxu0 0.0
        %3825 = vmatpush2.msra.mxu0 0.0
        %3826 = vmatprep.subr.mxu0 0.0
        %3827 = vmatpush2.msra.mxu0 0.0
        %3828 = vmatprep.subr.mxu0 0.0
        %3829 = vmatpush2.msra.mxu0 0.0
        %3830 = vmatprep.subr.mxu0 0.0
        %3831 = vmatpush2.msra.mxu0 0.0
        %3832 = vmatprep.subr.mxu0 0.0
        %3833 = vmatpush2.msra.mxu0 0.0
        %3834 = vmatprep.mubr.f32.mxu0 0.0
        %3835 = vmatmul.mubr.f32.gmra.mxu0 %v3768
        %v3836 = vpop.f32.mrf.mxu0
        %v3837 = vadd.f32 0.0, %v3836
        %v3838 = vpop.f32.mrf.mxu0
        %3839 = vdwg.mxu0
        %s3840 = scalar_lea.vmem %s5, 8
        %v3841 = vld [vmem:[%s3840] sm:$0xff]
        %3842 = vrot.lane.b32.xlu0 %v3666, 112
        %v3843 = vpop.permute.xlu0 %3842
        %3844 = vrot.lane.b32.xlu0 %v3666, 48
        %v3845 = vpop.permute.xlu0 %3844
        %v3846 = vsel %vm1069, %v3843, 0
        %v3848 = vsel %vm1069, %v3845, 0
        %3850 = vmatprep.subr.mxu0 0.0
        %3851 = vmatpush1.xpose.msra.mxu0 0.0
        %3852 = vmatprep.subr.mxu0 0.0
        %3853 = vmatpush1.xpose.msra.mxu0 0.0
        %3854 = vmatprep.subr.mxu0 0.0
        %3855 = vmatpush1.xpose.msra.mxu0 0.0
        %3856 = vmatprep.subr.mxu0 0.0
        %3857 = vmatpush1.xpose.msra.mxu0 0.0
        %3858 = vmatprep.subr.mxu0 0.0
        %3859 = vmatpush1.xpose.msra.mxu0 0.0
        %3860 = vmatprep.subr.mxu0 0.0
        %3861 = vmatpush1.xpose.msra.mxu0 0.0
        %3862 = vmatprep.subr.mxu0 0.0
        %3863 = vmatpush1.xpose.msra.mxu0 0.0
        %3864 = vmatprep.subr.mxu0 0.0
        %3865 = vmatpush1.xpose.msra.mxu0 0.0
        %3866 = vmatprep.subr.mxu0 0.0
        %3867 = vmatpush1.xpose.msra.mxu0 0.0
        %3868 = vmatprep.subr.mxu0 0.0
        %3869 = vmatpush1.xpose.msra.mxu0 0.0
        %3870 = vmatprep.subr.mxu0 0.0
        %3871 = vmatpush1.xpose.msra.mxu0 0.0
        %3872 = vmatprep.subr.mxu0 0.0
        %3873 = vmatpush1.xpose.msra.mxu0 0.0
        %3874 = vmatprep.subr.mxu0 0.0
        %3875 = vmatpush1.xpose.msra.mxu0 0.0
        %3876 = vmatprep.subr.mxu0 0.0
        %3877 = vmatpush1.xpose.msra.mxu0 0.0
        %3878 = vmatprep.subr.mxu0 0.0
        %3879 = vmatpush1.xpose.msra.mxu0 0.0
        %3880 = vmatprep.subr.mxu0 0.0
        %3881 = vmatpush1.xpose.msra.mxu0 %v3848
        %3882 = vmatprep.subr.mxu0 0.0
        %3883 = vmatpush2.xpose.msra.mxu0 0.0
        %3884 = vmatprep.subr.mxu0 0.0
        %3885 = vmatpush2.xpose.msra.mxu0 0.0
        %3886 = vmatprep.subr.mxu0 0.0
        %3887 = vmatpush2.xpose.msra.mxu0 0.0
        %3888 = vmatprep.subr.mxu0 0.0
        %3889 = vmatpush2.xpose.msra.mxu0 0.0
        %3890 = vmatprep.subr.mxu0 0.0
        %3891 = vmatpush2.xpose.msra.mxu0 0.0
        %3892 = vmatprep.subr.mxu0 0.0
        %3893 = vmatpush2.xpose.msra.mxu0 0.0
        %3894 = vmatprep.subr.mxu0 0.0
        %3895 = vmatpush2.xpose.msra.mxu0 0.0
        %3896 = vmatprep.subr.mxu0 0.0
        %3897 = vmatpush2.xpose.msra.mxu0 0.0
        %3898 = vmatprep.subr.mxu0 0.0
        %3899 = vmatpush2.xpose.msra.mxu0 0.0
        %3900 = vmatprep.subr.mxu0 0.0
        %3901 = vmatpush2.xpose.msra.mxu0 0.0
        %3902 = vmatprep.subr.mxu0 0.0
        %3903 = vmatpush2.xpose.msra.mxu0 0.0
        %3904 = vmatprep.subr.mxu0 0.0
        %3905 = vmatpush2.xpose.msra.mxu0 0.0
        %3906 = vmatprep.subr.mxu0 0.0
        %3907 = vmatpush2.xpose.msra.mxu0 0.0
        %3908 = vmatprep.subr.mxu0 0.0
        %3909 = vmatpush2.xpose.msra.mxu0 0.0
        %3910 = vmatprep.subr.mxu0 0.0
        %3911 = vmatpush2.xpose.msra.mxu0 0.0
        %3912 = vmatprep.subr.mxu0 0.0
        %3913 = vmatpush2.xpose.msra.mxu0 0.0
        %3914 = vmatprep.mubr.f32.mxu0 0.0
        %3915 = vmatmul.mubr.f32.gmra.mxu0 %v3846
        %v3916 = vpop.f32.mrf.mxu0
        %v3917 = vadd.f32 %v3841, %v3916
        %v3918 = vpop.f32.mrf.mxu0
        %3919 = vdwg.mxu0
        %v3920 = vsel %vm1144, %v3917, -inf
        %3921 = vmax.xlane.f32.xlu0 %v3920
        %v3922 = vpop.xlane.xlu0 %3921
        %v3923 = vsub.f32 %v3917, %v3922
        %v3924 = vmul.f32 %v3923, 1.442695
        %v3925 = vpow.pop %v3924
        %v3926 = vsel %vm1144, %v3925, 0.0
        %3927 = vadd.xlane.f32.xlu0 %v3926
        %v3928 = vpop.xlane.xlu0 %3927
        %v3929 = vrcp.pop %v3928
        %v3930 = vmul.f32 %v3925, %v3929
        %3932 = vrot.lane.b32.xlu0 %v3668, 112
        %v3933 = vpop.permute.xlu0 %3932
        %v3936 = vsel %vm1144, %v3930, 0
        %3938 = vmatprep.subr.mxu0 0.0
        %3939 = vmatpush1.msra.mxu0 0.0
        %3940 = vmatprep.subr.mxu0 0.0
        %3941 = vmatpush1.msra.mxu0 0.0
        %3942 = vmatprep.subr.mxu0 0.0
        %3943 = vmatpush1.msra.mxu0 0.0
        %3944 = vmatprep.subr.mxu0 0.0
        %3945 = vmatpush1.msra.mxu0 0.0
        %3946 = vmatprep.subr.mxu0 0.0
        %3947 = vmatpush1.msra.mxu0 0.0
        %3948 = vmatprep.subr.mxu0 0.0
        %3949 = vmatpush1.msra.mxu0 0.0
        %3950 = vmatprep.subr.mxu0 0.0
        %3951 = vmatpush1.msra.mxu0 0.0
        %3952 = vmatprep.subr.mxu0 0.0
        %3953 = vmatpush1.msra.mxu0 0.0
        %3954 = vmatprep.subr.mxu0 0.0
        %3955 = vmatpush1.msra.mxu0 0.0
        %3956 = vmatprep.subr.mxu0 0.0
        %3957 = vmatpush1.msra.mxu0 0.0
        %3958 = vmatprep.subr.mxu0 0.0
        %3959 = vmatpush1.msra.mxu0 0.0
        %3960 = vmatprep.subr.mxu0 0.0
        %3961 = vmatpush1.msra.mxu0 0.0
        %3962 = vmatprep.subr.mxu0 0.0
        %3963 = vmatpush1.msra.mxu0 0.0
        %3964 = vmatprep.subr.mxu0 0.0
        %3965 = vmatpush1.msra.mxu0 0.0
        %3966 = vmatprep.subr.mxu0 0.0
        %3967 = vmatpush1.msra.mxu0 0.0
        %3968 = vmatprep.subr.mxu0 0.0
        %3969 = vmatpush1.msra.mxu0 %v3933
        %3970 = vmatprep.subr.mxu0 0.0
        %3971 = vmatpush2.msra.mxu0 0.0
        %3972 = vmatprep.subr.mxu0 0.0
        %3973 = vmatpush2.msra.mxu0 0.0
        %3974 = vmatprep.subr.mxu0 0.0
        %3975 = vmatpush2.msra.mxu0 0.0
        %3976 = vmatprep.subr.mxu0 0.0
        %3977 = vmatpush2.msra.mxu0 0.0
        %3978 = vmatprep.subr.mxu0 0.0
        %3979 = vmatpush2.msra.mxu0 0.0
        %3980 = vmatprep.subr.mxu0 0.0
        %3981 = vmatpush2.msra.mxu0 0.0
        %3982 = vmatprep.subr.mxu0 0.0
        %3983 = vmatpush2.msra.mxu0 0.0
        %3984 = vmatprep.subr.mxu0 0.0
        %3985 = vmatpush2.msra.mxu0 0.0
        %3986 = vmatprep.subr.mxu0 0.0
        %3987 = vmatpush2.msra.mxu0 0.0
        %3988 = vmatprep.subr.mxu0 0.0
        %3989 = vmatpush2.msra.mxu0 0.0
        %3990 = vmatprep.subr.mxu0 0.0
        %3991 = vmatpush2.msra.mxu0 0.0
        %3992 = vmatprep.subr.mxu0 0.0
        %3993 = vmatpush2.msra.mxu0 0.0
        %3994 = vmatprep.subr.mxu0 0.0
        %3995 = vmatpush2.msra.mxu0 0.0
        %3996 = vmatprep.subr.mxu0 0.0
        %3997 = vmatpush2.msra.mxu0 0.0
        %3998 = vmatprep.subr.mxu0 0.0
        %3999 = vmatpush2.msra.mxu0 0.0
        %4000 = vmatprep.subr.mxu0 0.0
        %4001 = vmatpush2.msra.mxu0 0.0
        %4002 = vmatprep.mubr.f32.mxu0 0.0
        %4003 = vmatmul.mubr.f32.gmra.mxu0 %v3936
        %v4004 = vpop.f32.mrf.mxu0
        %v4005 = vadd.f32 0.0, %v4004
        %v4006 = vpop.f32.mrf.mxu0
        %4007 = vdwg.mxu0
        %v4009 = vsel %vm1069, %v4005, 0
        %4011 = vmatprep.subr.mxu0 0.0
        %4012 = vmatpush1.msra.mxu0 0.0
        %4013 = vmatprep.subr.mxu0 0.0
        %4014 = vmatpush1.msra.mxu0 0.0
        %4015 = vmatprep.subr.mxu0 0.0
        %4016 = vmatpush1.msra.mxu0 0.0
        %4017 = vmatprep.subr.mxu0 0.0
        %4018 = vmatpush1.msra.mxu0 0.0
        %4019 = vmatprep.subr.mxu0 0.0
        %4020 = vmatpush1.msra.mxu0 0.0
        %4021 = vmatprep.subr.mxu0 0.0
        %4022 = vmatpush1.msra.mxu0 0.0
        %4023 = vmatprep.subr.mxu0 0.0
        %4024 = vmatpush1.msra.mxu0 0.0
        %4025 = vmatprep.subr.mxu0 0.0
        %4026 = vmatpush1.msra.mxu0 0.0
        %4027 = vmatprep.subr.mxu0 0.0
        %4028 = vmatpush1.msra.mxu0 0.0
        %4029 = vmatprep.subr.mxu0 0.0
        %4030 = vmatpush1.msra.mxu0 0.0
        %4031 = vmatprep.subr.mxu0 0.0
        %4032 = vmatpush1.msra.mxu0 0.0
        %4033 = vmatprep.subr.mxu0 0.0
        %4034 = vmatpush1.msra.mxu0 0.0
        %4035 = vmatprep.subr.mxu0 0.0
        %4036 = vmatpush1.msra.mxu0 0.0
        %4037 = vmatprep.subr.mxu0 0.0
        %4038 = vmatpush1.msra.mxu0 0.0
        %4039 = vmatprep.subr.mxu0 0.0
        %4040 = vmatpush1.msra.mxu0 %v3673
        %4041 = vmatprep.subr.mxu0 0.0
        %4042 = vmatpush1.msra.mxu0 %v3672
        %4043 = vmatprep.subr.mxu0 0.0
        %4044 = vmatpush2.msra.mxu0 0.0
        %4045 = vmatprep.subr.mxu0 0.0
        %4046 = vmatpush2.msra.mxu0 0.0
        %4047 = vmatprep.subr.mxu0 0.0
        %4048 = vmatpush2.msra.mxu0 0.0
        %4049 = vmatprep.subr.mxu0 0.0
        %4050 = vmatpush2.msra.mxu0 0.0
        %4051 = vmatprep.subr.mxu0 0.0
        %4052 = vmatpush2.msra.mxu0 0.0
        %4053 = vmatprep.subr.mxu0 0.0
        %4054 = vmatpush2.msra.mxu0 0.0
        %4055 = vmatprep.subr.mxu0 0.0
        %4056 = vmatpush2.msra.mxu0 0.0
        %4057 = vmatprep.subr.mxu0 0.0
        %4058 = vmatpush2.msra.mxu0 0.0
        %4059 = vmatprep.subr.mxu0 0.0
        %4060 = vmatpush2.msra.mxu0 0.0
        %4061 = vmatprep.subr.mxu0 0.0
        %4062 = vmatpush2.msra.mxu0 0.0
        %4063 = vmatprep.subr.mxu0 0.0
        %4064 = vmatpush2.msra.mxu0 0.0
        %4065 = vmatprep.subr.mxu0 0.0
        %4066 = vmatpush2.msra.mxu0 0.0
        %4067 = vmatprep.subr.mxu0 0.0
        %4068 = vmatpush2.msra.mxu0 0.0
        %4069 = vmatprep.subr.mxu0 0.0
        %4070 = vmatpush2.msra.mxu0 0.0
        %4071 = vmatprep.subr.mxu0 0.0
        %4072 = vmatpush2.msra.mxu0 0.0
        %4073 = vmatprep.subr.mxu0 0.0
        %4074 = vmatpush2.msra.mxu0 0.0
        %4075 = vmatprep.mubr.f32.mxu0 0.0
        %4076 = vmatmul.mubr.f32.gmra.mxu0 %v4009
        %v4077 = vpop.f32.mrf.mxu0
        %v4078 = vadd.f32 0.0, %v4077
        %v4079 = vpop.f32.mrf.mxu0
        %4080 = vdwg.mxu0
        %v4082 = vsel %vm1069, %v3837, 0
        %4084 = vmatprep.subr.mxu0 0.0
        %4085 = vmatpush1.msra.mxu0 0.0
        %4086 = vmatprep.subr.mxu0 0.0
        %4087 = vmatpush1.msra.mxu0 0.0
        %4088 = vmatprep.subr.mxu0 0.0
        %4089 = vmatpush1.msra.mxu0 0.0
        %4090 = vmatprep.subr.mxu0 0.0
        %4091 = vmatpush1.msra.mxu0 0.0
        %4092 = vmatprep.subr.mxu0 0.0
        %4093 = vmatpush1.msra.mxu0 0.0
        %4094 = vmatprep.subr.mxu0 0.0
        %4095 = vmatpush1.msra.mxu0 0.0
        %4096 = vmatprep.subr.mxu0 0.0
        %4097 = vmatpush1.msra.mxu0 0.0
        %4098 = vmatprep.subr.mxu0 0.0
        %4099 = vmatpush1.msra.mxu0 0.0
        %4100 = vmatprep.subr.mxu0 0.0
        %4101 = vmatpush1.msra.mxu0 0.0
        %4102 = vmatprep.subr.mxu0 0.0
        %4103 = vmatpush1.msra.mxu0 0.0
        %4104 = vmatprep.subr.mxu0 0.0
        %4105 = vmatpush1.msra.mxu0 0.0
        %4106 = vmatprep.subr.mxu0 0.0
        %4107 = vmatpush1.msra.mxu0 0.0
        %4108 = vmatprep.subr.mxu0 0.0
        %4109 = vmatpush1.msra.mxu0 0.0
        %4110 = vmatprep.subr.mxu0 0.0
        %4111 = vmatpush1.msra.mxu0 0.0
        %4112 = vmatprep.subr.mxu0 0.0
        %4113 = vmatpush1.msra.mxu0 %v3671
        %4114 = vmatprep.subr.mxu0 0.0
        %4115 = vmatpush1.msra.mxu0 %v3670
        %4116 = vmatprep.subr.mxu0 0.0
        %4117 = vmatpush2.msra.mxu0 0.0
        %4118 = vmatprep.subr.mxu0 0.0
        %4119 = vmatpush2.msra.mxu0 0.0
        %4120 = vmatprep.subr.mxu0 0.0
        %4121 = vmatpush2.msra.mxu0 0.0
        %4122 = vmatprep.subr.mxu0 0.0
        %4123 = vmatpush2.msra.mxu0 0.0
        %4124 = vmatprep.subr.mxu0 0.0
        %4125 = vmatpush2.msra.mxu0 0.0
        %4126 = vmatprep.subr.mxu0 0.0
        %4127 = vmatpush2.msra.mxu0 0.0
        %4128 = vmatprep.subr.mxu0 0.0
        %4129 = vmatpush2.msra.mxu0 0.0
        %4130 = vmatprep.subr.mxu0 0.0
        %4131 = vmatpush2.msra.mxu0 0.0
        %4132 = vmatprep.subr.mxu0 0.0
        %4133 = vmatpush2.msra.mxu0 0.0
        %4134 = vmatprep.subr.mxu0 0.0
        %4135 = vmatpush2.msra.mxu0 0.0
        %4136 = vmatprep.subr.mxu0 0.0
        %4137 = vmatpush2.msra.mxu0 0.0
        %4138 = vmatprep.subr.mxu0 0.0
        %4139 = vmatpush2.msra.mxu0 0.0
        %4140 = vmatprep.subr.mxu0 0.0
        %4141 = vmatpush2.msra.mxu0 0.0
        %4142 = vmatprep.subr.mxu0 0.0
        %4143 = vmatpush2.msra.mxu0 0.0
        %4144 = vmatprep.subr.mxu0 0.0
        %4145 = vmatpush2.msra.mxu0 0.0
        %4146 = vmatprep.subr.mxu0 0.0
        %4147 = vmatpush2.msra.mxu0 0.0
        %4148 = vmatprep.mubr.f32.mxu0 0.0
        %4149 = vmatmul.mubr.f32.gmra.mxu0 %v4082
        %v4150 = vpop.f32.mrf.mxu0
        %v4151 = vadd.f32 %v4078, %v4150
        %v4152 = vpop.f32.mrf.mxu0
        %4153 = vdwg.mxu0
        %s4154 = scalar_lea.vmem %s5, 16
        %v4155 = vld [vmem:[%s4154] sm:$0xff]
        %4156 = vrot.lane.b32.xlu0 %v3666, 96
        %v4157 = vpop.permute.xlu0 %4156
        %4158 = vrot.lane.b32.xlu0 %v3666, 32
        %v4159 = vpop.permute.xlu0 %4158
        %v4160 = vsel %vm1069, %v4157, 0
        %v4162 = vsel %vm1069, %v4159, 0
        %4164 = vmatprep.subr.mxu0 0.0
        %4165 = vmatpush1.xpose.msra.mxu0 0.0
        %4166 = vmatprep.subr.mxu0 0.0
        %4167 = vmatpush1.xpose.msra.mxu0 0.0
        %4168 = vmatprep.subr.mxu0 0.0
        %4169 = vmatpush1.xpose.msra.mxu0 0.0
        %4170 = vmatprep.subr.mxu0 0.0
        %4171 = vmatpush1.xpose.msra.mxu0 0.0
        %4172 = vmatprep.subr.mxu0 0.0
        %4173 = vmatpush1.xpose.msra.mxu0 0.0
        %4174 = vmatprep.subr.mxu0 0.0
        %4175 = vmatpush1.xpose.msra.mxu0 0.0
        %4176 = vmatprep.subr.mxu0 0.0
        %4177 = vmatpush1.xpose.msra.mxu0 0.0
        %4178 = vmatprep.subr.mxu0 0.0
        %4179 = vmatpush1.xpose.msra.mxu0 0.0
        %4180 = vmatprep.subr.mxu0 0.0
        %4181 = vmatpush1.xpose.msra.mxu0 0.0
        %4182 = vmatprep.subr.mxu0 0.0
        %4183 = vmatpush1.xpose.msra.mxu0 0.0
        %4184 = vmatprep.subr.mxu0 0.0
        %4185 = vmatpush1.xpose.msra.mxu0 0.0
        %4186 = vmatprep.subr.mxu0 0.0
        %4187 = vmatpush1.xpose.msra.mxu0 0.0
        %4188 = vmatprep.subr.mxu0 0.0
        %4189 = vmatpush1.xpose.msra.mxu0 0.0
        %4190 = vmatprep.subr.mxu0 0.0
        %4191 = vmatpush1.xpose.msra.mxu0 0.0
        %4192 = vmatprep.subr.mxu0 0.0
        %4193 = vmatpush1.xpose.msra.mxu0 0.0
        %4194 = vmatprep.subr.mxu0 0.0
        %4195 = vmatpush1.xpose.msra.mxu0 %v4162
        %4196 = vmatprep.subr.mxu0 0.0
        %4197 = vmatpush2.xpose.msra.mxu0 0.0
        %4198 = vmatprep.subr.mxu0 0.0
        %4199 = vmatpush2.xpose.msra.mxu0 0.0
        %4200 = vmatprep.subr.mxu0 0.0
        %4201 = vmatpush2.xpose.msra.mxu0 0.0
        %4202 = vmatprep.subr.mxu0 0.0
        %4203 = vmatpush2.xpose.msra.mxu0 0.0
        %4204 = vmatprep.subr.mxu0 0.0
        %4205 = vmatpush2.xpose.msra.mxu0 0.0
        %4206 = vmatprep.subr.mxu0 0.0
        %4207 = vmatpush2.xpose.msra.mxu0 0.0
        %4208 = vmatprep.subr.mxu0 0.0
        %4209 = vmatpush2.xpose.msra.mxu0 0.0
        %4210 = vmatprep.subr.mxu0 0.0
        %4211 = vmatpush2.xpose.msra.mxu0 0.0
        %4212 = vmatprep.subr.mxu0 0.0
        %4213 = vmatpush2.xpose.msra.mxu0 0.0
        %4214 = vmatprep.subr.mxu0 0.0
        %4215 = vmatpush2.xpose.msra.mxu0 0.0
        %4216 = vmatprep.subr.mxu0 0.0
        %4217 = vmatpush2.xpose.msra.mxu0 0.0
        %4218 = vmatprep.subr.mxu0 0.0
        %4219 = vmatpush2.xpose.msra.mxu0 0.0
        %4220 = vmatprep.subr.mxu0 0.0
        %4221 = vmatpush2.xpose.msra.mxu0 0.0
        %4222 = vmatprep.subr.mxu0 0.0
        %4223 = vmatpush2.xpose.msra.mxu0 0.0
        %4224 = vmatprep.subr.mxu0 0.0
        %4225 = vmatpush2.xpose.msra.mxu0 0.0
        %4226 = vmatprep.subr.mxu0 0.0
        %4227 = vmatpush2.xpose.msra.mxu0 0.0
        %4228 = vmatprep.mubr.f32.mxu0 0.0
        %4229 = vmatmul.mubr.f32.gmra.mxu0 %v4160
        %v4230 = vpop.f32.mrf.mxu0
        %v4231 = vadd.f32 %v4155, %v4230
        %v4232 = vpop.f32.mrf.mxu0
        %4233 = vdwg.mxu0
        %v4234 = vsel %vm1144, %v4231, -inf
        %4235 = vmax.xlane.f32.xlu0 %v4234
        %v4236 = vpop.xlane.xlu0 %4235
        %v4237 = vsub.f32 %v4231, %v4236
        %v4238 = vmul.f32 %v4237, 1.442695
        %v4239 = vpow.pop %v4238
        %v4240 = vsel %vm1144, %v4239, 0.0
        %4241 = vadd.xlane.f32.xlu0 %v4240
        %v4242 = vpop.xlane.xlu0 %4241
        %v4243 = vrcp.pop %v4242
        %v4244 = vmul.f32 %v4239, %v4243
        %4245 = vrot.lane.b32.xlu0 %v3668, 96
        %v4246 = vpop.permute.xlu0 %4245
        %v4249 = vsel %vm1144, %v4244, 0
        %4251 = vmatprep.subr.mxu0 0.0
        %4252 = vmatpush1.msra.mxu0 0.0
        %4253 = vmatprep.subr.mxu0 0.0
        %4254 = vmatpush1.msra.mxu0 0.0
        %4255 = vmatprep.subr.mxu0 0.0
        %4256 = vmatpush1.msra.mxu0 0.0
        %4257 = vmatprep.subr.mxu0 0.0
        %4258 = vmatpush1.msra.mxu0 0.0
        %4259 = vmatprep.subr.mxu0 0.0
        %4260 = vmatpush1.msra.mxu0 0.0
        %4261 = vmatprep.subr.mxu0 0.0
        %4262 = vmatpush1.msra.mxu0 0.0
        %4263 = vmatprep.subr.mxu0 0.0
        %4264 = vmatpush1.msra.mxu0 0.0
        %4265 = vmatprep.subr.mxu0 0.0
        %4266 = vmatpush1.msra.mxu0 0.0
        %4267 = vmatprep.subr.mxu0 0.0
        %4268 = vmatpush1.msra.mxu0 0.0
        %4269 = vmatprep.subr.mxu0 0.0
        %4270 = vmatpush1.msra.mxu0 0.0
        %4271 = vmatprep.subr.mxu0 0.0
        %4272 = vmatpush1.msra.mxu0 0.0
        %4273 = vmatprep.subr.mxu0 0.0
        %4274 = vmatpush1.msra.mxu0 0.0
        %4275 = vmatprep.subr.mxu0 0.0
        %4276 = vmatpush1.msra.mxu0 0.0
        %4277 = vmatprep.subr.mxu0 0.0
        %4278 = vmatpush1.msra.mxu0 0.0
        %4279 = vmatprep.subr.mxu0 0.0
        %4280 = vmatpush1.msra.mxu0 0.0
        %4281 = vmatprep.subr.mxu0 0.0
        %4282 = vmatpush1.msra.mxu0 %v4246
        %4283 = vmatprep.subr.mxu0 0.0
        %4284 = vmatpush2.msra.mxu0 0.0
        %4285 = vmatprep.subr.mxu0 0.0
        %4286 = vmatpush2.msra.mxu0 0.0
        %4287 = vmatprep.subr.mxu0 0.0
        %4288 = vmatpush2.msra.mxu0 0.0
        %4289 = vmatprep.subr.mxu0 0.0
        %4290 = vmatpush2.msra.mxu0 0.0
        %4291 = vmatprep.subr.mxu0 0.0
        %4292 = vmatpush2.msra.mxu0 0.0
        %4293 = vmatprep.subr.mxu0 0.0
        %4294 = vmatpush2.msra.mxu0 0.0
        %4295 = vmatprep.subr.mxu0 0.0
        %4296 = vmatpush2.msra.mxu0 0.0
        %4297 = vmatprep.subr.mxu0 0.0
        %4298 = vmatpush2.msra.mxu0 0.0
        %4299 = vmatprep.subr.mxu0 0.0
        %4300 = vmatpush2.msra.mxu0 0.0
        %4301 = vmatprep.subr.mxu0 0.0
        %4302 = vmatpush2.msra.mxu0 0.0
        %4303 = vmatprep.subr.mxu0 0.0
        %4304 = vmatpush2.msra.mxu0 0.0
        %4305 = vmatprep.subr.mxu0 0.0
        %4306 = vmatpush2.msra.mxu0 0.0
        %4307 = vmatprep.subr.mxu0 0.0
        %4308 = vmatpush2.msra.mxu0 0.0
        %4309 = vmatprep.subr.mxu0 0.0
        %4310 = vmatpush2.msra.mxu0 0.0
        %4311 = vmatprep.subr.mxu0 0.0
        %4312 = vmatpush2.msra.mxu0 0.0
        %4313 = vmatprep.subr.mxu0 0.0
        %4314 = vmatpush2.msra.mxu0 0.0
        %4315 = vmatprep.mubr.f32.mxu0 0.0
        %4316 = vmatmul.mubr.f32.gmra.mxu0 %v4249
        %v4317 = vpop.f32.mrf.mxu0
        %v4318 = vadd.f32 0.0, %v4317
        %v4319 = vpop.f32.mrf.mxu0
        %4320 = vdwg.mxu0
        %v4322 = vsel %vm1069, %v4318, 0
        %4324 = vmatprep.subr.mxu0 0.0
        %4325 = vmatpush1.msra.mxu0 0.0
        %4326 = vmatprep.subr.mxu0 0.0
        %4327 = vmatpush1.msra.mxu0 0.0
        %4328 = vmatprep.subr.mxu0 0.0
        %4329 = vmatpush1.msra.mxu0 0.0
        %4330 = vmatprep.subr.mxu0 0.0
        %4331 = vmatpush1.msra.mxu0 0.0
        %4332 = vmatprep.subr.mxu0 0.0
        %4333 = vmatpush1.msra.mxu0 0.0
        %4334 = vmatprep.subr.mxu0 0.0
        %4335 = vmatpush1.msra.mxu0 0.0
        %4336 = vmatprep.subr.mxu0 0.0
        %4337 = vmatpush1.msra.mxu0 0.0
        %4338 = vmatprep.subr.mxu0 0.0
        %4339 = vmatpush1.msra.mxu0 0.0
        %4340 = vmatprep.subr.mxu0 0.0
        %4341 = vmatpush1.msra.mxu0 0.0
        %4342 = vmatprep.subr.mxu0 0.0
        %4343 = vmatpush1.msra.mxu0 0.0
        %4344 = vmatprep.subr.mxu0 0.0
        %4345 = vmatpush1.msra.mxu0 0.0
        %4346 = vmatprep.subr.mxu0 0.0
        %4347 = vmatpush1.msra.mxu0 0.0
        %4348 = vmatprep.subr.mxu0 0.0
        %4349 = vmatpush1.msra.mxu0 0.0
        %4350 = vmatprep.subr.mxu0 0.0
        %4351 = vmatpush1.msra.mxu0 0.0
        %4352 = vmatprep.subr.mxu0 0.0
        %4353 = vmatpush1.msra.mxu0 %v3675
        %4354 = vmatprep.subr.mxu0 0.0
        %4355 = vmatpush1.msra.mxu0 %v3674
        %4356 = vmatprep.subr.mxu0 0.0
        %4357 = vmatpush2.msra.mxu0 0.0
        %4358 = vmatprep.subr.mxu0 0.0
        %4359 = vmatpush2.msra.mxu0 0.0
        %4360 = vmatprep.subr.mxu0 0.0
        %4361 = vmatpush2.msra.mxu0 0.0
        %4362 = vmatprep.subr.mxu0 0.0
        %4363 = vmatpush2.msra.mxu0 0.0
        %4364 = vmatprep.subr.mxu0 0.0
        %4365 = vmatpush2.msra.mxu0 0.0
        %4366 = vmatprep.subr.mxu0 0.0
        %4367 = vmatpush2.msra.mxu0 0.0
        %4368 = vmatprep.subr.mxu0 0.0
        %4369 = vmatpush2.msra.mxu0 0.0
        %4370 = vmatprep.subr.mxu0 0.0
        %4371 = vmatpush2.msra.mxu0 0.0
        %4372 = vmatprep.subr.mxu0 0.0
        %4373 = vmatpush2.msra.mxu0 0.0
        %4374 = vmatprep.subr.mxu0 0.0
        %4375 = vmatpush2.msra.mxu0 0.0
        %4376 = vmatprep.subr.mxu0 0.0
        %4377 = vmatpush2.msra.mxu0 0.0
        %4378 = vmatprep.subr.mxu0 0.0
        %4379 = vmatpush2.msra.mxu0 0.0
        %4380 = vmatprep.subr.mxu0 0.0
        %4381 = vmatpush2.msra.mxu0 0.0
        %4382 = vmatprep.subr.mxu0 0.0
        %4383 = vmatpush2.msra.mxu0 0.0
        %4384 = vmatprep.subr.mxu0 0.0
        %4385 = vmatpush2.msra.mxu0 0.0
        %4386 = vmatprep.subr.mxu0 0.0
        %4387 = vmatpush2.msra.mxu0 0.0
        %4388 = vmatprep.mubr.f32.mxu0 0.0
        %4389 = vmatmul.mubr.f32.gmra.mxu0 %v4322
        %v4390 = vpop.f32.mrf.mxu0
        %v4391 = vadd.f32 0.0, %v4390
        %v4392 = vpop.f32.mrf.mxu0
        %4393 = vdwg.mxu0
        %v4394 = vadd.f32 %v4151, %v4391
        %s4395 = scalar_lea.vmem %s5, 24
        %v4396 = vld [vmem:[%s4395] sm:$0xff]
        %4397 = vrot.lane.b32.xlu0 %v3666, 80
        %v4398 = vpop.permute.xlu0 %4397
        %4399 = vrot.lane.b32.xlu0 %v3666, 16
        %v4400 = vpop.permute.xlu0 %4399
        %v4401 = vsel %vm1069, %v4398, 0
        %v4403 = vsel %vm1069, %v4400, 0
        %4405 = vmatprep.subr.mxu0 0.0
        %4406 = vmatpush1.xpose.msra.mxu0 0.0
        %4407 = vmatprep.subr.mxu0 0.0
        %4408 = vmatpush1.xpose.msra.mxu0 0.0
        %4409 = vmatprep.subr.mxu0 0.0
        %4410 = vmatpush1.xpose.msra.mxu0 0.0
        %4411 = vmatprep.subr.mxu0 0.0
        %4412 = vmatpush1.xpose.msra.mxu0 0.0
        %4413 = vmatprep.subr.mxu0 0.0
        %4414 = vmatpush1.xpose.msra.mxu0 0.0
        %4415 = vmatprep.subr.mxu0 0.0
        %4416 = vmatpush1.xpose.msra.mxu0 0.0
        %4417 = vmatprep.subr.mxu0 0.0
        %4418 = vmatpush1.xpose.msra.mxu0 0.0
        %4419 = vmatprep.subr.mxu0 0.0
        %4420 = vmatpush1.xpose.msra.mxu0 0.0
        %4421 = vmatprep.subr.mxu0 0.0
        %4422 = vmatpush1.xpose.msra.mxu0 0.0
        %4423 = vmatprep.subr.mxu0 0.0
        %4424 = vmatpush1.xpose.msra.mxu0 0.0
        %4425 = vmatprep.subr.mxu0 0.0
        %4426 = vmatpush1.xpose.msra.mxu0 0.0
        %4427 = vmatprep.subr.mxu0 0.0
        %4428 = vmatpush1.xpose.msra.mxu0 0.0
        %4429 = vmatprep.subr.mxu0 0.0
        %4430 = vmatpush1.xpose.msra.mxu0 0.0
        %4431 = vmatprep.subr.mxu0 0.0
        %4432 = vmatpush1.xpose.msra.mxu0 0.0
        %4433 = vmatprep.subr.mxu0 0.0
        %4434 = vmatpush1.xpose.msra.mxu0 0.0
        %4435 = vmatprep.subr.mxu0 0.0
        %4436 = vmatpush1.xpose.msra.mxu0 %v4403
        %4437 = vmatprep.subr.mxu0 0.0
        %4438 = vmatpush2.xpose.msra.mxu0 0.0
        %4439 = vmatprep.subr.mxu0 0.0
        %4440 = vmatpush2.xpose.msra.mxu0 0.0
        %4441 = vmatprep.subr.mxu0 0.0
        %4442 = vmatpush2.xpose.msra.mxu0 0.0
        %4443 = vmatprep.subr.mxu0 0.0
        %4444 = vmatpush2.xpose.msra.mxu0 0.0
        %4445 = vmatprep.subr.mxu0 0.0
        %4446 = vmatpush2.xpose.msra.mxu0 0.0
        %4447 = vmatprep.subr.mxu0 0.0
        %4448 = vmatpush2.xpose.msra.mxu0 0.0
        %4449 = vmatprep.subr.mxu0 0.0
        %4450 = vmatpush2.xpose.msra.mxu0 0.0
        %4451 = vmatprep.subr.mxu0 0.0
        %4452 = vmatpush2.xpose.msra.mxu0 0.0
        %4453 = vmatprep.subr.mxu0 0.0
        %4454 = vmatpush2.xpose.msra.mxu0 0.0
        %4455 = vmatprep.subr.mxu0 0.0
        %4456 = vmatpush2.xpose.msra.mxu0 0.0
        %4457 = vmatprep.subr.mxu0 0.0
        %4458 = vmatpush2.xpose.msra.mxu0 0.0
        %4459 = vmatprep.subr.mxu0 0.0
        %4460 = vmatpush2.xpose.msra.mxu0 0.0
        %4461 = vmatprep.subr.mxu0 0.0
        %4462 = vmatpush2.xpose.msra.mxu0 0.0
        %4463 = vmatprep.subr.mxu0 0.0
        %4464 = vmatpush2.xpose.msra.mxu0 0.0
        %4465 = vmatprep.subr.mxu0 0.0
        %4466 = vmatpush2.xpose.msra.mxu0 0.0
        %4467 = vmatprep.subr.mxu0 0.0
        %4468 = vmatpush2.xpose.msra.mxu0 0.0
        %4469 = vmatprep.mubr.f32.mxu0 0.0
        %4470 = vmatmul.mubr.f32.gmra.mxu0 %v4401
        %v4471 = vpop.f32.mrf.mxu0
        %v4472 = vadd.f32 %v4396, %v4471
        %v4473 = vpop.f32.mrf.mxu0
        %4474 = vdwg.mxu0
        %v4475 = vsel %vm1144, %v4472, -inf
        %4476 = vmax.xlane.f32.xlu0 %v4475
        %v4477 = vpop.xlane.xlu0 %4476
        %v4478 = vsub.f32 %v4472, %v4477
        %v4479 = vmul.f32 %v4478, 1.442695
        %v4480 = vpow.pop %v4479
        %v4481 = vsel %vm1144, %v4480, 0.0
        %4482 = vadd.xlane.f32.xlu0 %v4481
        %v4483 = vpop.xlane.xlu0 %4482
        %v4484 = vrcp.pop %v4483
        %v4485 = vmul.f32 %v4480, %v4484
        %4486 = vrot.lane.b32.xlu0 %v3668, 80
        %v4487 = vpop.permute.xlu0 %4486
        %v4490 = vsel %vm1144, %v4485, 0
        %4492 = vmatprep.subr.mxu0 0.0
        %4493 = vmatpush1.msra.mxu0 0.0
        %4494 = vmatprep.subr.mxu0 0.0
        %4495 = vmatpush1.msra.mxu0 0.0
        %4496 = vmatprep.subr.mxu0 0.0
        %4497 = vmatpush1.msra.mxu0 0.0
        %4498 = vmatprep.subr.mxu0 0.0
        %4499 = vmatpush1.msra.mxu0 0.0
        %4500 = vmatprep.subr.mxu0 0.0
        %4501 = vmatpush1.msra.mxu0 0.0
        %4502 = vmatprep.subr.mxu0 0.0
        %4503 = vmatpush1.msra.mxu0 0.0
        %4504 = vmatprep.subr.mxu0 0.0
        %4505 = vmatpush1.msra.mxu0 0.0
        %4506 = vmatprep.subr.mxu0 0.0
        %4507 = vmatpush1.msra.mxu0 0.0
        %4508 = vmatprep.subr.mxu0 0.0
        %4509 = vmatpush1.msra.mxu0 0.0
        %4510 = vmatprep.subr.mxu0 0.0
        %4511 = vmatpush1.msra.mxu0 0.0
        %4512 = vmatprep.subr.mxu0 0.0
        %4513 = vmatpush1.msra.mxu0 0.0
        %4514 = vmatprep.subr.mxu0 0.0
        %4515 = vmatpush1.msra.mxu0 0.0
        %4516 = vmatprep.subr.mxu0 0.0
        %4517 = vmatpush1.msra.mxu0 0.0
        %4518 = vmatprep.subr.mxu0 0.0
        %4519 = vmatpush1.msra.mxu0 0.0
        %4520 = vmatprep.subr.mxu0 0.0
        %4521 = vmatpush1.msra.mxu0 0.0
        %4522 = vmatprep.subr.mxu0 0.0
        %4523 = vmatpush1.msra.mxu0 %v4487
        %4524 = vmatprep.subr.mxu0 0.0
        %4525 = vmatpush2.msra.mxu0 0.0
        %4526 = vmatprep.subr.mxu0 0.0
        %4527 = vmatpush2.msra.mxu0 0.0
        %4528 = vmatprep.subr.mxu0 0.0
        %4529 = vmatpush2.msra.mxu0 0.0
        %4530 = vmatprep.subr.mxu0 0.0
        %4531 = vmatpush2.msra.mxu0 0.0
        %4532 = vmatprep.subr.mxu0 0.0
        %4533 = vmatpush2.msra.mxu0 0.0
        %4534 = vmatprep.subr.mxu0 0.0
        %4535 = vmatpush2.msra.mxu0 0.0
        %4536 = vmatprep.subr.mxu0 0.0
        %4537 = vmatpush2.msra.mxu0 0.0
        %4538 = vmatprep.subr.mxu0 0.0
        %4539 = vmatpush2.msra.mxu0 0.0
        %4540 = vmatprep.subr.mxu0 0.0
        %4541 = vmatpush2.msra.mxu0 0.0
        %4542 = vmatprep.subr.mxu0 0.0
        %4543 = vmatpush2.msra.mxu0 0.0
        %4544 = vmatprep.subr.mxu0 0.0
        %4545 = vmatpush2.msra.mxu0 0.0
        %4546 = vmatprep.subr.mxu0 0.0
        %4547 = vmatpush2.msra.mxu0 0.0
        %4548 = vmatprep.subr.mxu0 0.0
        %4549 = vmatpush2.msra.mxu0 0.0
        %4550 = vmatprep.subr.mxu0 0.0
        %4551 = vmatpush2.msra.mxu0 0.0
        %4552 = vmatprep.subr.mxu0 0.0
        %4553 = vmatpush2.msra.mxu0 0.0
        %4554 = vmatprep.subr.mxu0 0.0
        %4555 = vmatpush2.msra.mxu0 0.0
        %4556 = vmatprep.mubr.f32.mxu0 0.0
        %4557 = vmatmul.mubr.f32.gmra.mxu0 %v4490
        %v4558 = vpop.f32.mrf.mxu0
        %v4559 = vadd.f32 0.0, %v4558
        %v4560 = vpop.f32.mrf.mxu0
        %4561 = vdwg.mxu0
        %v4563 = vsel %vm1069, %v4559, 0
        %4565 = vmatprep.subr.mxu0 0.0
        %4566 = vmatpush1.msra.mxu0 0.0
        %4567 = vmatprep.subr.mxu0 0.0
        %4568 = vmatpush1.msra.mxu0 0.0
        %4569 = vmatprep.subr.mxu0 0.0
        %4570 = vmatpush1.msra.mxu0 0.0
        %4571 = vmatprep.subr.mxu0 0.0
        %4572 = vmatpush1.msra.mxu0 0.0
        %4573 = vmatprep.subr.mxu0 0.0
        %4574 = vmatpush1.msra.mxu0 0.0
        %4575 = vmatprep.subr.mxu0 0.0
        %4576 = vmatpush1.msra.mxu0 0.0
        %4577 = vmatprep.subr.mxu0 0.0
        %4578 = vmatpush1.msra.mxu0 0.0
        %4579 = vmatprep.subr.mxu0 0.0
        %4580 = vmatpush1.msra.mxu0 0.0
        %4581 = vmatprep.subr.mxu0 0.0
        %4582 = vmatpush1.msra.mxu0 0.0
        %4583 = vmatprep.subr.mxu0 0.0
        %4584 = vmatpush1.msra.mxu0 0.0
        %4585 = vmatprep.subr.mxu0 0.0
        %4586 = vmatpush1.msra.mxu0 0.0
        %4587 = vmatprep.subr.mxu0 0.0
        %4588 = vmatpush1.msra.mxu0 0.0
        %4589 = vmatprep.subr.mxu0 0.0
        %4590 = vmatpush1.msra.mxu0 0.0
        %4591 = vmatprep.subr.mxu0 0.0
        %4592 = vmatpush1.msra.mxu0 0.0
        %4593 = vmatprep.subr.mxu0 0.0
        %4594 = vmatpush1.msra.mxu0 %v3677
        %4595 = vmatprep.subr.mxu0 0.0
        %4596 = vmatpush1.msra.mxu0 %v3676
        %4597 = vmatprep.subr.mxu0 0.0
        %4598 = vmatpush2.msra.mxu0 0.0
        %4599 = vmatprep.subr.mxu0 0.0
        %4600 = vmatpush2.msra.mxu0 0.0
        %4601 = vmatprep.subr.mxu0 0.0
        %4602 = vmatpush2.msra.mxu0 0.0
        %4603 = vmatprep.subr.mxu0 0.0
        %4604 = vmatpush2.msra.mxu0 0.0
        %4605 = vmatprep.subr.mxu0 0.0
        %4606 = vmatpush2.msra.mxu0 0.0
        %4607 = vmatprep.subr.mxu0 0.0
        %4608 = vmatpush2.msra.mxu0 0.0
        %4609 = vmatprep.subr.mxu0 0.0
        %4610 = vmatpush2.msra.mxu0 0.0
        %4611 = vmatprep.subr.mxu0 0.0
        %4612 = vmatpush2.msra.mxu0 0.0
        %4613 = vmatprep.subr.mxu0 0.0
        %4614 = vmatpush2.msra.mxu0 0.0
        %4615 = vmatprep.subr.mxu0 0.0
        %4616 = vmatpush2.msra.mxu0 0.0
        %4617 = vmatprep.subr.mxu0 0.0
        %4618 = vmatpush2.msra.mxu0 0.0
        %4619 = vmatprep.subr.mxu0 0.0
        %4620 = vmatpush2.msra.mxu0 0.0
        %4621 = vmatprep.subr.mxu0 0.0
        %4622 = vmatpush2.msra.mxu0 0.0
        %4623 = vmatprep.subr.mxu0 0.0
        %4624 = vmatpush2.msra.mxu0 0.0
        %4625 = vmatprep.subr.mxu0 0.0
        %4626 = vmatpush2.msra.mxu0 0.0
        %4627 = vmatprep.subr.mxu0 0.0
        %4628 = vmatpush2.msra.mxu0 0.0
        %4629 = vmatprep.mubr.f32.mxu0 0.0
        %4630 = vmatmul.mubr.f32.gmra.mxu0 %v4563
        %v4631 = vpop.f32.mrf.mxu0
        %v4632 = vadd.f32 0.0, %v4631
        %v4633 = vpop.f32.mrf.mxu0
        %4634 = vdwg.mxu0
        %v4635 = vadd.f32 %v4394, %v4632
        %v4636 = vadd.f32 %v3561, %v4635
        %v4637 = vld [vmem:[%s16] sm:$0x1]
        %v4638 = vmul.f32 %v4636, %v4636
        %v4639 = vsel %vm944, %v4638, 0.0
        %4640 = vadd.xlane.f32.xlu0 %v4639
        %v4641 = vpop.xlane.xlu0 %4640
        %v4642 = vmul.f32 %v4641, %v948
        %v4643 = vadd.f32 %v4642, 1e-06
        %v4644 = vrsqrt.pop %v4643
        %v4645 = vmul.f32 %v4636, %v4644
        %v4647 = vlaneseq
        %v4648 = vshrl.u32 %v4647, 7
        %v4649 = vsub.s32 0, %v4648
        %v4650 = vrot.slane %v4637, %v4649
        %v4652 = vmul.f32 %v4645, %v4650
        %v4653 = vld [vmem:[%s17] sm:$0xff]
        %v4654 = vld [vmem:[%s17 + $0x8] sm:$0xff]
        %v4655 = vld [vmem:[%s17 + $0x10] sm:$0xff]
        %v4656 = vld [vmem:[%s17 + $0x18] sm:$0xff]
        %v4657 = vld [vmem:[%s17 + $0x20] sm:$0xff]
        %v4658 = vld [vmem:[%s17 + $0x28] sm:$0xff]
        %v4659 = vld [vmem:[%s17 + $0x30] sm:$0xff]
        %v4660 = vld [vmem:[%s17 + $0x38] sm:$0xff]
        %v4662 = vsel %vm944, %v4652, 0
        %4664 = vmatprep.subr.mxu0 0.0
        %4665 = vmatpush1.msra.mxu0 0.0
        %4666 = vmatprep.subr.mxu0 0.0
        %4667 = vmatpush1.msra.mxu0 0.0
        %4668 = vmatprep.subr.mxu0 0.0
        %4669 = vmatpush1.msra.mxu0 0.0
        %4670 = vmatprep.subr.mxu0 0.0
        %4671 = vmatpush1.msra.mxu0 0.0
        %4672 = vmatprep.subr.mxu0 0.0
        %4673 = vmatpush1.msra.mxu0 0.0
        %4674 = vmatprep.subr.mxu0 0.0
        %4675 = vmatpush1.msra.mxu0 0.0
        %4676 = vmatprep.subr.mxu0 0.0
        %4677 = vmatpush1.msra.mxu0 0.0
        %4678 = vmatprep.subr.mxu0 0.0
        %4679 = vmatpush1.msra.mxu0 0.0
        %4680 = vmatprep.subr.mxu0 0.0
        %4681 = vmatpush1.msra.mxu0 %v4660
        %4682 = vmatprep.subr.mxu0 0.0
        %4683 = vmatpush1.msra.mxu0 %v4659
        %4684 = vmatprep.subr.mxu0 0.0
        %4685 = vmatpush1.msra.mxu0 %v4658
        %4686 = vmatprep.subr.mxu0 0.0
        %4687 = vmatpush1.msra.mxu0 %v4657
        %4688 = vmatprep.subr.mxu0 0.0
        %4689 = vmatpush1.msra.mxu0 %v4656
        %4690 = vmatprep.subr.mxu0 0.0
        %4691 = vmatpush1.msra.mxu0 %v4655
        %4692 = vmatprep.subr.mxu0 0.0
        %4693 = vmatpush1.msra.mxu0 %v4654
        %4694 = vmatprep.subr.mxu0 0.0
        %4695 = vmatpush1.msra.mxu0 %v4653
        %4696 = vmatprep.subr.mxu0 0.0
        %4697 = vmatpush2.msra.mxu0 0.0
        %4698 = vmatprep.subr.mxu0 0.0
        %4699 = vmatpush2.msra.mxu0 0.0
        %4700 = vmatprep.subr.mxu0 0.0
        %4701 = vmatpush2.msra.mxu0 0.0
        %4702 = vmatprep.subr.mxu0 0.0
        %4703 = vmatpush2.msra.mxu0 0.0
        %4704 = vmatprep.subr.mxu0 0.0
        %4705 = vmatpush2.msra.mxu0 0.0
        %4706 = vmatprep.subr.mxu0 0.0
        %4707 = vmatpush2.msra.mxu0 0.0
        %4708 = vmatprep.subr.mxu0 0.0
        %4709 = vmatpush2.msra.mxu0 0.0
        %4710 = vmatprep.subr.mxu0 0.0
        %4711 = vmatpush2.msra.mxu0 0.0
        %4712 = vmatprep.subr.mxu0 0.0
        %4713 = vmatpush2.msra.mxu0 0.0
        %4714 = vmatprep.subr.mxu0 0.0
        %4715 = vmatpush2.msra.mxu0 0.0
        %4716 = vmatprep.subr.mxu0 0.0
        %4717 = vmatpush2.msra.mxu0 0.0
        %4718 = vmatprep.subr.mxu0 0.0
        %4719 = vmatpush2.msra.mxu0 0.0
        %4720 = vmatprep.subr.mxu0 0.0
        %4721 = vmatpush2.msra.mxu0 0.0
        %4722 = vmatprep.subr.mxu0 0.0
        %4723 = vmatpush2.msra.mxu0 0.0
        %4724 = vmatprep.subr.mxu0 0.0
        %4725 = vmatpush2.msra.mxu0 0.0
        %4726 = vmatprep.subr.mxu0 0.0
        %4727 = vmatpush2.msra.mxu0 0.0
        %4728 = vmatprep.mubr.f32.mxu0 0.0
        %4729 = vmatmul.mubr.f32.gmra.mxu0 %v4662
        %v4730 = vpop.f32.mrf.mxu0
        %v4731 = vadd.f32 0.0, %v4730
        %v4732 = vpop.f32.mrf.mxu0
        %4733 = vdwg.mxu0
        %v4734 = vld [vmem:[%s18] sm:$0xff]
        %v4735 = vld [vmem:[%s18 + $0x8] sm:$0xff]
        %v4736 = vld [vmem:[%s18 + $0x10] sm:$0xff]
        %v4737 = vld [vmem:[%s18 + $0x18] sm:$0xff]
        %v4738 = vld [vmem:[%s18 + $0x20] sm:$0xff]
        %v4739 = vld [vmem:[%s18 + $0x28] sm:$0xff]
        %v4740 = vld [vmem:[%s18 + $0x30] sm:$0xff]
        %v4741 = vld [vmem:[%s18 + $0x38] sm:$0xff]
        %v4743 = vsel %vm944, %v3486, 0
        %4745 = vmatprep.subr.mxu0 0.0
        %4746 = vmatpush1.msra.mxu0 0.0
        %4747 = vmatprep.subr.mxu0 0.0
        %4748 = vmatpush1.msra.mxu0 0.0
        %4749 = vmatprep.subr.mxu0 0.0
        %4750 = vmatpush1.msra.mxu0 0.0
        %4751 = vmatprep.subr.mxu0 0.0
        %4752 = vmatpush1.msra.mxu0 0.0
        %4753 = vmatprep.subr.mxu0 0.0
        %4754 = vmatpush1.msra.mxu0 0.0
        %4755 = vmatprep.subr.mxu0 0.0
        %4756 = vmatpush1.msra.mxu0 0.0
        %4757 = vmatprep.subr.mxu0 0.0
        %4758 = vmatpush1.msra.mxu0 0.0
        %4759 = vmatprep.subr.mxu0 0.0
        %4760 = vmatpush1.msra.mxu0 0.0
        %4761 = vmatprep.subr.mxu0 0.0
        %4762 = vmatpush1.msra.mxu0 %v4741
        %4763 = vmatprep.subr.mxu0 0.0
        %4764 = vmatpush1.msra.mxu0 %v4740
        %4765 = vmatprep.subr.mxu0 0.0
        %4766 = vmatpush1.msra.mxu0 %v4739
        %4767 = vmatprep.subr.mxu0 0.0
        %4768 = vmatpush1.msra.mxu0 %v4738
        %4769 = vmatprep.subr.mxu0 0.0
        %4770 = vmatpush1.msra.mxu0 %v4737
        %4771 = vmatprep.subr.mxu0 0.0
        %4772 = vmatpush1.msra.mxu0 %v4736
        %4773 = vmatprep.subr.mxu0 0.0
        %4774 = vmatpush1.msra.mxu0 %v4735
        %4775 = vmatprep.subr.mxu0 0.0
        %4776 = vmatpush1.msra.mxu0 %v4734
        %4777 = vmatprep.subr.mxu0 0.0
        %4778 = vmatpush2.msra.mxu0 0.0
        %4779 = vmatprep.subr.mxu0 0.0
        %4780 = vmatpush2.msra.mxu0 0.0
        %4781 = vmatprep.subr.mxu0 0.0
        %4782 = vmatpush2.msra.mxu0 0.0
        %4783 = vmatprep.subr.mxu0 0.0
        %4784 = vmatpush2.msra.mxu0 0.0
        %4785 = vmatprep.subr.mxu0 0.0
        %4786 = vmatpush2.msra.mxu0 0.0
        %4787 = vmatprep.subr.mxu0 0.0
        %4788 = vmatpush2.msra.mxu0 0.0
        %4789 = vmatprep.subr.mxu0 0.0
        %4790 = vmatpush2.msra.mxu0 0.0
        %4791 = vmatprep.subr.mxu0 0.0
        %4792 = vmatpush2.msra.mxu0 0.0
        %4793 = vmatprep.subr.mxu0 0.0
        %4794 = vmatpush2.msra.mxu0 0.0
        %4795 = vmatprep.subr.mxu0 0.0
        %4796 = vmatpush2.msra.mxu0 0.0
        %4797 = vmatprep.subr.mxu0 0.0
        %4798 = vmatpush2.msra.mxu0 0.0
        %4799 = vmatprep.subr.mxu0 0.0
        %4800 = vmatpush2.msra.mxu0 0.0
        %4801 = vmatprep.subr.mxu0 0.0
        %4802 = vmatpush2.msra.mxu0 0.0
        %4803 = vmatprep.subr.mxu0 0.0
        %4804 = vmatpush2.msra.mxu0 0.0
        %4805 = vmatprep.subr.mxu0 0.0
        %4806 = vmatpush2.msra.mxu0 0.0
        %4807 = vmatprep.subr.mxu0 0.0
        %4808 = vmatpush2.msra.mxu0 0.0
        %4809 = vmatprep.mubr.f32.mxu0 0.0
        %4810 = vmatmul.mubr.f32.gmra.mxu0 %v4743
        %v4811 = vpop.f32.mrf.mxu0
        %v4812 = vadd.f32 0.0, %v4811
        %v4813 = vpop.f32.mrf.mxu0
        %4814 = vdwg.mxu0
        %v4815 = vld [vmem:[%s19] sm:$0xff]
        %v4816 = vld [vmem:[%s19 + $0x8] sm:$0xff]
        %v4817 = vld [vmem:[%s19 + $0x10] sm:$0xff]
        %v4818 = vld [vmem:[%s19 + $0x18] sm:$0xff]
        %v4819 = vld [vmem:[%s19 + $0x20] sm:$0xff]
        %v4820 = vld [vmem:[%s19 + $0x28] sm:$0xff]
        %v4821 = vld [vmem:[%s19 + $0x30] sm:$0xff]
        %v4822 = vld [vmem:[%s19 + $0x38] sm:$0xff]
        %v4824 = vsel %vm1069, %v4731, 0
        %v4827 = vsel %vm1069, %v4812, 0
        %4829 = vmatprep.subr.mxu0 0.0
        %4830 = vmatpush1.xpose.msra.mxu0 0.0
        %4831 = vmatprep.subr.mxu0 0.0
        %4832 = vmatpush1.xpose.msra.mxu0 0.0
        %4833 = vmatprep.subr.mxu0 0.0
        %4834 = vmatpush1.xpose.msra.mxu0 0.0
        %4835 = vmatprep.subr.mxu0 0.0
        %4836 = vmatpush1.xpose.msra.mxu0 0.0
        %4837 = vmatprep.subr.mxu0 0.0
        %4838 = vmatpush1.xpose.msra.mxu0 0.0
        %4839 = vmatprep.subr.mxu0 0.0
        %4840 = vmatpush1.xpose.msra.mxu0 0.0
        %4841 = vmatprep.subr.mxu0 0.0
        %4842 = vmatpush1.xpose.msra.mxu0 0.0
        %4843 = vmatprep.subr.mxu0 0.0
        %4844 = vmatpush1.xpose.msra.mxu0 0.0
        %4845 = vmatprep.subr.mxu0 0.0
        %4846 = vmatpush1.xpose.msra.mxu0 0.0
        %4847 = vmatprep.subr.mxu0 0.0
        %4848 = vmatpush1.xpose.msra.mxu0 0.0
        %4849 = vmatprep.subr.mxu0 0.0
        %4850 = vmatpush1.xpose.msra.mxu0 0.0
        %4851 = vmatprep.subr.mxu0 0.0
        %4852 = vmatpush1.xpose.msra.mxu0 0.0
        %4853 = vmatprep.subr.mxu0 0.0
        %4854 = vmatpush1.xpose.msra.mxu0 0.0
        %4855 = vmatprep.subr.mxu0 0.0
        %4856 = vmatpush1.xpose.msra.mxu0 0.0
        %4857 = vmatprep.subr.mxu0 0.0
        %4858 = vmatpush1.xpose.msra.mxu0 0.0
        %4859 = vmatprep.subr.mxu0 0.0
        %4860 = vmatpush1.xpose.msra.mxu0 %v4827
        %4861 = vmatprep.subr.mxu0 0.0
        %4862 = vmatpush2.xpose.msra.mxu0 0.0
        %4863 = vmatprep.subr.mxu0 0.0
        %4864 = vmatpush2.xpose.msra.mxu0 0.0
        %4865 = vmatprep.subr.mxu0 0.0
        %4866 = vmatpush2.xpose.msra.mxu0 0.0
        %4867 = vmatprep.subr.mxu0 0.0
        %4868 = vmatpush2.xpose.msra.mxu0 0.0
        %4869 = vmatprep.subr.mxu0 0.0
        %4870 = vmatpush2.xpose.msra.mxu0 0.0
        %4871 = vmatprep.subr.mxu0 0.0
        %4872 = vmatpush2.xpose.msra.mxu0 0.0
        %4873 = vmatprep.subr.mxu0 0.0
        %4874 = vmatpush2.xpose.msra.mxu0 0.0
        %4875 = vmatprep.subr.mxu0 0.0
        %4876 = vmatpush2.xpose.msra.mxu0 0.0
        %4877 = vmatprep.subr.mxu0 0.0
        %4878 = vmatpush2.xpose.msra.mxu0 0.0
        %4879 = vmatprep.subr.mxu0 0.0
        %4880 = vmatpush2.xpose.msra.mxu0 0.0
        %4881 = vmatprep.subr.mxu0 0.0
        %4882 = vmatpush2.xpose.msra.mxu0 0.0
        %4883 = vmatprep.subr.mxu0 0.0
        %4884 = vmatpush2.xpose.msra.mxu0 0.0
        %4885 = vmatprep.subr.mxu0 0.0
        %4886 = vmatpush2.xpose.msra.mxu0 0.0
        %4887 = vmatprep.subr.mxu0 0.0
        %4888 = vmatpush2.xpose.msra.mxu0 0.0
        %4889 = vmatprep.subr.mxu0 0.0
        %4890 = vmatpush2.xpose.msra.mxu0 0.0
        %4891 = vmatprep.subr.mxu0 0.0
        %4892 = vmatpush2.xpose.msra.mxu0 0.0
        %4893 = vmatprep.mubr.f32.mxu0 0.0
        %4894 = vmatmul.mubr.f32.gmra.mxu0 %v4824
        %v4895 = vpop.f32.mrf.mxu0
        %v4896 = vadd.f32 %v1063, %v4895
        %v4897 = vpop.f32.mrf.mxu0
        %4898 = vdwg.mxu0
        %v4899 = vsel %vm1144, %v4896, -inf
        %4900 = vmax.xlane.f32.xlu0 %v4899
        %v4901 = vpop.xlane.xlu0 %4900
        %v4902 = vsub.f32 %v4896, %v4901
        %v4903 = vmul.f32 %v4902, 1.442695
        %v4904 = vpow.pop %v4903
        %v4905 = vsel %vm1144, %v4904, 0.0
        %4906 = vadd.xlane.f32.xlu0 %v4905
        %v4907 = vpop.xlane.xlu0 %4906
        %v4908 = vrcp.pop %v4907
        %v4909 = vmul.f32 %v4904, %v4908
        %4910 = vrot.lane.b32.xlu0 %v4812, 64
        %v4911 = vpop.permute.xlu0 %4910
        %v4914 = vsel %vm1144, %v4909, 0
        %4916 = vmatprep.subr.mxu0 0.0
        %4917 = vmatpush1.msra.mxu0 0.0
        %4918 = vmatprep.subr.mxu0 0.0
        %4919 = vmatpush1.msra.mxu0 0.0
        %4920 = vmatprep.subr.mxu0 0.0
        %4921 = vmatpush1.msra.mxu0 0.0
        %4922 = vmatprep.subr.mxu0 0.0
        %4923 = vmatpush1.msra.mxu0 0.0
        %4924 = vmatprep.subr.mxu0 0.0
        %4925 = vmatpush1.msra.mxu0 0.0
        %4926 = vmatprep.subr.mxu0 0.0
        %4927 = vmatpush1.msra.mxu0 0.0
        %4928 = vmatprep.subr.mxu0 0.0
        %4929 = vmatpush1.msra.mxu0 0.0
        %4930 = vmatprep.subr.mxu0 0.0
        %4931 = vmatpush1.msra.mxu0 0.0
        %4932 = vmatprep.subr.mxu0 0.0
        %4933 = vmatpush1.msra.mxu0 0.0
        %4934 = vmatprep.subr.mxu0 0.0
        %4935 = vmatpush1.msra.mxu0 0.0
        %4936 = vmatprep.subr.mxu0 0.0
        %4937 = vmatpush1.msra.mxu0 0.0
        %4938 = vmatprep.subr.mxu0 0.0
        %4939 = vmatpush1.msra.mxu0 0.0
        %4940 = vmatprep.subr.mxu0 0.0
        %4941 = vmatpush1.msra.mxu0 0.0
        %4942 = vmatprep.subr.mxu0 0.0
        %4943 = vmatpush1.msra.mxu0 0.0
        %4944 = vmatprep.subr.mxu0 0.0
        %4945 = vmatpush1.msra.mxu0 0.0
        %4946 = vmatprep.subr.mxu0 0.0
        %4947 = vmatpush1.msra.mxu0 %v4911
        %4948 = vmatprep.subr.mxu0 0.0
        %4949 = vmatpush2.msra.mxu0 0.0
        %4950 = vmatprep.subr.mxu0 0.0
        %4951 = vmatpush2.msra.mxu0 0.0
        %4952 = vmatprep.subr.mxu0 0.0
        %4953 = vmatpush2.msra.mxu0 0.0
        %4954 = vmatprep.subr.mxu0 0.0
        %4955 = vmatpush2.msra.mxu0 0.0
        %4956 = vmatprep.subr.mxu0 0.0
        %4957 = vmatpush2.msra.mxu0 0.0
        %4958 = vmatprep.subr.mxu0 0.0
        %4959 = vmatpush2.msra.mxu0 0.0
        %4960 = vmatprep.subr.mxu0 0.0
        %4961 = vmatpush2.msra.mxu0 0.0
        %4962 = vmatprep.subr.mxu0 0.0
        %4963 = vmatpush2.msra.mxu0 0.0
        %4964 = vmatprep.subr.mxu0 0.0
        %4965 = vmatpush2.msra.mxu0 0.0
        %4966 = vmatprep.subr.mxu0 0.0
        %4967 = vmatpush2.msra.mxu0 0.0
        %4968 = vmatprep.subr.mxu0 0.0
        %4969 = vmatpush2.msra.mxu0 0.0
        %4970 = vmatprep.subr.mxu0 0.0
        %4971 = vmatpush2.msra.mxu0 0.0
        %4972 = vmatprep.subr.mxu0 0.0
        %4973 = vmatpush2.msra.mxu0 0.0
        %4974 = vmatprep.subr.mxu0 0.0
        %4975 = vmatpush2.msra.mxu0 0.0
        %4976 = vmatprep.subr.mxu0 0.0
        %4977 = vmatpush2.msra.mxu0 0.0
        %4978 = vmatprep.subr.mxu0 0.0
        %4979 = vmatpush2.msra.mxu0 0.0
        %4980 = vmatprep.mubr.f32.mxu0 0.0
        %4981 = vmatmul.mubr.f32.gmra.mxu0 %v4914
        %v4982 = vpop.f32.mrf.mxu0
        %v4983 = vadd.f32 0.0, %v4982
        %v4984 = vpop.f32.mrf.mxu0
        %4985 = vdwg.mxu0
        %4986 = vrot.lane.b32.xlu0 %v4731, 112
        %v4987 = vpop.permute.xlu0 %4986
        %4988 = vrot.lane.b32.xlu0 %v4812, 112
        %v4989 = vpop.permute.xlu0 %4988
        %v4990 = vsel %vm1069, %v4987, 0
        %v4992 = vsel %vm1069, %v4989, 0
        %4994 = vmatprep.subr.mxu0 0.0
        %4995 = vmatpush1.xpose.msra.mxu0 0.0
        %4996 = vmatprep.subr.mxu0 0.0
        %4997 = vmatpush1.xpose.msra.mxu0 0.0
        %4998 = vmatprep.subr.mxu0 0.0
        %4999 = vmatpush1.xpose.msra.mxu0 0.0
        %5000 = vmatprep.subr.mxu0 0.0
        %5001 = vmatpush1.xpose.msra.mxu0 0.0
        %5002 = vmatprep.subr.mxu0 0.0
        %5003 = vmatpush1.xpose.msra.mxu0 0.0
        %5004 = vmatprep.subr.mxu0 0.0
        %5005 = vmatpush1.xpose.msra.mxu0 0.0
        %5006 = vmatprep.subr.mxu0 0.0
        %5007 = vmatpush1.xpose.msra.mxu0 0.0
        %5008 = vmatprep.subr.mxu0 0.0
        %5009 = vmatpush1.xpose.msra.mxu0 0.0
        %5010 = vmatprep.subr.mxu0 0.0
        %5011 = vmatpush1.xpose.msra.mxu0 0.0
        %5012 = vmatprep.subr.mxu0 0.0
        %5013 = vmatpush1.xpose.msra.mxu0 0.0
        %5014 = vmatprep.subr.mxu0 0.0
        %5015 = vmatpush1.xpose.msra.mxu0 0.0
        %5016 = vmatprep.subr.mxu0 0.0
        %5017 = vmatpush1.xpose.msra.mxu0 0.0
        %5018 = vmatprep.subr.mxu0 0.0
        %5019 = vmatpush1.xpose.msra.mxu0 0.0
        %5020 = vmatprep.subr.mxu0 0.0
        %5021 = vmatpush1.xpose.msra.mxu0 0.0
        %5022 = vmatprep.subr.mxu0 0.0
        %5023 = vmatpush1.xpose.msra.mxu0 0.0
        %5024 = vmatprep.subr.mxu0 0.0
        %5025 = vmatpush1.xpose.msra.mxu0 %v4992
        %5026 = vmatprep.subr.mxu0 0.0
        %5027 = vmatpush2.xpose.msra.mxu0 0.0
        %5028 = vmatprep.subr.mxu0 0.0
        %5029 = vmatpush2.xpose.msra.mxu0 0.0
        %5030 = vmatprep.subr.mxu0 0.0
        %5031 = vmatpush2.xpose.msra.mxu0 0.0
        %5032 = vmatprep.subr.mxu0 0.0
        %5033 = vmatpush2.xpose.msra.mxu0 0.0
        %5034 = vmatprep.subr.mxu0 0.0
        %5035 = vmatpush2.xpose.msra.mxu0 0.0
        %5036 = vmatprep.subr.mxu0 0.0
        %5037 = vmatpush2.xpose.msra.mxu0 0.0
        %5038 = vmatprep.subr.mxu0 0.0
        %5039 = vmatpush2.xpose.msra.mxu0 0.0
        %5040 = vmatprep.subr.mxu0 0.0
        %5041 = vmatpush2.xpose.msra.mxu0 0.0
        %5042 = vmatprep.subr.mxu0 0.0
        %5043 = vmatpush2.xpose.msra.mxu0 0.0
        %5044 = vmatprep.subr.mxu0 0.0
        %5045 = vmatpush2.xpose.msra.mxu0 0.0
        %5046 = vmatprep.subr.mxu0 0.0
        %5047 = vmatpush2.xpose.msra.mxu0 0.0
        %5048 = vmatprep.subr.mxu0 0.0
        %5049 = vmatpush2.xpose.msra.mxu0 0.0
        %5050 = vmatprep.subr.mxu0 0.0
        %5051 = vmatpush2.xpose.msra.mxu0 0.0
        %5052 = vmatprep.subr.mxu0 0.0
        %5053 = vmatpush2.xpose.msra.mxu0 0.0
        %5054 = vmatprep.subr.mxu0 0.0
        %5055 = vmatpush2.xpose.msra.mxu0 0.0
        %5056 = vmatprep.subr.mxu0 0.0
        %5057 = vmatpush2.xpose.msra.mxu0 0.0
        %5058 = vmatprep.mubr.f32.mxu0 0.0
        %5059 = vmatmul.mubr.f32.gmra.mxu0 %v4990
        %v5060 = vpop.f32.mrf.mxu0
        %v5061 = vadd.f32 %v1063, %v5060
        %v5062 = vpop.f32.mrf.mxu0
        %5063 = vdwg.mxu0
        %v5064 = vsel %vm1144, %v5061, -inf
        %5065 = vmax.xlane.f32.xlu0 %v5064
        %v5066 = vpop.xlane.xlu0 %5065
        %v5067 = vsub.f32 %v5061, %v5066
        %v5068 = vmul.f32 %v5067, 1.442695
        %v5069 = vpow.pop %v5068
        %v5070 = vsel %vm1144, %v5069, 0.0
        %5071 = vadd.xlane.f32.xlu0 %v5070
        %v5072 = vpop.xlane.xlu0 %5071
        %v5073 = vrcp.pop %v5072
        %v5074 = vmul.f32 %v5069, %v5073
        %5075 = vrot.lane.b32.xlu0 %v4812, 48
        %v5076 = vpop.permute.xlu0 %5075
        %v5079 = vsel %vm1144, %v5074, 0
        %5081 = vmatprep.subr.mxu0 0.0
        %5082 = vmatpush1.msra.mxu0 0.0
        %5083 = vmatprep.subr.mxu0 0.0
        %5084 = vmatpush1.msra.mxu0 0.0
        %5085 = vmatprep.subr.mxu0 0.0
        %5086 = vmatpush1.msra.mxu0 0.0
        %5087 = vmatprep.subr.mxu0 0.0
        %5088 = vmatpush1.msra.mxu0 0.0
        %5089 = vmatprep.subr.mxu0 0.0
        %5090 = vmatpush1.msra.mxu0 0.0
        %5091 = vmatprep.subr.mxu0 0.0
        %5092 = vmatpush1.msra.mxu0 0.0
        %5093 = vmatprep.subr.mxu0 0.0
        %5094 = vmatpush1.msra.mxu0 0.0
        %5095 = vmatprep.subr.mxu0 0.0
        %5096 = vmatpush1.msra.mxu0 0.0
        %5097 = vmatprep.subr.mxu0 0.0
        %5098 = vmatpush1.msra.mxu0 0.0
        %5099 = vmatprep.subr.mxu0 0.0
        %5100 = vmatpush1.msra.mxu0 0.0
        %5101 = vmatprep.subr.mxu0 0.0
        %5102 = vmatpush1.msra.mxu0 0.0
        %5103 = vmatprep.subr.mxu0 0.0
        %5104 = vmatpush1.msra.mxu0 0.0
        %5105 = vmatprep.subr.mxu0 0.0
        %5106 = vmatpush1.msra.mxu0 0.0
        %5107 = vmatprep.subr.mxu0 0.0
        %5108 = vmatpush1.msra.mxu0 0.0
        %5109 = vmatprep.subr.mxu0 0.0
        %5110 = vmatpush1.msra.mxu0 0.0
        %5111 = vmatprep.subr.mxu0 0.0
        %5112 = vmatpush1.msra.mxu0 %v5076
        %5113 = vmatprep.subr.mxu0 0.0
        %5114 = vmatpush2.msra.mxu0 0.0
        %5115 = vmatprep.subr.mxu0 0.0
        %5116 = vmatpush2.msra.mxu0 0.0
        %5117 = vmatprep.subr.mxu0 0.0
        %5118 = vmatpush2.msra.mxu0 0.0
        %5119 = vmatprep.subr.mxu0 0.0
        %5120 = vmatpush2.msra.mxu0 0.0
        %5121 = vmatprep.subr.mxu0 0.0
        %5122 = vmatpush2.msra.mxu0 0.0
        %5123 = vmatprep.subr.mxu0 0.0
        %5124 = vmatpush2.msra.mxu0 0.0
        %5125 = vmatprep.subr.mxu0 0.0
        %5126 = vmatpush2.msra.mxu0 0.0
        %5127 = vmatprep.subr.mxu0 0.0
        %5128 = vmatpush2.msra.mxu0 0.0
        %5129 = vmatprep.subr.mxu0 0.0
        %5130 = vmatpush2.msra.mxu0 0.0
        %5131 = vmatprep.subr.mxu0 0.0
        %5132 = vmatpush2.msra.mxu0 0.0
        %5133 = vmatprep.subr.mxu0 0.0
        %5134 = vmatpush2.msra.mxu0 0.0
        %5135 = vmatprep.subr.mxu0 0.0
        %5136 = vmatpush2.msra.mxu0 0.0
        %5137 = vmatprep.subr.mxu0 0.0
        %5138 = vmatpush2.msra.mxu0 0.0
        %5139 = vmatprep.subr.mxu0 0.0
        %5140 = vmatpush2.msra.mxu0 0.0
        %5141 = vmatprep.subr.mxu0 0.0
        %5142 = vmatpush2.msra.mxu0 0.0
        %5143 = vmatprep.subr.mxu0 0.0
        %5144 = vmatpush2.msra.mxu0 0.0
        %5145 = vmatprep.mubr.f32.mxu0 0.0
        %5146 = vmatmul.mubr.f32.gmra.mxu0 %v5079
        %v5147 = vpop.f32.mrf.mxu0
        %v5148 = vadd.f32 0.0, %v5147
        %v5149 = vpop.f32.mrf.mxu0
        %5150 = vdwg.mxu0
        %v5152 = vsel %vm1069, %v5148, 0
        %5154 = vmatprep.subr.mxu0 0.0
        %5155 = vmatpush1.msra.mxu0 0.0
        %5156 = vmatprep.subr.mxu0 0.0
        %5157 = vmatpush1.msra.mxu0 0.0
        %5158 = vmatprep.subr.mxu0 0.0
        %5159 = vmatpush1.msra.mxu0 0.0
        %5160 = vmatprep.subr.mxu0 0.0
        %5161 = vmatpush1.msra.mxu0 0.0
        %5162 = vmatprep.subr.mxu0 0.0
        %5163 = vmatpush1.msra.mxu0 0.0
        %5164 = vmatprep.subr.mxu0 0.0
        %5165 = vmatpush1.msra.mxu0 0.0
        %5166 = vmatprep.subr.mxu0 0.0
        %5167 = vmatpush1.msra.mxu0 0.0
        %5168 = vmatprep.subr.mxu0 0.0
        %5169 = vmatpush1.msra.mxu0 0.0
        %5170 = vmatprep.subr.mxu0 0.0
        %5171 = vmatpush1.msra.mxu0 0.0
        %5172 = vmatprep.subr.mxu0 0.0
        %5173 = vmatpush1.msra.mxu0 0.0
        %5174 = vmatprep.subr.mxu0 0.0
        %5175 = vmatpush1.msra.mxu0 0.0
        %5176 = vmatprep.subr.mxu0 0.0
        %5177 = vmatpush1.msra.mxu0 0.0
        %5178 = vmatprep.subr.mxu0 0.0
        %5179 = vmatpush1.msra.mxu0 0.0
        %5180 = vmatprep.subr.mxu0 0.0
        %5181 = vmatpush1.msra.mxu0 0.0
        %5182 = vmatprep.subr.mxu0 0.0
        %5183 = vmatpush1.msra.mxu0 %v4818
        %5184 = vmatprep.subr.mxu0 0.0
        %5185 = vmatpush1.msra.mxu0 %v4817
        %5186 = vmatprep.subr.mxu0 0.0
        %5187 = vmatpush2.msra.mxu0 0.0
        %5188 = vmatprep.subr.mxu0 0.0
        %5189 = vmatpush2.msra.mxu0 0.0
        %5190 = vmatprep.subr.mxu0 0.0
        %5191 = vmatpush2.msra.mxu0 0.0
        %5192 = vmatprep.subr.mxu0 0.0
        %5193 = vmatpush2.msra.mxu0 0.0
        %5194 = vmatprep.subr.mxu0 0.0
        %5195 = vmatpush2.msra.mxu0 0.0
        %5196 = vmatprep.subr.mxu0 0.0
        %5197 = vmatpush2.msra.mxu0 0.0
        %5198 = vmatprep.subr.mxu0 0.0
        %5199 = vmatpush2.msra.mxu0 0.0
        %5200 = vmatprep.subr.mxu0 0.0
        %5201 = vmatpush2.msra.mxu0 0.0
        %5202 = vmatprep.subr.mxu0 0.0
        %5203 = vmatpush2.msra.mxu0 0.0
        %5204 = vmatprep.subr.mxu0 0.0
        %5205 = vmatpush2.msra.mxu0 0.0
        %5206 = vmatprep.subr.mxu0 0.0
        %5207 = vmatpush2.msra.mxu0 0.0
        %5208 = vmatprep.subr.mxu0 0.0
        %5209 = vmatpush2.msra.mxu0 0.0
        %5210 = vmatprep.subr.mxu0 0.0
        %5211 = vmatpush2.msra.mxu0 0.0
        %5212 = vmatprep.subr.mxu0 0.0
        %5213 = vmatpush2.msra.mxu0 0.0
        %5214 = vmatprep.subr.mxu0 0.0
        %5215 = vmatpush2.msra.mxu0 0.0
        %5216 = vmatprep.subr.mxu0 0.0
        %5217 = vmatpush2.msra.mxu0 0.0
        %5218 = vmatprep.mubr.f32.mxu0 0.0
        %5219 = vmatmul.mubr.f32.gmra.mxu0 %v5152
        %v5220 = vpop.f32.mrf.mxu0
        %v5221 = vadd.f32 0.0, %v5220
        %v5222 = vpop.f32.mrf.mxu0
        %5223 = vdwg.mxu0
        %v5225 = vsel %vm1069, %v4983, 0
        %5227 = vmatprep.subr.mxu0 0.0
        %5228 = vmatpush1.msra.mxu0 0.0
        %5229 = vmatprep.subr.mxu0 0.0
        %5230 = vmatpush1.msra.mxu0 0.0
        %5231 = vmatprep.subr.mxu0 0.0
        %5232 = vmatpush1.msra.mxu0 0.0
        %5233 = vmatprep.subr.mxu0 0.0
        %5234 = vmatpush1.msra.mxu0 0.0
        %5235 = vmatprep.subr.mxu0 0.0
        %5236 = vmatpush1.msra.mxu0 0.0
        %5237 = vmatprep.subr.mxu0 0.0
        %5238 = vmatpush1.msra.mxu0 0.0
        %5239 = vmatprep.subr.mxu0 0.0
        %5240 = vmatpush1.msra.mxu0 0.0
        %5241 = vmatprep.subr.mxu0 0.0
        %5242 = vmatpush1.msra.mxu0 0.0
        %5243 = vmatprep.subr.mxu0 0.0
        %5244 = vmatpush1.msra.mxu0 0.0
        %5245 = vmatprep.subr.mxu0 0.0
        %5246 = vmatpush1.msra.mxu0 0.0
        %5247 = vmatprep.subr.mxu0 0.0
        %5248 = vmatpush1.msra.mxu0 0.0
        %5249 = vmatprep.subr.mxu0 0.0
        %5250 = vmatpush1.msra.mxu0 0.0
        %5251 = vmatprep.subr.mxu0 0.0
        %5252 = vmatpush1.msra.mxu0 0.0
        %5253 = vmatprep.subr.mxu0 0.0
        %5254 = vmatpush1.msra.mxu0 0.0
        %5255 = vmatprep.subr.mxu0 0.0
        %5256 = vmatpush1.msra.mxu0 %v4816
        %5257 = vmatprep.subr.mxu0 0.0
        %5258 = vmatpush1.msra.mxu0 %v4815
        %5259 = vmatprep.subr.mxu0 0.0
        %5260 = vmatpush2.msra.mxu0 0.0
        %5261 = vmatprep.subr.mxu0 0.0
        %5262 = vmatpush2.msra.mxu0 0.0
        %5263 = vmatprep.subr.mxu0 0.0
        %5264 = vmatpush2.msra.mxu0 0.0
        %5265 = vmatprep.subr.mxu0 0.0
        %5266 = vmatpush2.msra.mxu0 0.0
        %5267 = vmatprep.subr.mxu0 0.0
        %5268 = vmatpush2.msra.mxu0 0.0
        %5269 = vmatprep.subr.mxu0 0.0
        %5270 = vmatpush2.msra.mxu0 0.0
        %5271 = vmatprep.subr.mxu0 0.0
        %5272 = vmatpush2.msra.mxu0 0.0
        %5273 = vmatprep.subr.mxu0 0.0
        %5274 = vmatpush2.msra.mxu0 0.0
        %5275 = vmatprep.subr.mxu0 0.0
        %5276 = vmatpush2.msra.mxu0 0.0
        %5277 = vmatprep.subr.mxu0 0.0
        %5278 = vmatpush2.msra.mxu0 0.0
        %5279 = vmatprep.subr.mxu0 0.0
        %5280 = vmatpush2.msra.mxu0 0.0
        %5281 = vmatprep.subr.mxu0 0.0
        %5282 = vmatpush2.msra.mxu0 0.0
        %5283 = vmatprep.subr.mxu0 0.0
        %5284 = vmatpush2.msra.mxu0 0.0
        %5285 = vmatprep.subr.mxu0 0.0
        %5286 = vmatpush2.msra.mxu0 0.0
        %5287 = vmatprep.subr.mxu0 0.0
        %5288 = vmatpush2.msra.mxu0 0.0
        %5289 = vmatprep.subr.mxu0 0.0
        %5290 = vmatpush2.msra.mxu0 0.0
        %5291 = vmatprep.mubr.f32.mxu0 0.0
        %5292 = vmatmul.mubr.f32.gmra.mxu0 %v5225
        %v5293 = vpop.f32.mrf.mxu0
        %v5294 = vadd.f32 %v5221, %v5293
        %v5295 = vpop.f32.mrf.mxu0
        %5296 = vdwg.mxu0
        %5297 = vrot.lane.b32.xlu0 %v4731, 96
        %v5298 = vpop.permute.xlu0 %5297
        %5299 = vrot.lane.b32.xlu0 %v4812, 96
        %v5300 = vpop.permute.xlu0 %5299
        %v5301 = vsel %vm1069, %v5298, 0
        %v5303 = vsel %vm1069, %v5300, 0
        %5305 = vmatprep.subr.mxu0 0.0
        %5306 = vmatpush1.xpose.msra.mxu0 0.0
        %5307 = vmatprep.subr.mxu0 0.0
        %5308 = vmatpush1.xpose.msra.mxu0 0.0
        %5309 = vmatprep.subr.mxu0 0.0
        %5310 = vmatpush1.xpose.msra.mxu0 0.0
        %5311 = vmatprep.subr.mxu0 0.0
        %5312 = vmatpush1.xpose.msra.mxu0 0.0
        %5313 = vmatprep.subr.mxu0 0.0
        %5314 = vmatpush1.xpose.msra.mxu0 0.0
        %5315 = vmatprep.subr.mxu0 0.0
        %5316 = vmatpush1.xpose.msra.mxu0 0.0
        %5317 = vmatprep.subr.mxu0 0.0
        %5318 = vmatpush1.xpose.msra.mxu0 0.0
        %5319 = vmatprep.subr.mxu0 0.0
        %5320 = vmatpush1.xpose.msra.mxu0 0.0
        %5321 = vmatprep.subr.mxu0 0.0
        %5322 = vmatpush1.xpose.msra.mxu0 0.0
        %5323 = vmatprep.subr.mxu0 0.0
        %5324 = vmatpush1.xpose.msra.mxu0 0.0
        %5325 = vmatprep.subr.mxu0 0.0
        %5326 = vmatpush1.xpose.msra.mxu0 0.0
        %5327 = vmatprep.subr.mxu0 0.0
        %5328 = vmatpush1.xpose.msra.mxu0 0.0
        %5329 = vmatprep.subr.mxu0 0.0
        %5330 = vmatpush1.xpose.msra.mxu0 0.0
        %5331 = vmatprep.subr.mxu0 0.0
        %5332 = vmatpush1.xpose.msra.mxu0 0.0
        %5333 = vmatprep.subr.mxu0 0.0
        %5334 = vmatpush1.xpose.msra.mxu0 0.0
        %5335 = vmatprep.subr.mxu0 0.0
        %5336 = vmatpush1.xpose.msra.mxu0 %v5303
        %5337 = vmatprep.subr.mxu0 0.0
        %5338 = vmatpush2.xpose.msra.mxu0 0.0
        %5339 = vmatprep.subr.mxu0 0.0
        %5340 = vmatpush2.xpose.msra.mxu0 0.0
        %5341 = vmatprep.subr.mxu0 0.0
        %5342 = vmatpush2.xpose.msra.mxu0 0.0
        %5343 = vmatprep.subr.mxu0 0.0
        %5344 = vmatpush2.xpose.msra.mxu0 0.0
        %5345 = vmatprep.subr.mxu0 0.0
        %5346 = vmatpush2.xpose.msra.mxu0 0.0
        %5347 = vmatprep.subr.mxu0 0.0
        %5348 = vmatpush2.xpose.msra.mxu0 0.0
        %5349 = vmatprep.subr.mxu0 0.0
        %5350 = vmatpush2.xpose.msra.mxu0 0.0
        %5351 = vmatprep.subr.mxu0 0.0
        %5352 = vmatpush2.xpose.msra.mxu0 0.0
        %5353 = vmatprep.subr.mxu0 0.0
        %5354 = vmatpush2.xpose.msra.mxu0 0.0
        %5355 = vmatprep.subr.mxu0 0.0
        %5356 = vmatpush2.xpose.msra.mxu0 0.0
        %5357 = vmatprep.subr.mxu0 0.0
        %5358 = vmatpush2.xpose.msra.mxu0 0.0
        %5359 = vmatprep.subr.mxu0 0.0
        %5360 = vmatpush2.xpose.msra.mxu0 0.0
        %5361 = vmatprep.subr.mxu0 0.0
        %5362 = vmatpush2.xpose.msra.mxu0 0.0
        %5363 = vmatprep.subr.mxu0 0.0
        %5364 = vmatpush2.xpose.msra.mxu0 0.0
        %5365 = vmatprep.subr.mxu0 0.0
        %5366 = vmatpush2.xpose.msra.mxu0 0.0
        %5367 = vmatprep.subr.mxu0 0.0
        %5368 = vmatpush2.xpose.msra.mxu0 0.0
        %5369 = vmatprep.mubr.f32.mxu0 0.0
        %5370 = vmatmul.mubr.f32.gmra.mxu0 %v5301
        %v5371 = vpop.f32.mrf.mxu0
        %v5372 = vadd.f32 %v1063, %v5371
        %v5373 = vpop.f32.mrf.mxu0
        %5374 = vdwg.mxu0
        %v5375 = vsel %vm1144, %v5372, -inf
        %5376 = vmax.xlane.f32.xlu0 %v5375
        %v5377 = vpop.xlane.xlu0 %5376
        %v5378 = vsub.f32 %v5372, %v5377
        %v5379 = vmul.f32 %v5378, 1.442695
        %v5380 = vpow.pop %v5379
        %v5381 = vsel %vm1144, %v5380, 0.0
        %5382 = vadd.xlane.f32.xlu0 %v5381
        %v5383 = vpop.xlane.xlu0 %5382
        %v5384 = vrcp.pop %v5383
        %v5385 = vmul.f32 %v5380, %v5384
        %5386 = vrot.lane.b32.xlu0 %v4812, 32
        %v5387 = vpop.permute.xlu0 %5386
        %v5390 = vsel %vm1144, %v5385, 0
        %5392 = vmatprep.subr.mxu0 0.0
        %5393 = vmatpush1.msra.mxu0 0.0
        %5394 = vmatprep.subr.mxu0 0.0
        %5395 = vmatpush1.msra.mxu0 0.0
        %5396 = vmatprep.subr.mxu0 0.0
        %5397 = vmatpush1.msra.mxu0 0.0
        %5398 = vmatprep.subr.mxu0 0.0
        %5399 = vmatpush1.msra.mxu0 0.0
        %5400 = vmatprep.subr.mxu0 0.0
        %5401 = vmatpush1.msra.mxu0 0.0
        %5402 = vmatprep.subr.mxu0 0.0
        %5403 = vmatpush1.msra.mxu0 0.0
        %5404 = vmatprep.subr.mxu0 0.0
        %5405 = vmatpush1.msra.mxu0 0.0
        %5406 = vmatprep.subr.mxu0 0.0
        %5407 = vmatpush1.msra.mxu0 0.0
        %5408 = vmatprep.subr.mxu0 0.0
        %5409 = vmatpush1.msra.mxu0 0.0
        %5410 = vmatprep.subr.mxu0 0.0
        %5411 = vmatpush1.msra.mxu0 0.0
        %5412 = vmatprep.subr.mxu0 0.0
        %5413 = vmatpush1.msra.mxu0 0.0
        %5414 = vmatprep.subr.mxu0 0.0
        %5415 = vmatpush1.msra.mxu0 0.0
        %5416 = vmatprep.subr.mxu0 0.0
        %5417 = vmatpush1.msra.mxu0 0.0
        %5418 = vmatprep.subr.mxu0 0.0
        %5419 = vmatpush1.msra.mxu0 0.0
        %5420 = vmatprep.subr.mxu0 0.0
        %5421 = vmatpush1.msra.mxu0 0.0
        %5422 = vmatprep.subr.mxu0 0.0
        %5423 = vmatpush1.msra.mxu0 %v5387
        %5424 = vmatprep.subr.mxu0 0.0
        %5425 = vmatpush2.msra.mxu0 0.0
        %5426 = vmatprep.subr.mxu0 0.0
        %5427 = vmatpush2.msra.mxu0 0.0
        %5428 = vmatprep.subr.mxu0 0.0
        %5429 = vmatpush2.msra.mxu0 0.0
        %5430 = vmatprep.subr.mxu0 0.0
        %5431 = vmatpush2.msra.mxu0 0.0
        %5432 = vmatprep.subr.mxu0 0.0
        %5433 = vmatpush2.msra.mxu0 0.0
        %5434 = vmatprep.subr.mxu0 0.0
        %5435 = vmatpush2.msra.mxu0 0.0
        %5436 = vmatprep.subr.mxu0 0.0
        %5437 = vmatpush2.msra.mxu0 0.0
        %5438 = vmatprep.subr.mxu0 0.0
        %5439 = vmatpush2.msra.mxu0 0.0
        %5440 = vmatprep.subr.mxu0 0.0
        %5441 = vmatpush2.msra.mxu0 0.0
        %5442 = vmatprep.subr.mxu0 0.0
        %5443 = vmatpush2.msra.mxu0 0.0
        %5444 = vmatprep.subr.mxu0 0.0
        %5445 = vmatpush2.msra.mxu0 0.0
        %5446 = vmatprep.subr.mxu0 0.0
        %5447 = vmatpush2.msra.mxu0 0.0
        %5448 = vmatprep.subr.mxu0 0.0
        %5449 = vmatpush2.msra.mxu0 0.0
        %5450 = vmatprep.subr.mxu0 0.0
        %5451 = vmatpush2.msra.mxu0 0.0
        %5452 = vmatprep.subr.mxu0 0.0
        %5453 = vmatpush2.msra.mxu0 0.0
        %5454 = vmatprep.subr.mxu0 0.0
        %5455 = vmatpush2.msra.mxu0 0.0
        %5456 = vmatprep.mubr.f32.mxu0 0.0
        %5457 = vmatmul.mubr.f32.gmra.mxu0 %v5390
        %v5458 = vpop.f32.mrf.mxu0
        %v5459 = vadd.f32 0.0, %v5458
        %v5460 = vpop.f32.mrf.mxu0
        %5461 = vdwg.mxu0
        %v5463 = vsel %vm1069, %v5459, 0
        %5465 = vmatprep.subr.mxu0 0.0
        %5466 = vmatpush1.msra.mxu0 0.0
        %5467 = vmatprep.subr.mxu0 0.0
        %5468 = vmatpush1.msra.mxu0 0.0
        %5469 = vmatprep.subr.mxu0 0.0
        %5470 = vmatpush1.msra.mxu0 0.0
        %5471 = vmatprep.subr.mxu0 0.0
        %5472 = vmatpush1.msra.mxu0 0.0
        %5473 = vmatprep.subr.mxu0 0.0
        %5474 = vmatpush1.msra.mxu0 0.0
        %5475 = vmatprep.subr.mxu0 0.0
        %5476 = vmatpush1.msra.mxu0 0.0
        %5477 = vmatprep.subr.mxu0 0.0
        %5478 = vmatpush1.msra.mxu0 0.0
        %5479 = vmatprep.subr.mxu0 0.0
        %5480 = vmatpush1.msra.mxu0 0.0
        %5481 = vmatprep.subr.mxu0 0.0
        %5482 = vmatpush1.msra.mxu0 0.0
        %5483 = vmatprep.subr.mxu0 0.0
        %5484 = vmatpush1.msra.mxu0 0.0
        %5485 = vmatprep.subr.mxu0 0.0
        %5486 = vmatpush1.msra.mxu0 0.0
        %5487 = vmatprep.subr.mxu0 0.0
        %5488 = vmatpush1.msra.mxu0 0.0
        %5489 = vmatprep.subr.mxu0 0.0
        %5490 = vmatpush1.msra.mxu0 0.0
        %5491 = vmatprep.subr.mxu0 0.0
        %5492 = vmatpush1.msra.mxu0 0.0
        %5493 = vmatprep.subr.mxu0 0.0
        %5494 = vmatpush1.msra.mxu0 %v4820
        %5495 = vmatprep.subr.mxu0 0.0
        %5496 = vmatpush1.msra.mxu0 %v4819
        %5497 = vmatprep.subr.mxu0 0.0
        %5498 = vmatpush2.msra.mxu0 0.0
        %5499 = vmatprep.subr.mxu0 0.0
        %5500 = vmatpush2.msra.mxu0 0.0
        %5501 = vmatprep.subr.mxu0 0.0
        %5502 = vmatpush2.msra.mxu0 0.0
        %5503 = vmatprep.subr.mxu0 0.0
        %5504 = vmatpush2.msra.mxu0 0.0
        %5505 = vmatprep.subr.mxu0 0.0
        %5506 = vmatpush2.msra.mxu0 0.0
        %5507 = vmatprep.subr.mxu0 0.0
        %5508 = vmatpush2.msra.mxu0 0.0
        %5509 = vmatprep.subr.mxu0 0.0
        %5510 = vmatpush2.msra.mxu0 0.0
        %5511 = vmatprep.subr.mxu0 0.0
        %5512 = vmatpush2.msra.mxu0 0.0
        %5513 = vmatprep.subr.mxu0 0.0
        %5514 = vmatpush2.msra.mxu0 0.0
        %5515 = vmatprep.subr.mxu0 0.0
        %5516 = vmatpush2.msra.mxu0 0.0
        %5517 = vmatprep.subr.mxu0 0.0
        %5518 = vmatpush2.msra.mxu0 0.0
        %5519 = vmatprep.subr.mxu0 0.0
        %5520 = vmatpush2.msra.mxu0 0.0
        %5521 = vmatprep.subr.mxu0 0.0
        %5522 = vmatpush2.msra.mxu0 0.0
        %5523 = vmatprep.subr.mxu0 0.0
        %5524 = vmatpush2.msra.mxu0 0.0
        %5525 = vmatprep.subr.mxu0 0.0
        %5526 = vmatpush2.msra.mxu0 0.0
        %5527 = vmatprep.subr.mxu0 0.0
        %5528 = vmatpush2.msra.mxu0 0.0
        %5529 = vmatprep.mubr.f32.mxu0 0.0
        %5530 = vmatmul.mubr.f32.gmra.mxu0 %v5463
        %v5531 = vpop.f32.mrf.mxu0
        %v5532 = vadd.f32 0.0, %v5531
        %v5533 = vpop.f32.mrf.mxu0
        %5534 = vdwg.mxu0
        %v5535 = vadd.f32 %v5294, %v5532
        %5536 = vrot.lane.b32.xlu0 %v4731, 80
        %v5537 = vpop.permute.xlu0 %5536
        %5538 = vrot.lane.b32.xlu0 %v4812, 80
        %v5539 = vpop.permute.xlu0 %5538
        %v5540 = vsel %vm1069, %v5537, 0
        %v5542 = vsel %vm1069, %v5539, 0
        %5544 = vmatprep.subr.mxu0 0.0
        %5545 = vmatpush1.xpose.msra.mxu0 0.0
        %5546 = vmatprep.subr.mxu0 0.0
        %5547 = vmatpush1.xpose.msra.mxu0 0.0
        %5548 = vmatprep.subr.mxu0 0.0
        %5549 = vmatpush1.xpose.msra.mxu0 0.0
        %5550 = vmatprep.subr.mxu0 0.0
        %5551 = vmatpush1.xpose.msra.mxu0 0.0
        %5552 = vmatprep.subr.mxu0 0.0
        %5553 = vmatpush1.xpose.msra.mxu0 0.0
        %5554 = vmatprep.subr.mxu0 0.0
        %5555 = vmatpush1.xpose.msra.mxu0 0.0
        %5556 = vmatprep.subr.mxu0 0.0
        %5557 = vmatpush1.xpose.msra.mxu0 0.0
        %5558 = vmatprep.subr.mxu0 0.0
        %5559 = vmatpush1.xpose.msra.mxu0 0.0
        %5560 = vmatprep.subr.mxu0 0.0
        %5561 = vmatpush1.xpose.msra.mxu0 0.0
        %5562 = vmatprep.subr.mxu0 0.0
        %5563 = vmatpush1.xpose.msra.mxu0 0.0
        %5564 = vmatprep.subr.mxu0 0.0
        %5565 = vmatpush1.xpose.msra.mxu0 0.0
        %5566 = vmatprep.subr.mxu0 0.0
        %5567 = vmatpush1.xpose.msra.mxu0 0.0
        %5568 = vmatprep.subr.mxu0 0.0
        %5569 = vmatpush1.xpose.msra.mxu0 0.0
        %5570 = vmatprep.subr.mxu0 0.0
        %5571 = vmatpush1.xpose.msra.mxu0 0.0
        %5572 = vmatprep.subr.mxu0 0.0
        %5573 = vmatpush1.xpose.msra.mxu0 0.0
        %5574 = vmatprep.subr.mxu0 0.0
        %5575 = vmatpush1.xpose.msra.mxu0 %v5542
        %5576 = vmatprep.subr.mxu0 0.0
        %5577 = vmatpush2.xpose.msra.mxu0 0.0
        %5578 = vmatprep.subr.mxu0 0.0
        %5579 = vmatpush2.xpose.msra.mxu0 0.0
        %5580 = vmatprep.subr.mxu0 0.0
        %5581 = vmatpush2.xpose.msra.mxu0 0.0
        %5582 = vmatprep.subr.mxu0 0.0
        %5583 = vmatpush2.xpose.msra.mxu0 0.0
        %5584 = vmatprep.subr.mxu0 0.0
        %5585 = vmatpush2.xpose.msra.mxu0 0.0
        %5586 = vmatprep.subr.mxu0 0.0
        %5587 = vmatpush2.xpose.msra.mxu0 0.0
        %5588 = vmatprep.subr.mxu0 0.0
        %5589 = vmatpush2.xpose.msra.mxu0 0.0
        %5590 = vmatprep.subr.mxu0 0.0
        %5591 = vmatpush2.xpose.msra.mxu0 0.0
        %5592 = vmatprep.subr.mxu0 0.0
        %5593 = vmatpush2.xpose.msra.mxu0 0.0
        %5594 = vmatprep.subr.mxu0 0.0
        %5595 = vmatpush2.xpose.msra.mxu0 0.0
        %5596 = vmatprep.subr.mxu0 0.0
        %5597 = vmatpush2.xpose.msra.mxu0 0.0
        %5598 = vmatprep.subr.mxu0 0.0
        %5599 = vmatpush2.xpose.msra.mxu0 0.0
        %5600 = vmatprep.subr.mxu0 0.0
        %5601 = vmatpush2.xpose.msra.mxu0 0.0
        %5602 = vmatprep.subr.mxu0 0.0
        %5603 = vmatpush2.xpose.msra.mxu0 0.0
        %5604 = vmatprep.subr.mxu0 0.0
        %5605 = vmatpush2.xpose.msra.mxu0 0.0
        %5606 = vmatprep.subr.mxu0 0.0
        %5607 = vmatpush2.xpose.msra.mxu0 0.0
        %5608 = vmatprep.mubr.f32.mxu0 0.0
        %5609 = vmatmul.mubr.f32.gmra.mxu0 %v5540
        %v5610 = vpop.f32.mrf.mxu0
        %v5611 = vadd.f32 %v1063, %v5610
        %v5612 = vpop.f32.mrf.mxu0
        %5613 = vdwg.mxu0
        %v5614 = vsel %vm1144, %v5611, -inf
        %5615 = vmax.xlane.f32.xlu0 %v5614
        %v5616 = vpop.xlane.xlu0 %5615
        %v5617 = vsub.f32 %v5611, %v5616
        %v5618 = vmul.f32 %v5617, 1.442695
        %v5619 = vpow.pop %v5618
        %v5620 = vsel %vm1144, %v5619, 0.0
        %5621 = vadd.xlane.f32.xlu0 %v5620
        %v5622 = vpop.xlane.xlu0 %5621
        %v5623 = vrcp.pop %v5622
        %v5624 = vmul.f32 %v5619, %v5623
        %5625 = vrot.lane.b32.xlu0 %v4812, 16
        %v5626 = vpop.permute.xlu0 %5625
        %v5629 = vsel %vm1144, %v5624, 0
        %5631 = vmatprep.subr.mxu0 0.0
        %5632 = vmatpush1.msra.mxu0 0.0
        %5633 = vmatprep.subr.mxu0 0.0
        %5634 = vmatpush1.msra.mxu0 0.0
        %5635 = vmatprep.subr.mxu0 0.0
        %5636 = vmatpush1.msra.mxu0 0.0
        %5637 = vmatprep.subr.mxu0 0.0
        %5638 = vmatpush1.msra.mxu0 0.0
        %5639 = vmatprep.subr.mxu0 0.0
        %5640 = vmatpush1.msra.mxu0 0.0
        %5641 = vmatprep.subr.mxu0 0.0
        %5642 = vmatpush1.msra.mxu0 0.0
        %5643 = vmatprep.subr.mxu0 0.0
        %5644 = vmatpush1.msra.mxu0 0.0
        %5645 = vmatprep.subr.mxu0 0.0
        %5646 = vmatpush1.msra.mxu0 0.0
        %5647 = vmatprep.subr.mxu0 0.0
        %5648 = vmatpush1.msra.mxu0 0.0
        %5649 = vmatprep.subr.mxu0 0.0
        %5650 = vmatpush1.msra.mxu0 0.0
        %5651 = vmatprep.subr.mxu0 0.0
        %5652 = vmatpush1.msra.mxu0 0.0
        %5653 = vmatprep.subr.mxu0 0.0
        %5654 = vmatpush1.msra.mxu0 0.0
        %5655 = vmatprep.subr.mxu0 0.0
        %5656 = vmatpush1.msra.mxu0 0.0
        %5657 = vmatprep.subr.mxu0 0.0
        %5658 = vmatpush1.msra.mxu0 0.0
        %5659 = vmatprep.subr.mxu0 0.0
        %5660 = vmatpush1.msra.mxu0 0.0
        %5661 = vmatprep.subr.mxu0 0.0
        %5662 = vmatpush1.msra.mxu0 %v5626
        %5663 = vmatprep.subr.mxu0 0.0
        %5664 = vmatpush2.msra.mxu0 0.0
        %5665 = vmatprep.subr.mxu0 0.0
        %5666 = vmatpush2.msra.mxu0 0.0
        %5667 = vmatprep.subr.mxu0 0.0
        %5668 = vmatpush2.msra.mxu0 0.0
        %5669 = vmatprep.subr.mxu0 0.0
        %5670 = vmatpush2.msra.mxu0 0.0
        %5671 = vmatprep.subr.mxu0 0.0
        %5672 = vmatpush2.msra.mxu0 0.0
        %5673 = vmatprep.subr.mxu0 0.0
        %5674 = vmatpush2.msra.mxu0 0.0
        %5675 = vmatprep.subr.mxu0 0.0
        %5676 = vmatpush2.msra.mxu0 0.0
        %5677 = vmatprep.subr.mxu0 0.0
        %5678 = vmatpush2.msra.mxu0 0.0
        %5679 = vmatprep.subr.mxu0 0.0
        %5680 = vmatpush2.msra.mxu0 0.0
        %5681 = vmatprep.subr.mxu0 0.0
        %5682 = vmatpush2.msra.mxu0 0.0
        %5683 = vmatprep.subr.mxu0 0.0
        %5684 = vmatpush2.msra.mxu0 0.0
        %5685 = vmatprep.subr.mxu0 0.0
        %5686 = vmatpush2.msra.mxu0 0.0
        %5687 = vmatprep.subr.mxu0 0.0
        %5688 = vmatpush2.msra.mxu0 0.0
        %5689 = vmatprep.subr.mxu0 0.0
        %5690 = vmatpush2.msra.mxu0 0.0
        %5691 = vmatprep.subr.mxu0 0.0
        %5692 = vmatpush2.msra.mxu0 0.0
        %5693 = vmatprep.subr.mxu0 0.0
        %5694 = vmatpush2.msra.mxu0 0.0
        %5695 = vmatprep.mubr.f32.mxu0 0.0
        %5696 = vmatmul.mubr.f32.gmra.mxu0 %v5629
        %v5697 = vpop.f32.mrf.mxu0
        %v5698 = vadd.f32 0.0, %v5697
        %v5699 = vpop.f32.mrf.mxu0
        %5700 = vdwg.mxu0
        %v5702 = vsel %vm1069, %v5698, 0
        %5704 = vmatprep.subr.mxu0 0.0
        %5705 = vmatpush1.msra.mxu0 0.0
        %5706 = vmatprep.subr.mxu0 0.0
        %5707 = vmatpush1.msra.mxu0 0.0
        %5708 = vmatprep.subr.mxu0 0.0
        %5709 = vmatpush1.msra.mxu0 0.0
        %5710 = vmatprep.subr.mxu0 0.0
        %5711 = vmatpush1.msra.mxu0 0.0
        %5712 = vmatprep.subr.mxu0 0.0
        %5713 = vmatpush1.msra.mxu0 0.0
        %5714 = vmatprep.subr.mxu0 0.0
        %5715 = vmatpush1.msra.mxu0 0.0
        %5716 = vmatprep.subr.mxu0 0.0
        %5717 = vmatpush1.msra.mxu0 0.0
        %5718 = vmatprep.subr.mxu0 0.0
        %5719 = vmatpush1.msra.mxu0 0.0
        %5720 = vmatprep.subr.mxu0 0.0
        %5721 = vmatpush1.msra.mxu0 0.0
        %5722 = vmatprep.subr.mxu0 0.0
        %5723 = vmatpush1.msra.mxu0 0.0
        %5724 = vmatprep.subr.mxu0 0.0
        %5725 = vmatpush1.msra.mxu0 0.0
        %5726 = vmatprep.subr.mxu0 0.0
        %5727 = vmatpush1.msra.mxu0 0.0
        %5728 = vmatprep.subr.mxu0 0.0
        %5729 = vmatpush1.msra.mxu0 0.0
        %5730 = vmatprep.subr.mxu0 0.0
        %5731 = vmatpush1.msra.mxu0 0.0
        %5732 = vmatprep.subr.mxu0 0.0
        %5733 = vmatpush1.msra.mxu0 %v4822
        %5734 = vmatprep.subr.mxu0 0.0
        %5735 = vmatpush1.msra.mxu0 %v4821
        %5736 = vmatprep.subr.mxu0 0.0
        %5737 = vmatpush2.msra.mxu0 0.0
        %5738 = vmatprep.subr.mxu0 0.0
        %5739 = vmatpush2.msra.mxu0 0.0
        %5740 = vmatprep.subr.mxu0 0.0
        %5741 = vmatpush2.msra.mxu0 0.0
        %5742 = vmatprep.subr.mxu0 0.0
        %5743 = vmatpush2.msra.mxu0 0.0
        %5744 = vmatprep.subr.mxu0 0.0
        %5745 = vmatpush2.msra.mxu0 0.0
        %5746 = vmatprep.subr.mxu0 0.0
        %5747 = vmatpush2.msra.mxu0 0.0
        %5748 = vmatprep.subr.mxu0 0.0
        %5749 = vmatpush2.msra.mxu0 0.0
        %5750 = vmatprep.subr.mxu0 0.0
        %5751 = vmatpush2.msra.mxu0 0.0
        %5752 = vmatprep.subr.mxu0 0.0
        %5753 = vmatpush2.msra.mxu0 0.0
        %5754 = vmatprep.subr.mxu0 0.0
        %5755 = vmatpush2.msra.mxu0 0.0
        %5756 = vmatprep.subr.mxu0 0.0
        %5757 = vmatpush2.msra.mxu0 0.0
        %5758 = vmatprep.subr.mxu0 0.0
        %5759 = vmatpush2.msra.mxu0 0.0
        %5760 = vmatprep.subr.mxu0 0.0
        %5761 = vmatpush2.msra.mxu0 0.0
        %5762 = vmatprep.subr.mxu0 0.0
        %5763 = vmatpush2.msra.mxu0 0.0
        %5764 = vmatprep.subr.mxu0 0.0
        %5765 = vmatpush2.msra.mxu0 0.0
        %5766 = vmatprep.subr.mxu0 0.0
        %5767 = vmatpush2.msra.mxu0 0.0
        %5768 = vmatprep.mubr.f32.mxu0 0.0
        %5769 = vmatmul.mubr.f32.gmra.mxu0 %v5702
        %v5770 = vpop.f32.mrf.mxu0
        %v5771 = vadd.f32 0.0, %v5770
        %v5772 = vpop.f32.mrf.mxu0
        %5773 = vdwg.mxu0
        %v5774 = vadd.f32 %v5535, %v5771
        %v5775 = vadd.f32 %v4636, %v5774
        %v5776 = vld [vmem:[%s20] sm:$0x1]
        %v5777 = vmul.f32 %v5775, %v5775
        %v5778 = vsel %vm944, %v5777, 0.0
        %5779 = vadd.xlane.f32.xlu0 %v5778
        %v5780 = vpop.xlane.xlu0 %5779
        %v5781 = vmul.f32 %v5780, %v948
        %v5782 = vadd.f32 %v5781, 1e-06
        %v5783 = vrsqrt.pop %v5782
        %v5784 = vmul.f32 %v5775, %v5783
        %v5786 = vlaneseq
        %v5787 = vshrl.u32 %v5786, 7
        %v5788 = vsub.s32 0, %v5787
        %v5789 = vrot.slane %v5776, %v5788
        %v5791 = vmul.f32 %v5784, %v5789
        %v5792 = vld [vmem:[%s21] sm:$0xff]
        %v5793 = vld [vmem:[%s21 + $0x8] sm:$0xff]
        %v5794 = vld [vmem:[%s21 + $0x10] sm:$0xff]
        %v5795 = vld [vmem:[%s21 + $0x18] sm:$0xff]
        %v5796 = vld [vmem:[%s21 + $0x20] sm:$0xff]
        %v5797 = vld [vmem:[%s21 + $0x28] sm:$0xff]
        %v5798 = vld [vmem:[%s21 + $0x30] sm:$0xff]
        %v5799 = vld [vmem:[%s21 + $0x38] sm:$0xff]
        %v5801 = vsel %vm944, %v5791, 0
        %5803 = vmatprep.subr.mxu0 0.0
        %5804 = vmatpush1.msra.mxu0 0.0
        %5805 = vmatprep.subr.mxu0 0.0
        %5806 = vmatpush1.msra.mxu0 0.0
        %5807 = vmatprep.subr.mxu0 0.0
        %5808 = vmatpush1.msra.mxu0 0.0
        %5809 = vmatprep.subr.mxu0 0.0
        %5810 = vmatpush1.msra.mxu0 0.0
        %5811 = vmatprep.subr.mxu0 0.0
        %5812 = vmatpush1.msra.mxu0 0.0
        %5813 = vmatprep.subr.mxu0 0.0
        %5814 = vmatpush1.msra.mxu0 0.0
        %5815 = vmatprep.subr.mxu0 0.0
        %5816 = vmatpush1.msra.mxu0 0.0
        %5817 = vmatprep.subr.mxu0 0.0
        %5818 = vmatpush1.msra.mxu0 0.0
        %5819 = vmatprep.subr.mxu0 0.0
        %5820 = vmatpush1.msra.mxu0 %v5799
        %5821 = vmatprep.subr.mxu0 0.0
        %5822 = vmatpush1.msra.mxu0 %v5798
        %5823 = vmatprep.subr.mxu0 0.0
        %5824 = vmatpush1.msra.mxu0 %v5797
        %5825 = vmatprep.subr.mxu0 0.0
        %5826 = vmatpush1.msra.mxu0 %v5796
        %5827 = vmatprep.subr.mxu0 0.0
        %5828 = vmatpush1.msra.mxu0 %v5795
        %5829 = vmatprep.subr.mxu0 0.0
        %5830 = vmatpush1.msra.mxu0 %v5794
        %5831 = vmatprep.subr.mxu0 0.0
        %5832 = vmatpush1.msra.mxu0 %v5793
        %5833 = vmatprep.subr.mxu0 0.0
        %5834 = vmatpush1.msra.mxu0 %v5792
        %5835 = vmatprep.subr.mxu0 0.0
        %5836 = vmatpush2.msra.mxu0 0.0
        %5837 = vmatprep.subr.mxu0 0.0
        %5838 = vmatpush2.msra.mxu0 0.0
        %5839 = vmatprep.subr.mxu0 0.0
        %5840 = vmatpush2.msra.mxu0 0.0
        %5841 = vmatprep.subr.mxu0 0.0
        %5842 = vmatpush2.msra.mxu0 0.0
        %5843 = vmatprep.subr.mxu0 0.0
        %5844 = vmatpush2.msra.mxu0 0.0
        %5845 = vmatprep.subr.mxu0 0.0
        %5846 = vmatpush2.msra.mxu0 0.0
        %5847 = vmatprep.subr.mxu0 0.0
        %5848 = vmatpush2.msra.mxu0 0.0
        %5849 = vmatprep.subr.mxu0 0.0
        %5850 = vmatpush2.msra.mxu0 0.0
        %5851 = vmatprep.subr.mxu0 0.0
        %5852 = vmatpush2.msra.mxu0 0.0
        %5853 = vmatprep.subr.mxu0 0.0
        %5854 = vmatpush2.msra.mxu0 0.0
        %5855 = vmatprep.subr.mxu0 0.0
        %5856 = vmatpush2.msra.mxu0 0.0
        %5857 = vmatprep.subr.mxu0 0.0
        %5858 = vmatpush2.msra.mxu0 0.0
        %5859 = vmatprep.subr.mxu0 0.0
        %5860 = vmatpush2.msra.mxu0 0.0
        %5861 = vmatprep.subr.mxu0 0.0
        %5862 = vmatpush2.msra.mxu0 0.0
        %5863 = vmatprep.subr.mxu0 0.0
        %5864 = vmatpush2.msra.mxu0 0.0
        %5865 = vmatprep.subr.mxu0 0.0
        %5866 = vmatpush2.msra.mxu0 0.0
        %5867 = vmatprep.mubr.f32.mxu0 0.0
        %5868 = vmatmul.mubr.f32.gmra.mxu0 %v5801
        %v5869 = vpop.f32.mrf.mxu0
        %v5870 = vadd.f32 0.0, %v5869
        %v5871 = vpop.f32.mrf.mxu0
        %5872 = vdwg.mxu0
        %v5873 = vmax.f32 %v5870, 0.0
        %v5874 = vld [vmem:[%s22] sm:$0xff]
        %v5875 = vld [vmem:[%s22 + $0x8] sm:$0xff]
        %v5876 = vld [vmem:[%s22 + $0x10] sm:$0xff]
        %v5877 = vld [vmem:[%s22 + $0x18] sm:$0xff]
        %v5878 = vld [vmem:[%s22 + $0x20] sm:$0xff]
        %v5879 = vld [vmem:[%s22 + $0x28] sm:$0xff]
        %v5880 = vld [vmem:[%s22 + $0x30] sm:$0xff]
        %v5881 = vld [vmem:[%s22 + $0x38] sm:$0xff]
        %v5882 = vld [vmem:[%s22 + $0x40] sm:$0xff]
        %v5883 = vld [vmem:[%s22 + $0x48] sm:$0xff]
        %v5884 = vld [vmem:[%s22 + $0x50] sm:$0xff]
        %v5885 = vld [vmem:[%s22 + $0x58] sm:$0xff]
        %v5886 = vld [vmem:[%s22 + $0x60] sm:$0xff]
        %v5887 = vld [vmem:[%s22 + $0x68] sm:$0xff]
        %v5888 = vld [vmem:[%s22 + $0x70] sm:$0xff]
        %v5889 = vld [vmem:[%s22 + $0x78] sm:$0xff]
        %5890 = vmatprep.subr.mxu0 0.0
        %5891 = vmatpush1.msra.mxu0 %v5889
        %5892 = vmatprep.subr.mxu0 0.0
        %5893 = vmatpush1.msra.mxu0 %v5888
        %5894 = vmatprep.subr.mxu0 0.0
        %5895 = vmatpush1.msra.mxu0 %v5887
        %5896 = vmatprep.subr.mxu0 0.0
        %5897 = vmatpush1.msra.mxu0 %v5886
        %5898 = vmatprep.subr.mxu0 0.0
        %5899 = vmatpush1.msra.mxu0 %v5885
        %5900 = vmatprep.subr.mxu0 0.0
        %5901 = vmatpush1.msra.mxu0 %v5884
        %5902 = vmatprep.subr.mxu0 0.0
        %5903 = vmatpush1.msra.mxu0 %v5883
        %5904 = vmatprep.subr.mxu0 0.0
        %5905 = vmatpush1.msra.mxu0 %v5882
        %5906 = vmatprep.subr.mxu0 0.0
        %5907 = vmatpush1.msra.mxu0 %v5881
        %5908 = vmatprep.subr.mxu0 0.0
        %5909 = vmatpush1.msra.mxu0 %v5880
        %5910 = vmatprep.subr.mxu0 0.0
        %5911 = vmatpush1.msra.mxu0 %v5879
        %5912 = vmatprep.subr.mxu0 0.0
        %5913 = vmatpush1.msra.mxu0 %v5878
        %5914 = vmatprep.subr.mxu0 0.0
        %5915 = vmatpush1.msra.mxu0 %v5877
        %5916 = vmatprep.subr.mxu0 0.0
        %5917 = vmatpush1.msra.mxu0 %v5876
        %5918 = vmatprep.subr.mxu0 0.0
        %5919 = vmatpush1.msra.mxu0 %v5875
        %5920 = vmatprep.subr.mxu0 0.0
        %5921 = vmatpush1.msra.mxu0 %v5874
        %5922 = vmatprep.subr.mxu0 0.0
        %5923 = vmatpush2.msra.mxu0 0.0
        %5924 = vmatprep.subr.mxu0 0.0
        %5925 = vmatpush2.msra.mxu0 0.0
        %5926 = vmatprep.subr.mxu0 0.0
        %5927 = vmatpush2.msra.mxu0 0.0
        %5928 = vmatprep.subr.mxu0 0.0
        %5929 = vmatpush2.msra.mxu0 0.0
        %5930 = vmatprep.subr.mxu0 0.0
        %5931 = vmatpush2.msra.mxu0 0.0
        %5932 = vmatprep.subr.mxu0 0.0
        %5933 = vmatpush2.msra.mxu0 0.0
        %5934 = vmatprep.subr.mxu0 0.0
        %5935 = vmatpush2.msra.mxu0 0.0
        %5936 = vmatprep.subr.mxu0 0.0
        %5937 = vmatpush2.msra.mxu0 0.0
        %5938 = vmatprep.subr.mxu0 0.0
        %5939 = vmatpush2.msra.mxu0 0.0
        %5940 = vmatprep.subr.mxu0 0.0
        %5941 = vmatpush2.msra.mxu0 0.0
        %5942 = vmatprep.subr.mxu0 0.0
        %5943 = vmatpush2.msra.mxu0 0.0
        %5944 = vmatprep.subr.mxu0 0.0
        %5945 = vmatpush2.msra.mxu0 0.0
        %5946 = vmatprep.subr.mxu0 0.0
        %5947 = vmatpush2.msra.mxu0 0.0
        %5948 = vmatprep.subr.mxu0 0.0
        %5949 = vmatpush2.msra.mxu0 0.0
        %5950 = vmatprep.subr.mxu0 0.0
        %5951 = vmatpush2.msra.mxu0 0.0
        %5952 = vmatprep.subr.mxu0 0.0
        %5953 = vmatpush2.msra.mxu0 0.0
        %5954 = vmatprep.mubr.f32.mxu0 0.0
        %5955 = vmatmul.mubr.f32.gmra.mxu0 %v5873
        %v5956 = vpop.f32.mrf.mxu0
        %v5957 = vadd.f32 0.0, %v5956
        %v5958 = vpop.f32.mrf.mxu0
        %5959 = vdwg.mxu0
        %v5960 = vadd.f32 %v5775, %v5957
        %s5961 = scalar_lea.vmem %s13, 1
        %v5962 = vld [vmem:[%s5961] sm:$0x1]
        %v5963 = vmul.f32 %v5960, %v5960
        %v5964 = vsel %vm944, %v5963, 0.0
        %5965 = vadd.xlane.f32.xlu0 %v5964
        %v5966 = vpop.xlane.xlu0 %5965
        %v5967 = vmul.f32 %v5966, %v948
        %v5968 = vadd.f32 %v5967, 1e-06
        %v5969 = vrsqrt.pop %v5968
        %v5970 = vmul.f32 %v5960, %v5969
        %v5972 = vlaneseq
        %v5973 = vshrl.u32 %v5972, 7
        %v5974 = vsub.s32 0, %v5973
        %v5975 = vrot.slane %v5962, %v5974
        %v5977 = vmul.f32 %v5970, %v5975
        %s5978 = scalar_lea.vmem %s14, 128
        %v5979 = vld [vmem:[%s5978] sm:$0xff]
        %v5980 = vld [vmem:[%s5978 + $0x8] sm:$0xff]
        %v5981 = vld [vmem:[%s5978 + $0x10] sm:$0xff]
        %v5982 = vld [vmem:[%s5978 + $0x18] sm:$0xff]
        %v5983 = vld [vmem:[%s5978 + $0x20] sm:$0xff]
        %v5984 = vld [vmem:[%s5978 + $0x28] sm:$0xff]
        %v5985 = vld [vmem:[%s5978 + $0x30] sm:$0xff]
        %v5986 = vld [vmem:[%s5978 + $0x38] sm:$0xff]
        %v5987 = vld [vmem:[%s5978 + $0x40] sm:$0xff]
        %v5988 = vld [vmem:[%s5978 + $0x48] sm:$0xff]
        %v5989 = vld [vmem:[%s5978 + $0x50] sm:$0xff]
        %v5990 = vld [vmem:[%s5978 + $0x58] sm:$0xff]
        %v5991 = vld [vmem:[%s5978 + $0x60] sm:$0xff]
        %v5992 = vld [vmem:[%s5978 + $0x68] sm:$0xff]
        %v5993 = vld [vmem:[%s5978 + $0x70] sm:$0xff]
        %v5994 = vld [vmem:[%s5978 + $0x78] sm:$0xff]
        %v5996 = vsel %vm944, %v5977, 0
        %5998 = vmatprep.subr.mxu0 0.0
        %5999 = vmatpush1.msra.mxu0 0.0
        %6000 = vmatprep.subr.mxu0 0.0
        %6001 = vmatpush1.msra.mxu0 0.0
        %6002 = vmatprep.subr.mxu0 0.0
        %6003 = vmatpush1.msra.mxu0 0.0
        %6004 = vmatprep.subr.mxu0 0.0
        %6005 = vmatpush1.msra.mxu0 0.0
        %6006 = vmatprep.subr.mxu0 0.0
        %6007 = vmatpush1.msra.mxu0 0.0
        %6008 = vmatprep.subr.mxu0 0.0
        %6009 = vmatpush1.msra.mxu0 0.0
        %6010 = vmatprep.subr.mxu0 0.0
        %6011 = vmatpush1.msra.mxu0 0.0
        %6012 = vmatprep.subr.mxu0 0.0
        %6013 = vmatpush1.msra.mxu0 0.0
        %6014 = vmatprep.subr.mxu0 %v5994
        %6015 = vmatpush1.msra.mxu0 %v5993
        %6016 = vmatprep.subr.mxu0 %v5992
        %6017 = vmatpush1.msra.mxu0 %v5991
        %6018 = vmatprep.subr.mxu0 %v5990
        %6019 = vmatpush1.msra.mxu0 %v5989
        %6020 = vmatprep.subr.mxu0 %v5988
        %6021 = vmatpush1.msra.mxu0 %v5987
        %6022 = vmatprep.subr.mxu0 %v5986
        %6023 = vmatpush1.msra.mxu0 %v5985
        %6024 = vmatprep.subr.mxu0 %v5984
        %6025 = vmatpush1.msra.mxu0 %v5983
        %6026 = vmatprep.subr.mxu0 %v5982
        %6027 = vmatpush1.msra.mxu0 %v5981
        %6028 = vmatprep.subr.mxu0 %v5980
        %6029 = vmatpush1.msra.mxu0 %v5979
        %6030 = vmatprep.subr.mxu0 0.0
        %6031 = vmatpush2.msra.mxu0 0.0
        %6032 = vmatprep.subr.mxu0 0.0
        %6033 = vmatpush2.msra.mxu0 0.0
        %6034 = vmatprep.subr.mxu0 0.0
        %6035 = vmatpush2.msra.mxu0 0.0
        %6036 = vmatprep.subr.mxu0 0.0
        %6037 = vmatpush2.msra.mxu0 0.0
        %6038 = vmatprep.subr.mxu0 0.0
        %6039 = vmatpush2.msra.mxu0 0.0
        %6040 = vmatprep.subr.mxu0 0.0
        %6041 = vmatpush2.msra.mxu0 0.0
        %6042 = vmatprep.subr.mxu0 0.0
        %6043 = vmatpush2.msra.mxu0 0.0
        %6044 = vmatprep.subr.mxu0 0.0
        %6045 = vmatpush2.msra.mxu0 0.0
        %6046 = vmatprep.subr.mxu0 0.0
        %6047 = vmatpush2.msra.mxu0 0.0
        %6048 = vmatprep.subr.mxu0 0.0
        %6049 = vmatpush2.msra.mxu0 0.0
        %6050 = vmatprep.subr.mxu0 0.0
        %6051 = vmatpush2.msra.mxu0 0.0
        %6052 = vmatprep.subr.mxu0 0.0
        %6053 = vmatpush2.msra.mxu0 0.0
        %6054 = vmatprep.subr.mxu0 0.0
        %6055 = vmatpush2.msra.mxu0 0.0
        %6056 = vmatprep.subr.mxu0 0.0
        %6057 = vmatpush2.msra.mxu0 0.0
        %6058 = vmatprep.subr.mxu0 0.0
        %6059 = vmatpush2.msra.mxu0 0.0
        %6060 = vmatprep.subr.mxu0 0.0
        %6061 = vmatpush2.msra.mxu0 0.0
        %6062 = vmatprep.mubr.f32.mxu0 0.0
        %6063 = vmatmul.mubr.f32.gmra.mxu0 %v5996
        %v6064 = vpop.f32.mrf.mxu0
        %v6065 = vadd.f32 0.0, %v6064
        %v6066 = vpop.f32.mrf.mxu0
        %v6067 = vadd.f32 0.0, %v6066
        %6068 = vdwg.mxu0
        %s6069 = scalar_lea.vmem %s15, 64
        %v6070 = vld [vmem:[%s6069] sm:$0xff]
        %v6071 = vld [vmem:[%s6069 + $0x8] sm:$0xff]
        %v6072 = vld [vmem:[%s6069 + $0x10] sm:$0xff]
        %v6073 = vld [vmem:[%s6069 + $0x18] sm:$0xff]
        %v6074 = vld [vmem:[%s6069 + $0x20] sm:$0xff]
        %v6075 = vld [vmem:[%s6069 + $0x28] sm:$0xff]
        %v6076 = vld [vmem:[%s6069 + $0x30] sm:$0xff]
        %v6077 = vld [vmem:[%s6069 + $0x38] sm:$0xff]
        %6079 = vrot.lane.b32.xlu0 %v6065, 64
        %v6080 = vpop.permute.xlu0 %6079
        %v6081 = vsel %vm1069, %v6065, 0
        %v6083 = vsel %vm1069, %v6080, 0
        %6085 = vmatprep.subr.mxu0 0.0
        %6086 = vmatpush1.xpose.msra.mxu0 0.0
        %6087 = vmatprep.subr.mxu0 0.0
        %6088 = vmatpush1.xpose.msra.mxu0 0.0
        %6089 = vmatprep.subr.mxu0 0.0
        %6090 = vmatpush1.xpose.msra.mxu0 0.0
        %6091 = vmatprep.subr.mxu0 0.0
        %6092 = vmatpush1.xpose.msra.mxu0 0.0
        %6093 = vmatprep.subr.mxu0 0.0
        %6094 = vmatpush1.xpose.msra.mxu0 0.0
        %6095 = vmatprep.subr.mxu0 0.0
        %6096 = vmatpush1.xpose.msra.mxu0 0.0
        %6097 = vmatprep.subr.mxu0 0.0
        %6098 = vmatpush1.xpose.msra.mxu0 0.0
        %6099 = vmatprep.subr.mxu0 0.0
        %6100 = vmatpush1.xpose.msra.mxu0 0.0
        %6101 = vmatprep.subr.mxu0 0.0
        %6102 = vmatpush1.xpose.msra.mxu0 0.0
        %6103 = vmatprep.subr.mxu0 0.0
        %6104 = vmatpush1.xpose.msra.mxu0 0.0
        %6105 = vmatprep.subr.mxu0 0.0
        %6106 = vmatpush1.xpose.msra.mxu0 0.0
        %6107 = vmatprep.subr.mxu0 0.0
        %6108 = vmatpush1.xpose.msra.mxu0 0.0
        %6109 = vmatprep.subr.mxu0 0.0
        %6110 = vmatpush1.xpose.msra.mxu0 0.0
        %6111 = vmatprep.subr.mxu0 0.0
        %6112 = vmatpush1.xpose.msra.mxu0 0.0
        %6113 = vmatprep.subr.mxu0 0.0
        %6114 = vmatpush1.xpose.msra.mxu0 0.0
        %6115 = vmatprep.subr.mxu0 0.0
        %6116 = vmatpush1.xpose.msra.mxu0 %v6083
        %6117 = vmatprep.subr.mxu0 0.0
        %6118 = vmatpush2.xpose.msra.mxu0 0.0
        %6119 = vmatprep.subr.mxu0 0.0
        %6120 = vmatpush2.xpose.msra.mxu0 0.0
        %6121 = vmatprep.subr.mxu0 0.0
        %6122 = vmatpush2.xpose.msra.mxu0 0.0
        %6123 = vmatprep.subr.mxu0 0.0
        %6124 = vmatpush2.xpose.msra.mxu0 0.0
        %6125 = vmatprep.subr.mxu0 0.0
        %6126 = vmatpush2.xpose.msra.mxu0 0.0
        %6127 = vmatprep.subr.mxu0 0.0
        %6128 = vmatpush2.xpose.msra.mxu0 0.0
        %6129 = vmatprep.subr.mxu0 0.0
        %6130 = vmatpush2.xpose.msra.mxu0 0.0
        %6131 = vmatprep.subr.mxu0 0.0
        %6132 = vmatpush2.xpose.msra.mxu0 0.0
        %6133 = vmatprep.subr.mxu0 0.0
        %6134 = vmatpush2.xpose.msra.mxu0 0.0
        %6135 = vmatprep.subr.mxu0 0.0
        %6136 = vmatpush2.xpose.msra.mxu0 0.0
        %6137 = vmatprep.subr.mxu0 0.0
        %6138 = vmatpush2.xpose.msra.mxu0 0.0
        %6139 = vmatprep.subr.mxu0 0.0
        %6140 = vmatpush2.xpose.msra.mxu0 0.0
        %6141 = vmatprep.subr.mxu0 0.0
        %6142 = vmatpush2.xpose.msra.mxu0 0.0
        %6143 = vmatprep.subr.mxu0 0.0
        %6144 = vmatpush2.xpose.msra.mxu0 0.0
        %6145 = vmatprep.subr.mxu0 0.0
        %6146 = vmatpush2.xpose.msra.mxu0 0.0
        %6147 = vmatprep.subr.mxu0 0.0
        %6148 = vmatpush2.xpose.msra.mxu0 0.0
        %6149 = vmatprep.mubr.f32.mxu0 0.0
        %6150 = vmatmul.mubr.f32.gmra.mxu0 %v6081
        %v6151 = vpop.f32.mrf.mxu0
        %v6152 = vadd.f32 %v3678, %v6151
        %v6153 = vpop.f32.mrf.mxu0
        %6154 = vdwg.mxu0
        %v6155 = vsel %vm1144, %v6152, -inf
        %6156 = vmax.xlane.f32.xlu0 %v6155
        %v6157 = vpop.xlane.xlu0 %6156
        %v6158 = vsub.f32 %v6152, %v6157
        %v6159 = vmul.f32 %v6158, 1.442695
        %v6160 = vpow.pop %v6159
        %v6161 = vsel %vm1144, %v6160, 0.0
        %6162 = vadd.xlane.f32.xlu0 %v6161
        %v6163 = vpop.xlane.xlu0 %6162
        %v6164 = vrcp.pop %v6163
        %v6165 = vmul.f32 %v6160, %v6164
        %v6167 = vsel %vm1144, %v6165, 0
        %6169 = vmatprep.subr.mxu0 0.0
        %6170 = vmatpush1.msra.mxu0 0.0
        %6171 = vmatprep.subr.mxu0 0.0
        %6172 = vmatpush1.msra.mxu0 0.0
        %6173 = vmatprep.subr.mxu0 0.0
        %6174 = vmatpush1.msra.mxu0 0.0
        %6175 = vmatprep.subr.mxu0 0.0
        %6176 = vmatpush1.msra.mxu0 0.0
        %6177 = vmatprep.subr.mxu0 0.0
        %6178 = vmatpush1.msra.mxu0 0.0
        %6179 = vmatprep.subr.mxu0 0.0
        %6180 = vmatpush1.msra.mxu0 0.0
        %6181 = vmatprep.subr.mxu0 0.0
        %6182 = vmatpush1.msra.mxu0 0.0
        %6183 = vmatprep.subr.mxu0 0.0
        %6184 = vmatpush1.msra.mxu0 0.0
        %6185 = vmatprep.subr.mxu0 0.0
        %6186 = vmatpush1.msra.mxu0 0.0
        %6187 = vmatprep.subr.mxu0 0.0
        %6188 = vmatpush1.msra.mxu0 0.0
        %6189 = vmatprep.subr.mxu0 0.0
        %6190 = vmatpush1.msra.mxu0 0.0
        %6191 = vmatprep.subr.mxu0 0.0
        %6192 = vmatpush1.msra.mxu0 0.0
        %6193 = vmatprep.subr.mxu0 0.0
        %6194 = vmatpush1.msra.mxu0 0.0
        %6195 = vmatprep.subr.mxu0 0.0
        %6196 = vmatpush1.msra.mxu0 0.0
        %6197 = vmatprep.subr.mxu0 0.0
        %6198 = vmatpush1.msra.mxu0 0.0
        %6199 = vmatprep.subr.mxu0 0.0
        %6200 = vmatpush1.msra.mxu0 %v6067
        %6201 = vmatprep.subr.mxu0 0.0
        %6202 = vmatpush2.msra.mxu0 0.0
        %6203 = vmatprep.subr.mxu0 0.0
        %6204 = vmatpush2.msra.mxu0 0.0
        %6205 = vmatprep.subr.mxu0 0.0
        %6206 = vmatpush2.msra.mxu0 0.0
        %6207 = vmatprep.subr.mxu0 0.0
        %6208 = vmatpush2.msra.mxu0 0.0
        %6209 = vmatprep.subr.mxu0 0.0
        %6210 = vmatpush2.msra.mxu0 0.0
        %6211 = vmatprep.subr.mxu0 0.0
        %6212 = vmatpush2.msra.mxu0 0.0
        %6213 = vmatprep.subr.mxu0 0.0
        %6214 = vmatpush2.msra.mxu0 0.0
        %6215 = vmatprep.subr.mxu0 0.0
        %6216 = vmatpush2.msra.mxu0 0.0
        %6217 = vmatprep.subr.mxu0 0.0
        %6218 = vmatpush2.msra.mxu0 0.0
        %6219 = vmatprep.subr.mxu0 0.0
        %6220 = vmatpush2.msra.mxu0 0.0
        %6221 = vmatprep.subr.mxu0 0.0
        %6222 = vmatpush2.msra.mxu0 0.0
        %6223 = vmatprep.subr.mxu0 0.0
        %6224 = vmatpush2.msra.mxu0 0.0
        %6225 = vmatprep.subr.mxu0 0.0
        %6226 = vmatpush2.msra.mxu0 0.0
        %6227 = vmatprep.subr.mxu0 0.0
        %6228 = vmatpush2.msra.mxu0 0.0
        %6229 = vmatprep.subr.mxu0 0.0
        %6230 = vmatpush2.msra.mxu0 0.0
        %6231 = vmatprep.subr.mxu0 0.0
        %6232 = vmatpush2.msra.mxu0 0.0
        %6233 = vmatprep.mubr.f32.mxu0 0.0
        %6234 = vmatmul.mubr.f32.gmra.mxu0 %v6167
        %v6235 = vpop.f32.mrf.mxu0
        %v6236 = vadd.f32 0.0, %v6235
        %v6237 = vpop.f32.mrf.mxu0
        %6238 = vdwg.mxu0
        %6239 = vrot.lane.b32.xlu0 %v6065, 112
        %v6240 = vpop.permute.xlu0 %6239
        %6241 = vrot.lane.b32.xlu0 %v6065, 48
        %v6242 = vpop.permute.xlu0 %6241
        %v6243 = vsel %vm1069, %v6240, 0
        %v6245 = vsel %vm1069, %v6242, 0
        %6247 = vmatprep.subr.mxu0 0.0
        %6248 = vmatpush1.xpose.msra.mxu0 0.0
        %6249 = vmatprep.subr.mxu0 0.0
        %6250 = vmatpush1.xpose.msra.mxu0 0.0
        %6251 = vmatprep.subr.mxu0 0.0
        %6252 = vmatpush1.xpose.msra.mxu0 0.0
        %6253 = vmatprep.subr.mxu0 0.0
        %6254 = vmatpush1.xpose.msra.mxu0 0.0
        %6255 = vmatprep.subr.mxu0 0.0
        %6256 = vmatpush1.xpose.msra.mxu0 0.0
        %6257 = vmatprep.subr.mxu0 0.0
        %6258 = vmatpush1.xpose.msra.mxu0 0.0
        %6259 = vmatprep.subr.mxu0 0.0
        %6260 = vmatpush1.xpose.msra.mxu0 0.0
        %6261 = vmatprep.subr.mxu0 0.0
        %6262 = vmatpush1.xpose.msra.mxu0 0.0
        %6263 = vmatprep.subr.mxu0 0.0
        %6264 = vmatpush1.xpose.msra.mxu0 0.0
        %6265 = vmatprep.subr.mxu0 0.0
        %6266 = vmatpush1.xpose.msra.mxu0 0.0
        %6267 = vmatprep.subr.mxu0 0.0
        %6268 = vmatpush1.xpose.msra.mxu0 0.0
        %6269 = vmatprep.subr.mxu0 0.0
        %6270 = vmatpush1.xpose.msra.mxu0 0.0
        %6271 = vmatprep.subr.mxu0 0.0
        %6272 = vmatpush1.xpose.msra.mxu0 0.0
        %6273 = vmatprep.subr.mxu0 0.0
        %6274 = vmatpush1.xpose.msra.mxu0 0.0
        %6275 = vmatprep.subr.mxu0 0.0
        %6276 = vmatpush1.xpose.msra.mxu0 0.0
        %6277 = vmatprep.subr.mxu0 0.0
        %6278 = vmatpush1.xpose.msra.mxu0 %v6245
        %6279 = vmatprep.subr.mxu0 0.0
        %6280 = vmatpush2.xpose.msra.mxu0 0.0
        %6281 = vmatprep.subr.mxu0 0.0
        %6282 = vmatpush2.xpose.msra.mxu0 0.0
        %6283 = vmatprep.subr.mxu0 0.0
        %6284 = vmatpush2.xpose.msra.mxu0 0.0
        %6285 = vmatprep.subr.mxu0 0.0
        %6286 = vmatpush2.xpose.msra.mxu0 0.0
        %6287 = vmatprep.subr.mxu0 0.0
        %6288 = vmatpush2.xpose.msra.mxu0 0.0
        %6289 = vmatprep.subr.mxu0 0.0
        %6290 = vmatpush2.xpose.msra.mxu0 0.0
        %6291 = vmatprep.subr.mxu0 0.0
        %6292 = vmatpush2.xpose.msra.mxu0 0.0
        %6293 = vmatprep.subr.mxu0 0.0
        %6294 = vmatpush2.xpose.msra.mxu0 0.0
        %6295 = vmatprep.subr.mxu0 0.0
        %6296 = vmatpush2.xpose.msra.mxu0 0.0
        %6297 = vmatprep.subr.mxu0 0.0
        %6298 = vmatpush2.xpose.msra.mxu0 0.0
        %6299 = vmatprep.subr.mxu0 0.0
        %6300 = vmatpush2.xpose.msra.mxu0 0.0
        %6301 = vmatprep.subr.mxu0 0.0
        %6302 = vmatpush2.xpose.msra.mxu0 0.0
        %6303 = vmatprep.subr.mxu0 0.0
        %6304 = vmatpush2.xpose.msra.mxu0 0.0
        %6305 = vmatprep.subr.mxu0 0.0
        %6306 = vmatpush2.xpose.msra.mxu0 0.0
        %6307 = vmatprep.subr.mxu0 0.0
        %6308 = vmatpush2.xpose.msra.mxu0 0.0
        %6309 = vmatprep.subr.mxu0 0.0
        %6310 = vmatpush2.xpose.msra.mxu0 0.0
        %6311 = vmatprep.mubr.f32.mxu0 0.0
        %6312 = vmatmul.mubr.f32.gmra.mxu0 %v6243
        %v6313 = vpop.f32.mrf.mxu0
        %v6314 = vadd.f32 %v3841, %v6313
        %v6315 = vpop.f32.mrf.mxu0
        %6316 = vdwg.mxu0
        %v6317 = vsel %vm1144, %v6314, -inf
        %6318 = vmax.xlane.f32.xlu0 %v6317
        %v6319 = vpop.xlane.xlu0 %6318
        %v6320 = vsub.f32 %v6314, %v6319
        %v6321 = vmul.f32 %v6320, 1.442695
        %v6322 = vpow.pop %v6321
        %v6323 = vsel %vm1144, %v6322, 0.0
        %6324 = vadd.xlane.f32.xlu0 %v6323
        %v6325 = vpop.xlane.xlu0 %6324
        %v6326 = vrcp.pop %v6325
        %v6327 = vmul.f32 %v6322, %v6326
        %6329 = vrot.lane.b32.xlu0 %v6067, 112
        %v6330 = vpop.permute.xlu0 %6329
        %v6333 = vsel %vm1144, %v6327, 0
        %6335 = vmatprep.subr.mxu0 0.0
        %6336 = vmatpush1.msra.mxu0 0.0
        %6337 = vmatprep.subr.mxu0 0.0
        %6338 = vmatpush1.msra.mxu0 0.0
        %6339 = vmatprep.subr.mxu0 0.0
        %6340 = vmatpush1.msra.mxu0 0.0
        %6341 = vmatprep.subr.mxu0 0.0
        %6342 = vmatpush1.msra.mxu0 0.0
        %6343 = vmatprep.subr.mxu0 0.0
        %6344 = vmatpush1.msra.mxu0 0.0
        %6345 = vmatprep.subr.mxu0 0.0
        %6346 = vmatpush1.msra.mxu0 0.0
        %6347 = vmatprep.subr.mxu0 0.0
        %6348 = vmatpush1.msra.mxu0 0.0
        %6349 = vmatprep.subr.mxu0 0.0
        %6350 = vmatpush1.msra.mxu0 0.0
        %6351 = vmatprep.subr.mxu0 0.0
        %6352 = vmatpush1.msra.mxu0 0.0
        %6353 = vmatprep.subr.mxu0 0.0
        %6354 = vmatpush1.msra.mxu0 0.0
        %6355 = vmatprep.subr.mxu0 0.0
        %6356 = vmatpush1.msra.mxu0 0.0
        %6357 = vmatprep.subr.mxu0 0.0
        %6358 = vmatpush1.msra.mxu0 0.0
        %6359 = vmatprep.subr.mxu0 0.0
        %6360 = vmatpush1.msra.mxu0 0.0
        %6361 = vmatprep.subr.mxu0 0.0
        %6362 = vmatpush1.msra.mxu0 0.0
        %6363 = vmatprep.subr.mxu0 0.0
        %6364 = vmatpush1.msra.mxu0 0.0
        %6365 = vmatprep.subr.mxu0 0.0
        %6366 = vmatpush1.msra.mxu0 %v6330
        %6367 = vmatprep.subr.mxu0 0.0
        %6368 = vmatpush2.msra.mxu0 0.0
        %6369 = vmatprep.subr.mxu0 0.0
        %6370 = vmatpush2.msra.mxu0 0.0
        %6371 = vmatprep.subr.mxu0 0.0
        %6372 = vmatpush2.msra.mxu0 0.0
        %6373 = vmatprep.subr.mxu0 0.0
        %6374 = vmatpush2.msra.mxu0 0.0
        %6375 = vmatprep.subr.mxu0 0.0
        %6376 = vmatpush2.msra.mxu0 0.0
        %6377 = vmatprep.subr.mxu0 0.0
        %6378 = vmatpush2.msra.mxu0 0.0
        %6379 = vmatprep.subr.mxu0 0.0
        %6380 = vmatpush2.msra.mxu0 0.0
        %6381 = vmatprep.subr.mxu0 0.0
        %6382 = vmatpush2.msra.mxu0 0.0
        %6383 = vmatprep.subr.mxu0 0.0
        %6384 = vmatpush2.msra.mxu0 0.0
        %6385 = vmatprep.subr.mxu0 0.0
        %6386 = vmatpush2.msra.mxu0 0.0
        %6387 = vmatprep.subr.mxu0 0.0
        %6388 = vmatpush2.msra.mxu0 0.0
        %6389 = vmatprep.subr.mxu0 0.0
        %6390 = vmatpush2.msra.mxu0 0.0
        %6391 = vmatprep.subr.mxu0 0.0
        %6392 = vmatpush2.msra.mxu0 0.0
        %6393 = vmatprep.subr.mxu0 0.0
        %6394 = vmatpush2.msra.mxu0 0.0
        %6395 = vmatprep.subr.mxu0 0.0
        %6396 = vmatpush2.msra.mxu0 0.0
        %6397 = vmatprep.subr.mxu0 0.0
        %6398 = vmatpush2.msra.mxu0 0.0
        %6399 = vmatprep.mubr.f32.mxu0 0.0
        %6400 = vmatmul.mubr.f32.gmra.mxu0 %v6333
        %v6401 = vpop.f32.mrf.mxu0
        %v6402 = vadd.f32 0.0, %v6401
        %v6403 = vpop.f32.mrf.mxu0
        %6404 = vdwg.mxu0
        %v6406 = vsel %vm1069, %v6402, 0
        %6408 = vmatprep.subr.mxu0 0.0
        %6409 = vmatpush1.msra.mxu0 0.0
        %6410 = vmatprep.subr.mxu0 0.0
        %6411 = vmatpush1.msra.mxu0 0.0
        %6412 = vmatprep.subr.mxu0 0.0
        %6413 = vmatpush1.msra.mxu0 0.0
        %6414 = vmatprep.subr.mxu0 0.0
        %6415 = vmatpush1.msra.mxu0 0.0
        %6416 = vmatprep.subr.mxu0 0.0
        %6417 = vmatpush1.msra.mxu0 0.0
        %6418 = vmatprep.subr.mxu0 0.0
        %6419 = vmatpush1.msra.mxu0 0.0
        %6420 = vmatprep.subr.mxu0 0.0
        %6421 = vmatpush1.msra.mxu0 0.0
        %6422 = vmatprep.subr.mxu0 0.0
        %6423 = vmatpush1.msra.mxu0 0.0
        %6424 = vmatprep.subr.mxu0 0.0
        %6425 = vmatpush1.msra.mxu0 0.0
        %6426 = vmatprep.subr.mxu0 0.0
        %6427 = vmatpush1.msra.mxu0 0.0
        %6428 = vmatprep.subr.mxu0 0.0
        %6429 = vmatpush1.msra.mxu0 0.0
        %6430 = vmatprep.subr.mxu0 0.0
        %6431 = vmatpush1.msra.mxu0 0.0
        %6432 = vmatprep.subr.mxu0 0.0
        %6433 = vmatpush1.msra.mxu0 0.0
        %6434 = vmatprep.subr.mxu0 0.0
        %6435 = vmatpush1.msra.mxu0 0.0
        %6436 = vmatprep.subr.mxu0 0.0
        %6437 = vmatpush1.msra.mxu0 %v6073
        %6438 = vmatprep.subr.mxu0 0.0
        %6439 = vmatpush1.msra.mxu0 %v6072
        %6440 = vmatprep.subr.mxu0 0.0
        %6441 = vmatpush2.msra.mxu0 0.0
        %6442 = vmatprep.subr.mxu0 0.0
        %6443 = vmatpush2.msra.mxu0 0.0
        %6444 = vmatprep.subr.mxu0 0.0
        %6445 = vmatpush2.msra.mxu0 0.0
        %6446 = vmatprep.subr.mxu0 0.0
        %6447 = vmatpush2.msra.mxu0 0.0
        %6448 = vmatprep.subr.mxu0 0.0
        %6449 = vmatpush2.msra.mxu0 0.0
        %6450 = vmatprep.subr.mxu0 0.0
        %6451 = vmatpush2.msra.mxu0 0.0
        %6452 = vmatprep.subr.mxu0 0.0
        %6453 = vmatpush2.msra.mxu0 0.0
        %6454 = vmatprep.subr.mxu0 0.0
        %6455 = vmatpush2.msra.mxu0 0.0
        %6456 = vmatprep.subr.mxu0 0.0
        %6457 = vmatpush2.msra.mxu0 0.0
        %6458 = vmatprep.subr.mxu0 0.0
        %6459 = vmatpush2.msra.mxu0 0.0
        %6460 = vmatprep.subr.mxu0 0.0
        %6461 = vmatpush2.msra.mxu0 0.0
        %6462 = vmatprep.subr.mxu0 0.0
        %6463 = vmatpush2.msra.mxu0 0.0
        %6464 = vmatprep.subr.mxu0 0.0
        %6465 = vmatpush2.msra.mxu0 0.0
        %6466 = vmatprep.subr.mxu0 0.0
        %6467 = vmatpush2.msra.mxu0 0.0
        %6468 = vmatprep.subr.mxu0 0.0
        %6469 = vmatpush2.msra.mxu0 0.0
        %6470 = vmatprep.subr.mxu0 0.0
        %6471 = vmatpush2.msra.mxu0 0.0
        %6472 = vmatprep.mubr.f32.mxu0 0.0
        %6473 = vmatmul.mubr.f32.gmra.mxu0 %v6406
        %v6474 = vpop.f32.mrf.mxu0
        %v6475 = vadd.f32 0.0, %v6474
        %v6476 = vpop.f32.mrf.mxu0
        %6477 = vdwg.mxu0
        %v6479 = vsel %vm1069, %v6236, 0
        %6481 = vmatprep.subr.mxu0 0.0
        %6482 = vmatpush1.msra.mxu0 0.0
        %6483 = vmatprep.subr.mxu0 0.0
        %6484 = vmatpush1.msra.mxu0 0.0
        %6485 = vmatprep.subr.mxu0 0.0
        %6486 = vmatpush1.msra.mxu0 0.0
        %6487 = vmatprep.subr.mxu0 0.0
        %6488 = vmatpush1.msra.mxu0 0.0
        %6489 = vmatprep.subr.mxu0 0.0
        %6490 = vmatpush1.msra.mxu0 0.0
        %6491 = vmatprep.subr.mxu0 0.0
        %6492 = vmatpush1.msra.mxu0 0.0
        %6493 = vmatprep.subr.mxu0 0.0
        %6494 = vmatpush1.msra.mxu0 0.0
        %6495 = vmatprep.subr.mxu0 0.0
        %6496 = vmatpush1.msra.mxu0 0.0
        %6497 = vmatprep.subr.mxu0 0.0
        %6498 = vmatpush1.msra.mxu0 0.0
        %6499 = vmatprep.subr.mxu0 0.0
        %6500 = vmatpush1.msra.mxu0 0.0
        %6501 = vmatprep.subr.mxu0 0.0
        %6502 = vmatpush1.msra.mxu0 0.0
        %6503 = vmatprep.subr.mxu0 0.0
        %6504 = vmatpush1.msra.mxu0 0.0
        %6505 = vmatprep.subr.mxu0 0.0
        %6506 = vmatpush1.msra.mxu0 0.0
        %6507 = vmatprep.subr.mxu0 0.0
        %6508 = vmatpush1.msra.mxu0 0.0
        %6509 = vmatprep.subr.mxu0 0.0
        %6510 = vmatpush1.msra.mxu0 %v6071
        %6511 = vmatprep.subr.mxu0 0.0
        %6512 = vmatpush1.msra.mxu0 %v6070
        %6513 = vmatprep.subr.mxu0 0.0
        %6514 = vmatpush2.msra.mxu0 0.0
        %6515 = vmatprep.subr.mxu0 0.0
        %6516 = vmatpush2.msra.mxu0 0.0
        %6517 = vmatprep.subr.mxu0 0.0
        %6518 = vmatpush2.msra.mxu0 0.0
        %6519 = vmatprep.subr.mxu0 0.0
        %6520 = vmatpush2.msra.mxu0 0.0
        %6521 = vmatprep.subr.mxu0 0.0
        %6522 = vmatpush2.msra.mxu0 0.0
        %6523 = vmatprep.subr.mxu0 0.0
        %6524 = vmatpush2.msra.mxu0 0.0
        %6525 = vmatprep.subr.mxu0 0.0
        %6526 = vmatpush2.msra.mxu0 0.0
        %6527 = vmatprep.subr.mxu0 0.0
        %6528 = vmatpush2.msra.mxu0 0.0
        %6529 = vmatprep.subr.mxu0 0.0
        %6530 = vmatpush2.msra.mxu0 0.0
        %6531 = vmatprep.subr.mxu0 0.0
        %6532 = vmatpush2.msra.mxu0 0.0
        %6533 = vmatprep.subr.mxu0 0.0
        %6534 = vmatpush2.msra.mxu0 0.0
        %6535 = vmatprep.subr.mxu0 0.0
        %6536 = vmatpush2.msra.mxu0 0.0
        %6537 = vmatprep.subr.mxu0 0.0
        %6538 = vmatpush2.msra.mxu0 0.0
        %6539 = vmatprep.subr.mxu0 0.0
        %6540 = vmatpush2.msra.mxu0 0.0
        %6541 = vmatprep.subr.mxu0 0.0
        %6542 = vmatpush2.msra.mxu0 0.0
        %6543 = vmatprep.subr.mxu0 0.0
        %6544 = vmatpush2.msra.mxu0 0.0
        %6545 = vmatprep.mubr.f32.mxu0 0.0
        %6546 = vmatmul.mubr.f32.gmra.mxu0 %v6479
        %v6547 = vpop.f32.mrf.mxu0
        %v6548 = vadd.f32 %v6475, %v6547
        %v6549 = vpop.f32.mrf.mxu0
        %6550 = vdwg.mxu0
        %6551 = vrot.lane.b32.xlu0 %v6065, 96
        %v6552 = vpop.permute.xlu0 %6551
        %6553 = vrot.lane.b32.xlu0 %v6065, 32
        %v6554 = vpop.permute.xlu0 %6553
        %v6555 = vsel %vm1069, %v6552, 0
        %v6557 = vsel %vm1069, %v6554, 0
        %6559 = vmatprep.subr.mxu0 0.0
        %6560 = vmatpush1.xpose.msra.mxu0 0.0
        %6561 = vmatprep.subr.mxu0 0.0
        %6562 = vmatpush1.xpose.msra.mxu0 0.0
        %6563 = vmatprep.subr.mxu0 0.0
        %6564 = vmatpush1.xpose.msra.mxu0 0.0
        %6565 = vmatprep.subr.mxu0 0.0
        %6566 = vmatpush1.xpose.msra.mxu0 0.0
        %6567 = vmatprep.subr.mxu0 0.0
        %6568 = vmatpush1.xpose.msra.mxu0 0.0
        %6569 = vmatprep.subr.mxu0 0.0
        %6570 = vmatpush1.xpose.msra.mxu0 0.0
        %6571 = vmatprep.subr.mxu0 0.0
        %6572 = vmatpush1.xpose.msra.mxu0 0.0
        %6573 = vmatprep.subr.mxu0 0.0
        %6574 = vmatpush1.xpose.msra.mxu0 0.0
        %6575 = vmatprep.subr.mxu0 0.0
        %6576 = vmatpush1.xpose.msra.mxu0 0.0
        %6577 = vmatprep.subr.mxu0 0.0
        %6578 = vmatpush1.xpose.msra.mxu0 0.0
        %6579 = vmatprep.subr.mxu0 0.0
        %6580 = vmatpush1.xpose.msra.mxu0 0.0
        %6581 = vmatprep.subr.mxu0 0.0
        %6582 = vmatpush1.xpose.msra.mxu0 0.0
        %6583 = vmatprep.subr.mxu0 0.0
        %6584 = vmatpush1.xpose.msra.mxu0 0.0
        %6585 = vmatprep.subr.mxu0 0.0
        %6586 = vmatpush1.xpose.msra.mxu0 0.0
        %6587 = vmatprep.subr.mxu0 0.0
        %6588 = vmatpush1.xpose.msra.mxu0 0.0
        %6589 = vmatprep.subr.mxu0 0.0
        %6590 = vmatpush1.xpose.msra.mxu0 %v6557
        %6591 = vmatprep.subr.mxu0 0.0
        %6592 = vmatpush2.xpose.msra.mxu0 0.0
        %6593 = vmatprep.subr.mxu0 0.0
        %6594 = vmatpush2.xpose.msra.mxu0 0.0
        %6595 = vmatprep.subr.mxu0 0.0
        %6596 = vmatpush2.xpose.msra.mxu0 0.0
        %6597 = vmatprep.subr.mxu0 0.0
        %6598 = vmatpush2.xpose.msra.mxu0 0.0
        %6599 = vmatprep.subr.mxu0 0.0
        %6600 = vmatpush2.xpose.msra.mxu0 0.0
        %6601 = vmatprep.subr.mxu0 0.0
        %6602 = vmatpush2.xpose.msra.mxu0 0.0
        %6603 = vmatprep.subr.mxu0 0.0
        %6604 = vmatpush2.xpose.msra.mxu0 0.0
        %6605 = vmatprep.subr.mxu0 0.0
        %6606 = vmatpush2.xpose.msra.mxu0 0.0
        %6607 = vmatprep.subr.mxu0 0.0
        %6608 = vmatpush2.xpose.msra.mxu0 0.0
        %6609 = vmatprep.subr.mxu0 0.0
        %6610 = vmatpush2.xpose.msra.mxu0 0.0
        %6611 = vmatprep.subr.mxu0 0.0
        %6612 = vmatpush2.xpose.msra.mxu0 0.0
        %6613 = vmatprep.subr.mxu0 0.0
        %6614 = vmatpush2.xpose.msra.mxu0 0.0
        %6615 = vmatprep.subr.mxu0 0.0
        %6616 = vmatpush2.xpose.msra.mxu0 0.0
        %6617 = vmatprep.subr.mxu0 0.0
        %6618 = vmatpush2.xpose.msra.mxu0 0.0
        %6619 = vmatprep.subr.mxu0 0.0
        %6620 = vmatpush2.xpose.msra.mxu0 0.0
        %6621 = vmatprep.subr.mxu0 0.0
        %6622 = vmatpush2.xpose.msra.mxu0 0.0
        %6623 = vmatprep.mubr.f32.mxu0 0.0
        %6624 = vmatmul.mubr.f32.gmra.mxu0 %v6555
        %v6625 = vpop.f32.mrf.mxu0
        %v6626 = vadd.f32 %v4155, %v6625
        %v6627 = vpop.f32.mrf.mxu0
        %6628 = vdwg.mxu0
        %v6629 = vsel %vm1144, %v6626, -inf
        %6630 = vmax.xlane.f32.xlu0 %v6629
        %v6631 = vpop.xlane.xlu0 %6630
        %v6632 = vsub.f32 %v6626, %v6631
        %v6633 = vmul.f32 %v6632, 1.442695
        %v6634 = vpow.pop %v6633
        %v6635 = vsel %vm1144, %v6634, 0.0
        %6636 = vadd.xlane.f32.xlu0 %v6635
        %v6637 = vpop.xlane.xlu0 %6636
        %v6638 = vrcp.pop %v6637
        %v6639 = vmul.f32 %v6634, %v6638
        %6640 = vrot.lane.b32.xlu0 %v6067, 96
        %v6641 = vpop.permute.xlu0 %6640
        %v6644 = vsel %vm1144, %v6639, 0
        %6646 = vmatprep.subr.mxu0 0.0
        %6647 = vmatpush1.msra.mxu0 0.0
        %6648 = vmatprep.subr.mxu0 0.0
        %6649 = vmatpush1.msra.mxu0 0.0
        %6650 = vmatprep.subr.mxu0 0.0
        %6651 = vmatpush1.msra.mxu0 0.0
        %6652 = vmatprep.subr.mxu0 0.0
        %6653 = vmatpush1.msra.mxu0 0.0
        %6654 = vmatprep.subr.mxu0 0.0
        %6655 = vmatpush1.msra.mxu0 0.0
        %6656 = vmatprep.subr.mxu0 0.0
        %6657 = vmatpush1.msra.mxu0 0.0
        %6658 = vmatprep.subr.mxu0 0.0
        %6659 = vmatpush1.msra.mxu0 0.0
        %6660 = vmatprep.subr.mxu0 0.0
        %6661 = vmatpush1.msra.mxu0 0.0
        %6662 = vmatprep.subr.mxu0 0.0
        %6663 = vmatpush1.msra.mxu0 0.0
        %6664 = vmatprep.subr.mxu0 0.0
        %6665 = vmatpush1.msra.mxu0 0.0
        %6666 = vmatprep.subr.mxu0 0.0
        %6667 = vmatpush1.msra.mxu0 0.0
        %6668 = vmatprep.subr.mxu0 0.0
        %6669 = vmatpush1.msra.mxu0 0.0
        %6670 = vmatprep.subr.mxu0 0.0
        %6671 = vmatpush1.msra.mxu0 0.0
        %6672 = vmatprep.subr.mxu0 0.0
        %6673 = vmatpush1.msra.mxu0 0.0
        %6674 = vmatprep.subr.mxu0 0.0
        %6675 = vmatpush1.msra.mxu0 0.0
        %6676 = vmatprep.subr.mxu0 0.0
        %6677 = vmatpush1.msra.mxu0 %v6641
        %6678 = vmatprep.subr.mxu0 0.0
        %6679 = vmatpush2.msra.mxu0 0.0
        %6680 = vmatprep.subr.mxu0 0.0
        %6681 = vmatpush2.msra.mxu0 0.0
        %6682 = vmatprep.subr.mxu0 0.0
        %6683 = vmatpush2.msra.mxu0 0.0
        %6684 = vmatprep.subr.mxu0 0.0
        %6685 = vmatpush2.msra.mxu0 0.0
        %6686 = vmatprep.subr.mxu0 0.0
        %6687 = vmatpush2.msra.mxu0 0.0
        %6688 = vmatprep.subr.mxu0 0.0
        %6689 = vmatpush2.msra.mxu0 0.0
        %6690 = vmatprep.subr.mxu0 0.0
        %6691 = vmatpush2.msra.mxu0 0.0
        %6692 = vmatprep.subr.mxu0 0.0
        %6693 = vmatpush2.msra.mxu0 0.0
        %6694 = vmatprep.subr.mxu0 0.0
        %6695 = vmatpush2.msra.mxu0 0.0
        %6696 = vmatprep.subr.mxu0 0.0
        %6697 = vmatpush2.msra.mxu0 0.0
        %6698 = vmatprep.subr.mxu0 0.0
        %6699 = vmatpush2.msra.mxu0 0.0
        %6700 = vmatprep.subr.mxu0 0.0
        %6701 = vmatpush2.msra.mxu0 0.0
        %6702 = vmatprep.subr.mxu0 0.0
        %6703 = vmatpush2.msra.mxu0 0.0
        %6704 = vmatprep.subr.mxu0 0.0
        %6705 = vmatpush2.msra.mxu0 0.0
        %6706 = vmatprep.subr.mxu0 0.0
        %6707 = vmatpush2.msra.mxu0 0.0
        %6708 = vmatprep.subr.mxu0 0.0
        %6709 = vmatpush2.msra.mxu0 0.0
        %6710 = vmatprep.mubr.f32.mxu0 0.0
        %6711 = vmatmul.mubr.f32.gmra.mxu0 %v6644
        %v6712 = vpop.f32.mrf.mxu0
        %v6713 = vadd.f32 0.0, %v6712
        %v6714 = vpop.f32.mrf.mxu0
        %6715 = vdwg.mxu0
        %v6717 = vsel %vm1069, %v6713, 0
        %6719 = vmatprep.subr.mxu0 0.0
        %6720 = vmatpush1.msra.mxu0 0.0
        %6721 = vmatprep.subr.mxu0 0.0
        %6722 = vmatpush1.msra.mxu0 0.0
        %6723 = vmatprep.subr.mxu0 0.0
        %6724 = vmatpush1.msra.mxu0 0.0
        %6725 = vmatprep.subr.mxu0 0.0
        %6726 = vmatpush1.msra.mxu0 0.0
        %6727 = vmatprep.subr.mxu0 0.0
        %6728 = vmatpush1.msra.mxu0 0.0
        %6729 = vmatprep.subr.mxu0 0.0
        %6730 = vmatpush1.msra.mxu0 0.0
        %6731 = vmatprep.subr.mxu0 0.0
        %6732 = vmatpush1.msra.mxu0 0.0
        %6733 = vmatprep.subr.mxu0 0.0
        %6734 = vmatpush1.msra.mxu0 0.0
        %6735 = vmatprep.subr.mxu0 0.0
        %6736 = vmatpush1.msra.mxu0 0.0
        %6737 = vmatprep.subr.mxu0 0.0
        %6738 = vmatpush1.msra.mxu0 0.0
        %6739 = vmatprep.subr.mxu0 0.0
        %6740 = vmatpush1.msra.mxu0 0.0
        %6741 = vmatprep.subr.mxu0 0.0
        %6742 = vmatpush1.msra.mxu0 0.0
        %6743 = vmatprep.subr.mxu0 0.0
        %6744 = vmatpush1.msra.mxu0 0.0
        %6745 = vmatprep.subr.mxu0 0.0
        %6746 = vmatpush1.msra.mxu0 0.0
        %6747 = vmatprep.subr.mxu0 0.0
        %6748 = vmatpush1.msra.mxu0 %v6075
        %6749 = vmatprep.subr.mxu0 0.0
        %6750 = vmatpush1.msra.mxu0 %v6074
        %6751 = vmatprep.subr.mxu0 0.0
        %6752 = vmatpush2.msra.mxu0 0.0
        %6753 = vmatprep.subr.mxu0 0.0
        %6754 = vmatpush2.msra.mxu0 0.0
        %6755 = vmatprep.subr.mxu0 0.0
        %6756 = vmatpush2.msra.mxu0 0.0
        %6757 = vmatprep.subr.mxu0 0.0
        %6758 = vmatpush2.msra.mxu0 0.0
        %6759 = vmatprep.subr.mxu0 0.0
        %6760 = vmatpush2.msra.mxu0 0.0
        %6761 = vmatprep.subr.mxu0 0.0
        %6762 = vmatpush2.msra.mxu0 0.0
        %6763 = vmatprep.subr.mxu0 0.0
        %6764 = vmatpush2.msra.mxu0 0.0
        %6765 = vmatprep.subr.mxu0 0.0
        %6766 = vmatpush2.msra.mxu0 0.0
        %6767 = vmatprep.subr.mxu0 0.0
        %6768 = vmatpush2.msra.mxu0 0.0
        %6769 = vmatprep.subr.mxu0 0.0
        %6770 = vmatpush2.msra.mxu0 0.0
        %6771 = vmatprep.subr.mxu0 0.0
        %6772 = vmatpush2.msra.mxu0 0.0
        %6773 = vmatprep.subr.mxu0 0.0
        %6774 = vmatpush2.msra.mxu0 0.0
        %6775 = vmatprep.subr.mxu0 0.0
        %6776 = vmatpush2.msra.mxu0 0.0
        %6777 = vmatprep.subr.mxu0 0.0
        %6778 = vmatpush2.msra.mxu0 0.0
        %6779 = vmatprep.subr.mxu0 0.0
        %6780 = vmatpush2.msra.mxu0 0.0
        %6781 = vmatprep.subr.mxu0 0.0
        %6782 = vmatpush2.msra.mxu0 0.0
        %6783 = vmatprep.mubr.f32.mxu0 0.0
        %6784 = vmatmul.mubr.f32.gmra.mxu0 %v6717
        %v6785 = vpop.f32.mrf.mxu0
        %v6786 = vadd.f32 0.0, %v6785
        %v6787 = vpop.f32.mrf.mxu0
        %6788 = vdwg.mxu0
        %v6789 = vadd.f32 %v6548, %v6786
        %6790 = vrot.lane.b32.xlu0 %v6065, 80
        %v6791 = vpop.permute.xlu0 %6790
        %6792 = vrot.lane.b32.xlu0 %v6065, 16
        %v6793 = vpop.permute.xlu0 %6792
        %v6794 = vsel %vm1069, %v6791, 0
        %v6796 = vsel %vm1069, %v6793, 0
        %6798 = vmatprep.subr.mxu0 0.0
        %6799 = vmatpush1.xpose.msra.mxu0 0.0
        %6800 = vmatprep.subr.mxu0 0.0
        %6801 = vmatpush1.xpose.msra.mxu0 0.0
        %6802 = vmatprep.subr.mxu0 0.0
        %6803 = vmatpush1.xpose.msra.mxu0 0.0
        %6804 = vmatprep.subr.mxu0 0.0
        %6805 = vmatpush1.xpose.msra.mxu0 0.0
        %6806 = vmatprep.subr.mxu0 0.0
        %6807 = vmatpush1.xpose.msra.mxu0 0.0
        %6808 = vmatprep.subr.mxu0 0.0
        %6809 = vmatpush1.xpose.msra.mxu0 0.0
        %6810 = vmatprep.subr.mxu0 0.0
        %6811 = vmatpush1.xpose.msra.mxu0 0.0
        %6812 = vmatprep.subr.mxu0 0.0
        %6813 = vmatpush1.xpose.msra.mxu0 0.0
        %6814 = vmatprep.subr.mxu0 0.0
        %6815 = vmatpush1.xpose.msra.mxu0 0.0
        %6816 = vmatprep.subr.mxu0 0.0
        %6817 = vmatpush1.xpose.msra.mxu0 0.0
        %6818 = vmatprep.subr.mxu0 0.0
        %6819 = vmatpush1.xpose.msra.mxu0 0.0
        %6820 = vmatprep.subr.mxu0 0.0
        %6821 = vmatpush1.xpose.msra.mxu0 0.0
        %6822 = vmatprep.subr.mxu0 0.0
        %6823 = vmatpush1.xpose.msra.mxu0 0.0
        %6824 = vmatprep.subr.mxu0 0.0
        %6825 = vmatpush1.xpose.msra.mxu0 0.0
        %6826 = vmatprep.subr.mxu0 0.0
        %6827 = vmatpush1.xpose.msra.mxu0 0.0
        %6828 = vmatprep.subr.mxu0 0.0
        %6829 = vmatpush1.xpose.msra.mxu0 %v6796
        %6830 = vmatprep.subr.mxu0 0.0
        %6831 = vmatpush2.xpose.msra.mxu0 0.0
        %6832 = vmatprep.subr.mxu0 0.0
        %6833 = vmatpush2.xpose.msra.mxu0 0.0
        %6834 = vmatprep.subr.mxu0 0.0
        %6835 = vmatpush2.xpose.msra.mxu0 0.0
        %6836 = vmatprep.subr.mxu0 0.0
        %6837 = vmatpush2.xpose.msra.mxu0 0.0
        %6838 = vmatprep.subr.mxu0 0.0
        %6839 = vmatpush2.xpose.msra.mxu0 0.0
        %6840 = vmatprep.subr.mxu0 0.0
        %6841 = vmatpush2.xpose.msra.mxu0 0.0
        %6842 = vmatprep.subr.mxu0 0.0
        %6843 = vmatpush2.xpose.msra.mxu0 0.0
        %6844 = vmatprep.subr.mxu0 0.0
        %6845 = vmatpush2.xpose.msra.mxu0 0.0
        %6846 = vmatprep.subr.mxu0 0.0
        %6847 = vmatpush2.xpose.msra.mxu0 0.0
        %6848 = vmatprep.subr.mxu0 0.0
        %6849 = vmatpush2.xpose.msra.mxu0 0.0
        %6850 = vmatprep.subr.mxu0 0.0
        %6851 = vmatpush2.xpose.msra.mxu0 0.0
        %6852 = vmatprep.subr.mxu0 0.0
        %6853 = vmatpush2.xpose.msra.mxu0 0.0
        %6854 = vmatprep.subr.mxu0 0.0
        %6855 = vmatpush2.xpose.msra.mxu0 0.0
        %6856 = vmatprep.subr.mxu0 0.0
        %6857 = vmatpush2.xpose.msra.mxu0 0.0
        %6858 = vmatprep.subr.mxu0 0.0
        %6859 = vmatpush2.xpose.msra.mxu0 0.0
        %6860 = vmatprep.subr.mxu0 0.0
        %6861 = vmatpush2.xpose.msra.mxu0 0.0
        %6862 = vmatprep.mubr.f32.mxu0 0.0
        %6863 = vmatmul.mubr.f32.gmra.mxu0 %v6794
        %v6864 = vpop.f32.mrf.mxu0
        %v6865 = vadd.f32 %v4396, %v6864
        %v6866 = vpop.f32.mrf.mxu0
        %6867 = vdwg.mxu0
        %v6868 = vsel %vm1144, %v6865, -inf
        %6869 = vmax.xlane.f32.xlu0 %v6868
        %v6870 = vpop.xlane.xlu0 %6869
        %v6871 = vsub.f32 %v6865, %v6870
        %v6872 = vmul.f32 %v6871, 1.442695
        %v6873 = vpow.pop %v6872
        %v6874 = vsel %vm1144, %v6873, 0.0
        %6875 = vadd.xlane.f32.xlu0 %v6874
        %v6876 = vpop.xlane.xlu0 %6875
        %v6877 = vrcp.pop %v6876
        %v6878 = vmul.f32 %v6873, %v6877
        %6879 = vrot.lane.b32.xlu0 %v6067, 80
        %v6880 = vpop.permute.xlu0 %6879
        %v6883 = vsel %vm1144, %v6878, 0
        %6885 = vmatprep.subr.mxu0 0.0
        %6886 = vmatpush1.msra.mxu0 0.0
        %6887 = vmatprep.subr.mxu0 0.0
        %6888 = vmatpush1.msra.mxu0 0.0
        %6889 = vmatprep.subr.mxu0 0.0
        %6890 = vmatpush1.msra.mxu0 0.0
        %6891 = vmatprep.subr.mxu0 0.0
        %6892 = vmatpush1.msra.mxu0 0.0
        %6893 = vmatprep.subr.mxu0 0.0
        %6894 = vmatpush1.msra.mxu0 0.0
        %6895 = vmatprep.subr.mxu0 0.0
        %6896 = vmatpush1.msra.mxu0 0.0
        %6897 = vmatprep.subr.mxu0 0.0
        %6898 = vmatpush1.msra.mxu0 0.0
        %6899 = vmatprep.subr.mxu0 0.0
        %6900 = vmatpush1.msra.mxu0 0.0
        %6901 = vmatprep.subr.mxu0 0.0
        %6902 = vmatpush1.msra.mxu0 0.0
        %6903 = vmatprep.subr.mxu0 0.0
        %6904 = vmatpush1.msra.mxu0 0.0
        %6905 = vmatprep.subr.mxu0 0.0
        %6906 = vmatpush1.msra.mxu0 0.0
        %6907 = vmatprep.subr.mxu0 0.0
        %6908 = vmatpush1.msra.mxu0 0.0
        %6909 = vmatprep.subr.mxu0 0.0
        %6910 = vmatpush1.msra.mxu0 0.0
        %6911 = vmatprep.subr.mxu0 0.0
        %6912 = vmatpush1.msra.mxu0 0.0
        %6913 = vmatprep.subr.mxu0 0.0
        %6914 = vmatpush1.msra.mxu0 0.0
        %6915 = vmatprep.subr.mxu0 0.0
        %6916 = vmatpush1.msra.mxu0 %v6880
        %6917 = vmatprep.subr.mxu0 0.0
        %6918 = vmatpush2.msra.mxu0 0.0
        %6919 = vmatprep.subr.mxu0 0.0
        %6920 = vmatpush2.msra.mxu0 0.0
        %6921 = vmatprep.subr.mxu0 0.0
        %6922 = vmatpush2.msra.mxu0 0.0
        %6923 = vmatprep.subr.mxu0 0.0
        %6924 = vmatpush2.msra.mxu0 0.0
        %6925 = vmatprep.subr.mxu0 0.0
        %6926 = vmatpush2.msra.mxu0 0.0
        %6927 = vmatprep.subr.mxu0 0.0
        %6928 = vmatpush2.msra.mxu0 0.0
        %6929 = vmatprep.subr.mxu0 0.0
        %6930 = vmatpush2.msra.mxu0 0.0
        %6931 = vmatprep.subr.mxu0 0.0
        %6932 = vmatpush2.msra.mxu0 0.0
        %6933 = vmatprep.subr.mxu0 0.0
        %6934 = vmatpush2.msra.mxu0 0.0
        %6935 = vmatprep.subr.mxu0 0.0
        %6936 = vmatpush2.msra.mxu0 0.0
        %6937 = vmatprep.subr.mxu0 0.0
        %6938 = vmatpush2.msra.mxu0 0.0
        %6939 = vmatprep.subr.mxu0 0.0
        %6940 = vmatpush2.msra.mxu0 0.0
        %6941 = vmatprep.subr.mxu0 0.0
        %6942 = vmatpush2.msra.mxu0 0.0
        %6943 = vmatprep.subr.mxu0 0.0
        %6944 = vmatpush2.msra.mxu0 0.0
        %6945 = vmatprep.subr.mxu0 0.0
        %6946 = vmatpush2.msra.mxu0 0.0
        %6947 = vmatprep.subr.mxu0 0.0
        %6948 = vmatpush2.msra.mxu0 0.0
        %6949 = vmatprep.mubr.f32.mxu0 0.0
        %6950 = vmatmul.mubr.f32.gmra.mxu0 %v6883
        %v6951 = vpop.f32.mrf.mxu0
        %v6952 = vadd.f32 0.0, %v6951
        %v6953 = vpop.f32.mrf.mxu0
        %6954 = vdwg.mxu0
        %v6956 = vsel %vm1069, %v6952, 0
        %6958 = vmatprep.subr.mxu0 0.0
        %6959 = vmatpush1.msra.mxu0 0.0
        %6960 = vmatprep.subr.mxu0 0.0
        %6961 = vmatpush1.msra.mxu0 0.0
        %6962 = vmatprep.subr.mxu0 0.0
        %6963 = vmatpush1.msra.mxu0 0.0
        %6964 = vmatprep.subr.mxu0 0.0
        %6965 = vmatpush1.msra.mxu0 0.0
        %6966 = vmatprep.subr.mxu0 0.0
        %6967 = vmatpush1.msra.mxu0 0.0
        %6968 = vmatprep.subr.mxu0 0.0
        %6969 = vmatpush1.msra.mxu0 0.0
        %6970 = vmatprep.subr.mxu0 0.0
        %6971 = vmatpush1.msra.mxu0 0.0
        %6972 = vmatprep.subr.mxu0 0.0
        %6973 = vmatpush1.msra.mxu0 0.0
        %6974 = vmatprep.subr.mxu0 0.0
        %6975 = vmatpush1.msra.mxu0 0.0
        %6976 = vmatprep.subr.mxu0 0.0
        %6977 = vmatpush1.msra.mxu0 0.0
        %6978 = vmatprep.subr.mxu0 0.0
        %6979 = vmatpush1.msra.mxu0 0.0
        %6980 = vmatprep.subr.mxu0 0.0
        %6981 = vmatpush1.msra.mxu0 0.0
        %6982 = vmatprep.subr.mxu0 0.0
        %6983 = vmatpush1.msra.mxu0 0.0
        %6984 = vmatprep.subr.mxu0 0.0
        %6985 = vmatpush1.msra.mxu0 0.0
        %6986 = vmatprep.subr.mxu0 0.0
        %6987 = vmatpush1.msra.mxu0 %v6077
        %6988 = vmatprep.subr.mxu0 0.0
        %6989 = vmatpush1.msra.mxu0 %v6076
        %6990 = vmatprep.subr.mxu0 0.0
        %6991 = vmatpush2.msra.mxu0 0.0
        %6992 = vmatprep.subr.mxu0 0.0
        %6993 = vmatpush2.msra.mxu0 0.0
        %6994 = vmatprep.subr.mxu0 0.0
        %6995 = vmatpush2.msra.mxu0 0.0
        %6996 = vmatprep.subr.mxu0 0.0
        %6997 = vmatpush2.msra.mxu0 0.0
        %6998 = vmatprep.subr.mxu0 0.0
        %6999 = vmatpush2.msra.mxu0 0.0
        %7000 = vmatprep.subr.mxu0 0.0
        %7001 = vmatpush2.msra.mxu0 0.0
        %7002 = vmatprep.subr.mxu0 0.0
        %7003 = vmatpush2.msra.mxu0 0.0
        %7004 = vmatprep.subr.mxu0 0.0
        %7005 = vmatpush2.msra.mxu0 0.0
        %7006 = vmatprep.subr.mxu0 0.0
        %7007 = vmatpush2.msra.mxu0 0.0
        %7008 = vmatprep.subr.mxu0 0.0
        %7009 = vmatpush2.msra.mxu0 0.0
        %7010 = vmatprep.subr.mxu0 0.0
        %7011 = vmatpush2.msra.mxu0 0.0
        %7012 = vmatprep.subr.mxu0 0.0
        %7013 = vmatpush2.msra.mxu0 0.0
        %7014 = vmatprep.subr.mxu0 0.0
        %7015 = vmatpush2.msra.mxu0 0.0
        %7016 = vmatprep.subr.mxu0 0.0
        %7017 = vmatpush2.msra.mxu0 0.0
        %7018 = vmatprep.subr.mxu0 0.0
        %7019 = vmatpush2.msra.mxu0 0.0
        %7020 = vmatprep.subr.mxu0 0.0
        %7021 = vmatpush2.msra.mxu0 0.0
        %7022 = vmatprep.mubr.f32.mxu0 0.0
        %7023 = vmatmul.mubr.f32.gmra.mxu0 %v6956
        %v7024 = vpop.f32.mrf.mxu0
        %v7025 = vadd.f32 0.0, %v7024
        %v7026 = vpop.f32.mrf.mxu0
        %7027 = vdwg.mxu0
        %v7028 = vadd.f32 %v6789, %v7025
        %v7029 = vadd.f32 %v5960, %v7028
        %s7030 = scalar_lea.vmem %s16, 1
        %v7031 = vld [vmem:[%s7030] sm:$0x1]
        %v7032 = vmul.f32 %v7029, %v7029
        %v7033 = vsel %vm944, %v7032, 0.0
        %7034 = vadd.xlane.f32.xlu0 %v7033
        %v7035 = vpop.xlane.xlu0 %7034
        %v7036 = vmul.f32 %v7035, %v948
        %v7037 = vadd.f32 %v7036, 1e-06
        %v7038 = vrsqrt.pop %v7037
        %v7039 = vmul.f32 %v7029, %v7038
        %v7041 = vlaneseq
        %v7042 = vshrl.u32 %v7041, 7
        %v7043 = vsub.s32 0, %v7042
        %v7044 = vrot.slane %v7031, %v7043
        %v7046 = vmul.f32 %v7039, %v7044
        %s7047 = scalar_lea.vmem %s17, 64
        %v7048 = vld [vmem:[%s7047] sm:$0xff]
        %v7049 = vld [vmem:[%s7047 + $0x8] sm:$0xff]
        %v7050 = vld [vmem:[%s7047 + $0x10] sm:$0xff]
        %v7051 = vld [vmem:[%s7047 + $0x18] sm:$0xff]
        %v7052 = vld [vmem:[%s7047 + $0x20] sm:$0xff]
        %v7053 = vld [vmem:[%s7047 + $0x28] sm:$0xff]
        %v7054 = vld [vmem:[%s7047 + $0x30] sm:$0xff]
        %v7055 = vld [vmem:[%s7047 + $0x38] sm:$0xff]
        %v7057 = vsel %vm944, %v7046, 0
        %7059 = vmatprep.subr.mxu0 0.0
        %7060 = vmatpush1.msra.mxu0 0.0
        %7061 = vmatprep.subr.mxu0 0.0
        %7062 = vmatpush1.msra.mxu0 0.0
        %7063 = vmatprep.subr.mxu0 0.0
        %7064 = vmatpush1.msra.mxu0 0.0
        %7065 = vmatprep.subr.mxu0 0.0
        %7066 = vmatpush1.msra.mxu0 0.0
        %7067 = vmatprep.subr.mxu0 0.0
        %7068 = vmatpush1.msra.mxu0 0.0
        %7069 = vmatprep.subr.mxu0 0.0
        %7070 = vmatpush1.msra.mxu0 0.0
        %7071 = vmatprep.subr.mxu0 0.0
        %7072 = vmatpush1.msra.mxu0 0.0
        %7073 = vmatprep.subr.mxu0 0.0
        %7074 = vmatpush1.msra.mxu0 0.0
        %7075 = vmatprep.subr.mxu0 0.0
        %7076 = vmatpush1.msra.mxu0 %v7055
        %7077 = vmatprep.subr.mxu0 0.0
        %7078 = vmatpush1.msra.mxu0 %v7054
        %7079 = vmatprep.subr.mxu0 0.0
        %7080 = vmatpush1.msra.mxu0 %v7053
        %7081 = vmatprep.subr.mxu0 0.0
        %7082 = vmatpush1.msra.mxu0 %v7052
        %7083 = vmatprep.subr.mxu0 0.0
        %7084 = vmatpush1.msra.mxu0 %v7051
        %7085 = vmatprep.subr.mxu0 0.0
        %7086 = vmatpush1.msra.mxu0 %v7050
        %7087 = vmatprep.subr.mxu0 0.0
        %7088 = vmatpush1.msra.mxu0 %v7049
        %7089 = vmatprep.subr.mxu0 0.0
        %7090 = vmatpush1.msra.mxu0 %v7048
        %7091 = vmatprep.subr.mxu0 0.0
        %7092 = vmatpush2.msra.mxu0 0.0
        %7093 = vmatprep.subr.mxu0 0.0
        %7094 = vmatpush2.msra.mxu0 0.0
        %7095 = vmatprep.subr.mxu0 0.0
        %7096 = vmatpush2.msra.mxu0 0.0
        %7097 = vmatprep.subr.mxu0 0.0
        %7098 = vmatpush2.msra.mxu0 0.0
        %7099 = vmatprep.subr.mxu0 0.0
        %7100 = vmatpush2.msra.mxu0 0.0
        %7101 = vmatprep.subr.mxu0 0.0
        %7102 = vmatpush2.msra.mxu0 0.0
        %7103 = vmatprep.subr.mxu0 0.0
        %7104 = vmatpush2.msra.mxu0 0.0
        %7105 = vmatprep.subr.mxu0 0.0
        %7106 = vmatpush2.msra.mxu0 0.0
        %7107 = vmatprep.subr.mxu0 0.0
        %7108 = vmatpush2.msra.mxu0 0.0
        %7109 = vmatprep.subr.mxu0 0.0
        %7110 = vmatpush2.msra.mxu0 0.0
        %7111 = vmatprep.subr.mxu0 0.0
        %7112 = vmatpush2.msra.mxu0 0.0
        %7113 = vmatprep.subr.mxu0 0.0
        %7114 = vmatpush2.msra.mxu0 0.0
        %7115 = vmatprep.subr.mxu0 0.0
        %7116 = vmatpush2.msra.mxu0 0.0
        %7117 = vmatprep.subr.mxu0 0.0
        %7118 = vmatpush2.msra.mxu0 0.0
        %7119 = vmatprep.subr.mxu0 0.0
        %7120 = vmatpush2.msra.mxu0 0.0
        %7121 = vmatprep.subr.mxu0 0.0
        %7122 = vmatpush2.msra.mxu0 0.0
        %7123 = vmatprep.mubr.f32.mxu0 0.0
        %7124 = vmatmul.mubr.f32.gmra.mxu0 %v7057
        %v7125 = vpop.f32.mrf.mxu0
        %v7126 = vadd.f32 0.0, %v7125
        %v7127 = vpop.f32.mrf.mxu0
        %7128 = vdwg.mxu0
        %s7129 = scalar_lea.vmem %s18, 64
        %v7130 = vld [vmem:[%s7129] sm:$0xff]
        %v7131 = vld [vmem:[%s7129 + $0x8] sm:$0xff]
        %v7132 = vld [vmem:[%s7129 + $0x10] sm:$0xff]
        %v7133 = vld [vmem:[%s7129 + $0x18] sm:$0xff]
        %v7134 = vld [vmem:[%s7129 + $0x20] sm:$0xff]
        %v7135 = vld [vmem:[%s7129 + $0x28] sm:$0xff]
        %v7136 = vld [vmem:[%s7129 + $0x30] sm:$0xff]
        %v7137 = vld [vmem:[%s7129 + $0x38] sm:$0xff]
        %7138 = vmatprep.subr.mxu0 0.0
        %7139 = vmatpush1.msra.mxu0 0.0
        %7140 = vmatprep.subr.mxu0 0.0
        %7141 = vmatpush1.msra.mxu0 0.0
        %7142 = vmatprep.subr.mxu0 0.0
        %7143 = vmatpush1.msra.mxu0 0.0
        %7144 = vmatprep.subr.mxu0 0.0
        %7145 = vmatpush1.msra.mxu0 0.0
        %7146 = vmatprep.subr.mxu0 0.0
        %7147 = vmatpush1.msra.mxu0 0.0
        %7148 = vmatprep.subr.mxu0 0.0
        %7149 = vmatpush1.msra.mxu0 0.0
        %7150 = vmatprep.subr.mxu0 0.0
        %7151 = vmatpush1.msra.mxu0 0.0
        %7152 = vmatprep.subr.mxu0 0.0
        %7153 = vmatpush1.msra.mxu0 0.0
        %7154 = vmatprep.subr.mxu0 0.0
        %7155 = vmatpush1.msra.mxu0 %v7137
        %7156 = vmatprep.subr.mxu0 0.0
        %7157 = vmatpush1.msra.mxu0 %v7136
        %7158 = vmatprep.subr.mxu0 0.0
        %7159 = vmatpush1.msra.mxu0 %v7135
        %7160 = vmatprep.subr.mxu0 0.0
        %7161 = vmatpush1.msra.mxu0 %v7134
        %7162 = vmatprep.subr.mxu0 0.0
        %7163 = vmatpush1.msra.mxu0 %v7133
        %7164 = vmatprep.subr.mxu0 0.0
        %7165 = vmatpush1.msra.mxu0 %v7132
        %7166 = vmatprep.subr.mxu0 0.0
        %7167 = vmatpush1.msra.mxu0 %v7131
        %7168 = vmatprep.subr.mxu0 0.0
        %7169 = vmatpush1.msra.mxu0 %v7130
        %7170 = vmatprep.subr.mxu0 0.0
        %7171 = vmatpush2.msra.mxu0 0.0
        %7172 = vmatprep.subr.mxu0 0.0
        %7173 = vmatpush2.msra.mxu0 0.0
        %7174 = vmatprep.subr.mxu0 0.0
        %7175 = vmatpush2.msra.mxu0 0.0
        %7176 = vmatprep.subr.mxu0 0.0
        %7177 = vmatpush2.msra.mxu0 0.0
        %7178 = vmatprep.subr.mxu0 0.0
        %7179 = vmatpush2.msra.mxu0 0.0
        %7180 = vmatprep.subr.mxu0 0.0
        %7181 = vmatpush2.msra.mxu0 0.0
        %7182 = vmatprep.subr.mxu0 0.0
        %7183 = vmatpush2.msra.mxu0 0.0
        %7184 = vmatprep.subr.mxu0 0.0
        %7185 = vmatpush2.msra.mxu0 0.0
        %7186 = vmatprep.subr.mxu0 0.0
        %7187 = vmatpush2.msra.mxu0 0.0
        %7188 = vmatprep.subr.mxu0 0.0
        %7189 = vmatpush2.msra.mxu0 0.0
        %7190 = vmatprep.subr.mxu0 0.0
        %7191 = vmatpush2.msra.mxu0 0.0
        %7192 = vmatprep.subr.mxu0 0.0
        %7193 = vmatpush2.msra.mxu0 0.0
        %7194 = vmatprep.subr.mxu0 0.0
        %7195 = vmatpush2.msra.mxu0 0.0
        %7196 = vmatprep.subr.mxu0 0.0
        %7197 = vmatpush2.msra.mxu0 0.0
        %7198 = vmatprep.subr.mxu0 0.0
        %7199 = vmatpush2.msra.mxu0 0.0
        %7200 = vmatprep.subr.mxu0 0.0
        %7201 = vmatpush2.msra.mxu0 0.0
        %7202 = vmatprep.mubr.f32.mxu0 0.0
        %7203 = vmatmul.mubr.f32.gmra.mxu0 %v4743
        %v7204 = vpop.f32.mrf.mxu0
        %v7205 = vadd.f32 0.0, %v7204
        %v7206 = vpop.f32.mrf.mxu0
        %7207 = vdwg.mxu0
        %s7208 = scalar_lea.vmem %s19, 64
        %v7209 = vld [vmem:[%s7208] sm:$0xff]
        %v7210 = vld [vmem:[%s7208 + $0x8] sm:$0xff]
        %v7211 = vld [vmem:[%s7208 + $0x10] sm:$0xff]
        %v7212 = vld [vmem:[%s7208 + $0x18] sm:$0xff]
        %v7213 = vld [vmem:[%s7208 + $0x20] sm:$0xff]
        %v7214 = vld [vmem:[%s7208 + $0x28] sm:$0xff]
        %v7215 = vld [vmem:[%s7208 + $0x30] sm:$0xff]
        %v7216 = vld [vmem:[%s7208 + $0x38] sm:$0xff]
        %v7218 = vsel %vm1069, %v7126, 0
        %v7221 = vsel %vm1069, %v7205, 0
        %7223 = vmatprep.subr.mxu0 0.0
        %7224 = vmatpush1.xpose.msra.mxu0 0.0
        %7225 = vmatprep.subr.mxu0 0.0
        %7226 = vmatpush1.xpose.msra.mxu0 0.0
        %7227 = vmatprep.subr.mxu0 0.0
        %7228 = vmatpush1.xpose.msra.mxu0 0.0
        %7229 = vmatprep.subr.mxu0 0.0
        %7230 = vmatpush1.xpose.msra.mxu0 0.0
        %7231 = vmatprep.subr.mxu0 0.0
        %7232 = vmatpush1.xpose.msra.mxu0 0.0
        %7233 = vmatprep.subr.mxu0 0.0
        %7234 = vmatpush1.xpose.msra.mxu0 0.0
        %7235 = vmatprep.subr.mxu0 0.0
        %7236 = vmatpush1.xpose.msra.mxu0 0.0
        %7237 = vmatprep.subr.mxu0 0.0
        %7238 = vmatpush1.xpose.msra.mxu0 0.0
        %7239 = vmatprep.subr.mxu0 0.0
        %7240 = vmatpush1.xpose.msra.mxu0 0.0
        %7241 = vmatprep.subr.mxu0 0.0
        %7242 = vmatpush1.xpose.msra.mxu0 0.0
        %7243 = vmatprep.subr.mxu0 0.0
        %7244 = vmatpush1.xpose.msra.mxu0 0.0
        %7245 = vmatprep.subr.mxu0 0.0
        %7246 = vmatpush1.xpose.msra.mxu0 0.0
        %7247 = vmatprep.subr.mxu0 0.0
        %7248 = vmatpush1.xpose.msra.mxu0 0.0
        %7249 = vmatprep.subr.mxu0 0.0
        %7250 = vmatpush1.xpose.msra.mxu0 0.0
        %7251 = vmatprep.subr.mxu0 0.0
        %7252 = vmatpush1.xpose.msra.mxu0 0.0
        %7253 = vmatprep.subr.mxu0 0.0
        %7254 = vmatpush1.xpose.msra.mxu0 %v7221
        %7255 = vmatprep.subr.mxu0 0.0
        %7256 = vmatpush2.xpose.msra.mxu0 0.0
        %7257 = vmatprep.subr.mxu0 0.0
        %7258 = vmatpush2.xpose.msra.mxu0 0.0
        %7259 = vmatprep.subr.mxu0 0.0
        %7260 = vmatpush2.xpose.msra.mxu0 0.0
        %7261 = vmatprep.subr.mxu0 0.0
        %7262 = vmatpush2.xpose.msra.mxu0 0.0
        %7263 = vmatprep.subr.mxu0 0.0
        %7264 = vmatpush2.xpose.msra.mxu0 0.0
        %7265 = vmatprep.subr.mxu0 0.0
        %7266 = vmatpush2.xpose.msra.mxu0 0.0
        %7267 = vmatprep.subr.mxu0 0.0
        %7268 = vmatpush2.xpose.msra.mxu0 0.0
        %7269 = vmatprep.subr.mxu0 0.0
        %7270 = vmatpush2.xpose.msra.mxu0 0.0
        %7271 = vmatprep.subr.mxu0 0.0
        %7272 = vmatpush2.xpose.msra.mxu0 0.0
        %7273 = vmatprep.subr.mxu0 0.0
        %7274 = vmatpush2.xpose.msra.mxu0 0.0
        %7275 = vmatprep.subr.mxu0 0.0
        %7276 = vmatpush2.xpose.msra.mxu0 0.0
        %7277 = vmatprep.subr.mxu0 0.0
        %7278 = vmatpush2.xpose.msra.mxu0 0.0
        %7279 = vmatprep.subr.mxu0 0.0
        %7280 = vmatpush2.xpose.msra.mxu0 0.0
        %7281 = vmatprep.subr.mxu0 0.0
        %7282 = vmatpush2.xpose.msra.mxu0 0.0
        %7283 = vmatprep.subr.mxu0 0.0
        %7284 = vmatpush2.xpose.msra.mxu0 0.0
        %7285 = vmatprep.subr.mxu0 0.0
        %7286 = vmatpush2.xpose.msra.mxu0 0.0
        %7287 = vmatprep.mubr.f32.mxu0 0.0
        %7288 = vmatmul.mubr.f32.gmra.mxu0 %v7218
        %v7289 = vpop.f32.mrf.mxu0
        %v7290 = vadd.f32 %v1063, %v7289
        %v7291 = vpop.f32.mrf.mxu0
        %7292 = vdwg.mxu0
        %v7293 = vsel %vm1144, %v7290, -inf
        %7294 = vmax.xlane.f32.xlu0 %v7293
        %v7295 = vpop.xlane.xlu0 %7294
        %v7296 = vsub.f32 %v7290, %v7295
        %v7297 = vmul.f32 %v7296, 1.442695
        %v7298 = vpow.pop %v7297
        %v7299 = vsel %vm1144, %v7298, 0.0
        %7300 = vadd.xlane.f32.xlu0 %v7299
        %v7301 = vpop.xlane.xlu0 %7300
        %v7302 = vrcp.pop %v7301
        %v7303 = vmul.f32 %v7298, %v7302
        %7304 = vrot.lane.b32.xlu0 %v7205, 64
        %v7305 = vpop.permute.xlu0 %7304
        %v7308 = vsel %vm1144, %v7303, 0
        %7310 = vmatprep.subr.mxu0 0.0
        %7311 = vmatpush1.msra.mxu0 0.0
        %7312 = vmatprep.subr.mxu0 0.0
        %7313 = vmatpush1.msra.mxu0 0.0
        %7314 = vmatprep.subr.mxu0 0.0
        %7315 = vmatpush1.msra.mxu0 0.0
        %7316 = vmatprep.subr.mxu0 0.0
        %7317 = vmatpush1.msra.mxu0 0.0
        %7318 = vmatprep.subr.mxu0 0.0
        %7319 = vmatpush1.msra.mxu0 0.0
        %7320 = vmatprep.subr.mxu0 0.0
        %7321 = vmatpush1.msra.mxu0 0.0
        %7322 = vmatprep.subr.mxu0 0.0
        %7323 = vmatpush1.msra.mxu0 0.0
        %7324 = vmatprep.subr.mxu0 0.0
        %7325 = vmatpush1.msra.mxu0 0.0
        %7326 = vmatprep.subr.mxu0 0.0
        %7327 = vmatpush1.msra.mxu0 0.0
        %7328 = vmatprep.subr.mxu0 0.0
        %7329 = vmatpush1.msra.mxu0 0.0
        %7330 = vmatprep.subr.mxu0 0.0
        %7331 = vmatpush1.msra.mxu0 0.0
        %7332 = vmatprep.subr.mxu0 0.0
        %7333 = vmatpush1.msra.mxu0 0.0
        %7334 = vmatprep.subr.mxu0 0.0
        %7335 = vmatpush1.msra.mxu0 0.0
        %7336 = vmatprep.subr.mxu0 0.0
        %7337 = vmatpush1.msra.mxu0 0.0
        %7338 = vmatprep.subr.mxu0 0.0
        %7339 = vmatpush1.msra.mxu0 0.0
        %7340 = vmatprep.subr.mxu0 0.0
        %7341 = vmatpush1.msra.mxu0 %v7305
        %7342 = vmatprep.subr.mxu0 0.0
        %7343 = vmatpush2.msra.mxu0 0.0
        %7344 = vmatprep.subr.mxu0 0.0
        %7345 = vmatpush2.msra.mxu0 0.0
        %7346 = vmatprep.subr.mxu0 0.0
        %7347 = vmatpush2.msra.mxu0 0.0
        %7348 = vmatprep.subr.mxu0 0.0
        %7349 = vmatpush2.msra.mxu0 0.0
        %7350 = vmatprep.subr.mxu0 0.0
        %7351 = vmatpush2.msra.mxu0 0.0
        %7352 = vmatprep.subr.mxu0 0.0
        %7353 = vmatpush2.msra.mxu0 0.0
        %7354 = vmatprep.subr.mxu0 0.0
        %7355 = vmatpush2.msra.mxu0 0.0
        %7356 = vmatprep.subr.mxu0 0.0
        %7357 = vmatpush2.msra.mxu0 0.0
        %7358 = vmatprep.subr.mxu0 0.0
        %7359 = vmatpush2.msra.mxu0 0.0
        %7360 = vmatprep.subr.mxu0 0.0
        %7361 = vmatpush2.msra.mxu0 0.0
        %7362 = vmatprep.subr.mxu0 0.0
        %7363 = vmatpush2.msra.mxu0 0.0
        %7364 = vmatprep.subr.mxu0 0.0
        %7365 = vmatpush2.msra.mxu0 0.0
        %7366 = vmatprep.subr.mxu0 0.0
        %7367 = vmatpush2.msra.mxu0 0.0
        %7368 = vmatprep.subr.mxu0 0.0
        %7369 = vmatpush2.msra.mxu0 0.0
        %7370 = vmatprep.subr.mxu0 0.0
        %7371 = vmatpush2.msra.mxu0 0.0
        %7372 = vmatprep.subr.mxu0 0.0
        %7373 = vmatpush2.msra.mxu0 0.0
        %7374 = vmatprep.mubr.f32.mxu0 0.0
        %7375 = vmatmul.mubr.f32.gmra.mxu0 %v7308
        %v7376 = vpop.f32.mrf.mxu0
        %v7377 = vadd.f32 0.0, %v7376
        %v7378 = vpop.f32.mrf.mxu0
        %7379 = vdwg.mxu0
        %7380 = vrot.lane.b32.xlu0 %v7126, 112
        %v7381 = vpop.permute.xlu0 %7380
        %7382 = vrot.lane.b32.xlu0 %v7205, 112
        %v7383 = vpop.permute.xlu0 %7382
        %v7384 = vsel %vm1069, %v7381, 0
        %v7386 = vsel %vm1069, %v7383, 0
        %7388 = vmatprep.subr.mxu0 0.0
        %7389 = vmatpush1.xpose.msra.mxu0 0.0
        %7390 = vmatprep.subr.mxu0 0.0
        %7391 = vmatpush1.xpose.msra.mxu0 0.0
        %7392 = vmatprep.subr.mxu0 0.0
        %7393 = vmatpush1.xpose.msra.mxu0 0.0
        %7394 = vmatprep.subr.mxu0 0.0
        %7395 = vmatpush1.xpose.msra.mxu0 0.0
        %7396 = vmatprep.subr.mxu0 0.0
        %7397 = vmatpush1.xpose.msra.mxu0 0.0
        %7398 = vmatprep.subr.mxu0 0.0
        %7399 = vmatpush1.xpose.msra.mxu0 0.0
        %7400 = vmatprep.subr.mxu0 0.0
        %7401 = vmatpush1.xpose.msra.mxu0 0.0
        %7402 = vmatprep.subr.mxu0 0.0
        %7403 = vmatpush1.xpose.msra.mxu0 0.0
        %7404 = vmatprep.subr.mxu0 0.0
        %7405 = vmatpush1.xpose.msra.mxu0 0.0
        %7406 = vmatprep.subr.mxu0 0.0
        %7407 = vmatpush1.xpose.msra.mxu0 0.0
        %7408 = vmatprep.subr.mxu0 0.0
        %7409 = vmatpush1.xpose.msra.mxu0 0.0
        %7410 = vmatprep.subr.mxu0 0.0
        %7411 = vmatpush1.xpose.msra.mxu0 0.0
        %7412 = vmatprep.subr.mxu0 0.0
        %7413 = vmatpush1.xpose.msra.mxu0 0.0
        %7414 = vmatprep.subr.mxu0 0.0
        %7415 = vmatpush1.xpose.msra.mxu0 0.0
        %7416 = vmatprep.subr.mxu0 0.0
        %7417 = vmatpush1.xpose.msra.mxu0 0.0
        %7418 = vmatprep.subr.mxu0 0.0
        %7419 = vmatpush1.xpose.msra.mxu0 %v7386
        %7420 = vmatprep.subr.mxu0 0.0
        %7421 = vmatpush2.xpose.msra.mxu0 0.0
        %7422 = vmatprep.subr.mxu0 0.0
        %7423 = vmatpush2.xpose.msra.mxu0 0.0
        %7424 = vmatprep.subr.mxu0 0.0
        %7425 = vmatpush2.xpose.msra.mxu0 0.0
        %7426 = vmatprep.subr.mxu0 0.0
        %7427 = vmatpush2.xpose.msra.mxu0 0.0
        %7428 = vmatprep.subr.mxu0 0.0
        %7429 = vmatpush2.xpose.msra.mxu0 0.0
        %7430 = vmatprep.subr.mxu0 0.0
        %7431 = vmatpush2.xpose.msra.mxu0 0.0
        %7432 = vmatprep.subr.mxu0 0.0
        %7433 = vmatpush2.xpose.msra.mxu0 0.0
        %7434 = vmatprep.subr.mxu0 0.0
        %7435 = vmatpush2.xpose.msra.mxu0 0.0
        %7436 = vmatprep.subr.mxu0 0.0
        %7437 = vmatpush2.xpose.msra.mxu0 0.0
        %7438 = vmatprep.subr.mxu0 0.0
        %7439 = vmatpush2.xpose.msra.mxu0 0.0
        %7440 = vmatprep.subr.mxu0 0.0
        %7441 = vmatpush2.xpose.msra.mxu0 0.0
        %7442 = vmatprep.subr.mxu0 0.0
        %7443 = vmatpush2.xpose.msra.mxu0 0.0
        %7444 = vmatprep.subr.mxu0 0.0
        %7445 = vmatpush2.xpose.msra.mxu0 0.0
        %7446 = vmatprep.subr.mxu0 0.0
        %7447 = vmatpush2.xpose.msra.mxu0 0.0
        %7448 = vmatprep.subr.mxu0 0.0
        %7449 = vmatpush2.xpose.msra.mxu0 0.0
        %7450 = vmatprep.subr.mxu0 0.0
        %7451 = vmatpush2.xpose.msra.mxu0 0.0
        %7452 = vmatprep.mubr.f32.mxu0 0.0
        %7453 = vmatmul.mubr.f32.gmra.mxu0 %v7384
        %v7454 = vpop.f32.mrf.mxu0
        %v7455 = vadd.f32 %v1063, %v7454
        %v7456 = vpop.f32.mrf.mxu0
        %7457 = vdwg.mxu0
        %v7458 = vsel %vm1144, %v7455, -inf
        %7459 = vmax.xlane.f32.xlu0 %v7458
        %v7460 = vpop.xlane.xlu0 %7459
        %v7461 = vsub.f32 %v7455, %v7460
        %v7462 = vmul.f32 %v7461, 1.442695
        %v7463 = vpow.pop %v7462
        %v7464 = vsel %vm1144, %v7463, 0.0
        %7465 = vadd.xlane.f32.xlu0 %v7464
        %v7466 = vpop.xlane.xlu0 %7465
        %v7467 = vrcp.pop %v7466
        %v7468 = vmul.f32 %v7463, %v7467
        %7469 = vrot.lane.b32.xlu0 %v7205, 48
        %v7470 = vpop.permute.xlu0 %7469
        %v7473 = vsel %vm1144, %v7468, 0
        %7475 = vmatprep.subr.mxu0 0.0
        %7476 = vmatpush1.msra.mxu0 0.0
        %7477 = vmatprep.subr.mxu0 0.0
        %7478 = vmatpush1.msra.mxu0 0.0
        %7479 = vmatprep.subr.mxu0 0.0
        %7480 = vmatpush1.msra.mxu0 0.0
        %7481 = vmatprep.subr.mxu0 0.0
        %7482 = vmatpush1.msra.mxu0 0.0
        %7483 = vmatprep.subr.mxu0 0.0
        %7484 = vmatpush1.msra.mxu0 0.0
        %7485 = vmatprep.subr.mxu0 0.0
        %7486 = vmatpush1.msra.mxu0 0.0
        %7487 = vmatprep.subr.mxu0 0.0
        %7488 = vmatpush1.msra.mxu0 0.0
        %7489 = vmatprep.subr.mxu0 0.0
        %7490 = vmatpush1.msra.mxu0 0.0
        %7491 = vmatprep.subr.mxu0 0.0
        %7492 = vmatpush1.msra.mxu0 0.0
        %7493 = vmatprep.subr.mxu0 0.0
        %7494 = vmatpush1.msra.mxu0 0.0
        %7495 = vmatprep.subr.mxu0 0.0
        %7496 = vmatpush1.msra.mxu0 0.0
        %7497 = vmatprep.subr.mxu0 0.0
        %7498 = vmatpush1.msra.mxu0 0.0
        %7499 = vmatprep.subr.mxu0 0.0
        %7500 = vmatpush1.msra.mxu0 0.0
        %7501 = vmatprep.subr.mxu0 0.0
        %7502 = vmatpush1.msra.mxu0 0.0
        %7503 = vmatprep.subr.mxu0 0.0
        %7504 = vmatpush1.msra.mxu0 0.0
        %7505 = vmatprep.subr.mxu0 0.0
        %7506 = vmatpush1.msra.mxu0 %v7470
        %7507 = vmatprep.subr.mxu0 0.0
        %7508 = vmatpush2.msra.mxu0 0.0
        %7509 = vmatprep.subr.mxu0 0.0
        %7510 = vmatpush2.msra.mxu0 0.0
        %7511 = vmatprep.subr.mxu0 0.0
        %7512 = vmatpush2.msra.mxu0 0.0
        %7513 = vmatprep.subr.mxu0 0.0
        %7514 = vmatpush2.msra.mxu0 0.0
        %7515 = vmatprep.subr.mxu0 0.0
        %7516 = vmatpush2.msra.mxu0 0.0
        %7517 = vmatprep.subr.mxu0 0.0
        %7518 = vmatpush2.msra.mxu0 0.0
        %7519 = vmatprep.subr.mxu0 0.0
        %7520 = vmatpush2.msra.mxu0 0.0
        %7521 = vmatprep.subr.mxu0 0.0
        %7522 = vmatpush2.msra.mxu0 0.0
        %7523 = vmatprep.subr.mxu0 0.0
        %7524 = vmatpush2.msra.mxu0 0.0
        %7525 = vmatprep.subr.mxu0 0.0
        %7526 = vmatpush2.msra.mxu0 0.0
        %7527 = vmatprep.subr.mxu0 0.0
        %7528 = vmatpush2.msra.mxu0 0.0
        %7529 = vmatprep.subr.mxu0 0.0
        %7530 = vmatpush2.msra.mxu0 0.0
        %7531 = vmatprep.subr.mxu0 0.0
        %7532 = vmatpush2.msra.mxu0 0.0
        %7533 = vmatprep.subr.mxu0 0.0
        %7534 = vmatpush2.msra.mxu0 0.0
        %7535 = vmatprep.subr.mxu0 0.0
        %7536 = vmatpush2.msra.mxu0 0.0
        %7537 = vmatprep.subr.mxu0 0.0
        %7538 = vmatpush2.msra.mxu0 0.0
        %7539 = vmatprep.mubr.f32.mxu0 0.0
        %7540 = vmatmul.mubr.f32.gmra.mxu0 %v7473
        %v7541 = vpop.f32.mrf.mxu0
        %v7542 = vadd.f32 0.0, %v7541
        %v7543 = vpop.f32.mrf.mxu0
        %7544 = vdwg.mxu0
        %v7546 = vsel %vm1069, %v7542, 0
        %7548 = vmatprep.subr.mxu0 0.0
        %7549 = vmatpush1.msra.mxu0 0.0
        %7550 = vmatprep.subr.mxu0 0.0
        %7551 = vmatpush1.msra.mxu0 0.0
        %7552 = vmatprep.subr.mxu0 0.0
        %7553 = vmatpush1.msra.mxu0 0.0
        %7554 = vmatprep.subr.mxu0 0.0
        %7555 = vmatpush1.msra.mxu0 0.0
        %7556 = vmatprep.subr.mxu0 0.0
        %7557 = vmatpush1.msra.mxu0 0.0
        %7558 = vmatprep.subr.mxu0 0.0
        %7559 = vmatpush1.msra.mxu0 0.0
        %7560 = vmatprep.subr.mxu0 0.0
        %7561 = vmatpush1.msra.mxu0 0.0
        %7562 = vmatprep.subr.mxu0 0.0
        %7563 = vmatpush1.msra.mxu0 0.0
        %7564 = vmatprep.subr.mxu0 0.0
        %7565 = vmatpush1.msra.mxu0 0.0
        %7566 = vmatprep.subr.mxu0 0.0
        %7567 = vmatpush1.msra.mxu0 0.0
        %7568 = vmatprep.subr.mxu0 0.0
        %7569 = vmatpush1.msra.mxu0 0.0
        %7570 = vmatprep.subr.mxu0 0.0
        %7571 = vmatpush1.msra.mxu0 0.0
        %7572 = vmatprep.subr.mxu0 0.0
        %7573 = vmatpush1.msra.mxu0 0.0
        %7574 = vmatprep.subr.mxu0 0.0
        %7575 = vmatpush1.msra.mxu0 0.0
        %7576 = vmatprep.subr.mxu0 0.0
        %7577 = vmatpush1.msra.mxu0 %v7212
        %7578 = vmatprep.subr.mxu0 0.0
        %7579 = vmatpush1.msra.mxu0 %v7211
        %7580 = vmatprep.subr.mxu0 0.0
        %7581 = vmatpush2.msra.mxu0 0.0
        %7582 = vmatprep.subr.mxu0 0.0
        %7583 = vmatpush2.msra.mxu0 0.0
        %7584 = vmatprep.subr.mxu0 0.0
        %7585 = vmatpush2.msra.mxu0 0.0
        %7586 = vmatprep.subr.mxu0 0.0
        %7587 = vmatpush2.msra.mxu0 0.0
        %7588 = vmatprep.subr.mxu0 0.0
        %7589 = vmatpush2.msra.mxu0 0.0
        %7590 = vmatprep.subr.mxu0 0.0
        %7591 = vmatpush2.msra.mxu0 0.0
        %7592 = vmatprep.subr.mxu0 0.0
        %7593 = vmatpush2.msra.mxu0 0.0
        %7594 = vmatprep.subr.mxu0 0.0
        %7595 = vmatpush2.msra.mxu0 0.0
        %7596 = vmatprep.subr.mxu0 0.0
        %7597 = vmatpush2.msra.mxu0 0.0
        %7598 = vmatprep.subr.mxu0 0.0
        %7599 = vmatpush2.msra.mxu0 0.0
        %7600 = vmatprep.subr.mxu0 0.0
        %7601 = vmatpush2.msra.mxu0 0.0
        %7602 = vmatprep.subr.mxu0 0.0
        %7603 = vmatpush2.msra.mxu0 0.0
        %7604 = vmatprep.subr.mxu0 0.0
        %7605 = vmatpush2.msra.mxu0 0.0
        %7606 = vmatprep.subr.mxu0 0.0
        %7607 = vmatpush2.msra.mxu0 0.0
        %7608 = vmatprep.subr.mxu0 0.0
        %7609 = vmatpush2.msra.mxu0 0.0
        %7610 = vmatprep.subr.mxu0 0.0
        %7611 = vmatpush2.msra.mxu0 0.0
        %7612 = vmatprep.mubr.f32.mxu0 0.0
        %7613 = vmatmul.mubr.f32.gmra.mxu0 %v7546
        %v7614 = vpop.f32.mrf.mxu0
        %v7615 = vadd.f32 0.0, %v7614
        %v7616 = vpop.f32.mrf.mxu0
        %7617 = vdwg.mxu0
        %v7619 = vsel %vm1069, %v7377, 0
        %7621 = vmatprep.subr.mxu0 0.0
        %7622 = vmatpush1.msra.mxu0 0.0
        %7623 = vmatprep.subr.mxu0 0.0
        %7624 = vmatpush1.msra.mxu0 0.0
        %7625 = vmatprep.subr.mxu0 0.0
        %7626 = vmatpush1.msra.mxu0 0.0
        %7627 = vmatprep.subr.mxu0 0.0
        %7628 = vmatpush1.msra.mxu0 0.0
        %7629 = vmatprep.subr.mxu0 0.0
        %7630 = vmatpush1.msra.mxu0 0.0
        %7631 = vmatprep.subr.mxu0 0.0
        %7632 = vmatpush1.msra.mxu0 0.0
        %7633 = vmatprep.subr.mxu0 0.0
        %7634 = vmatpush1.msra.mxu0 0.0
        %7635 = vmatprep.subr.mxu0 0.0
        %7636 = vmatpush1.msra.mxu0 0.0
        %7637 = vmatprep.subr.mxu0 0.0
        %7638 = vmatpush1.msra.mxu0 0.0
        %7639 = vmatprep.subr.mxu0 0.0
        %7640 = vmatpush1.msra.mxu0 0.0
        %7641 = vmatprep.subr.mxu0 0.0
        %7642 = vmatpush1.msra.mxu0 0.0
        %7643 = vmatprep.subr.mxu0 0.0
        %7644 = vmatpush1.msra.mxu0 0.0
        %7645 = vmatprep.subr.mxu0 0.0
        %7646 = vmatpush1.msra.mxu0 0.0
        %7647 = vmatprep.subr.mxu0 0.0
        %7648 = vmatpush1.msra.mxu0 0.0
        %7649 = vmatprep.subr.mxu0 0.0
        %7650 = vmatpush1.msra.mxu0 %v7210
        %7651 = vmatprep.subr.mxu0 0.0
        %7652 = vmatpush1.msra.mxu0 %v7209
        %7653 = vmatprep.subr.mxu0 0.0
        %7654 = vmatpush2.msra.mxu0 0.0
        %7655 = vmatprep.subr.mxu0 0.0
        %7656 = vmatpush2.msra.mxu0 0.0
        %7657 = vmatprep.subr.mxu0 0.0
        %7658 = vmatpush2.msra.mxu0 0.0
        %7659 = vmatprep.subr.mxu0 0.0
        %7660 = vmatpush2.msra.mxu0 0.0
        %7661 = vmatprep.subr.mxu0 0.0
        %7662 = vmatpush2.msra.mxu0 0.0
        %7663 = vmatprep.subr.mxu0 0.0
        %7664 = vmatpush2.msra.mxu0 0.0
        %7665 = vmatprep.subr.mxu0 0.0
        %7666 = vmatpush2.msra.mxu0 0.0
        %7667 = vmatprep.subr.mxu0 0.0
        %7668 = vmatpush2.msra.mxu0 0.0
        %7669 = vmatprep.subr.mxu0 0.0
        %7670 = vmatpush2.msra.mxu0 0.0
        %7671 = vmatprep.subr.mxu0 0.0
        %7672 = vmatpush2.msra.mxu0 0.0
        %7673 = vmatprep.subr.mxu0 0.0
        %7674 = vmatpush2.msra.mxu0 0.0
        %7675 = vmatprep.subr.mxu0 0.0
        %7676 = vmatpush2.msra.mxu0 0.0
        %7677 = vmatprep.subr.mxu0 0.0
        %7678 = vmatpush2.msra.mxu0 0.0
        %7679 = vmatprep.subr.mxu0 0.0
        %7680 = vmatpush2.msra.mxu0 0.0
        %7681 = vmatprep.subr.mxu0 0.0
        %7682 = vmatpush2.msra.mxu0 0.0
        %7683 = vmatprep.subr.mxu0 0.0
        %7684 = vmatpush2.msra.mxu0 0.0
        %7685 = vmatprep.mubr.f32.mxu0 0.0
        %7686 = vmatmul.mubr.f32.gmra.mxu0 %v7619
        %v7687 = vpop.f32.mrf.mxu0
        %v7688 = vadd.f32 %v7615, %v7687
        %v7689 = vpop.f32.mrf.mxu0
        %7690 = vdwg.mxu0
        %7691 = vrot.lane.b32.xlu0 %v7126, 96
        %v7692 = vpop.permute.xlu0 %7691
        %7693 = vrot.lane.b32.xlu0 %v7205, 96
        %v7694 = vpop.permute.xlu0 %7693
        %v7695 = vsel %vm1069, %v7692, 0
        %v7697 = vsel %vm1069, %v7694, 0
        %7699 = vmatprep.subr.mxu0 0.0
        %7700 = vmatpush1.xpose.msra.mxu0 0.0
        %7701 = vmatprep.subr.mxu0 0.0
        %7702 = vmatpush1.xpose.msra.mxu0 0.0
        %7703 = vmatprep.subr.mxu0 0.0
        %7704 = vmatpush1.xpose.msra.mxu0 0.0
        %7705 = vmatprep.subr.mxu0 0.0
        %7706 = vmatpush1.xpose.msra.mxu0 0.0
        %7707 = vmatprep.subr.mxu0 0.0
        %7708 = vmatpush1.xpose.msra.mxu0 0.0
        %7709 = vmatprep.subr.mxu0 0.0
        %7710 = vmatpush1.xpose.msra.mxu0 0.0
        %7711 = vmatprep.subr.mxu0 0.0
        %7712 = vmatpush1.xpose.msra.mxu0 0.0
        %7713 = vmatprep.subr.mxu0 0.0
        %7714 = vmatpush1.xpose.msra.mxu0 0.0
        %7715 = vmatprep.subr.mxu0 0.0
        %7716 = vmatpush1.xpose.msra.mxu0 0.0
        %7717 = vmatprep.subr.mxu0 0.0
        %7718 = vmatpush1.xpose.msra.mxu0 0.0
        %7719 = vmatprep.subr.mxu0 0.0
        %7720 = vmatpush1.xpose.msra.mxu0 0.0
        %7721 = vmatprep.subr.mxu0 0.0
        %7722 = vmatpush1.xpose.msra.mxu0 0.0
        %7723 = vmatprep.subr.mxu0 0.0
        %7724 = vmatpush1.xpose.msra.mxu0 0.0
        %7725 = vmatprep.subr.mxu0 0.0
        %7726 = vmatpush1.xpose.msra.mxu0 0.0
        %7727 = vmatprep.subr.mxu0 0.0
        %7728 = vmatpush1.xpose.msra.mxu0 0.0
        %7729 = vmatprep.subr.mxu0 0.0
        %7730 = vmatpush1.xpose.msra.mxu0 %v7697
        %7731 = vmatprep.subr.mxu0 0.0
        %7732 = vmatpush2.xpose.msra.mxu0 0.0
        %7733 = vmatprep.subr.mxu0 0.0
        %7734 = vmatpush2.xpose.msra.mxu0 0.0
        %7735 = vmatprep.subr.mxu0 0.0
        %7736 = vmatpush2.xpose.msra.mxu0 0.0
        %7737 = vmatprep.subr.mxu0 0.0
        %7738 = vmatpush2.xpose.msra.mxu0 0.0
        %7739 = vmatprep.subr.mxu0 0.0
        %7740 = vmatpush2.xpose.msra.mxu0 0.0
        %7741 = vmatprep.subr.mxu0 0.0
        %7742 = vmatpush2.xpose.msra.mxu0 0.0
        %7743 = vmatprep.subr.mxu0 0.0
        %7744 = vmatpush2.xpose.msra.mxu0 0.0
        %7745 = vmatprep.subr.mxu0 0.0
        %7746 = vmatpush2.xpose.msra.mxu0 0.0
        %7747 = vmatprep.subr.mxu0 0.0
        %7748 = vmatpush2.xpose.msra.mxu0 0.0
        %7749 = vmatprep.subr.mxu0 0.0
        %7750 = vmatpush2.xpose.msra.mxu0 0.0
        %7751 = vmatprep.subr.mxu0 0.0
        %7752 = vmatpush2.xpose.msra.mxu0 0.0
        %7753 = vmatprep.subr.mxu0 0.0
        %7754 = vmatpush2.xpose.msra.mxu0 0.0
        %7755 = vmatprep.subr.mxu0 0.0
        %7756 = vmatpush2.xpose.msra.mxu0 0.0
        %7757 = vmatprep.subr.mxu0 0.0
        %7758 = vmatpush2.xpose.msra.mxu0 0.0
        %7759 = vmatprep.subr.mxu0 0.0
        %7760 = vmatpush2.xpose.msra.mxu0 0.0
        %7761 = vmatprep.subr.mxu0 0.0
        %7762 = vmatpush2.xpose.msra.mxu0 0.0
        %7763 = vmatprep.mubr.f32.mxu0 0.0
        %7764 = vmatmul.mubr.f32.gmra.mxu0 %v7695
        %v7765 = vpop.f32.mrf.mxu0
        %v7766 = vadd.f32 %v1063, %v7765
        %v7767 = vpop.f32.mrf.mxu0
        %7768 = vdwg.mxu0
        %v7769 = vsel %vm1144, %v7766, -inf
        %7770 = vmax.xlane.f32.xlu0 %v7769
        %v7771 = vpop.xlane.xlu0 %7770
        %v7772 = vsub.f32 %v7766, %v7771
        %v7773 = vmul.f32 %v7772, 1.442695
        %v7774 = vpow.pop %v7773
        %v7775 = vsel %vm1144, %v7774, 0.0
        %7776 = vadd.xlane.f32.xlu0 %v7775
        %v7777 = vpop.xlane.xlu0 %7776
        %v7778 = vrcp.pop %v7777
        %v7779 = vmul.f32 %v7774, %v7778
        %7780 = vrot.lane.b32.xlu0 %v7205, 32
        %v7781 = vpop.permute.xlu0 %7780
        %v7784 = vsel %vm1144, %v7779, 0
        %7786 = vmatprep.subr.mxu0 0.0
        %7787 = vmatpush1.msra.mxu0 0.0
        %7788 = vmatprep.subr.mxu0 0.0
        %7789 = vmatpush1.msra.mxu0 0.0
        %7790 = vmatprep.subr.mxu0 0.0
        %7791 = vmatpush1.msra.mxu0 0.0
        %7792 = vmatprep.subr.mxu0 0.0
        %7793 = vmatpush1.msra.mxu0 0.0
        %7794 = vmatprep.subr.mxu0 0.0
        %7795 = vmatpush1.msra.mxu0 0.0
        %7796 = vmatprep.subr.mxu0 0.0
        %7797 = vmatpush1.msra.mxu0 0.0
        %7798 = vmatprep.subr.mxu0 0.0
        %7799 = vmatpush1.msra.mxu0 0.0
        %7800 = vmatprep.subr.mxu0 0.0
        %7801 = vmatpush1.msra.mxu0 0.0
        %7802 = vmatprep.subr.mxu0 0.0
        %7803 = vmatpush1.msra.mxu0 0.0
        %7804 = vmatprep.subr.mxu0 0.0
        %7805 = vmatpush1.msra.mxu0 0.0
        %7806 = vmatprep.subr.mxu0 0.0
        %7807 = vmatpush1.msra.mxu0 0.0
        %7808 = vmatprep.subr.mxu0 0.0
        %7809 = vmatpush1.msra.mxu0 0.0
        %7810 = vmatprep.subr.mxu0 0.0
        %7811 = vmatpush1.msra.mxu0 0.0
        %7812 = vmatprep.subr.mxu0 0.0
        %7813 = vmatpush1.msra.mxu0 0.0
        %7814 = vmatprep.subr.mxu0 0.0
        %7815 = vmatpush1.msra.mxu0 0.0
        %7816 = vmatprep.subr.mxu0 0.0
        %7817 = vmatpush1.msra.mxu0 %v7781
        %7818 = vmatprep.subr.mxu0 0.0
        %7819 = vmatpush2.msra.mxu0 0.0
        %7820 = vmatprep.subr.mxu0 0.0
        %7821 = vmatpush2.msra.mxu0 0.0
        %7822 = vmatprep.subr.mxu0 0.0
        %7823 = vmatpush2.msra.mxu0 0.0
        %7824 = vmatprep.subr.mxu0 0.0
        %7825 = vmatpush2.msra.mxu0 0.0
        %7826 = vmatprep.subr.mxu0 0.0
        %7827 = vmatpush2.msra.mxu0 0.0
        %7828 = vmatprep.subr.mxu0 0.0
        %7829 = vmatpush2.msra.mxu0 0.0
        %7830 = vmatprep.subr.mxu0 0.0
        %7831 = vmatpush2.msra.mxu0 0.0
        %7832 = vmatprep.subr.mxu0 0.0
        %7833 = vmatpush2.msra.mxu0 0.0
        %7834 = vmatprep.subr.mxu0 0.0
        %7835 = vmatpush2.msra.mxu0 0.0
        %7836 = vmatprep.subr.mxu0 0.0
        %7837 = vmatpush2.msra.mxu0 0.0
        %7838 = vmatprep.subr.mxu0 0.0
        %7839 = vmatpush2.msra.mxu0 0.0
        %7840 = vmatprep.subr.mxu0 0.0
        %7841 = vmatpush2.msra.mxu0 0.0
        %7842 = vmatprep.subr.mxu0 0.0
        %7843 = vmatpush2.msra.mxu0 0.0
        %7844 = vmatprep.subr.mxu0 0.0
        %7845 = vmatpush2.msra.mxu0 0.0
        %7846 = vmatprep.subr.mxu0 0.0
        %7847 = vmatpush2.msra.mxu0 0.0
        %7848 = vmatprep.subr.mxu0 0.0
        %7849 = vmatpush2.msra.mxu0 0.0
        %7850 = vmatprep.mubr.f32.mxu0 0.0
        %7851 = vmatmul.mubr.f32.gmra.mxu0 %v7784
        %v7852 = vpop.f32.mrf.mxu0
        %v7853 = vadd.f32 0.0, %v7852
        %v7854 = vpop.f32.mrf.mxu0
        %7855 = vdwg.mxu0
        %v7857 = vsel %vm1069, %v7853, 0
        %7859 = vmatprep.subr.mxu0 0.0
        %7860 = vmatpush1.msra.mxu0 0.0
        %7861 = vmatprep.subr.mxu0 0.0
        %7862 = vmatpush1.msra.mxu0 0.0
        %7863 = vmatprep.subr.mxu0 0.0
        %7864 = vmatpush1.msra.mxu0 0.0
        %7865 = vmatprep.subr.mxu0 0.0
        %7866 = vmatpush1.msra.mxu0 0.0
        %7867 = vmatprep.subr.mxu0 0.0
        %7868 = vmatpush1.msra.mxu0 0.0
        %7869 = vmatprep.subr.mxu0 0.0
        %7870 = vmatpush1.msra.mxu0 0.0
        %7871 = vmatprep.subr.mxu0 0.0
        %7872 = vmatpush1.msra.mxu0 0.0
        %7873 = vmatprep.subr.mxu0 0.0
        %7874 = vmatpush1.msra.mxu0 0.0
        %7875 = vmatprep.subr.mxu0 0.0
        %7876 = vmatpush1.msra.mxu0 0.0
        %7877 = vmatprep.subr.mxu0 0.0
        %7878 = vmatpush1.msra.mxu0 0.0
        %7879 = vmatprep.subr.mxu0 0.0
        %7880 = vmatpush1.msra.mxu0 0.0
        %7881 = vmatprep.subr.mxu0 0.0
        %7882 = vmatpush1.msra.mxu0 0.0
        %7883 = vmatprep.subr.mxu0 0.0
        %7884 = vmatpush1.msra.mxu0 0.0
        %7885 = vmatprep.subr.mxu0 0.0
        %7886 = vmatpush1.msra.mxu0 0.0
        %7887 = vmatprep.subr.mxu0 0.0
        %7888 = vmatpush1.msra.mxu0 %v7214
        %7889 = vmatprep.subr.mxu0 0.0
        %7890 = vmatpush1.msra.mxu0 %v7213
        %7891 = vmatprep.subr.mxu0 0.0
        %7892 = vmatpush2.msra.mxu0 0.0
        %7893 = vmatprep.subr.mxu0 0.0
        %7894 = vmatpush2.msra.mxu0 0.0
        %7895 = vmatprep.subr.mxu0 0.0
        %7896 = vmatpush2.msra.mxu0 0.0
        %7897 = vmatprep.subr.mxu0 0.0
        %7898 = vmatpush2.msra.mxu0 0.0
        %7899 = vmatprep.subr.mxu0 0.0
        %7900 = vmatpush2.msra.mxu0 0.0
        %7901 = vmatprep.subr.mxu0 0.0
        %7902 = vmatpush2.msra.mxu0 0.0
        %7903 = vmatprep.subr.mxu0 0.0
        %7904 = vmatpush2.msra.mxu0 0.0
        %7905 = vmatprep.subr.mxu0 0.0
        %7906 = vmatpush2.msra.mxu0 0.0
        %7907 = vmatprep.subr.mxu0 0.0
        %7908 = vmatpush2.msra.mxu0 0.0
        %7909 = vmatprep.subr.mxu0 0.0
        %7910 = vmatpush2.msra.mxu0 0.0
        %7911 = vmatprep.subr.mxu0 0.0
        %7912 = vmatpush2.msra.mxu0 0.0
        %7913 = vmatprep.subr.mxu0 0.0
        %7914 = vmatpush2.msra.mxu0 0.0
        %7915 = vmatprep.subr.mxu0 0.0
        %7916 = vmatpush2.msra.mxu0 0.0
        %7917 = vmatprep.subr.mxu0 0.0
        %7918 = vmatpush2.msra.mxu0 0.0
        %7919 = vmatprep.subr.mxu0 0.0
        %7920 = vmatpush2.msra.mxu0 0.0
        %7921 = vmatprep.subr.mxu0 0.0
        %7922 = vmatpush2.msra.mxu0 0.0
        %7923 = vmatprep.mubr.f32.mxu0 0.0
        %7924 = vmatmul.mubr.f32.gmra.mxu0 %v7857
        %v7925 = vpop.f32.mrf.mxu0
        %v7926 = vadd.f32 0.0, %v7925
        %v7927 = vpop.f32.mrf.mxu0
        %7928 = vdwg.mxu0
        %v7929 = vadd.f32 %v7688, %v7926
        %7930 = vrot.lane.b32.xlu0 %v7126, 80
        %v7931 = vpop.permute.xlu0 %7930
        %7932 = vrot.lane.b32.xlu0 %v7205, 80
        %v7933 = vpop.permute.xlu0 %7932
        %v7934 = vsel %vm1069, %v7931, 0
        %v7936 = vsel %vm1069, %v7933, 0
        %7938 = vmatprep.subr.mxu0 0.0
        %7939 = vmatpush1.xpose.msra.mxu0 0.0
        %7940 = vmatprep.subr.mxu0 0.0
        %7941 = vmatpush1.xpose.msra.mxu0 0.0
        %7942 = vmatprep.subr.mxu0 0.0
        %7943 = vmatpush1.xpose.msra.mxu0 0.0
        %7944 = vmatprep.subr.mxu0 0.0
        %7945 = vmatpush1.xpose.msra.mxu0 0.0
        %7946 = vmatprep.subr.mxu0 0.0
        %7947 = vmatpush1.xpose.msra.mxu0 0.0
        %7948 = vmatprep.subr.mxu0 0.0
        %7949 = vmatpush1.xpose.msra.mxu0 0.0
        %7950 = vmatprep.subr.mxu0 0.0
        %7951 = vmatpush1.xpose.msra.mxu0 0.0
        %7952 = vmatprep.subr.mxu0 0.0
        %7953 = vmatpush1.xpose.msra.mxu0 0.0
        %7954 = vmatprep.subr.mxu0 0.0
        %7955 = vmatpush1.xpose.msra.mxu0 0.0
        %7956 = vmatprep.subr.mxu0 0.0
        %7957 = vmatpush1.xpose.msra.mxu0 0.0
        %7958 = vmatprep.subr.mxu0 0.0
        %7959 = vmatpush1.xpose.msra.mxu0 0.0
        %7960 = vmatprep.subr.mxu0 0.0
        %7961 = vmatpush1.xpose.msra.mxu0 0.0
        %7962 = vmatprep.subr.mxu0 0.0
        %7963 = vmatpush1.xpose.msra.mxu0 0.0
        %7964 = vmatprep.subr.mxu0 0.0
        %7965 = vmatpush1.xpose.msra.mxu0 0.0
        %7966 = vmatprep.subr.mxu0 0.0
        %7967 = vmatpush1.xpose.msra.mxu0 0.0
        %7968 = vmatprep.subr.mxu0 0.0
        %7969 = vmatpush1.xpose.msra.mxu0 %v7936
        %7970 = vmatprep.subr.mxu0 0.0
        %7971 = vmatpush2.xpose.msra.mxu0 0.0
        %7972 = vmatprep.subr.mxu0 0.0
        %7973 = vmatpush2.xpose.msra.mxu0 0.0
        %7974 = vmatprep.subr.mxu0 0.0
        %7975 = vmatpush2.xpose.msra.mxu0 0.0
        %7976 = vmatprep.subr.mxu0 0.0
        %7977 = vmatpush2.xpose.msra.mxu0 0.0
        %7978 = vmatprep.subr.mxu0 0.0
        %7979 = vmatpush2.xpose.msra.mxu0 0.0
        %7980 = vmatprep.subr.mxu0 0.0
        %7981 = vmatpush2.xpose.msra.mxu0 0.0
        %7982 = vmatprep.subr.mxu0 0.0
        %7983 = vmatpush2.xpose.msra.mxu0 0.0
        %7984 = vmatprep.subr.mxu0 0.0
        %7985 = vmatpush2.xpose.msra.mxu0 0.0
        %7986 = vmatprep.subr.mxu0 0.0
        %7987 = vmatpush2.xpose.msra.mxu0 0.0
        %7988 = vmatprep.subr.mxu0 0.0
        %7989 = vmatpush2.xpose.msra.mxu0 0.0
        %7990 = vmatprep.subr.mxu0 0.0
        %7991 = vmatpush2.xpose.msra.mxu0 0.0
        %7992 = vmatprep.subr.mxu0 0.0
        %7993 = vmatpush2.xpose.msra.mxu0 0.0
        %7994 = vmatprep.subr.mxu0 0.0
        %7995 = vmatpush2.xpose.msra.mxu0 0.0
        %7996 = vmatprep.subr.mxu0 0.0
        %7997 = vmatpush2.xpose.msra.mxu0 0.0
        %7998 = vmatprep.subr.mxu0 0.0
        %7999 = vmatpush2.xpose.msra.mxu0 0.0
        %8000 = vmatprep.subr.mxu0 0.0
        %8001 = vmatpush2.xpose.msra.mxu0 0.0
        %8002 = vmatprep.mubr.f32.mxu0 0.0
        %8003 = vmatmul.mubr.f32.gmra.mxu0 %v7934
        %v8004 = vpop.f32.mrf.mxu0
        %v8005 = vadd.f32 %v1063, %v8004
        %v8006 = vpop.f32.mrf.mxu0
        %8007 = vdwg.mxu0
        %v8008 = vsel %vm1144, %v8005, -inf
        %8009 = vmax.xlane.f32.xlu0 %v8008
        %v8010 = vpop.xlane.xlu0 %8009
        %v8011 = vsub.f32 %v8005, %v8010
        %v8012 = vmul.f32 %v8011, 1.442695
        %v8013 = vpow.pop %v8012
        %v8014 = vsel %vm1144, %v8013, 0.0
        %8015 = vadd.xlane.f32.xlu0 %v8014
        %v8016 = vpop.xlane.xlu0 %8015
        %v8017 = vrcp.pop %v8016
        %v8018 = vmul.f32 %v8013, %v8017
        %8019 = vrot.lane.b32.xlu0 %v7205, 16
        %v8020 = vpop.permute.xlu0 %8019
        %v8023 = vsel %vm1144, %v8018, 0
        %8025 = vmatprep.subr.mxu0 0.0
        %8026 = vmatpush1.msra.mxu0 0.0
        %8027 = vmatprep.subr.mxu0 0.0
        %8028 = vmatpush1.msra.mxu0 0.0
        %8029 = vmatprep.subr.mxu0 0.0
        %8030 = vmatpush1.msra.mxu0 0.0
        %8031 = vmatprep.subr.mxu0 0.0
        %8032 = vmatpush1.msra.mxu0 0.0
        %8033 = vmatprep.subr.mxu0 0.0
        %8034 = vmatpush1.msra.mxu0 0.0
        %8035 = vmatprep.subr.mxu0 0.0
        %8036 = vmatpush1.msra.mxu0 0.0
        %8037 = vmatprep.subr.mxu0 0.0
        %8038 = vmatpush1.msra.mxu0 0.0
        %8039 = vmatprep.subr.mxu0 0.0
        %8040 = vmatpush1.msra.mxu0 0.0
        %8041 = vmatprep.subr.mxu0 0.0
        %8042 = vmatpush1.msra.mxu0 0.0
        %8043 = vmatprep.subr.mxu0 0.0
        %8044 = vmatpush1.msra.mxu0 0.0
        %8045 = vmatprep.subr.mxu0 0.0
        %8046 = vmatpush1.msra.mxu0 0.0
        %8047 = vmatprep.subr.mxu0 0.0
        %8048 = vmatpush1.msra.mxu0 0.0
        %8049 = vmatprep.subr.mxu0 0.0
        %8050 = vmatpush1.msra.mxu0 0.0
        %8051 = vmatprep.subr.mxu0 0.0
        %8052 = vmatpush1.msra.mxu0 0.0
        %8053 = vmatprep.subr.mxu0 0.0
        %8054 = vmatpush1.msra.mxu0 0.0
        %8055 = vmatprep.subr.mxu0 0.0
        %8056 = vmatpush1.msra.mxu0 %v8020
        %8057 = vmatprep.subr.mxu0 0.0
        %8058 = vmatpush2.msra.mxu0 0.0
        %8059 = vmatprep.subr.mxu0 0.0
        %8060 = vmatpush2.msra.mxu0 0.0
        %8061 = vmatprep.subr.mxu0 0.0
        %8062 = vmatpush2.msra.mxu0 0.0
        %8063 = vmatprep.subr.mxu0 0.0
        %8064 = vmatpush2.msra.mxu0 0.0
        %8065 = vmatprep.subr.mxu0 0.0
        %8066 = vmatpush2.msra.mxu0 0.0
        %8067 = vmatprep.subr.mxu0 0.0
        %8068 = vmatpush2.msra.mxu0 0.0
        %8069 = vmatprep.subr.mxu0 0.0
        %8070 = vmatpush2.msra.mxu0 0.0
        %8071 = vmatprep.subr.mxu0 0.0
        %8072 = vmatpush2.msra.mxu0 0.0
        %8073 = vmatprep.subr.mxu0 0.0
        %8074 = vmatpush2.msra.mxu0 0.0
        %8075 = vmatprep.subr.mxu0 0.0
        %8076 = vmatpush2.msra.mxu0 0.0
        %8077 = vmatprep.subr.mxu0 0.0
        %8078 = vmatpush2.msra.mxu0 0.0
        %8079 = vmatprep.subr.mxu0 0.0
        %8080 = vmatpush2.msra.mxu0 0.0
        %8081 = vmatprep.subr.mxu0 0.0
        %8082 = vmatpush2.msra.mxu0 0.0
        %8083 = vmatprep.subr.mxu0 0.0
        %8084 = vmatpush2.msra.mxu0 0.0
        %8085 = vmatprep.subr.mxu0 0.0
        %8086 = vmatpush2.msra.mxu0 0.0
        %8087 = vmatprep.subr.mxu0 0.0
        %8088 = vmatpush2.msra.mxu0 0.0
        %8089 = vmatprep.mubr.f32.mxu0 0.0
        %8090 = vmatmul.mubr.f32.gmra.mxu0 %v8023
        %v8091 = vpop.f32.mrf.mxu0
        %v8092 = vadd.f32 0.0, %v8091
        %v8093 = vpop.f32.mrf.mxu0
        %8094 = vdwg.mxu0
        %v8096 = vsel %vm1069, %v8092, 0
        %8098 = vmatprep.subr.mxu0 0.0
        %8099 = vmatpush1.msra.mxu0 0.0
        %8100 = vmatprep.subr.mxu0 0.0
        %8101 = vmatpush1.msra.mxu0 0.0
        %8102 = vmatprep.subr.mxu0 0.0
        %8103 = vmatpush1.msra.mxu0 0.0
        %8104 = vmatprep.subr.mxu0 0.0
        %8105 = vmatpush1.msra.mxu0 0.0
        %8106 = vmatprep.subr.mxu0 0.0
        %8107 = vmatpush1.msra.mxu0 0.0
        %8108 = vmatprep.subr.mxu0 0.0
        %8109 = vmatpush1.msra.mxu0 0.0
        %8110 = vmatprep.subr.mxu0 0.0
        %8111 = vmatpush1.msra.mxu0 0.0
        %8112 = vmatprep.subr.mxu0 0.0
        %8113 = vmatpush1.msra.mxu0 0.0
        %8114 = vmatprep.subr.mxu0 0.0
        %8115 = vmatpush1.msra.mxu0 0.0
        %8116 = vmatprep.subr.mxu0 0.0
        %8117 = vmatpush1.msra.mxu0 0.0
        %8118 = vmatprep.subr.mxu0 0.0
        %8119 = vmatpush1.msra.mxu0 0.0
        %8120 = vmatprep.subr.mxu0 0.0
        %8121 = vmatpush1.msra.mxu0 0.0
        %8122 = vmatprep.subr.mxu0 0.0
        %8123 = vmatpush1.msra.mxu0 0.0
        %8124 = vmatprep.subr.mxu0 0.0
        %8125 = vmatpush1.msra.mxu0 0.0
        %8126 = vmatprep.subr.mxu0 0.0
        %8127 = vmatpush1.msra.mxu0 %v7216
        %8128 = vmatprep.subr.mxu0 0.0
        %8129 = vmatpush1.msra.mxu0 %v7215
        %8130 = vmatprep.subr.mxu0 0.0
        %8131 = vmatpush2.msra.mxu0 0.0
        %8132 = vmatprep.subr.mxu0 0.0
        %8133 = vmatpush2.msra.mxu0 0.0
        %8134 = vmatprep.subr.mxu0 0.0
        %8135 = vmatpush2.msra.mxu0 0.0
        %8136 = vmatprep.subr.mxu0 0.0
        %8137 = vmatpush2.msra.mxu0 0.0
        %8138 = vmatprep.subr.mxu0 0.0
        %8139 = vmatpush2.msra.mxu0 0.0
        %8140 = vmatprep.subr.mxu0 0.0
        %8141 = vmatpush2.msra.mxu0 0.0
        %8142 = vmatprep.subr.mxu0 0.0
        %8143 = vmatpush2.msra.mxu0 0.0
        %8144 = vmatprep.subr.mxu0 0.0
        %8145 = vmatpush2.msra.mxu0 0.0
        %8146 = vmatprep.subr.mxu0 0.0
        %8147 = vmatpush2.msra.mxu0 0.0
        %8148 = vmatprep.subr.mxu0 0.0
        %8149 = vmatpush2.msra.mxu0 0.0
        %8150 = vmatprep.subr.mxu0 0.0
        %8151 = vmatpush2.msra.mxu0 0.0
        %8152 = vmatprep.subr.mxu0 0.0
        %8153 = vmatpush2.msra.mxu0 0.0
        %8154 = vmatprep.subr.mxu0 0.0
        %8155 = vmatpush2.msra.mxu0 0.0
        %8156 = vmatprep.subr.mxu0 0.0
        %8157 = vmatpush2.msra.mxu0 0.0
        %8158 = vmatprep.subr.mxu0 0.0
        %8159 = vmatpush2.msra.mxu0 0.0
        %8160 = vmatprep.subr.mxu0 0.0
        %8161 = vmatpush2.msra.mxu0 0.0
        %8162 = vmatprep.mubr.f32.mxu0 0.0
        %8163 = vmatmul.mubr.f32.gmra.mxu0 %v8096
        %v8164 = vpop.f32.mrf.mxu0
        %v8165 = vadd.f32 0.0, %v8164
        %v8166 = vpop.f32.mrf.mxu0
        %8167 = vdwg.mxu0
        %v8168 = vadd.f32 %v7929, %v8165
        %v8169 = vadd.f32 %v7029, %v8168
        %s8170 = scalar_lea.vmem %s20, 1
        %v8171 = vld [vmem:[%s8170] sm:$0x1]
        %v8172 = vmul.f32 %v8169, %v8169
        %v8173 = vsel %vm944, %v8172, 0.0
        %8174 = vadd.xlane.f32.xlu0 %v8173
        %v8175 = vpop.xlane.xlu0 %8174
        %v8176 = vmul.f32 %v8175, %v948
        %v8177 = vadd.f32 %v8176, 1e-06
        %v8178 = vrsqrt.pop %v8177
        %v8179 = vmul.f32 %v8169, %v8178
        %v8181 = vlaneseq
        %v8182 = vshrl.u32 %v8181, 7
        %v8183 = vsub.s32 0, %v8182
        %v8184 = vrot.slane %v8171, %v8183
        %v8186 = vmul.f32 %v8179, %v8184
        %s8187 = scalar_lea.vmem %s21, 64
        %v8188 = vld [vmem:[%s8187] sm:$0xff]
        %v8189 = vld [vmem:[%s8187 + $0x8] sm:$0xff]
        %v8190 = vld [vmem:[%s8187 + $0x10] sm:$0xff]
        %v8191 = vld [vmem:[%s8187 + $0x18] sm:$0xff]
        %v8192 = vld [vmem:[%s8187 + $0x20] sm:$0xff]
        %v8193 = vld [vmem:[%s8187 + $0x28] sm:$0xff]
        %v8194 = vld [vmem:[%s8187 + $0x30] sm:$0xff]
        %v8195 = vld [vmem:[%s8187 + $0x38] sm:$0xff]
        %v8197 = vsel %vm944, %v8186, 0
        %8199 = vmatprep.subr.mxu0 0.0
        %8200 = vmatpush1.msra.mxu0 0.0
        %8201 = vmatprep.subr.mxu0 0.0
        %8202 = vmatpush1.msra.mxu0 0.0
        %8203 = vmatprep.subr.mxu0 0.0
        %8204 = vmatpush1.msra.mxu0 0.0
        %8205 = vmatprep.subr.mxu0 0.0
        %8206 = vmatpush1.msra.mxu0 0.0
        %8207 = vmatprep.subr.mxu0 0.0
        %8208 = vmatpush1.msra.mxu0 0.0
        %8209 = vmatprep.subr.mxu0 0.0
        %8210 = vmatpush1.msra.mxu0 0.0
        %8211 = vmatprep.subr.mxu0 0.0
        %8212 = vmatpush1.msra.mxu0 0.0
        %8213 = vmatprep.subr.mxu0 0.0
        %8214 = vmatpush1.msra.mxu0 0.0
        %8215 = vmatprep.subr.mxu0 0.0
        %8216 = vmatpush1.msra.mxu0 %v8195
        %8217 = vmatprep.subr.mxu0 0.0
        %8218 = vmatpush1.msra.mxu0 %v8194
        %8219 = vmatprep.subr.mxu0 0.0
        %8220 = vmatpush1.msra.mxu0 %v8193
        %8221 = vmatprep.subr.mxu0 0.0
        %8222 = vmatpush1.msra.mxu0 %v8192
        %8223 = vmatprep.subr.mxu0 0.0
        %8224 = vmatpush1.msra.mxu0 %v8191
        %8225 = vmatprep.subr.mxu0 0.0
        %8226 = vmatpush1.msra.mxu0 %v8190
        %8227 = vmatprep.subr.mxu0 0.0
        %8228 = vmatpush1.msra.mxu0 %v8189
        %8229 = vmatprep.subr.mxu0 0.0
        %8230 = vmatpush1.msra.mxu0 %v8188
        %8231 = vmatprep.subr.mxu0 0.0
        %8232 = vmatpush2.msra.mxu0 0.0
        %8233 = vmatprep.subr.mxu0 0.0
        %8234 = vmatpush2.msra.mxu0 0.0
        %8235 = vmatprep.subr.mxu0 0.0
        %8236 = vmatpush2.msra.mxu0 0.0
        %8237 = vmatprep.subr.mxu0 0.0
        %8238 = vmatpush2.msra.mxu0 0.0
        %8239 = vmatprep.subr.mxu0 0.0
        %8240 = vmatpush2.msra.mxu0 0.0
        %8241 = vmatprep.subr.mxu0 0.0
        %8242 = vmatpush2.msra.mxu0 0.0
        %8243 = vmatprep.subr.mxu0 0.0
        %8244 = vmatpush2.msra.mxu0 0.0
        %8245 = vmatprep.subr.mxu0 0.0
        %8246 = vmatpush2.msra.mxu0 0.0
        %8247 = vmatprep.subr.mxu0 0.0
        %8248 = vmatpush2.msra.mxu0 0.0
        %8249 = vmatprep.subr.mxu0 0.0
        %8250 = vmatpush2.msra.mxu0 0.0
        %8251 = vmatprep.subr.mxu0 0.0
        %8252 = vmatpush2.msra.mxu0 0.0
        %8253 = vmatprep.subr.mxu0 0.0
        %8254 = vmatpush2.msra.mxu0 0.0
        %8255 = vmatprep.subr.mxu0 0.0
        %8256 = vmatpush2.msra.mxu0 0.0
        %8257 = vmatprep.subr.mxu0 0.0
        %8258 = vmatpush2.msra.mxu0 0.0
        %8259 = vmatprep.subr.mxu0 0.0
        %8260 = vmatpush2.msra.mxu0 0.0
        %8261 = vmatprep.subr.mxu0 0.0
        %8262 = vmatpush2.msra.mxu0 0.0
        %8263 = vmatprep.mubr.f32.mxu0 0.0
        %8264 = vmatmul.mubr.f32.gmra.mxu0 %v8197
        %v8265 = vpop.f32.mrf.mxu0
        %v8266 = vadd.f32 0.0, %v8265
        %v8267 = vpop.f32.mrf.mxu0
        %8268 = vdwg.mxu0
        %v8269 = vmax.f32 %v8266, 0.0
        %s8270 = scalar_lea.vmem %s22, 128
        %v8271 = vld [vmem:[%s8270] sm:$0xff]
        %v8272 = vld [vmem:[%s8270 + $0x8] sm:$0xff]
        %v8273 = vld [vmem:[%s8270 + $0x10] sm:$0xff]
        %v8274 = vld [vmem:[%s8270 + $0x18] sm:$0xff]
        %v8275 = vld [vmem:[%s8270 + $0x20] sm:$0xff]
        %v8276 = vld [vmem:[%s8270 + $0x28] sm:$0xff]
        %v8277 = vld [vmem:[%s8270 + $0x30] sm:$0xff]
        %v8278 = vld [vmem:[%s8270 + $0x38] sm:$0xff]
        %v8279 = vld [vmem:[%s8270 + $0x40] sm:$0xff]
        %v8280 = vld [vmem:[%s8270 + $0x48] sm:$0xff]
        %v8281 = vld [vmem:[%s8270 + $0x50] sm:$0xff]
        %v8282 = vld [vmem:[%s8270 + $0x58] sm:$0xff]
        %v8283 = vld [vmem:[%s8270 + $0x60] sm:$0xff]
        %v8284 = vld [vmem:[%s8270 + $0x68] sm:$0xff]
        %v8285 = vld [vmem:[%s8270 + $0x70] sm:$0xff]
        %v8286 = vld [vmem:[%s8270 + $0x78] sm:$0xff]
        %8287 = vmatprep.subr.mxu0 0.0
        %8288 = vmatpush1.msra.mxu0 %v8286
        %8289 = vmatprep.subr.mxu0 0.0
        %8290 = vmatpush1.msra.mxu0 %v8285
        %8291 = vmatprep.subr.mxu0 0.0
        %8292 = vmatpush1.msra.mxu0 %v8284
        %8293 = vmatprep.subr.mxu0 0.0
        %8294 = vmatpush1.msra.mxu0 %v8283
        %8295 = vmatprep.subr.mxu0 0.0
        %8296 = vmatpush1.msra.mxu0 %v8282
        %8297 = vmatprep.subr.mxu0 0.0
        %8298 = vmatpush1.msra.mxu0 %v8281
        %8299 = vmatprep.subr.mxu0 0.0
        %8300 = vmatpush1.msra.mxu0 %v8280
        %8301 = vmatprep.subr.mxu0 0.0
        %8302 = vmatpush1.msra.mxu0 %v8279
        %8303 = vmatprep.subr.mxu0 0.0
        %8304 = vmatpush1.msra.mxu0 %v8278
        %8305 = vmatprep.subr.mxu0 0.0
        %8306 = vmatpush1.msra.mxu0 %v8277
        %8307 = vmatprep.subr.mxu0 0.0
        %8308 = vmatpush1.msra.mxu0 %v8276
        %8309 = vmatprep.subr.mxu0 0.0
        %8310 = vmatpush1.msra.mxu0 %v8275
        %8311 = vmatprep.subr.mxu0 0.0
        %8312 = vmatpush1.msra.mxu0 %v8274
        %8313 = vmatprep.subr.mxu0 0.0
        %8314 = vmatpush1.msra.mxu0 %v8273
        %8315 = vmatprep.subr.mxu0 0.0
        %8316 = vmatpush1.msra.mxu0 %v8272
        %8317 = vmatprep.subr.mxu0 0.0
        %8318 = vmatpush1.msra.mxu0 %v8271
        %8319 = vmatprep.subr.mxu0 0.0
        %8320 = vmatpush2.msra.mxu0 0.0
        %8321 = vmatprep.subr.mxu0 0.0
        %8322 = vmatpush2.msra.mxu0 0.0
        %8323 = vmatprep.subr.mxu0 0.0
        %8324 = vmatpush2.msra.mxu0 0.0
        %8325 = vmatprep.subr.mxu0 0.0
        %8326 = vmatpush2.msra.mxu0 0.0
        %8327 = vmatprep.subr.mxu0 0.0
        %8328 = vmatpush2.msra.mxu0 0.0
        %8329 = vmatprep.subr.mxu0 0.0
        %8330 = vmatpush2.msra.mxu0 0.0
        %8331 = vmatprep.subr.mxu0 0.0
        %8332 = vmatpush2.msra.mxu0 0.0
        %8333 = vmatprep.subr.mxu0 0.0
        %8334 = vmatpush2.msra.mxu0 0.0
        %8335 = vmatprep.subr.mxu0 0.0
        %8336 = vmatpush2.msra.mxu0 0.0
        %8337 = vmatprep.subr.mxu0 0.0
        %8338 = vmatpush2.msra.mxu0 0.0
        %8339 = vmatprep.subr.mxu0 0.0
        %8340 = vmatpush2.msra.mxu0 0.0
        %8341 = vmatprep.subr.mxu0 0.0
        %8342 = vmatpush2.msra.mxu0 0.0
        %8343 = vmatprep.subr.mxu0 0.0
        %8344 = vmatpush2.msra.mxu0 0.0
        %8345 = vmatprep.subr.mxu0 0.0
        %8346 = vmatpush2.msra.mxu0 0.0
        %8347 = vmatprep.subr.mxu0 0.0
        %8348 = vmatpush2.msra.mxu0 0.0
        %8349 = vmatprep.subr.mxu0 0.0
        %8350 = vmatpush2.msra.mxu0 0.0
        %8351 = vmatprep.mubr.f32.mxu0 0.0
        %8352 = vmatmul.mubr.f32.gmra.mxu0 %v8269
        %v8353 = vpop.f32.mrf.mxu0
        %v8354 = vadd.f32 0.0, %v8353
        %v8355 = vpop.f32.mrf.mxu0
        %8356 = vdwg.mxu0
        %v8357 = vadd.f32 %v8169, %v8354
        %v8358 = vld [vmem:[%s24] sm:$0x1]
        %v8359 = vmul.f32 %v8357, %v8357
        %v8360 = vsel %vm944, %v8359, 0.0
        %8361 = vadd.xlane.f32.xlu0 %v8360
        %v8362 = vpop.xlane.xlu0 %8361
        %v8363 = vmul.f32 %v8362, %v948
        %v8364 = vadd.f32 %v8363, 1e-06
        %v8365 = vrsqrt.pop %v8364
        %v8366 = vmul.f32 %v8357, %v8365
        %v8368 = vlaneseq
        %v8369 = vshrl.u32 %v8368, 7
        %v8370 = vsub.s32 0, %v8369
        %v8371 = vrot.slane %v8358, %v8370
        %v8373 = vmul.f32 %v8366, %v8371
        %v8374 = vmul.f32 %v8373, 0.125
        %v8376 = vsel %vm944, %v8374, 0
        %v8379 = vsel %vm944, %v856, 0
        %v8382 = vsel %vm944, %v857, 0
        %v8385 = vsel %vm944, %v858, 0
        %v8388 = vsel %vm944, %v859, 0
        %v8391 = vsel %vm944, %v860, 0
        %v8394 = vsel %vm944, %v861, 0
        %v8397 = vsel %vm944, %v862, 0
        %v8400 = vsel %vm944, %v863, 0
        %v8403 = vsel %vm944, %v864, 0
        %v8406 = vsel %vm944, %v865, 0
        %v8409 = vsel %vm944, %v866, 0
        %v8412 = vsel %vm944, %v867, 0
        %v8415 = vsel %vm944, %v868, 0
        %v8418 = vsel %vm944, %v869, 0
        %v8421 = vsel %vm944, %v870, 0
        %v8424 = vsel %vm944, %v871, 0
        %8426 = vmatprep.subr.mxu0 0.0
        %8427 = vmatpush1.xpose.msra.mxu0 %v8424
        %8428 = vmatprep.subr.mxu0 0.0
        %8429 = vmatpush1.xpose.msra.mxu0 %v8421
        %8430 = vmatprep.subr.mxu0 0.0
        %8431 = vmatpush1.xpose.msra.mxu0 %v8418
        %8432 = vmatprep.subr.mxu0 0.0
        %8433 = vmatpush1.xpose.msra.mxu0 %v8415
        %8434 = vmatprep.subr.mxu0 0.0
        %8435 = vmatpush1.xpose.msra.mxu0 %v8412
        %8436 = vmatprep.subr.mxu0 0.0
        %8437 = vmatpush1.xpose.msra.mxu0 %v8409
        %8438 = vmatprep.subr.mxu0 0.0
        %8439 = vmatpush1.xpose.msra.mxu0 %v8406
        %8440 = vmatprep.subr.mxu0 0.0
        %8441 = vmatpush1.xpose.msra.mxu0 %v8403
        %8442 = vmatprep.subr.mxu0 0.0
        %8443 = vmatpush1.xpose.msra.mxu0 %v8400
        %8444 = vmatprep.subr.mxu0 0.0
        %8445 = vmatpush1.xpose.msra.mxu0 %v8397
        %8446 = vmatprep.subr.mxu0 0.0
        %8447 = vmatpush1.xpose.msra.mxu0 %v8394
        %8448 = vmatprep.subr.mxu0 0.0
        %8449 = vmatpush1.xpose.msra.mxu0 %v8391
        %8450 = vmatprep.subr.mxu0 0.0
        %8451 = vmatpush1.xpose.msra.mxu0 %v8388
        %8452 = vmatprep.subr.mxu0 0.0
        %8453 = vmatpush1.xpose.msra.mxu0 %v8385
        %8454 = vmatprep.subr.mxu0 0.0
        %8455 = vmatpush1.xpose.msra.mxu0 %v8382
        %8456 = vmatprep.subr.mxu0 0.0
        %8457 = vmatpush1.xpose.msra.mxu0 %v8379
        %8458 = vmatprep.subr.mxu0 0.0
        %8459 = vmatpush2.xpose.msra.mxu0 0.0
        %8460 = vmatprep.subr.mxu0 0.0
        %8461 = vmatpush2.xpose.msra.mxu0 0.0
        %8462 = vmatprep.subr.mxu0 0.0
        %8463 = vmatpush2.xpose.msra.mxu0 0.0
        %8464 = vmatprep.subr.mxu0 0.0
        %8465 = vmatpush2.xpose.msra.mxu0 0.0
        %8466 = vmatprep.subr.mxu0 0.0
        %8467 = vmatpush2.xpose.msra.mxu0 0.0
        %8468 = vmatprep.subr.mxu0 0.0
        %8469 = vmatpush2.xpose.msra.mxu0 0.0
        %8470 = vmatprep.subr.mxu0 0.0
        %8471 = vmatpush2.xpose.msra.mxu0 0.0
        %8472 = vmatprep.subr.mxu0 0.0
        %8473 = vmatpush2.xpose.msra.mxu0 0.0
        %8474 = vmatprep.subr.mxu0 0.0
        %8475 = vmatpush2.xpose.msra.mxu0 0.0
        %8476 = vmatprep.subr.mxu0 0.0
        %8477 = vmatpush2.xpose.msra.mxu0 0.0
        %8478 = vmatprep.subr.mxu0 0.0
        %8479 = vmatpush2.xpose.msra.mxu0 0.0
        %8480 = vmatprep.subr.mxu0 0.0
        %8481 = vmatpush2.xpose.msra.mxu0 0.0
        %8482 = vmatprep.subr.mxu0 0.0
        %8483 = vmatpush2.xpose.msra.mxu0 0.0
        %8484 = vmatprep.subr.mxu0 0.0
        %8485 = vmatpush2.xpose.msra.mxu0 0.0
        %8486 = vmatprep.subr.mxu0 0.0
        %8487 = vmatpush2.xpose.msra.mxu0 0.0
        %8488 = vmatprep.subr.mxu0 0.0
        %8489 = vmatpush2.xpose.msra.mxu0 0.0
        %8490 = vmatprep.mubr.f32.mxu0 0.0
        %8491 = vmatmul.mubr.f32.gmra.mxu0 %v8376
        %v8492 = vpop.f32.mrf.mxu0
        %v8493 = vadd.f32 0.0, %v8492
        %v8494 = vpop.f32.mrf.mxu0
        %8495 = vdwg.mxu0
        %8496 = vst [vmem:[%s820] sm:$0xff] %v8493
        %v8497 = vld [vmem:[%s838] sm:$0xff]
        %vm8498 = vcmp.eq.s32.totalorder %v8497, 4294967196
        %v8499 = vsel %vm8498, 0, %v8497
        %8500 = vset.pattern.permute.xlu0 0
        %8501 = vperm.xlu0 %8500, %v8499
        %v8502 = vpop.permute.xlu0 %8501
        %vm8503 = vcmp.eq.s32.totalorder %v849, %v8502
        %v8504 = vsel %vm8503, 1, 0
        %v8505 = vcvt.s32.f32 %v8504
        %8506 = vmax.xlane.f32.xlu0 %v8493
        %v8507 = vpop.xlane.xlu0 %8506
        %v8508 = vsub.f32 %v8493, %v8507
        %v8509 = vmul.f32 %v8508, 1.442695
        %v8510 = vpow.pop %v8509
        %8511 = vadd.xlane.f32.xlu0 %v8510
        %v8512 = vpop.xlane.xlu0 %8511
        %v8513 = vlog2.pop %v8512
        %v8514 = vmul.f32 %v8513, 0.6931472
        %v8515 = vadd.f32 %v8514, %v8507
        %v8516 = vsub.f32 %v8515, %v8493
        %v8517 = vmul.f32 %v8505, %v8516
        %8518 = vadd.xlane.f32.xlu0 %v8517
        %v8519 = vpop.xlane.xlu0 %8518
        %vm8520 = vcmask 7168
        %8521 = vst.msk [vmem:[%s845] sm:$0xff] %vm8520, %v8519
        %s8522 = sand.u32 %s594, 1
        %s8523 = scalar_lea.sflag [#allocation3], %s8522
        %s8524 = sand.u32 %s594, 1
        %s8525 = smul.addr %s8524, 8
        %s8526 = scalar_lea.vmem [#allocation2], %s8525
        %p8527 = scmp.lt.s32.totalorder %s41, 1
        %s8528 = scalar_select %p8527, %s41, 1
        %s8529 = smul.addr %s8528, 8
        %s8530 = scalar_lea.vmem %s26, %s8529
        // Predicated region
        $region121: #{t5_forward.1} parent=119 // pred_check
          %p8531 = pneg %p604
        $region122: #{t5_forward.1} parent=119 // pred_check_branch
          %8533 = sbr.rel (%p8531) target = $region124
        $region123: #{t5_forward.1} parent=119 // pred_region
          %s8535 = ssub.s32 128, 128
          %8536 = vsyncadd %s8523, %s8535
          %s8537 = smul.addr %s41, 128
          %s8538 = scalar_lea.hbm %s25, %s8537
          %s8540 = sshll.u32 %s8526, 4
          %s8541 = int_to_ptr.vmem [resolvable:$true] %s8540
          %8543 = dma.vmem_to_hbm [thread:$0]  %s8541, 128, %s8538, %s8523
        $region124: #{t5_forward.1} parent=119 // pred_fallthru
          _
        // Predicated region
        $region125: #{t5_forward.1} parent=119 // pred_check
          %p8544 = pneg %p630
        $region126: #{t5_forward.1} parent=119 // pred_check_branch
          %8546 = sbr.rel (%p8544) target = $region128
        $region127: #{t5_forward.1} parent=119 // pred_region
          _
        $region128: #{t5_forward.1} parent=119 // pred_fallthru
          _
      $region120: #{t5_forward.1} parent=5 // pred_fallthru
        _
      %p8547 = scmp.le.s32.totalorder 2, %s36
      // Predicated region
      $region129: #{t5_forward.1} parent=5 // pred_check
        %p8548 = pneg %p8547
      $region130: #{t5_forward.1} parent=5 // pred_check_branch
        %8550 = sbr.rel (%p8548) target = $region132
      $region131: #{t5_forward.1} parent=5 // pred_region
        %s8551 = ssub.s32 %s36, 2
        // Predicated region
        $region133: #{t5_forward.1} parent=131 // pred_check
          %p8552 = pneg %p610
        $region134: #{t5_forward.1} parent=131 // pred_check_branch
          %8554 = sbr.rel (%p8552) target = $region136
        $region135: #{t5_forward.1} parent=131 // pred_region
          %s8555 = sand.u32 %s595, 1
          %s8556 = scalar_lea.sflag [#allocation3], %s8555
          %s8557 = sand.u32 %s595, 1
          %s8558 = smul.addr %s8557, 8
          %s8559 = scalar_lea.vmem [#allocation2], %s8558
          %8560 = dma.done %s8556, 128
        $region136: #{t5_forward.1} parent=131 // pred_fallthru
          _
        // Predicated region
        $region137: #{t5_forward.1} parent=131 // pred_check
          %p8561 = pneg %p636
        $region138: #{t5_forward.1} parent=131 // pred_check_branch
          %8563 = sbr.rel (%p8561) target = $region140
        $region139: #{t5_forward.1} parent=131 // pred_region
          %p8564 = scmp.lt.s32.totalorder %s42, 1
          %s8565 = scalar_select %p8564, %s42, 1
          %s8566 = smul.addr %s8565, 8
          %s8567 = scalar_lea.vmem %s26, %s8566
        $region140: #{t5_forward.1} parent=131 // pred_fallthru
          _
      $region132: #{t5_forward.1} parent=5 // pred_fallthru
        _
    $region6: #{t5_forward.1} parent=1 // loop_footer
      %s40 = sadd.s32 1, %s36
    $region7: #{t5_forward.1} parent=1 // loop_footer_branch
      %35 = sbr.rel target = $region3
    $region8: #{t5_forward.1} parent=1 // loop_exit
      _
    %8568 = vsyncpa [#allocation3], 1
    %s8569 = scalar_lea.sflag [#allocation3], 1
    %8570 = vsyncpa %s8569, 1

</llo_original>
